<compile_context>
chip_gen: v7x
topology: tpu7x:2x2x1
jax: 0.10.0
libtpu: 0.0.40
codegen_flags: <defaults>
</compile_context>

<pallas_src>
import jax
import jax.numpy as jnp
from jax.experimental import pallas as pl
from jax.experimental.pallas import tpu as pltpu

# ----- dimensions implied by the PyTorch module -----
EMBED_DIM = 100                     # fc1 expects 16*31 = 496 -> embed dim 100
SEQ_CH = 91                         # conv1 in_channels (padded sentence length)
C1, C2 = 8, 16
KW = 4
L1 = EMBED_DIM - KW + 1             # 97
L2 = L1 - KW + 1                    # 94
POOL = 3
LP = (L2 - POOL) // POOL + 1        # 31
FLAT = C2 * LP                      # 496
H1, H2, NOUT = 128, 32, 4

# ----- kernel layout constants (all lane offsets multiples of 128) -----
CPAD = 96                           # conv1 channel dim padded 91 -> 96
LG = 16                             # conv1 output positions per column group
N_GRP = -(-L1 // LG)                # 7 groups cover l1 in [0, 112)
L1PAD = N_GRP * LG                  # 112
KW_G = LG + KW                      # 20 embed positions feeding one group
G_STRIDE = LG * CPAD                # 1536 = 12*128  (aligned slice start step)
G_K = KW_G * CPAD                   # 1920 = 15*128  (aligned slice length)
DPAD = (N_GRP - 1) * LG + KW_G      # 116 embed positions after padding
XLANES = DPAD * CPAD                # 11136 = 87*128 flattened input lanes
N1P = L1PAD * C1                    # 896  conv1 out lanes, lane = l1*8 + o1
POOL_PAD = 32                       # pool windows padded 31 -> 32
FCK = C2 * POOL_PAD                 # 512  pooled lanes, lane = o2*32 + p
N2P = POOL * FCK                    # 1536 conv2 out lanes, lane = r*512 + o2*32 + p


def _net_kernel(x_ref, w1_ref, w2_ref, wp1_ref, wf2_ref, wf3_ref,
                b1_ref, b2_ref, bp1_ref, bf2_ref, bf3_ref, o_ref):
    w1b = w1_ref[...]                                            # (1920, 128)

    # conv1: 7 aligned banded column-group matmuls sharing one Toeplitz tile.
    parts = []
    for g in range(N_GRP):
        xg = x_ref[:, g * G_STRIDE: g * G_STRIDE + G_K]          # (tb, 1920)
        parts.append(jnp.dot(xg, w1b, preferred_element_type=jnp.float32))
    a1 = jnp.concatenate(parts, axis=1)                          # (tb, 896) f32
    h1 = jnp.maximum(a1 + b1_ref[...], 0.0).astype(w2_ref.dtype)

    # conv2 (taps folded), output columns ordered (r, o2, p) for aligned pooling.
    a2 = jnp.dot(h1, w2_ref[...], preferred_element_type=jnp.float32) + b2_ref[...]
    h2 = jnp.maximum(a2, 0.0)                                    # (tb, 1536) f32

    # MaxPool1d(3): max over the three aligned 512-lane slabs (fp32), cast once.
    m = jnp.maximum(jnp.maximum(h2[:, :FCK], h2[:, FCK:2 * FCK]), h2[:, 2 * FCK:])
    m = m.astype(wp1_ref.dtype)                                  # (tb, 512)

    # fc1 (pool-select + flatten fused into wp1) + ReLU. Dropout: eval identity.
    z1 = jnp.dot(m, wp1_ref[...], preferred_element_type=jnp.float32) + bp1_ref[...]
    z1 = jnp.maximum(z1, 0.0).astype(wf2_ref.dtype)              # (tb, 128)

    # fc2 + ReLU. Dropout: eval identity.
    z2 = jnp.dot(z1, wf2_ref[...], preferred_element_type=jnp.float32) + bf2_ref[...]
    z2 = jnp.maximum(z2, 0.0).astype(wf3_ref.dtype)              # (tb, 32)

    # fc3
    o_ref[...] = (jnp.dot(z2, wf3_ref[...], preferred_element_type=jnp.float32)
                  + bf3_ref[...])                                # (tb, 4)


def fold_params(params, compute_dtype=jnp.bfloat16):
    """Precompute the folded / fused weights the Pallas kernel consumes."""
    f32 = jnp.float32
    w1 = params["conv1_w"].astype(f32)                           # (8, 91, 4)
    w2 = params["conv2_w"].astype(f32)                           # (16, 8, 4)
    fw1 = params["fc1_w"].astype(f32)                            # (128, 496)

    # conv1 block-Toeplitz tile shared by all 7 column groups:
    #   w1b[dd*96 + c, ll*8 + o] = conv1_w[o, c, dd-ll] if 0 <= dd-ll < 4
    w1c = jnp.pad(w1, ((0, 0), (0, CPAD - SEQ_CH), (0, 0)))      # (8, 96, 4)
    dd = jnp.arange(KW_G)
    ll = jnp.arange(LG)
    k1 = dd[:, None] - ll[None, :]                               # (20, 16)
    v1 = ((k1 >= 0) & (k1 < KW)).astype(f32)
    t1 = w1c[:, :, jnp.clip(k1, 0, KW - 1)] * v1[None, None]     # (8, 96, 20, 16)
    w1b = t1.transpose(2, 1, 3, 0).reshape(G_K, LG * C1)         # (1920, 128)

    # conv2 dense-folded: rows in conv1's (l1, o1) layout, columns (r, o2, p)
    # so MaxPool1d(3) is a max over 3 aligned 512-lane slabs.
    l1i = jnp.arange(L1PAD)                                      # 112
    pp = jnp.arange(POOL_PAD)                                    # 32
    rr = jnp.arange(POOL)                                        # 3
    l2i = POOL * pp[None, :] + rr[:, None]                       # (3, 32)
    k2 = l1i[:, None, None] - l2i[None, :, :]                    # (112, 3, 32)
    v2 = ((k2 >= 0) & (k2 < KW)
          & (l1i[:, None, None] < L1)
          & (pp[None, None, :] < LP)).astype(f32)
    t2 = w2[:, :, jnp.clip(k2, 0, KW - 1)] * v2[None, None]      # (16, 8, 112, 3, 32)
    w2d = t2.transpose(2, 1, 3, 0, 4).reshape(N1P, N2P)          # (896, 1536)

    # fc1 in the pooled (o2, p) layout (p padded 31 -> 32 with zero rows).
    fw1_r = jnp.transpose(fw1.reshape(H1, C2, LP), (1, 2, 0))    # (16, 31, 128)
    wp1 = jnp.pad(fw1_r, ((0, 0), (0, POOL_PAD - LP), (0, 0))).reshape(FCK, H1)

    b1 = jnp.tile(params["conv1_b"].astype(f32), L1PAD).reshape(1, N1P)
    b2 = jnp.broadcast_to(params["conv2_b"].astype(f32)[None, :, None],
                          (POOL, C2, POOL_PAD)).reshape(1, N2P)

    return {
        "embedding": params["embedding"].astype(compute_dtype),
        "w1b": w1b.astype(compute_dtype),
        "w2d": w2d.astype(compute_dtype),
        "wp1": wp1.astype(compute_dtype),
        "wf2": params["fc2_w"].astype(f32).T.astype(compute_dtype),  # (128, 32)
        "wf3": params["fc3_w"].astype(f32).T.astype(compute_dtype),  # (32, 4)
        "b1": b1,
        "b2": b2,
        "bp1": params["fc1_b"].astype(f32).reshape(1, H1),
        "bf2": params["fc2_b"].astype(f32).reshape(1, H2),
        "bf3": params["fc3_b"].astype(f32).reshape(1, NOUT),
    }


def _round_up(x, m):
    return (x + m - 1) // m * m


def _vmem_limit_bytes():
    """~48 MiB on v7x (64 MiB physical), ~96 MiB on v5e/v6e (128 MiB physical)."""
    try:
        cap = pltpu.get_tpu_info().vmem_capacity_bytes
        return max(32 * 1024 * 1024, min(int(cap) * 3 // 4, 100 * 1024 * 1024))
    except Exception:
        return 48 * 1024 * 1024


def _const_spec(shape):
    """Constant-index block; single-buffered (no DMA to hide across steps)."""
    try:
        return pl.BlockSpec(shape, lambda i: (0, 0), pipeline_mode=pl.Buffered(1))
    except Exception:
        return pl.BlockSpec(shape, lambda i: (0, 0))


def experimental_network_forward(tokens, folded, *, batch_tile=256):
    """tokens: (B, S) int32 token ids, S <= 91. Returns (B, 4) float32."""
    B, S = tokens.shape
    assert S <= SEQ_CH, f"sentence length {S} > {SEQ_CH}"
    if S != SEQ_CH:
        # PyTorch pads the token-id tensor with 0 BEFORE the embedding lookup.
        tokens = jnp.pad(tokens, ((0, 0), (0, SEQ_CH - S)))

    # Embedding lookup (glue), d-major layout, lane = d*96 + c, zero padded.
    xe = jnp.take(folded["embedding"], tokens, axis=0)           # (B, 91, 100)
    xt = jnp.transpose(xe, (0, 2, 1))                            # (B, 100, 91)
    xt = jnp.pad(xt, ((0, 0), (0, DPAD - EMBED_DIM), (0, CPAD - SEQ_CH)))
    x = xt.reshape(B, XLANES)                                    # (B, 11136)

    # Batch tiling: TB rows per grid step (multiple of 16 for bf16 sublane pack).
    tb = max(16, min(_round_up(batch_tile, 16), _round_up(B, 16)))
    b_pad = _round_up(B, tb)
    if b_pad != B:
        x = jnp.pad(x, ((0, b_pad - B), (0, 0)))
    grid = (b_pad // tb,)

    out = pl.pallas_call(
        _net_kernel,
        out_shape=jax.ShapeDtypeStruct((b_pad, NOUT), jnp.float32),
        grid=grid,
        in_specs=[
            pl.BlockSpec((tb, XLANES), lambda i: (i, 0)),        # x (batched)
            _const_spec((G_K, LG * C1)),                         # w1b (conv1 Toeplitz tile)
            _const_spec((N1P, N2P)),                             # w2d (conv2 folded, pool-ordered)
            _const_spec((FCK, H1)),                              # wp1 (pool-select + fc1)
            _const_spec((H1, H2)),                               # wf2
            _const_spec((H2, NOUT)),                             # wf3
            _const_spec((1, N1P)),                               # b1
            _const_spec((1, N2P)),                               # b2
            _const_spec((1, H1)),                                # bp1
            _const_spec((1, H2)),                                # bf2
            _const_spec((1, NOUT)),                              # bf3
        ],
        out_specs=pl.BlockSpec((tb, NOUT), lambda i: (i, 0)),
        compiler_params=pltpu.CompilerParams(
            dimension_semantics=("parallel",),
            vmem_limit_bytes=_vmem_limit_bytes()),
    )(x, folded["w1b"], folded["w2d"], folded["wp1"], folded["wf2"],
      folded["wf3"], folded["b1"], folded["b2"], folded["bp1"],
      folded["bf2"], folded["bf3"])

    return out[:B]


# ----- pure-JAX reference (eval mode) for correctness checking -----
def reference_forward(params, tokens):
    hp = jax.lax.Precision.HIGHEST
    B, S = tokens.shape
    if S != SEQ_CH:
        tokens = jnp.pad(tokens, ((0, 0), (0, SEQ_CH - S)))
    x = jnp.take(params["embedding"], tokens, axis=0)            # (B, 91, 100)

    def conv1d(h, w, b):
        K = w.shape[-1]
        L = h.shape[-1]
        out = sum(jnp.einsum("bcl,oc->bol", h[:, :, k:L - K + 1 + k],
                             w[:, :, k], precision=hp) for k in range(K))
        return out + b[None, :, None]

    h1 = jax.nn.relu(conv1d(x, params["conv1_w"], params["conv1_b"]))
    h2 = jax.nn.relu(conv1d(h1, params["conv2_w"], params["conv2_b"]))
    Bc, C, L = h2.shape
    P = L // POOL
    m = h2[:, :, :P * POOL].reshape(Bc, C, P, POOL).max(-1)
    f = m.reshape(Bc, C * P)
    z1 = jax.nn.relu(jnp.dot(f, params["fc1_w"].T, precision=hp) + params["fc1_b"])
    z2 = jax.nn.relu(jnp.dot(z1, params["fc2_w"].T, precision=hp) + params["fc2_b"])
    return jnp.dot(z2, params["fc3_w"].T, precision=hp) + params["fc3_b"]


def init_params(key, vocab_size):
    ks = jax.random.split(key, 11)

    def u(k, shape, scale):
        return jax.random.uniform(k, shape, jnp.float32, -1.0, 1.0) * scale

    return {
        "embedding": u(ks[0], (vocab_size, EMBED_DIM), 1.0),
        "conv1_w": u(ks[1], (C1, SEQ_CH, KW), 0.5),
        "conv1_b": u(ks[2], (C1,), 0.5),
        "conv2_w": u(ks[3], (C2, C1, KW), 0.5),
        "conv2_b": u(ks[4], (C2,), 0.5),
        "fc1_w":   u(ks[5], (H1, FLAT), 0.5),
        "fc1_b":   u(ks[6], (H1,), 0.5),
        "fc2_w":   u(ks[7], (H2, H1), 0.5),
        "fc2_b":   u(ks[8], (H2,), 0.5),
        "fc3_w":   u(ks[9], (NOUT, H2), 0.5),
        "fc3_b":   u(ks[10], (NOUT,), 0.5),
    }


if __name__ == "__main__":
    key = jax.random.PRNGKey(0)
    pkey, tkey = jax.random.split(key)

    vocab_size = 50
    B, S = 2, 8                       # short sentence -> wrapper pads token ids to 91
    params = init_params(pkey, vocab_size)
    tokens = jax.random.randint(tkey, (B, S), 0, vocab_size, dtype=jnp.int32)

    fwd = jax.jit(experimental_network_forward)
    ref = reference_forward(params, tokens)

    # fp32 folded weights: tight-ish check against the pure-JAX reference.
    out32 = jax.block_until_ready(fwd(tokens, fold_params(params, jnp.float32)))
    assert out32.shape == (B, NOUT) and bool(jnp.all(jnp.isfinite(out32)))
    assert bool(jnp.allclose(out32, ref, rtol=2e-2, atol=2e-1))

    # bf16 folded weights (production default): loose check + finiteness.
    out = jax.block_until_ready(fwd(tokens, fold_params(params)))
    assert out.shape == (B, NOUT) and out.dtype == jnp.float32
    assert bool(jnp.all(jnp.isfinite(out)))
    assert bool(jnp.allclose(out, ref, rtol=1e-1, atol=2.0))

    print("KERNEL_OK")
</pallas_src>

<mosaic_0001>
module attributes {stable_mosaic.version = 11 : i64} {
  func.func @_net_kernel(%arg0: i32, %arg1: memref<16x11136xf32, #tpu.memory_space<vmem>>, %arg2: memref<1920x128xf32, #tpu.memory_space<vmem>>, %arg3: memref<896x1536xf32, #tpu.memory_space<vmem>>, %arg4: memref<512x128xf32, #tpu.memory_space<vmem>>, %arg5: memref<128x32xf32, #tpu.memory_space<vmem>>, %arg6: memref<32x4xf32, #tpu.memory_space<vmem>>, %arg7: memref<1x896xf32, #tpu.memory_space<vmem>>, %arg8: memref<1x1536xf32, #tpu.memory_space<vmem>>, %arg9: memref<1x128xf32, #tpu.memory_space<vmem>>, %arg10: memref<1x32xf32, #tpu.memory_space<vmem>>, %arg11: memref<1x4xf32, #tpu.memory_space<vmem>>, %arg12: memref<16x4xf32, #tpu.memory_space<vmem>>) attributes {dimension_semantics = [#tpu.dimension_semantics<parallel>], iteration_bounds = array<i64: 1>, scalar_prefetch = 0 : i64, scratch_operands = 0 : i64, tpu.core_type = #tpu.core_type<tc>, window_params = [{transform_indices = @transform_0, window_bounds = array<i64: 16, 11136>}, {pipeline_mode = #tpu.pipeline_mode<synchronous>, transform_indices = @transform_1, window_bounds = array<i64: 1920, 128>}, {pipeline_mode = #tpu.pipeline_mode<synchronous>, transform_indices = @transform_2, window_bounds = array<i64: 896, 1536>}, {pipeline_mode = #tpu.pipeline_mode<synchronous>, transform_indices = @transform_3, window_bounds = array<i64: 512, 128>}, {pipeline_mode = #tpu.pipeline_mode<synchronous>, transform_indices = @transform_4, window_bounds = array<i64: 128, 32>}, {pipeline_mode = #tpu.pipeline_mode<synchronous>, transform_indices = @transform_5, window_bounds = array<i64: 32, 4>}, {pipeline_mode = #tpu.pipeline_mode<synchronous>, transform_indices = @transform_6, window_bounds = array<i64: 1, 896>}, {pipeline_mode = #tpu.pipeline_mode<synchronous>, transform_indices = @transform_7, window_bounds = array<i64: 1, 1536>}, {pipeline_mode = #tpu.pipeline_mode<synchronous>, transform_indices = @transform_8, window_bounds = array<i64: 1, 128>}, {pipeline_mode = #tpu.pipeline_mode<synchronous>, transform_indices = @transform_9, window_bounds = array<i64: 1, 32>}, {pipeline_mode = #tpu.pipeline_mode<synchronous>, transform_indices = @transform_10, window_bounds = array<i64: 1, 4>}, {transform_indices = @transform_11, window_bounds = array<i64: 16, 4>}]} {
    %c0 = arith.constant 0 : index
    %c0_0 = arith.constant 0 : index
    %0 = vector.load %arg2[%c0, %c0_0] : memref<1920x128xf32, #tpu.memory_space<vmem>>, vector<1920x128xf32>
    %c0_1 = arith.constant 0 : index
    %c0_2 = arith.constant 0 : index
    %1 = vector.load %arg1[%c0_1, %c0_2] : memref<16x11136xf32, #tpu.memory_space<vmem>>, vector<16x1920xf32>
    %cst = arith.constant dense<0.000000e+00> : vector<16x128xf32>
    %2 = tpu.matmul %1, %0, %cst {dimension_numbers = #tpu.dot_dimension_numbers<[1], [0], [0], [1], [0, 0, 1, 1], [], []>} : vector<16x1920xf32>, vector<1920x128xf32>, vector<16x128xf32> -> vector<16x128xf32>
    %c0_3 = arith.constant 0 : index
    %c1536 = arith.constant 1536 : index
    %3 = vector.load %arg1[%c0_3, %c1536] : memref<16x11136xf32, #tpu.memory_space<vmem>>, vector<16x1920xf32>
    %cst_4 = arith.constant dense<0.000000e+00> : vector<16x128xf32>
    %4 = tpu.matmul %3, %0, %cst_4 {dimension_numbers = #tpu.dot_dimension_numbers<[1], [0], [0], [1], [0, 0, 1, 1], [], []>} : vector<16x1920xf32>, vector<1920x128xf32>, vector<16x128xf32> -> vector<16x128xf32>
    %c0_5 = arith.constant 0 : index
    %c3072 = arith.constant 3072 : index
    %5 = vector.load %arg1[%c0_5, %c3072] : memref<16x11136xf32, #tpu.memory_space<vmem>>, vector<16x1920xf32>
    %cst_6 = arith.constant dense<0.000000e+00> : vector<16x128xf32>
    %6 = tpu.matmul %5, %0, %cst_6 {dimension_numbers = #tpu.dot_dimension_numbers<[1], [0], [0], [1], [0, 0, 1, 1], [], []>} : vector<16x1920xf32>, vector<1920x128xf32>, vector<16x128xf32> -> vector<16x128xf32>
    %c0_7 = arith.constant 0 : index
    %c4608 = arith.constant 4608 : index
    %7 = vector.load %arg1[%c0_7, %c4608] : memref<16x11136xf32, #tpu.memory_space<vmem>>, vector<16x1920xf32>
    %cst_8 = arith.constant dense<0.000000e+00> : vector<16x128xf32>
    %8 = tpu.matmul %7, %0, %cst_8 {dimension_numbers = #tpu.dot_dimension_numbers<[1], [0], [0], [1], [0, 0, 1, 1], [], []>} : vector<16x1920xf32>, vector<1920x128xf32>, vector<16x128xf32> -> vector<16x128xf32>
    %c0_9 = arith.constant 0 : index
    %c6144 = arith.constant 6144 : index
    %9 = vector.load %arg1[%c0_9, %c6144] : memref<16x11136xf32, #tpu.memory_space<vmem>>, vector<16x1920xf32>
    %cst_10 = arith.constant dense<0.000000e+00> : vector<16x128xf32>
    %10 = tpu.matmul %9, %0, %cst_10 {dimension_numbers = #tpu.dot_dimension_numbers<[1], [0], [0], [1], [0, 0, 1, 1], [], []>} : vector<16x1920xf32>, vector<1920x128xf32>, vector<16x128xf32> -> vector<16x128xf32>
    %c0_11 = arith.constant 0 : index
    %c7680 = arith.constant 7680 : index
    %11 = vector.load %arg1[%c0_11, %c7680] : memref<16x11136xf32, #tpu.memory_space<vmem>>, vector<16x1920xf32>
    %cst_12 = arith.constant dense<0.000000e+00> : vector<16x128xf32>
    %12 = tpu.matmul %11, %0, %cst_12 {dimension_numbers = #tpu.dot_dimension_numbers<[1], [0], [0], [1], [0, 0, 1, 1], [], []>} : vector<16x1920xf32>, vector<1920x128xf32>, vector<16x128xf32> -> vector<16x128xf32>
    %c0_13 = arith.constant 0 : index
    %c9216 = arith.constant 9216 : index
    %13 = vector.load %arg1[%c0_13, %c9216] : memref<16x11136xf32, #tpu.memory_space<vmem>>, vector<16x1920xf32>
    %cst_14 = arith.constant dense<0.000000e+00> : vector<16x128xf32>
    %14 = tpu.matmul %13, %0, %cst_14 {dimension_numbers = #tpu.dot_dimension_numbers<[1], [0], [0], [1], [0, 0, 1, 1], [], []>} : vector<16x1920xf32>, vector<1920x128xf32>, vector<16x128xf32> -> vector<16x128xf32>
    %15 = tpu.concatenate %2, %4, %6, %8, %10, %12, %14 in 1 : vector<16x128xf32>, vector<16x128xf32>, vector<16x128xf32>, vector<16x128xf32>, vector<16x128xf32>, vector<16x128xf32>, vector<16x128xf32> -> vector<16x896xf32>
    %c0_15 = arith.constant 0 : index
    %c0_16 = arith.constant 0 : index
    %16 = vector.load %arg7[%c0_15, %c0_16] : memref<1x896xf32, #tpu.memory_space<vmem>>, vector<1x896xf32>
    %17 = vector.broadcast %16 : vector<1x896xf32> to vector<16x896xf32>
    %18 = arith.addf %15, %17 : vector<16x896xf32>
    %cst_17 = arith.constant 0.000000e+00 : f32
    %19 = vector.broadcast %cst_17 : f32 to vector<16x896xf32>
    %20 = arith.maximumf %18, %19 : vector<16x896xf32>
    %c0_18 = arith.constant 0 : index
    %c0_19 = arith.constant 0 : index
    %21 = vector.load %arg3[%c0_18, %c0_19] : memref<896x1536xf32, #tpu.memory_space<vmem>>, vector<896x1536xf32>
    %cst_20 = arith.constant dense<0.000000e+00> : vector<16x1536xf32>
    %22 = tpu.matmul %20, %21, %cst_20 {dimension_numbers = #tpu.dot_dimension_numbers<[1], [0], [0], [1], [0, 0, 1, 1], [], []>} : vector<16x896xf32>, vector<896x1536xf32>, vector<16x1536xf32> -> vector<16x1536xf32>
    %c0_21 = arith.constant 0 : index
    %c0_22 = arith.constant 0 : index
    %23 = vector.load %arg8[%c0_21, %c0_22] : memref<1x1536xf32, #tpu.memory_space<vmem>>, vector<1x1536xf32>
    %24 = vector.broadcast %23 : vector<1x1536xf32> to vector<16x1536xf32>
    %25 = arith.addf %22, %24 : vector<16x1536xf32>
    %cst_23 = arith.constant 0.000000e+00 : f32
    %26 = vector.broadcast %cst_23 : f32 to vector<16x1536xf32>
    %27 = arith.maximumf %25, %26 : vector<16x1536xf32>
    %28 = vector.extract_strided_slice %27 {offsets = [0, 0], sizes = [16, 512], strides = [1, 1]} : vector<16x1536xf32> to vector<16x512xf32>
    %29 = vector.extract_strided_slice %27 {offsets = [0, 512], sizes = [16, 512], strides = [1, 1]} : vector<16x1536xf32> to vector<16x512xf32>
    %30 = arith.maximumf %28, %29 : vector<16x512xf32>
    %31 = vector.extract_strided_slice %27 {offsets = [0, 1024], sizes = [16, 512], strides = [1, 1]} : vector<16x1536xf32> to vector<16x512xf32>
    %32 = arith.maximumf %30, %31 : vector<16x512xf32>
    %c0_24 = arith.constant 0 : index
    %c0_25 = arith.constant 0 : index
    %33 = vector.load %arg4[%c0_24, %c0_25] : memref<512x128xf32, #tpu.memory_space<vmem>>, vector<512x128xf32>
    %cst_26 = arith.constant dense<0.000000e+00> : vector<16x128xf32>
    %34 = tpu.matmul %32, %33, %cst_26 {dimension_numbers = #tpu.dot_dimension_numbers<[1], [0], [0], [1], [0, 0, 1, 1], [], []>} : vector<16x512xf32>, vector<512x128xf32>, vector<16x128xf32> -> vector<16x128xf32>
    %c0_27 = arith.constant 0 : index
    %c0_28 = arith.constant 0 : index
    %35 = vector.load %arg9[%c0_27, %c0_28] : memref<1x128xf32, #tpu.memory_space<vmem>>, vector<1x128xf32>
    %36 = vector.broadcast %35 : vector<1x128xf32> to vector<16x128xf32>
    %37 = arith.addf %34, %36 : vector<16x128xf32>
    %cst_29 = arith.constant 0.000000e+00 : f32
    %38 = vector.broadcast %cst_29 : f32 to vector<16x128xf32>
    %39 = arith.maximumf %37, %38 : vector<16x128xf32>
    %c0_30 = arith.constant 0 : index
    %c0_31 = arith.constant 0 : index
    %40 = vector.load %arg5[%c0_30, %c0_31] : memref<128x32xf32, #tpu.memory_space<vmem>>, vector<128x32xf32>
    %cst_32 = arith.constant dense<0.000000e+00> : vector<16x32xf32>
    %41 = tpu.matmul %39, %40, %cst_32 {dimension_numbers = #tpu.dot_dimension_numbers<[1], [0], [0], [1], [0, 0, 1, 1], [], []>} : vector<16x128xf32>, vector<128x32xf32>, vector<16x32xf32> -> vector<16x32xf32>
    %c0_33 = arith.constant 0 : index
    %c0_34 = arith.constant 0 : index
    %42 = vector.load %arg10[%c0_33, %c0_34] : memref<1x32xf32, #tpu.memory_space<vmem>>, vector<1x32xf32>
    %43 = vector.broadcast %42 : vector<1x32xf32> to vector<16x32xf32>
    %44 = arith.addf %41, %43 : vector<16x32xf32>
    %cst_35 = arith.constant 0.000000e+00 : f32
    %45 = vector.broadcast %cst_35 : f32 to vector<16x32xf32>
    %46 = arith.maximumf %44, %45 : vector<16x32xf32>
    %c0_36 = arith.constant 0 : index
    %c0_37 = arith.constant 0 : index
    %47 = vector.load %arg6[%c0_36, %c0_37] : memref<32x4xf32, #tpu.memory_space<vmem>>, vector<32x4xf32>
    %cst_38 = arith.constant dense<0.000000e+00> : vector<16x4xf32>
    %48 = tpu.matmul %46, %47, %cst_38 {dimension_numbers = #tpu.dot_dimension_numbers<[1], [0], [0], [1], [0, 0, 1, 1], [], []>} : vector<16x32xf32>, vector<32x4xf32>, vector<16x4xf32> -> vector<16x4xf32>
    %c0_39 = arith.constant 0 : index
    %c0_40 = arith.constant 0 : index
    %49 = vector.load %arg11[%c0_39, %c0_40] : memref<1x4xf32, #tpu.memory_space<vmem>>, vector<1x4xf32>
    %50 = vector.broadcast %49 : vector<1x4xf32> to vector<16x4xf32>
    %51 = arith.addf %48, %50 : vector<16x4xf32>
    %c0_41 = arith.constant 0 : index
    %c0_42 = arith.constant 0 : index
    %52 = vector.load %arg12[%c0_41, %c0_42] : memref<16x4xf32, #tpu.memory_space<vmem>>, vector<16x4xf32>
    tpu.vector_store %arg12[%c0_41, %c0_42], %51 {strides = array<i32>} : memref<16x4xf32, #tpu.memory_space<vmem>>, vector<16x4xf32>,
    return
  }
  func.func @transform_0(%arg0: i32) -> (i32, i32) {
    %c0_i32 = arith.constant 0 : i32
    %c0_i32_0 = arith.constant 0 : i32
    return %arg0, %c0_i32 : i32, i32
  }
  func.func @transform_1(%arg0: i32) -> (i32, i32) {
    %c0_i32 = arith.constant 0 : i32
    %c0_i32_0 = arith.constant 0 : i32
    %c0_i32_1 = arith.constant 0 : i32
    return %c0_i32, %c0_i32_0 : i32, i32
  }
  func.func @transform_2(%arg0: i32) -> (i32, i32) {
    %c0_i32 = arith.constant 0 : i32
    %c0_i32_0 = arith.constant 0 : i32
    %c0_i32_1 = arith.constant 0 : i32
    return %c0_i32, %c0_i32_0 : i32, i32
  }
  func.func @transform_3(%arg0: i32) -> (i32, i32) {
    %c0_i32 = arith.constant 0 : i32
    %c0_i32_0 = arith.constant 0 : i32
    %c0_i32_1 = arith.constant 0 : i32
    return %c0_i32, %c0_i32_0 : i32, i32
  }
  func.func @transform_4(%arg0: i32) -> (i32, i32) {
    %c0_i32 = arith.constant 0 : i32
    %c0_i32_0 = arith.constant 0 : i32
    %c0_i32_1 = arith.constant 0 : i32
    return %c0_i32, %c0_i32_0 : i32, i32
  }
  func.func @transform_5(%arg0: i32) -> (i32, i32) {
    %c0_i32 = arith.constant 0 : i32
    %c0_i32_0 = arith.constant 0 : i32
    %c0_i32_1 = arith.constant 0 : i32
    return %c0_i32, %c0_i32_0 : i32, i32
  }
  func.func @transform_6(%arg0: i32) -> (i32, i32) {
    %c0_i32 = arith.constant 0 : i32
    %c0_i32_0 = arith.constant 0 : i32
    %c0_i32_1 = arith.constant 0 : i32
    return %c0_i32, %c0_i32_0 : i32, i32
  }
  func.func @transform_7(%arg0: i32) -> (i32, i32) {
    %c0_i32 = arith.constant 0 : i32
    %c0_i32_0 = arith.constant 0 : i32
    %c0_i32_1 = arith.constant 0 : i32
    return %c0_i32, %c0_i32_0 : i32, i32
  }
  func.func @transform_8(%arg0: i32) -> (i32, i32) {
    %c0_i32 = arith.constant 0 : i32
    %c0_i32_0 = arith.constant 0 : i32
    %c0_i32_1 = arith.constant 0 : i32
    return %c0_i32, %c0_i32_0 : i32, i32
  }
  func.func @transform_9(%arg0: i32) -> (i32, i32) {
    %c0_i32 = arith.constant 0 : i32
    %c0_i32_0 = arith.constant 0 : i32
    %c0_i32_1 = arith.constant 0 : i32
    return %c0_i32, %c0_i32_0 : i32, i32
  }
  func.func @transform_10(%arg0: i32) -> (i32, i32) {
    %c0_i32 = arith.constant 0 : i32
    %c0_i32_0 = arith.constant 0 : i32
    %c0_i32_1 = arith.constant 0 : i32
    return %c0_i32, %c0_i32_0 : i32, i32
  }
  func.func @transform_11(%arg0: i32) -> (i32, i32) {
    %c0_i32 = arith.constant 0 : i32
    %c0_i32_0 = arith.constant 0 : i32
    return %arg0, %c0_i32 : i32, i32
  }
}

</mosaic_0001>

<llo_original>
// kernel: experimental_network_forward.1
$region0: #{experimental_network_forward.1}
  #allocation0 [shape = 'u32[]', space=smem, size = 0x4, offset = 0x4, fixed_abs, tag = 'smem constant byte address 0x4 - core index']
  #allocation1 [shape = 'u32[144,128]{1,0:T(1,128)}', space=vmem, size = 0x12000, scoped, tag = 'internal scratch']
  %s0 = inlined_call_operand.vmem [shape: f32[16,11136], index: 0, kind: input, shape index: {}]
  %s1 = inlined_call_operand.hbm [shape: f32[1920,128], index: 1, kind: input, shape index: {}]
  %s2 = inlined_call_operand.hbm [shape: f32[896,1536], index: 2, kind: input, shape index: {}]
  %s3 = inlined_call_operand.hbm [shape: f32[512,128], index: 3, kind: input, shape index: {}]
  %s4 = inlined_call_operand.vmem [shape: f32[128,32], index: 4, kind: input, shape index: {}]
  %s5 = inlined_call_operand.vmem [shape: f32[32,4], index: 5, kind: input, shape index: {}]
  %s6 = inlined_call_operand.hbm [shape: f32[1,896], index: 6, kind: input, shape index: {}]
  %s7 = inlined_call_operand.hbm [shape: f32[1,1536], index: 7, kind: input, shape index: {}]
  %s8 = inlined_call_operand.hbm [shape: f32[1,128], index: 8, kind: input, shape index: {}]
  %s9 = inlined_call_operand.hbm [shape: f32[1,32], index: 9, kind: input, shape index: {}]
  %s10 = inlined_call_operand.hbm [shape: f32[1,4], index: 10, kind: input, shape index: {}]
  %s11 = inlined_call_operand.vmem [shape: f32[16,4], index: 11, kind: output, shape index: {}]
  %s12 = sld [smem:[#allocation0]]
  $region86: #{experimental_network_forward.1} parent=0
    _
  %s14 = ssub.s32 1, %s12
  %s15 = scalar_select 0, %s14, %s12
  $region1: #{experimental_network_forward.1} parent=0
    #allocation2 [shape = 'u8[983040]{0}', space=vmem, size = 0xf0000, scoped, tag = 'input window, operand 1, single buffered']
    #allocation3 [shape = 's32[1]{0}', space=sflag, size = 0x4, scoped, tag = 'scoped memory for experimental_network_forward.1']
    #allocation4 [shape = 'u8[5505024]{0}', space=vmem, size = 0x540000, scoped, tag = 'input window, operand 2, single buffered']
    #allocation5 [shape = 's32[1]{0}', space=sflag, size = 0x4, scoped, tag = 'scoped memory for experimental_network_forward.1']
    #allocation6 [shape = 'u8[262144]{0}', space=vmem, size = 0x40000, scoped, tag = 'input window, operand 3, single buffered']
    #allocation7 [shape = 'u8[3584]{0}', space=vmem, size = 0x1000, scoped, tag = 'input window, operand 6, single buffered']
    #allocation8 [shape = 's32[1]{0}', space=sflag, size = 0x4, scoped, tag = 'scoped memory for experimental_network_forward.1']
    #allocation9 [shape = 'u8[6144]{0}', space=vmem, size = 0x1800, scoped, tag = 'input window, operand 7, single buffered']
    #allocation10 [shape = 'u8[512]{0}', space=vmem, size = 0x400, scoped, tag = 'input window, operand 8, single buffered']
    #allocation11 [shape = 's32[1]{0}', space=sflag, size = 0x4, scoped, tag = 'scoped memory for experimental_network_forward.1']
    #allocation12 [shape = 'u8[512]{0}', space=vmem, size = 0x400, scoped, tag = 'input window, operand 9, single buffered']
    #allocation13 [shape = 'u8[512]{0}', space=vmem, size = 0x400, scoped, tag = 'input window, operand 10, single buffered']
    #allocation14 [shape = 's32[1]{0}', space=sflag, size = 0x4, scoped, tag = 'scoped memory for experimental_network_forward.1']
    %16 = vsyncpa [#allocation3], 0
    %17 = vsyncpa [#allocation5], 0
    %18 = vsyncpa [#allocation8], 0
    %19 = vsyncpa [#allocation11], 0
    %20 = vsyncpa [#allocation14], 0
    // Predicated region
    $region2: #{experimental_network_forward.1} parent=1 // pred_check
      _
    $region3: #{experimental_network_forward.1} parent=1 // pred_check_branch
      %22 = sbr.rel (0) target = $region5
    $region4: #{experimental_network_forward.1} parent=1 // pred_region
      _
    $region5: #{experimental_network_forward.1} parent=1 // pred_fallthru
      _
    // Predicated region
    $region6: #{experimental_network_forward.1} parent=1 // pred_check
      _
    $region7: #{experimental_network_forward.1} parent=1 // pred_check_branch
      %24 = sbr.rel (0) target = $region9
    $region8: #{experimental_network_forward.1} parent=1 // pred_region
      %s26 = ssub.s32 30720, 30720
      %27 = vsyncadd [#allocation3], %s26
      %s28 = sshll.u32 [#allocation2], 4
      %s29 = int_to_ptr.vmem [resolvable:$true] %s28
      %34 = dma.hbm_to_vmem [thread:$0]  %s1, 30720, %s29, [#allocation3], 128, 128, 8
    $region9: #{experimental_network_forward.1} parent=1 // pred_fallthru
      _
    // Predicated region
    $region10: #{experimental_network_forward.1} parent=1 // pred_check
      _
    $region11: #{experimental_network_forward.1} parent=1 // pred_check_branch
      %36 = sbr.rel (0) target = $region13
    $region12: #{experimental_network_forward.1} parent=1 // pred_region
      %s38 = ssub.s32 172032, 172032
      %39 = vsyncadd [#allocation5], %s38
      %s40 = sshll.u32 [#allocation4], 4
      %s41 = int_to_ptr.vmem [resolvable:$true] %s40
      %46 = dma.hbm_to_vmem [thread:$0]  %s2, 172032, %s41, [#allocation5], 1536, 1536, 96
    $region13: #{experimental_network_forward.1} parent=1 // pred_fallthru
      _
    // Predicated region
    $region14: #{experimental_network_forward.1} parent=1 // pred_check
      _
    $region15: #{experimental_network_forward.1} parent=1 // pred_check_branch
      %48 = sbr.rel (0) target = $region17
    $region16: #{experimental_network_forward.1} parent=1 // pred_region
      %s50 = ssub.s32 8192, 8192
      %51 = vsyncadd [#allocation5], %s50
      %s52 = sshll.u32 [#allocation6], 4
      %s53 = int_to_ptr.vmem [resolvable:$true] %s52
      %58 = dma.hbm_to_vmem [thread:$0]  %s3, 8192, %s53, [#allocation5], 128, 128, 8
    $region17: #{experimental_network_forward.1} parent=1 // pred_fallthru
      _
    // Predicated region
    $region18: #{experimental_network_forward.1} parent=1 // pred_check
      _
    $region19: #{experimental_network_forward.1} parent=1 // pred_check_branch
      %60 = sbr.rel (0) target = $region21
    $region20: #{experimental_network_forward.1} parent=1 // pred_region
      _
    $region21: #{experimental_network_forward.1} parent=1 // pred_fallthru
      _
    // Predicated region
    $region22: #{experimental_network_forward.1} parent=1 // pred_check
      _
    $region23: #{experimental_network_forward.1} parent=1 // pred_check_branch
      %62 = sbr.rel (0) target = $region25
    $region24: #{experimental_network_forward.1} parent=1 // pred_region
      _
    $region25: #{experimental_network_forward.1} parent=1 // pred_fallthru
      _
    // Predicated region
    $region26: #{experimental_network_forward.1} parent=1 // pred_check
      _
    $region27: #{experimental_network_forward.1} parent=1 // pred_check_branch
      %64 = sbr.rel (0) target = $region29
    $region28: #{experimental_network_forward.1} parent=1 // pred_region
      %s66 = ssub.s32 112, 112
      %67 = vsyncadd [#allocation8], %s66
      %s69 = sshll.u32 [#allocation7], 4
      %s70 = int_to_ptr.vmem [resolvable:$true] %s69
      %72 = dma.hbm_to_vmem [thread:$0]  %s6, 112, %s70, [#allocation8]
    $region29: #{experimental_network_forward.1} parent=1 // pred_fallthru
      _
    // Predicated region
    $region30: #{experimental_network_forward.1} parent=1 // pred_check
      _
    $region31: #{experimental_network_forward.1} parent=1 // pred_check_branch
      %74 = sbr.rel (0) target = $region33
    $region32: #{experimental_network_forward.1} parent=1 // pred_region
      %s76 = ssub.s32 192, 192
      %77 = vsyncadd [#allocation8], %s76
      %s79 = sshll.u32 [#allocation9], 4
      %s80 = int_to_ptr.vmem [resolvable:$true] %s79
      %82 = dma.hbm_to_vmem [thread:$0]  %s7, 192, %s80, [#allocation8]
    $region33: #{experimental_network_forward.1} parent=1 // pred_fallthru
      _
    // Predicated region
    $region34: #{experimental_network_forward.1} parent=1 // pred_check
      _
    $region35: #{experimental_network_forward.1} parent=1 // pred_check_branch
      %84 = sbr.rel (0) target = $region37
    $region36: #{experimental_network_forward.1} parent=1 // pred_region
      %s86 = ssub.s32 16, 16
      %87 = vsyncadd [#allocation11], %s86
      %s89 = sshll.u32 [#allocation10], 4
      %s90 = int_to_ptr.vmem [resolvable:$true] %s89
      %92 = dma.hbm_to_vmem [thread:$0]  %s8, 16, %s90, [#allocation11]
    $region37: #{experimental_network_forward.1} parent=1 // pred_fallthru
      _
    // Predicated region
    $region38: #{experimental_network_forward.1} parent=1 // pred_check
      _
    $region39: #{experimental_network_forward.1} parent=1 // pred_check_branch
      %94 = sbr.rel (0) target = $region41
    $region40: #{experimental_network_forward.1} parent=1 // pred_region
      %s96 = ssub.s32 16, 16
      %97 = vsyncadd [#allocation11], %s96
      %s99 = sshll.u32 [#allocation12], 4
      %s100 = int_to_ptr.vmem [resolvable:$true] %s99
      %102 = dma.hbm_to_vmem [thread:$0]  %s9, 16, %s100, [#allocation11]
    $region41: #{experimental_network_forward.1} parent=1 // pred_fallthru
      _
    // Predicated region
    $region42: #{experimental_network_forward.1} parent=1 // pred_check
      _
    $region43: #{experimental_network_forward.1} parent=1 // pred_check_branch
      %104 = sbr.rel (0) target = $region45
    $region44: #{experimental_network_forward.1} parent=1 // pred_region
      %s106 = ssub.s32 16, 16
      %107 = vsyncadd [#allocation14], %s106
      %s109 = sshll.u32 [#allocation13], 4
      %s110 = int_to_ptr.vmem [resolvable:$true] %s109
      %112 = dma.hbm_to_vmem [thread:$0]  %s10, 16, %s110, [#allocation14]
    $region45: #{experimental_network_forward.1} parent=1 // pred_fallthru
      _
    // Predicated region
    $region46: #{experimental_network_forward.1} parent=1 // pred_check
      _
    $region47: #{experimental_network_forward.1} parent=1 // pred_check_branch
      %114 = sbr.rel (0) target = $region49
    $region48: #{experimental_network_forward.1} parent=1 // pred_region
      %115 = dma.done [#allocation3], 30720
    $region49: #{experimental_network_forward.1} parent=1 // pred_fallthru
      _
    // Predicated region
    $region50: #{experimental_network_forward.1} parent=1 // pred_check
      _
    $region51: #{experimental_network_forward.1} parent=1 // pred_check_branch
      %117 = sbr.rel (0) target = $region53
    $region52: #{experimental_network_forward.1} parent=1 // pred_region
      %118 = dma.done [#allocation5], 172032
    $region53: #{experimental_network_forward.1} parent=1 // pred_fallthru
      _
    // Predicated region
    $region54: #{experimental_network_forward.1} parent=1 // pred_check
      _
    $region55: #{experimental_network_forward.1} parent=1 // pred_check_branch
      %120 = sbr.rel (0) target = $region57
    $region56: #{experimental_network_forward.1} parent=1 // pred_region
      %121 = dma.done [#allocation5], 8192
    $region57: #{experimental_network_forward.1} parent=1 // pred_fallthru
      _
    // Predicated region
    $region58: #{experimental_network_forward.1} parent=1 // pred_check
      _
    $region59: #{experimental_network_forward.1} parent=1 // pred_check_branch
      %123 = sbr.rel (0) target = $region61
    $region60: #{experimental_network_forward.1} parent=1 // pred_region
      %124 = dma.done [#allocation8], 112
    $region61: #{experimental_network_forward.1} parent=1 // pred_fallthru
      _
    // Predicated region
    $region62: #{experimental_network_forward.1} parent=1 // pred_check
      _
    $region63: #{experimental_network_forward.1} parent=1 // pred_check_branch
      %126 = sbr.rel (0) target = $region65
    $region64: #{experimental_network_forward.1} parent=1 // pred_region
      %127 = dma.done [#allocation8], 192
    $region65: #{experimental_network_forward.1} parent=1 // pred_fallthru
      _
    // Predicated region
    $region66: #{experimental_network_forward.1} parent=1 // pred_check
      _
    $region67: #{experimental_network_forward.1} parent=1 // pred_check_branch
      %129 = sbr.rel (0) target = $region69
    $region68: #{experimental_network_forward.1} parent=1 // pred_region
      %130 = dma.done [#allocation11], 16
    $region69: #{experimental_network_forward.1} parent=1 // pred_fallthru
      _
    // Predicated region
    $region70: #{experimental_network_forward.1} parent=1 // pred_check
      _
    $region71: #{experimental_network_forward.1} parent=1 // pred_check_branch
      %132 = sbr.rel (0) target = $region73
    $region72: #{experimental_network_forward.1} parent=1 // pred_region
      %133 = dma.done [#allocation11], 16
    $region73: #{experimental_network_forward.1} parent=1 // pred_fallthru
      _
    // Predicated region
    $region74: #{experimental_network_forward.1} parent=1 // pred_check
      _
    $region75: #{experimental_network_forward.1} parent=1 // pred_check_branch
      %135 = sbr.rel (0) target = $region77
    $region76: #{experimental_network_forward.1} parent=1 // pred_region
      %136 = dma.done [#allocation14], 16
    $region77: #{experimental_network_forward.1} parent=1 // pred_fallthru
      _
    %v137 = vld [vmem:[#allocation2] sm:$0xff]
    %v138 = vld [vmem:[#allocation2 + $0x8] sm:$0xff]
    %v139 = vld [vmem:[#allocation2 + $0x10] sm:$0xff]
    %v140 = vld [vmem:[#allocation2 + $0x18] sm:$0xff]
    %v141 = vld [vmem:[#allocation2 + $0x20] sm:$0xff]
    %v142 = vld [vmem:[#allocation2 + $0x28] sm:$0xff]
    %v143 = vld [vmem:[#allocation2 + $0x30] sm:$0xff]
    %v144 = vld [vmem:[#allocation2 + $0x38] sm:$0xff]
    %v145 = vld [vmem:[#allocation2 + $0x40] sm:$0xff]
    %v146 = vld [vmem:[#allocation2 + $0x48] sm:$0xff]
    %v147 = vld [vmem:[#allocation2 + $0x50] sm:$0xff]
    %v148 = vld [vmem:[#allocation2 + $0x58] sm:$0xff]
    %v149 = vld [vmem:[#allocation2 + $0x60] sm:$0xff]
    %v150 = vld [vmem:[#allocation2 + $0x68] sm:$0xff]
    %v151 = vld [vmem:[#allocation2 + $0x70] sm:$0xff]
    %v152 = vld [vmem:[#allocation2 + $0x78] sm:$0xff]
    %v153 = vld [vmem:[#allocation2 + $0x80] sm:$0xff]
    %v154 = vld [vmem:[#allocation2 + $0x88] sm:$0xff]
    %v155 = vld [vmem:[#allocation2 + $0x90] sm:$0xff]
    %v156 = vld [vmem:[#allocation2 + $0x98] sm:$0xff]
    %v157 = vld [vmem:[#allocation2 + $0xa0] sm:$0xff]
    %v158 = vld [vmem:[#allocation2 + $0xa8] sm:$0xff]
    %v159 = vld [vmem:[#allocation2 + $0xb0] sm:$0xff]
    %v160 = vld [vmem:[#allocation2 + $0xb8] sm:$0xff]
    %v161 = vld [vmem:[#allocation2 + $0xc0] sm:$0xff]
    %v162 = vld [vmem:[#allocation2 + $0xc8] sm:$0xff]
    %v163 = vld [vmem:[#allocation2 + $0xd0] sm:$0xff]
    %v164 = vld [vmem:[#allocation2 + $0xd8] sm:$0xff]
    %v165 = vld [vmem:[#allocation2 + $0xe0] sm:$0xff]
    %v166 = vld [vmem:[#allocation2 + $0xe8] sm:$0xff]
    %v167 = vld [vmem:[#allocation2 + $0xf0] sm:$0xff]
    %v168 = vld [vmem:[#allocation2 + $0xf8] sm:$0xff]
    %v169 = vld [vmem:[#allocation2 + $0x100] sm:$0xff]
    %v170 = vld [vmem:[#allocation2 + $0x108] sm:$0xff]
    %v171 = vld [vmem:[#allocation2 + $0x110] sm:$0xff]
    %v172 = vld [vmem:[#allocation2 + $0x118] sm:$0xff]
    %v173 = vld [vmem:[#allocation2 + $0x120] sm:$0xff]
    %v174 = vld [vmem:[#allocation2 + $0x128] sm:$0xff]
    %v175 = vld [vmem:[#allocation2 + $0x130] sm:$0xff]
    %v176 = vld [vmem:[#allocation2 + $0x138] sm:$0xff]
    %v177 = vld [vmem:[#allocation2 + $0x140] sm:$0xff]
    %v178 = vld [vmem:[#allocation2 + $0x148] sm:$0xff]
    %v179 = vld [vmem:[#allocation2 + $0x150] sm:$0xff]
    %v180 = vld [vmem:[#allocation2 + $0x158] sm:$0xff]
    %v181 = vld [vmem:[#allocation2 + $0x160] sm:$0xff]
    %v182 = vld [vmem:[#allocation2 + $0x168] sm:$0xff]
    %v183 = vld [vmem:[#allocation2 + $0x170] sm:$0xff]
    %v184 = vld [vmem:[#allocation2 + $0x178] sm:$0xff]
    %v185 = vld [vmem:[#allocation2 + $0x180] sm:$0xff]
    %v186 = vld [vmem:[#allocation2 + $0x188] sm:$0xff]
    %v187 = vld [vmem:[#allocation2 + $0x190] sm:$0xff]
    %v188 = vld [vmem:[#allocation2 + $0x198] sm:$0xff]
    %v189 = vld [vmem:[#allocation2 + $0x1a0] sm:$0xff]
    %v190 = vld [vmem:[#allocation2 + $0x1a8] sm:$0xff]
    %v191 = vld [vmem:[#allocation2 + $0x1b0] sm:$0xff]
    %v192 = vld [vmem:[#allocation2 + $0x1b8] sm:$0xff]
    %v193 = vld [vmem:[#allocation2 + $0x1c0] sm:$0xff]
    %v194 = vld [vmem:[#allocation2 + $0x1c8] sm:$0xff]
    %v195 = vld [vmem:[#allocation2 + $0x1d0] sm:$0xff]
    %v196 = vld [vmem:[#allocation2 + $0x1d8] sm:$0xff]
    %v197 = vld [vmem:[#allocation2 + $0x1e0] sm:$0xff]
    %v198 = vld [vmem:[#allocation2 + $0x1e8] sm:$0xff]
    %v199 = vld [vmem:[#allocation2 + $0x1f0] sm:$0xff]
    %v200 = vld [vmem:[#allocation2 + $0x1f8] sm:$0xff]
    %v201 = vld [vmem:[#allocation2 + $0x200] sm:$0xff]
    %v202 = vld [vmem:[#allocation2 + $0x208] sm:$0xff]
    %v203 = vld [vmem:[#allocation2 + $0x210] sm:$0xff]
    %v204 = vld [vmem:[#allocation2 + $0x218] sm:$0xff]
    %v205 = vld [vmem:[#allocation2 + $0x220] sm:$0xff]
    %v206 = vld [vmem:[#allocation2 + $0x228] sm:$0xff]
    %v207 = vld [vmem:[#allocation2 + $0x230] sm:$0xff]
    %v208 = vld [vmem:[#allocation2 + $0x238] sm:$0xff]
    %v209 = vld [vmem:[#allocation2 + $0x240] sm:$0xff]
    %v210 = vld [vmem:[#allocation2 + $0x248] sm:$0xff]
    %v211 = vld [vmem:[#allocation2 + $0x250] sm:$0xff]
    %v212 = vld [vmem:[#allocation2 + $0x258] sm:$0xff]
    %v213 = vld [vmem:[#allocation2 + $0x260] sm:$0xff]
    %v214 = vld [vmem:[#allocation2 + $0x268] sm:$0xff]
    %v215 = vld [vmem:[#allocation2 + $0x270] sm:$0xff]
    %v216 = vld [vmem:[#allocation2 + $0x278] sm:$0xff]
    %v217 = vld [vmem:[#allocation2 + $0x280] sm:$0xff]
    %v218 = vld [vmem:[#allocation2 + $0x288] sm:$0xff]
    %v219 = vld [vmem:[#allocation2 + $0x290] sm:$0xff]
    %v220 = vld [vmem:[#allocation2 + $0x298] sm:$0xff]
    %v221 = vld [vmem:[#allocation2 + $0x2a0] sm:$0xff]
    %v222 = vld [vmem:[#allocation2 + $0x2a8] sm:$0xff]
    %v223 = vld [vmem:[#allocation2 + $0x2b0] sm:$0xff]
    %v224 = vld [vmem:[#allocation2 + $0x2b8] sm:$0xff]
    %v225 = vld [vmem:[#allocation2 + $0x2c0] sm:$0xff]
    %v226 = vld [vmem:[#allocation2 + $0x2c8] sm:$0xff]
    %v227 = vld [vmem:[#allocation2 + $0x2d0] sm:$0xff]
    %v228 = vld [vmem:[#allocation2 + $0x2d8] sm:$0xff]
    %v229 = vld [vmem:[#allocation2 + $0x2e0] sm:$0xff]
    %v230 = vld [vmem:[#allocation2 + $0x2e8] sm:$0xff]
    %v231 = vld [vmem:[#allocation2 + $0x2f0] sm:$0xff]
    %v232 = vld [vmem:[#allocation2 + $0x2f8] sm:$0xff]
    %v233 = vld [vmem:[#allocation2 + $0x300] sm:$0xff]
    %v234 = vld [vmem:[#allocation2 + $0x308] sm:$0xff]
    %v235 = vld [vmem:[#allocation2 + $0x310] sm:$0xff]
    %v236 = vld [vmem:[#allocation2 + $0x318] sm:$0xff]
    %v237 = vld [vmem:[#allocation2 + $0x320] sm:$0xff]
    %v238 = vld [vmem:[#allocation2 + $0x328] sm:$0xff]
    %v239 = vld [vmem:[#allocation2 + $0x330] sm:$0xff]
    %v240 = vld [vmem:[#allocation2 + $0x338] sm:$0xff]
    %v241 = vld [vmem:[#allocation2 + $0x340] sm:$0xff]
    %v242 = vld [vmem:[#allocation2 + $0x348] sm:$0xff]
    %v243 = vld [vmem:[#allocation2 + $0x350] sm:$0xff]
    %v244 = vld [vmem:[#allocation2 + $0x358] sm:$0xff]
    %v245 = vld [vmem:[#allocation2 + $0x360] sm:$0xff]
    %v246 = vld [vmem:[#allocation2 + $0x368] sm:$0xff]
    %v247 = vld [vmem:[#allocation2 + $0x370] sm:$0xff]
    %v248 = vld [vmem:[#allocation2 + $0x378] sm:$0xff]
    %v249 = vld [vmem:[#allocation2 + $0x380] sm:$0xff]
    %v250 = vld [vmem:[#allocation2 + $0x388] sm:$0xff]
    %v251 = vld [vmem:[#allocation2 + $0x390] sm:$0xff]
    %v252 = vld [vmem:[#allocation2 + $0x398] sm:$0xff]
    %v253 = vld [vmem:[#allocation2 + $0x3a0] sm:$0xff]
    %v254 = vld [vmem:[#allocation2 + $0x3a8] sm:$0xff]
    %v255 = vld [vmem:[#allocation2 + $0x3b0] sm:$0xff]
    %v256 = vld [vmem:[#allocation2 + $0x3b8] sm:$0xff]
    %v257 = vld [vmem:[#allocation2 + $0x3c0] sm:$0xff]
    %v258 = vld [vmem:[#allocation2 + $0x3c8] sm:$0xff]
    %v259 = vld [vmem:[#allocation2 + $0x3d0] sm:$0xff]
    %v260 = vld [vmem:[#allocation2 + $0x3d8] sm:$0xff]
    %v261 = vld [vmem:[#allocation2 + $0x3e0] sm:$0xff]
    %v262 = vld [vmem:[#allocation2 + $0x3e8] sm:$0xff]
    %v263 = vld [vmem:[#allocation2 + $0x3f0] sm:$0xff]
    %v264 = vld [vmem:[#allocation2 + $0x3f8] sm:$0xff]
    %v265 = vld [vmem:[#allocation2 + $0x400] sm:$0xff]
    %v266 = vld [vmem:[#allocation2 + $0x408] sm:$0xff]
    %v267 = vld [vmem:[#allocation2 + $0x410] sm:$0xff]
    %v268 = vld [vmem:[#allocation2 + $0x418] sm:$0xff]
    %v269 = vld [vmem:[#allocation2 + $0x420] sm:$0xff]
    %v270 = vld [vmem:[#allocation2 + $0x428] sm:$0xff]
    %v271 = vld [vmem:[#allocation2 + $0x430] sm:$0xff]
    %v272 = vld [vmem:[#allocation2 + $0x438] sm:$0xff]
    %v273 = vld [vmem:[#allocation2 + $0x440] sm:$0xff]
    %v274 = vld [vmem:[#allocation2 + $0x448] sm:$0xff]
    %v275 = vld [vmem:[#allocation2 + $0x450] sm:$0xff]
    %v276 = vld [vmem:[#allocation2 + $0x458] sm:$0xff]
    %v277 = vld [vmem:[#allocation2 + $0x460] sm:$0xff]
    %v278 = vld [vmem:[#allocation2 + $0x468] sm:$0xff]
    %v279 = vld [vmem:[#allocation2 + $0x470] sm:$0xff]
    %v280 = vld [vmem:[#allocation2 + $0x478] sm:$0xff]
    %v281 = vld [vmem:[#allocation2 + $0x480] sm:$0xff]
    %v282 = vld [vmem:[#allocation2 + $0x488] sm:$0xff]
    %v283 = vld [vmem:[#allocation2 + $0x490] sm:$0xff]
    %v284 = vld [vmem:[#allocation2 + $0x498] sm:$0xff]
    %v285 = vld [vmem:[#allocation2 + $0x4a0] sm:$0xff]
    %v286 = vld [vmem:[#allocation2 + $0x4a8] sm:$0xff]
    %v287 = vld [vmem:[#allocation2 + $0x4b0] sm:$0xff]
    %v288 = vld [vmem:[#allocation2 + $0x4b8] sm:$0xff]
    %v289 = vld [vmem:[#allocation2 + $0x4c0] sm:$0xff]
    %v290 = vld [vmem:[#allocation2 + $0x4c8] sm:$0xff]
    %v291 = vld [vmem:[#allocation2 + $0x4d0] sm:$0xff]
    %v292 = vld [vmem:[#allocation2 + $0x4d8] sm:$0xff]
    %v293 = vld [vmem:[#allocation2 + $0x4e0] sm:$0xff]
    %v294 = vld [vmem:[#allocation2 + $0x4e8] sm:$0xff]
    %v295 = vld [vmem:[#allocation2 + $0x4f0] sm:$0xff]
    %v296 = vld [vmem:[#allocation2 + $0x4f8] sm:$0xff]
    %v297 = vld [vmem:[#allocation2 + $0x500] sm:$0xff]
    %v298 = vld [vmem:[#allocation2 + $0x508] sm:$0xff]
    %v299 = vld [vmem:[#allocation2 + $0x510] sm:$0xff]
    %v300 = vld [vmem:[#allocation2 + $0x518] sm:$0xff]
    %v301 = vld [vmem:[#allocation2 + $0x520] sm:$0xff]
    %v302 = vld [vmem:[#allocation2 + $0x528] sm:$0xff]
    %v303 = vld [vmem:[#allocation2 + $0x530] sm:$0xff]
    %v304 = vld [vmem:[#allocation2 + $0x538] sm:$0xff]
    %v305 = vld [vmem:[#allocation2 + $0x540] sm:$0xff]
    %v306 = vld [vmem:[#allocation2 + $0x548] sm:$0xff]
    %v307 = vld [vmem:[#allocation2 + $0x550] sm:$0xff]
    %v308 = vld [vmem:[#allocation2 + $0x558] sm:$0xff]
    %v309 = vld [vmem:[#allocation2 + $0x560] sm:$0xff]
    %v310 = vld [vmem:[#allocation2 + $0x568] sm:$0xff]
    %v311 = vld [vmem:[#allocation2 + $0x570] sm:$0xff]
    %v312 = vld [vmem:[#allocation2 + $0x578] sm:$0xff]
    %v313 = vld [vmem:[#allocation2 + $0x580] sm:$0xff]
    %v314 = vld [vmem:[#allocation2 + $0x588] sm:$0xff]
    %v315 = vld [vmem:[#allocation2 + $0x590] sm:$0xff]
    %v316 = vld [vmem:[#allocation2 + $0x598] sm:$0xff]
    %v317 = vld [vmem:[#allocation2 + $0x5a0] sm:$0xff]
    %v318 = vld [vmem:[#allocation2 + $0x5a8] sm:$0xff]
    %v319 = vld [vmem:[#allocation2 + $0x5b0] sm:$0xff]
    %v320 = vld [vmem:[#allocation2 + $0x5b8] sm:$0xff]
    %v321 = vld [vmem:[#allocation2 + $0x5c0] sm:$0xff]
    %v322 = vld [vmem:[#allocation2 + $0x5c8] sm:$0xff]
    %v323 = vld [vmem:[#allocation2 + $0x5d0] sm:$0xff]
    %v324 = vld [vmem:[#allocation2 + $0x5d8] sm:$0xff]
    %v325 = vld [vmem:[#allocation2 + $0x5e0] sm:$0xff]
    %v326 = vld [vmem:[#allocation2 + $0x5e8] sm:$0xff]
    %v327 = vld [vmem:[#allocation2 + $0x5f0] sm:$0xff]
    %v328 = vld [vmem:[#allocation2 + $0x5f8] sm:$0xff]
    %v329 = vld [vmem:[#allocation2 + $0x600] sm:$0xff]
    %v330 = vld [vmem:[#allocation2 + $0x608] sm:$0xff]
    %v331 = vld [vmem:[#allocation2 + $0x610] sm:$0xff]
    %v332 = vld [vmem:[#allocation2 + $0x618] sm:$0xff]
    %v333 = vld [vmem:[#allocation2 + $0x620] sm:$0xff]
    %v334 = vld [vmem:[#allocation2 + $0x628] sm:$0xff]
    %v335 = vld [vmem:[#allocation2 + $0x630] sm:$0xff]
    %v336 = vld [vmem:[#allocation2 + $0x638] sm:$0xff]
    %v337 = vld [vmem:[#allocation2 + $0x640] sm:$0xff]
    %v338 = vld [vmem:[#allocation2 + $0x648] sm:$0xff]
    %v339 = vld [vmem:[#allocation2 + $0x650] sm:$0xff]
    %v340 = vld [vmem:[#allocation2 + $0x658] sm:$0xff]
    %v341 = vld [vmem:[#allocation2 + $0x660] sm:$0xff]
    %v342 = vld [vmem:[#allocation2 + $0x668] sm:$0xff]
    %v343 = vld [vmem:[#allocation2 + $0x670] sm:$0xff]
    %v344 = vld [vmem:[#allocation2 + $0x678] sm:$0xff]
    %v345 = vld [vmem:[#allocation2 + $0x680] sm:$0xff]
    %v346 = vld [vmem:[#allocation2 + $0x688] sm:$0xff]
    %v347 = vld [vmem:[#allocation2 + $0x690] sm:$0xff]
    %v348 = vld [vmem:[#allocation2 + $0x698] sm:$0xff]
    %v349 = vld [vmem:[#allocation2 + $0x6a0] sm:$0xff]
    %v350 = vld [vmem:[#allocation2 + $0x6a8] sm:$0xff]
    %v351 = vld [vmem:[#allocation2 + $0x6b0] sm:$0xff]
    %v352 = vld [vmem:[#allocation2 + $0x6b8] sm:$0xff]
    %v353 = vld [vmem:[#allocation2 + $0x6c0] sm:$0xff]
    %v354 = vld [vmem:[#allocation2 + $0x6c8] sm:$0xff]
    %v355 = vld [vmem:[#allocation2 + $0x6d0] sm:$0xff]
    %v356 = vld [vmem:[#allocation2 + $0x6d8] sm:$0xff]
    %v357 = vld [vmem:[#allocation2 + $0x6e0] sm:$0xff]
    %v358 = vld [vmem:[#allocation2 + $0x6e8] sm:$0xff]
    %v359 = vld [vmem:[#allocation2 + $0x6f0] sm:$0xff]
    %v360 = vld [vmem:[#allocation2 + $0x6f8] sm:$0xff]
    %v361 = vld [vmem:[#allocation2 + $0x700] sm:$0xff]
    %v362 = vld [vmem:[#allocation2 + $0x708] sm:$0xff]
    %v363 = vld [vmem:[#allocation2 + $0x710] sm:$0xff]
    %v364 = vld [vmem:[#allocation2 + $0x718] sm:$0xff]
    %v365 = vld [vmem:[#allocation2 + $0x720] sm:$0xff]
    %v366 = vld [vmem:[#allocation2 + $0x728] sm:$0xff]
    %v367 = vld [vmem:[#allocation2 + $0x730] sm:$0xff]
    %v368 = vld [vmem:[#allocation2 + $0x738] sm:$0xff]
    %v369 = vld [vmem:[#allocation2 + $0x740] sm:$0xff]
    %v370 = vld [vmem:[#allocation2 + $0x748] sm:$0xff]
    %v371 = vld [vmem:[#allocation2 + $0x750] sm:$0xff]
    %v372 = vld [vmem:[#allocation2 + $0x758] sm:$0xff]
    %v373 = vld [vmem:[#allocation2 + $0x760] sm:$0xff]
    %v374 = vld [vmem:[#allocation2 + $0x768] sm:$0xff]
    %v375 = vld [vmem:[#allocation2 + $0x770] sm:$0xff]
    %v376 = vld [vmem:[#allocation2 + $0x778] sm:$0xff]
    %v377 = vld [vmem:[%s0] sm:$0xff]
    %v378 = vld [vmem:[%s0 + $0x8] sm:$0xff]
    %v379 = vld [vmem:[%s0 + $0x10] sm:$0xff]
    %v380 = vld [vmem:[%s0 + $0x18] sm:$0xff]
    %v381 = vld [vmem:[%s0 + $0x20] sm:$0xff]
    %v382 = vld [vmem:[%s0 + $0x28] sm:$0xff]
    %v383 = vld [vmem:[%s0 + $0x30] sm:$0xff]
    %v384 = vld [vmem:[%s0 + $0x38] sm:$0xff]
    %v385 = vld [vmem:[%s0 + $0x40] sm:$0xff]
    %v386 = vld [vmem:[%s0 + $0x48] sm:$0xff]
    %v387 = vld [vmem:[%s0 + $0x50] sm:$0xff]
    %v388 = vld [vmem:[%s0 + $0x58] sm:$0xff]
    %v389 = vld [vmem:[%s0 + $0x60] sm:$0xff]
    %v390 = vld [vmem:[%s0 + $0x68] sm:$0xff]
    %v391 = vld [vmem:[%s0 + $0x70] sm:$0xff]
    %v392 = vld [vmem:[%s0 + $0x2b8] sm:$0xff]
    %v393 = vld [vmem:[%s0 + $0x2c0] sm:$0xff]
    %v394 = vld [vmem:[%s0 + $0x2c8] sm:$0xff]
    %v395 = vld [vmem:[%s0 + $0x2d0] sm:$0xff]
    %v396 = vld [vmem:[%s0 + $0x2d8] sm:$0xff]
    %v397 = vld [vmem:[%s0 + $0x2e0] sm:$0xff]
    %v398 = vld [vmem:[%s0 + $0x2e8] sm:$0xff]
    %v399 = vld [vmem:[%s0 + $0x2f0] sm:$0xff]
    %v400 = vld [vmem:[%s0 + $0x2f8] sm:$0xff]
    %v401 = vld [vmem:[%s0 + $0x300] sm:$0xff]
    %v402 = vld [vmem:[%s0 + $0x308] sm:$0xff]
    %v403 = vld [vmem:[%s0 + $0x310] sm:$0xff]
    %v404 = vld [vmem:[%s0 + $0x318] sm:$0xff]
    %v405 = vld [vmem:[%s0 + $0x320] sm:$0xff]
    %v406 = vld [vmem:[%s0 + $0x328] sm:$0xff]
    %407 = vmatprep.subr.mxu0 0.0
    %408 = vmatpush1.msra.mxu0 %v137
    %409 = vmatprep.subr.mxu0 0.0
    %410 = vmatpush1.msra.mxu0 %v138
    %411 = vmatprep.subr.mxu0 0.0
    %412 = vmatpush1.msra.mxu0 %v139
    %413 = vmatprep.subr.mxu0 0.0
    %414 = vmatpush1.msra.mxu0 %v140
    %415 = vmatprep.subr.mxu0 0.0
    %416 = vmatpush1.msra.mxu0 %v141
    %417 = vmatprep.subr.mxu0 0.0
    %418 = vmatpush1.msra.mxu0 %v142
    %419 = vmatprep.subr.mxu0 0.0
    %420 = vmatpush1.msra.mxu0 %v143
    %421 = vmatprep.subr.mxu0 0.0
    %422 = vmatpush1.msra.mxu0 %v144
    %423 = vmatprep.subr.mxu0 0.0
    %424 = vmatpush1.msra.mxu0 %v145
    %425 = vmatprep.subr.mxu0 0.0
    %426 = vmatpush1.msra.mxu0 %v146
    %427 = vmatprep.subr.mxu0 0.0
    %428 = vmatpush1.msra.mxu0 %v147
    %429 = vmatprep.subr.mxu0 0.0
    %430 = vmatpush1.msra.mxu0 %v148
    %431 = vmatprep.subr.mxu0 0.0
    %432 = vmatpush1.msra.mxu0 %v149
    %433 = vmatprep.subr.mxu0 0.0
    %434 = vmatpush1.msra.mxu0 %v150
    %435 = vmatprep.subr.mxu0 0.0
    %436 = vmatpush1.msra.mxu0 %v151
    %437 = vmatprep.subr.mxu0 0.0
    %438 = vmatpush1.msra.mxu0 %v152
    %439 = vmatprep.subr.mxu0 0.0
    %440 = vmatpush1.msra.mxu0 %v153
    %441 = vmatprep.subr.mxu0 0.0
    %442 = vmatpush1.msra.mxu0 %v154
    %443 = vmatprep.subr.mxu0 0.0
    %444 = vmatpush1.msra.mxu0 %v155
    %445 = vmatprep.subr.mxu0 0.0
    %446 = vmatpush1.msra.mxu0 %v156
    %447 = vmatprep.subr.mxu0 0.0
    %448 = vmatpush1.msra.mxu0 %v157
    %449 = vmatprep.subr.mxu0 0.0
    %450 = vmatpush1.msra.mxu0 %v158
    %451 = vmatprep.subr.mxu0 0.0
    %452 = vmatpush1.msra.mxu0 %v159
    %453 = vmatprep.subr.mxu0 0.0
    %454 = vmatpush1.msra.mxu0 %v160
    %455 = vmatprep.subr.mxu0 0.0
    %456 = vmatpush1.msra.mxu0 %v161
    %457 = vmatprep.subr.mxu0 0.0
    %458 = vmatpush1.msra.mxu0 %v162
    %459 = vmatprep.subr.mxu0 0.0
    %460 = vmatpush1.msra.mxu0 %v163
    %461 = vmatprep.subr.mxu0 0.0
    %462 = vmatpush1.msra.mxu0 %v164
    %463 = vmatprep.subr.mxu0 0.0
    %464 = vmatpush1.msra.mxu0 %v165
    %465 = vmatprep.subr.mxu0 0.0
    %466 = vmatpush1.msra.mxu0 %v166
    %467 = vmatprep.subr.mxu0 0.0
    %468 = vmatpush1.msra.mxu0 %v167
    %469 = vmatprep.subr.mxu0 0.0
    %470 = vmatpush1.msra.mxu0 %v168
    %471 = vmatprep.mubr.f32.mxu0 %v378
    %472 = vmatmul.mubr.f32.gmra.mrb[0].mxu0 %v377
    %v473 = vpop.f32.mrb[0].mxu0
    %v474 = vadd.f32 0.0, %v473
    %v475 = vpop.f32.mrb[0].mxu0
    %476 = vmatprep.mubr.f32.mxu0 %v393
    %477 = vmatmul.mubr.f32.gmra.mrb[0].mxu0 %v392
    %v478 = vpop.f32.mrb[0].mxu0
    %v479 = vadd.f32 0.0, %v478
    %v480 = vpop.f32.mrb[0].mxu0
    %481 = vdwg.mxu0
    %482 = vmatprep.subr.mxu0 0.0
    %483 = vmatpush1.msra.mxu0 %v169
    %484 = vmatprep.subr.mxu0 0.0
    %485 = vmatpush1.msra.mxu0 %v170
    %486 = vmatprep.subr.mxu0 0.0
    %487 = vmatpush1.msra.mxu0 %v171
    %488 = vmatprep.subr.mxu0 0.0
    %489 = vmatpush1.msra.mxu0 %v172
    %490 = vmatprep.subr.mxu0 0.0
    %491 = vmatpush1.msra.mxu0 %v173
    %492 = vmatprep.subr.mxu0 0.0
    %493 = vmatpush1.msra.mxu0 %v174
    %494 = vmatprep.subr.mxu0 0.0
    %495 = vmatpush1.msra.mxu0 %v175
    %496 = vmatprep.subr.mxu0 0.0
    %497 = vmatpush1.msra.mxu0 %v176
    %498 = vmatprep.subr.mxu0 0.0
    %499 = vmatpush1.msra.mxu0 %v177
    %500 = vmatprep.subr.mxu0 0.0
    %501 = vmatpush1.msra.mxu0 %v178
    %502 = vmatprep.subr.mxu0 0.0
    %503 = vmatpush1.msra.mxu0 %v179
    %504 = vmatprep.subr.mxu0 0.0
    %505 = vmatpush1.msra.mxu0 %v180
    %506 = vmatprep.subr.mxu0 0.0
    %507 = vmatpush1.msra.mxu0 %v181
    %508 = vmatprep.subr.mxu0 0.0
    %509 = vmatpush1.msra.mxu0 %v182
    %510 = vmatprep.subr.mxu0 0.0
    %511 = vmatpush1.msra.mxu0 %v183
    %512 = vmatprep.subr.mxu0 0.0
    %513 = vmatpush1.msra.mxu0 %v184
    %514 = vmatprep.subr.mxu0 0.0
    %515 = vmatpush1.msra.mxu0 %v185
    %516 = vmatprep.subr.mxu0 0.0
    %517 = vmatpush1.msra.mxu0 %v186
    %518 = vmatprep.subr.mxu0 0.0
    %519 = vmatpush1.msra.mxu0 %v187
    %520 = vmatprep.subr.mxu0 0.0
    %521 = vmatpush1.msra.mxu0 %v188
    %522 = vmatprep.subr.mxu0 0.0
    %523 = vmatpush1.msra.mxu0 %v189
    %524 = vmatprep.subr.mxu0 0.0
    %525 = vmatpush1.msra.mxu0 %v190
    %526 = vmatprep.subr.mxu0 0.0
    %527 = vmatpush1.msra.mxu0 %v191
    %528 = vmatprep.subr.mxu0 0.0
    %529 = vmatpush1.msra.mxu0 %v192
    %530 = vmatprep.subr.mxu0 0.0
    %531 = vmatpush1.msra.mxu0 %v193
    %532 = vmatprep.subr.mxu0 0.0
    %533 = vmatpush1.msra.mxu0 %v194
    %534 = vmatprep.subr.mxu0 0.0
    %535 = vmatpush1.msra.mxu0 %v195
    %536 = vmatprep.subr.mxu0 0.0
    %537 = vmatpush1.msra.mxu0 %v196
    %538 = vmatprep.subr.mxu0 0.0
    %539 = vmatpush1.msra.mxu0 %v197
    %540 = vmatprep.subr.mxu0 0.0
    %541 = vmatpush1.msra.mxu0 %v198
    %542 = vmatprep.subr.mxu0 0.0
    %543 = vmatpush1.msra.mxu0 %v199
    %544 = vmatprep.subr.mxu0 0.0
    %545 = vmatpush1.msra.mxu0 %v200
    %546 = vmatprep.mubr.f32.mxu0 %v380
    %547 = vmatmul.mubr.f32.gmra.mrb[0].mxu0 %v379
    %v548 = vpop.f32.mrb[0].mxu0
    %v549 = vadd.f32 %v474, %v548
    %v550 = vpop.f32.mrb[0].mxu0
    %551 = vmatprep.mubr.f32.mxu0 %v395
    %552 = vmatmul.mubr.f32.gmra.mrb[0].mxu0 %v394
    %v553 = vpop.f32.mrb[0].mxu0
    %v554 = vadd.f32 %v479, %v553
    %v555 = vpop.f32.mrb[0].mxu0
    %556 = vdwg.mxu0
    %557 = vmatprep.subr.mxu0 0.0
    %558 = vmatpush1.msra.mxu0 %v201
    %559 = vmatprep.subr.mxu0 0.0
    %560 = vmatpush1.msra.mxu0 %v202
    %561 = vmatprep.subr.mxu0 0.0
    %562 = vmatpush1.msra.mxu0 %v203
    %563 = vmatprep.subr.mxu0 0.0
    %564 = vmatpush1.msra.mxu0 %v204
    %565 = vmatprep.subr.mxu0 0.0
    %566 = vmatpush1.msra.mxu0 %v205
    %567 = vmatprep.subr.mxu0 0.0
    %568 = vmatpush1.msra.mxu0 %v206
    %569 = vmatprep.subr.mxu0 0.0
    %570 = vmatpush1.msra.mxu0 %v207
    %571 = vmatprep.subr.mxu0 0.0
    %572 = vmatpush1.msra.mxu0 %v208
    %573 = vmatprep.subr.mxu0 0.0
    %574 = vmatpush1.msra.mxu0 %v209
    %575 = vmatprep.subr.mxu0 0.0
    %576 = vmatpush1.msra.mxu0 %v210
    %577 = vmatprep.subr.mxu0 0.0
    %578 = vmatpush1.msra.mxu0 %v211
    %579 = vmatprep.subr.mxu0 0.0
    %580 = vmatpush1.msra.mxu0 %v212
    %581 = vmatprep.subr.mxu0 0.0
    %582 = vmatpush1.msra.mxu0 %v213
    %583 = vmatprep.subr.mxu0 0.0
    %584 = vmatpush1.msra.mxu0 %v214
    %585 = vmatprep.subr.mxu0 0.0
    %586 = vmatpush1.msra.mxu0 %v215
    %587 = vmatprep.subr.mxu0 0.0
    %588 = vmatpush1.msra.mxu0 %v216
    %589 = vmatprep.subr.mxu0 0.0
    %590 = vmatpush1.msra.mxu0 %v217
    %591 = vmatprep.subr.mxu0 0.0
    %592 = vmatpush1.msra.mxu0 %v218
    %593 = vmatprep.subr.mxu0 0.0
    %594 = vmatpush1.msra.mxu0 %v219
    %595 = vmatprep.subr.mxu0 0.0
    %596 = vmatpush1.msra.mxu0 %v220
    %597 = vmatprep.subr.mxu0 0.0
    %598 = vmatpush1.msra.mxu0 %v221
    %599 = vmatprep.subr.mxu0 0.0
    %600 = vmatpush1.msra.mxu0 %v222
    %601 = vmatprep.subr.mxu0 0.0
    %602 = vmatpush1.msra.mxu0 %v223
    %603 = vmatprep.subr.mxu0 0.0
    %604 = vmatpush1.msra.mxu0 %v224
    %605 = vmatprep.subr.mxu0 0.0
    %606 = vmatpush1.msra.mxu0 %v225
    %607 = vmatprep.subr.mxu0 0.0
    %608 = vmatpush1.msra.mxu0 %v226
    %609 = vmatprep.subr.mxu0 0.0
    %610 = vmatpush1.msra.mxu0 %v227
    %611 = vmatprep.subr.mxu0 0.0
    %612 = vmatpush1.msra.mxu0 %v228
    %613 = vmatprep.subr.mxu0 0.0
    %614 = vmatpush1.msra.mxu0 %v229
    %615 = vmatprep.subr.mxu0 0.0
    %616 = vmatpush1.msra.mxu0 %v230
    %617 = vmatprep.subr.mxu0 0.0
    %618 = vmatpush1.msra.mxu0 %v231
    %619 = vmatprep.subr.mxu0 0.0
    %620 = vmatpush1.msra.mxu0 %v232
    %621 = vmatprep.mubr.f32.mxu0 %v382
    %622 = vmatmul.mubr.f32.gmra.mrb[0].mxu0 %v381
    %v623 = vpop.f32.mrb[0].mxu0
    %v624 = vadd.f32 %v549, %v623
    %v625 = vpop.f32.mrb[0].mxu0
    %626 = vmatprep.mubr.f32.mxu0 %v397
    %627 = vmatmul.mubr.f32.gmra.mrb[0].mxu0 %v396
    %v628 = vpop.f32.mrb[0].mxu0
    %v629 = vadd.f32 %v554, %v628
    %v630 = vpop.f32.mrb[0].mxu0
    %631 = vdwg.mxu0
    %632 = vmatprep.subr.mxu0 0.0
    %633 = vmatpush1.msra.mxu0 %v233
    %634 = vmatprep.subr.mxu0 0.0
    %635 = vmatpush1.msra.mxu0 %v234
    %636 = vmatprep.subr.mxu0 0.0
    %637 = vmatpush1.msra.mxu0 %v235
    %638 = vmatprep.subr.mxu0 0.0
    %639 = vmatpush1.msra.mxu0 %v236
    %640 = vmatprep.subr.mxu0 0.0
    %641 = vmatpush1.msra.mxu0 %v237
    %642 = vmatprep.subr.mxu0 0.0
    %643 = vmatpush1.msra.mxu0 %v238
    %644 = vmatprep.subr.mxu0 0.0
    %645 = vmatpush1.msra.mxu0 %v239
    %646 = vmatprep.subr.mxu0 0.0
    %647 = vmatpush1.msra.mxu0 %v240
    %648 = vmatprep.subr.mxu0 0.0
    %649 = vmatpush1.msra.mxu0 %v241
    %650 = vmatprep.subr.mxu0 0.0
    %651 = vmatpush1.msra.mxu0 %v242
    %652 = vmatprep.subr.mxu0 0.0
    %653 = vmatpush1.msra.mxu0 %v243
    %654 = vmatprep.subr.mxu0 0.0
    %655 = vmatpush1.msra.mxu0 %v244
    %656 = vmatprep.subr.mxu0 0.0
    %657 = vmatpush1.msra.mxu0 %v245
    %658 = vmatprep.subr.mxu0 0.0
    %659 = vmatpush1.msra.mxu0 %v246
    %660 = vmatprep.subr.mxu0 0.0
    %661 = vmatpush1.msra.mxu0 %v247
    %662 = vmatprep.subr.mxu0 0.0
    %663 = vmatpush1.msra.mxu0 %v248
    %664 = vmatprep.subr.mxu0 0.0
    %665 = vmatpush1.msra.mxu0 %v249
    %666 = vmatprep.subr.mxu0 0.0
    %667 = vmatpush1.msra.mxu0 %v250
    %668 = vmatprep.subr.mxu0 0.0
    %669 = vmatpush1.msra.mxu0 %v251
    %670 = vmatprep.subr.mxu0 0.0
    %671 = vmatpush1.msra.mxu0 %v252
    %672 = vmatprep.subr.mxu0 0.0
    %673 = vmatpush1.msra.mxu0 %v253
    %674 = vmatprep.subr.mxu0 0.0
    %675 = vmatpush1.msra.mxu0 %v254
    %676 = vmatprep.subr.mxu0 0.0
    %677 = vmatpush1.msra.mxu0 %v255
    %678 = vmatprep.subr.mxu0 0.0
    %679 = vmatpush1.msra.mxu0 %v256
    %680 = vmatprep.subr.mxu0 0.0
    %681 = vmatpush1.msra.mxu0 %v257
    %682 = vmatprep.subr.mxu0 0.0
    %683 = vmatpush1.msra.mxu0 %v258
    %684 = vmatprep.subr.mxu0 0.0
    %685 = vmatpush1.msra.mxu0 %v259
    %686 = vmatprep.subr.mxu0 0.0
    %687 = vmatpush1.msra.mxu0 %v260
    %688 = vmatprep.subr.mxu0 0.0
    %689 = vmatpush1.msra.mxu0 %v261
    %690 = vmatprep.subr.mxu0 0.0
    %691 = vmatpush1.msra.mxu0 %v262
    %692 = vmatprep.subr.mxu0 0.0
    %693 = vmatpush1.msra.mxu0 %v263
    %694 = vmatprep.subr.mxu0 0.0
    %695 = vmatpush1.msra.mxu0 %v264
    %696 = vmatprep.mubr.f32.mxu0 %v384
    %697 = vmatmul.mubr.f32.gmra.mrb[0].mxu0 %v383
    %v698 = vpop.f32.mrb[0].mxu0
    %v699 = vadd.f32 %v624, %v698
    %v700 = vpop.f32.mrb[0].mxu0
    %701 = vmatprep.mubr.f32.mxu0 %v399
    %702 = vmatmul.mubr.f32.gmra.mrb[0].mxu0 %v398
    %v703 = vpop.f32.mrb[0].mxu0
    %v704 = vadd.f32 %v629, %v703
    %v705 = vpop.f32.mrb[0].mxu0
    %706 = vdwg.mxu0
    %707 = vmatprep.subr.mxu0 0.0
    %708 = vmatpush1.msra.mxu0 %v265
    %709 = vmatprep.subr.mxu0 0.0
    %710 = vmatpush1.msra.mxu0 %v266
    %711 = vmatprep.subr.mxu0 0.0
    %712 = vmatpush1.msra.mxu0 %v267
    %713 = vmatprep.subr.mxu0 0.0
    %714 = vmatpush1.msra.mxu0 %v268
    %715 = vmatprep.subr.mxu0 0.0
    %716 = vmatpush1.msra.mxu0 %v269
    %717 = vmatprep.subr.mxu0 0.0
    %718 = vmatpush1.msra.mxu0 %v270
    %719 = vmatprep.subr.mxu0 0.0
    %720 = vmatpush1.msra.mxu0 %v271
    %721 = vmatprep.subr.mxu0 0.0
    %722 = vmatpush1.msra.mxu0 %v272
    %723 = vmatprep.subr.mxu0 0.0
    %724 = vmatpush1.msra.mxu0 %v273
    %725 = vmatprep.subr.mxu0 0.0
    %726 = vmatpush1.msra.mxu0 %v274
    %727 = vmatprep.subr.mxu0 0.0
    %728 = vmatpush1.msra.mxu0 %v275
    %729 = vmatprep.subr.mxu0 0.0
    %730 = vmatpush1.msra.mxu0 %v276
    %731 = vmatprep.subr.mxu0 0.0
    %732 = vmatpush1.msra.mxu0 %v277
    %733 = vmatprep.subr.mxu0 0.0
    %734 = vmatpush1.msra.mxu0 %v278
    %735 = vmatprep.subr.mxu0 0.0
    %736 = vmatpush1.msra.mxu0 %v279
    %737 = vmatprep.subr.mxu0 0.0
    %738 = vmatpush1.msra.mxu0 %v280
    %739 = vmatprep.subr.mxu0 0.0
    %740 = vmatpush1.msra.mxu0 %v281
    %741 = vmatprep.subr.mxu0 0.0
    %742 = vmatpush1.msra.mxu0 %v282
    %743 = vmatprep.subr.mxu0 0.0
    %744 = vmatpush1.msra.mxu0 %v283
    %745 = vmatprep.subr.mxu0 0.0
    %746 = vmatpush1.msra.mxu0 %v284
    %747 = vmatprep.subr.mxu0 0.0
    %748 = vmatpush1.msra.mxu0 %v285
    %749 = vmatprep.subr.mxu0 0.0
    %750 = vmatpush1.msra.mxu0 %v286
    %751 = vmatprep.subr.mxu0 0.0
    %752 = vmatpush1.msra.mxu0 %v287
    %753 = vmatprep.subr.mxu0 0.0
    %754 = vmatpush1.msra.mxu0 %v288
    %755 = vmatprep.subr.mxu0 0.0
    %756 = vmatpush1.msra.mxu0 %v289
    %757 = vmatprep.subr.mxu0 0.0
    %758 = vmatpush1.msra.mxu0 %v290
    %759 = vmatprep.subr.mxu0 0.0
    %760 = vmatpush1.msra.mxu0 %v291
    %761 = vmatprep.subr.mxu0 0.0
    %762 = vmatpush1.msra.mxu0 %v292
    %763 = vmatprep.subr.mxu0 0.0
    %764 = vmatpush1.msra.mxu0 %v293
    %765 = vmatprep.subr.mxu0 0.0
    %766 = vmatpush1.msra.mxu0 %v294
    %767 = vmatprep.subr.mxu0 0.0
    %768 = vmatpush1.msra.mxu0 %v295
    %769 = vmatprep.subr.mxu0 0.0
    %770 = vmatpush1.msra.mxu0 %v296
    %771 = vmatprep.mubr.f32.mxu0 %v386
    %772 = vmatmul.mubr.f32.gmra.mrb[0].mxu0 %v385
    %v773 = vpop.f32.mrb[0].mxu0
    %v774 = vadd.f32 %v699, %v773
    %v775 = vpop.f32.mrb[0].mxu0
    %776 = vmatprep.mubr.f32.mxu0 %v401
    %777 = vmatmul.mubr.f32.gmra.mrb[0].mxu0 %v400
    %v778 = vpop.f32.mrb[0].mxu0
    %v779 = vadd.f32 %v704, %v778
    %v780 = vpop.f32.mrb[0].mxu0
    %781 = vdwg.mxu0
    %782 = vmatprep.subr.mxu0 0.0
    %783 = vmatpush1.msra.mxu0 %v297
    %784 = vmatprep.subr.mxu0 0.0
    %785 = vmatpush1.msra.mxu0 %v298
    %786 = vmatprep.subr.mxu0 0.0
    %787 = vmatpush1.msra.mxu0 %v299
    %788 = vmatprep.subr.mxu0 0.0
    %789 = vmatpush1.msra.mxu0 %v300
    %790 = vmatprep.subr.mxu0 0.0
    %791 = vmatpush1.msra.mxu0 %v301
    %792 = vmatprep.subr.mxu0 0.0
    %793 = vmatpush1.msra.mxu0 %v302
    %794 = vmatprep.subr.mxu0 0.0
    %795 = vmatpush1.msra.mxu0 %v303
    %796 = vmatprep.subr.mxu0 0.0
    %797 = vmatpush1.msra.mxu0 %v304
    %798 = vmatprep.subr.mxu0 0.0
    %799 = vmatpush1.msra.mxu0 %v305
    %800 = vmatprep.subr.mxu0 0.0
    %801 = vmatpush1.msra.mxu0 %v306
    %802 = vmatprep.subr.mxu0 0.0
    %803 = vmatpush1.msra.mxu0 %v307
    %804 = vmatprep.subr.mxu0 0.0
    %805 = vmatpush1.msra.mxu0 %v308
    %806 = vmatprep.subr.mxu0 0.0
    %807 = vmatpush1.msra.mxu0 %v309
    %808 = vmatprep.subr.mxu0 0.0
    %809 = vmatpush1.msra.mxu0 %v310
    %810 = vmatprep.subr.mxu0 0.0
    %811 = vmatpush1.msra.mxu0 %v311
    %812 = vmatprep.subr.mxu0 0.0
    %813 = vmatpush1.msra.mxu0 %v312
    %814 = vmatprep.subr.mxu0 0.0
    %815 = vmatpush1.msra.mxu0 %v313
    %816 = vmatprep.subr.mxu0 0.0
    %817 = vmatpush1.msra.mxu0 %v314
    %818 = vmatprep.subr.mxu0 0.0
    %819 = vmatpush1.msra.mxu0 %v315
    %820 = vmatprep.subr.mxu0 0.0
    %821 = vmatpush1.msra.mxu0 %v316
    %822 = vmatprep.subr.mxu0 0.0
    %823 = vmatpush1.msra.mxu0 %v317
    %824 = vmatprep.subr.mxu0 0.0
    %825 = vmatpush1.msra.mxu0 %v318
    %826 = vmatprep.subr.mxu0 0.0
    %827 = vmatpush1.msra.mxu0 %v319
    %828 = vmatprep.subr.mxu0 0.0
    %829 = vmatpush1.msra.mxu0 %v320
    %830 = vmatprep.subr.mxu0 0.0
    %831 = vmatpush1.msra.mxu0 %v321
    %832 = vmatprep.subr.mxu0 0.0
    %833 = vmatpush1.msra.mxu0 %v322
    %834 = vmatprep.subr.mxu0 0.0
    %835 = vmatpush1.msra.mxu0 %v323
    %836 = vmatprep.subr.mxu0 0.0
    %837 = vmatpush1.msra.mxu0 %v324
    %838 = vmatprep.subr.mxu0 0.0
    %839 = vmatpush1.msra.mxu0 %v325
    %840 = vmatprep.subr.mxu0 0.0
    %841 = vmatpush1.msra.mxu0 %v326
    %842 = vmatprep.subr.mxu0 0.0
    %843 = vmatpush1.msra.mxu0 %v327
    %844 = vmatprep.subr.mxu0 0.0
    %845 = vmatpush1.msra.mxu0 %v328
    %846 = vmatprep.mubr.f32.mxu0 %v388
    %847 = vmatmul.mubr.f32.gmra.mrb[0].mxu0 %v387
    %v848 = vpop.f32.mrb[0].mxu0
    %v849 = vadd.f32 %v774, %v848
    %v850 = vpop.f32.mrb[0].mxu0
    %851 = vmatprep.mubr.f32.mxu0 %v403
    %852 = vmatmul.mubr.f32.gmra.mrb[0].mxu0 %v402
    %v853 = vpop.f32.mrb[0].mxu0
    %v854 = vadd.f32 %v779, %v853
    %v855 = vpop.f32.mrb[0].mxu0
    %856 = vdwg.mxu0
    %857 = vmatprep.subr.mxu0 0.0
    %858 = vmatpush1.msra.mxu0 %v329
    %859 = vmatprep.subr.mxu0 0.0
    %860 = vmatpush1.msra.mxu0 %v330
    %861 = vmatprep.subr.mxu0 0.0
    %862 = vmatpush1.msra.mxu0 %v331
    %863 = vmatprep.subr.mxu0 0.0
    %864 = vmatpush1.msra.mxu0 %v332
    %865 = vmatprep.subr.mxu0 0.0
    %866 = vmatpush1.msra.mxu0 %v333
    %867 = vmatprep.subr.mxu0 0.0
    %868 = vmatpush1.msra.mxu0 %v334
    %869 = vmatprep.subr.mxu0 0.0
    %870 = vmatpush1.msra.mxu0 %v335
    %871 = vmatprep.subr.mxu0 0.0
    %872 = vmatpush1.msra.mxu0 %v336
    %873 = vmatprep.subr.mxu0 0.0
    %874 = vmatpush1.msra.mxu0 %v337
    %875 = vmatprep.subr.mxu0 0.0
    %876 = vmatpush1.msra.mxu0 %v338
    %877 = vmatprep.subr.mxu0 0.0
    %878 = vmatpush1.msra.mxu0 %v339
    %879 = vmatprep.subr.mxu0 0.0
    %880 = vmatpush1.msra.mxu0 %v340
    %881 = vmatprep.subr.mxu0 0.0
    %882 = vmatpush1.msra.mxu0 %v341
    %883 = vmatprep.subr.mxu0 0.0
    %884 = vmatpush1.msra.mxu0 %v342
    %885 = vmatprep.subr.mxu0 0.0
    %886 = vmatpush1.msra.mxu0 %v343
    %887 = vmatprep.subr.mxu0 0.0
    %888 = vmatpush1.msra.mxu0 %v344
    %889 = vmatprep.subr.mxu0 0.0
    %890 = vmatpush1.msra.mxu0 %v345
    %891 = vmatprep.subr.mxu0 0.0
    %892 = vmatpush1.msra.mxu0 %v346
    %893 = vmatprep.subr.mxu0 0.0
    %894 = vmatpush1.msra.mxu0 %v347
    %895 = vmatprep.subr.mxu0 0.0
    %896 = vmatpush1.msra.mxu0 %v348
    %897 = vmatprep.subr.mxu0 0.0
    %898 = vmatpush1.msra.mxu0 %v349
    %899 = vmatprep.subr.mxu0 0.0
    %900 = vmatpush1.msra.mxu0 %v350
    %901 = vmatprep.subr.mxu0 0.0
    %902 = vmatpush1.msra.mxu0 %v351
    %903 = vmatprep.subr.mxu0 0.0
    %904 = vmatpush1.msra.mxu0 %v352
    %905 = vmatprep.subr.mxu0 0.0
    %906 = vmatpush1.msra.mxu0 %v353
    %907 = vmatprep.subr.mxu0 0.0
    %908 = vmatpush1.msra.mxu0 %v354
    %909 = vmatprep.subr.mxu0 0.0
    %910 = vmatpush1.msra.mxu0 %v355
    %911 = vmatprep.subr.mxu0 0.0
    %912 = vmatpush1.msra.mxu0 %v356
    %913 = vmatprep.subr.mxu0 0.0
    %914 = vmatpush1.msra.mxu0 %v357
    %915 = vmatprep.subr.mxu0 0.0
    %916 = vmatpush1.msra.mxu0 %v358
    %917 = vmatprep.subr.mxu0 0.0
    %918 = vmatpush1.msra.mxu0 %v359
    %919 = vmatprep.subr.mxu0 0.0
    %920 = vmatpush1.msra.mxu0 %v360
    %921 = vmatprep.mubr.f32.mxu0 %v390
    %922 = vmatmul.mubr.f32.gmra.mrb[0].mxu0 %v389
    %v923 = vpop.f32.mrb[0].mxu0
    %v924 = vadd.f32 %v849, %v923
    %v925 = vpop.f32.mrb[0].mxu0
    %926 = vmatprep.mubr.f32.mxu0 %v405
    %927 = vmatmul.mubr.f32.gmra.mrb[0].mxu0 %v404
    %v928 = vpop.f32.mrb[0].mxu0
    %v929 = vadd.f32 %v854, %v928
    %v930 = vpop.f32.mrb[0].mxu0
    %931 = vdwg.mxu0
    %932 = vmatprep.subr.mxu0 0.0
    %933 = vmatpush1.msra.mxu0 %v361
    %934 = vmatprep.subr.mxu0 0.0
    %935 = vmatpush1.msra.mxu0 %v362
    %936 = vmatprep.subr.mxu0 0.0
    %937 = vmatpush1.msra.mxu0 %v363
    %938 = vmatprep.subr.mxu0 0.0
    %939 = vmatpush1.msra.mxu0 %v364
    %940 = vmatprep.subr.mxu0 0.0
    %941 = vmatpush1.msra.mxu0 %v365
    %942 = vmatprep.subr.mxu0 0.0
    %943 = vmatpush1.msra.mxu0 %v366
    %944 = vmatprep.subr.mxu0 0.0
    %945 = vmatpush1.msra.mxu0 %v367
    %946 = vmatprep.subr.mxu0 0.0
    %947 = vmatpush1.msra.mxu0 %v368
    %948 = vmatprep.subr.mxu0 0.0
    %949 = vmatpush1.msra.mxu0 %v369
    %950 = vmatprep.subr.mxu0 0.0
    %951 = vmatpush1.msra.mxu0 %v370
    %952 = vmatprep.subr.mxu0 0.0
    %953 = vmatpush1.msra.mxu0 %v371
    %954 = vmatprep.subr.mxu0 0.0
    %955 = vmatpush1.msra.mxu0 %v372
    %956 = vmatprep.subr.mxu0 0.0
    %957 = vmatpush1.msra.mxu0 %v373
    %958 = vmatprep.subr.mxu0 0.0
    %959 = vmatpush1.msra.mxu0 %v374
    %960 = vmatprep.subr.mxu0 0.0
    %961 = vmatpush1.msra.mxu0 %v375
    %962 = vmatprep.subr.mxu0 0.0
    %963 = vmatpush1.msra.mxu0 %v376
    %964 = vmatprep.subr.mxu0 0.0
    %965 = vmatpush1.msra.mxu0 0.0
    %966 = vmatprep.subr.mxu0 0.0
    %967 = vmatpush1.msra.mxu0 0.0
    %968 = vmatprep.subr.mxu0 0.0
    %969 = vmatpush1.msra.mxu0 0.0
    %970 = vmatprep.subr.mxu0 0.0
    %971 = vmatpush1.msra.mxu0 0.0
    %972 = vmatprep.subr.mxu0 0.0
    %973 = vmatpush1.msra.mxu0 0.0
    %974 = vmatprep.subr.mxu0 0.0
    %975 = vmatpush1.msra.mxu0 0.0
    %976 = vmatprep.subr.mxu0 0.0
    %977 = vmatpush1.msra.mxu0 0.0
    %978 = vmatprep.subr.mxu0 0.0
    %979 = vmatpush1.msra.mxu0 0.0
    %980 = vmatprep.subr.mxu0 0.0
    %981 = vmatpush1.msra.mxu0 0.0
    %982 = vmatprep.subr.mxu0 0.0
    %983 = vmatpush1.msra.mxu0 0.0
    %984 = vmatprep.subr.mxu0 0.0
    %985 = vmatpush1.msra.mxu0 0.0
    %986 = vmatprep.subr.mxu0 0.0
    %987 = vmatpush1.msra.mxu0 0.0
    %988 = vmatprep.subr.mxu0 0.0
    %989 = vmatpush1.msra.mxu0 0.0
    %990 = vmatprep.subr.mxu0 0.0
    %991 = vmatpush1.msra.mxu0 0.0
    %992 = vmatprep.subr.mxu0 0.0
    %993 = vmatpush1.msra.mxu0 0.0
    %994 = vmatprep.subr.mxu0 0.0
    %995 = vmatpush1.msra.mxu0 0.0
    %996 = vmatprep.mubr.f32.mxu0 0.0
    %997 = vmatmul.mubr.f32.gmra.mrb[0].mxu0 %v391
    %v998 = vpop.f32.mrb[0].mxu0
    %v999 = vadd.f32 %v924, %v998
    %v1000 = vpop.f32.mrb[0].mxu0
    %1001 = vmatprep.mubr.f32.mxu0 0.0
    %1002 = vmatmul.mubr.f32.gmra.mrb[0].mxu0 %v406
    %v1003 = vpop.f32.mrb[0].mxu0
    %v1004 = vadd.f32 %v929, %v1003
    %v1005 = vpop.f32.mrb[0].mxu0
    %1006 = vdwg.mxu0
    %v1007 = vld [vmem:[%s0 + $0x60] sm:$0xff]
    %v1008 = vld [vmem:[%s0 + $0x68] sm:$0xff]
    %v1009 = vld [vmem:[%s0 + $0x70] sm:$0xff]
    %v1010 = vld [vmem:[%s0 + $0x78] sm:$0xff]
    %v1011 = vld [vmem:[%s0 + $0x80] sm:$0xff]
    %v1012 = vld [vmem:[%s0 + $0x88] sm:$0xff]
    %v1013 = vld [vmem:[%s0 + $0x90] sm:$0xff]
    %v1014 = vld [vmem:[%s0 + $0x98] sm:$0xff]
    %v1015 = vld [vmem:[%s0 + $0xa0] sm:$0xff]
    %v1016 = vld [vmem:[%s0 + $0xa8] sm:$0xff]
    %v1017 = vld [vmem:[%s0 + $0xb0] sm:$0xff]
    %v1018 = vld [vmem:[%s0 + $0xb8] sm:$0xff]
    %v1019 = vld [vmem:[%s0 + $0xc0] sm:$0xff]
    %v1020 = vld [vmem:[%s0 + $0xc8] sm:$0xff]
    %v1021 = vld [vmem:[%s0 + $0xd0] sm:$0xff]
    %v1022 = vld [vmem:[%s0 + $0x318] sm:$0xff]
    %v1023 = vld [vmem:[%s0 + $0x320] sm:$0xff]
    %v1024 = vld [vmem:[%s0 + $0x328] sm:$0xff]
    %v1025 = vld [vmem:[%s0 + $0x330] sm:$0xff]
    %v1026 = vld [vmem:[%s0 + $0x338] sm:$0xff]
    %v1027 = vld [vmem:[%s0 + $0x340] sm:$0xff]
    %v1028 = vld [vmem:[%s0 + $0x348] sm:$0xff]
    %v1029 = vld [vmem:[%s0 + $0x350] sm:$0xff]
    %v1030 = vld [vmem:[%s0 + $0x358] sm:$0xff]
    %v1031 = vld [vmem:[%s0 + $0x360] sm:$0xff]
    %v1032 = vld [vmem:[%s0 + $0x368] sm:$0xff]
    %v1033 = vld [vmem:[%s0 + $0x370] sm:$0xff]
    %v1034 = vld [vmem:[%s0 + $0x378] sm:$0xff]
    %v1035 = vld [vmem:[%s0 + $0x380] sm:$0xff]
    %v1036 = vld [vmem:[%s0 + $0x388] sm:$0xff]
    %1037 = vmatprep.subr.mxu0 0.0
    %1038 = vmatpush1.msra.mxu0 %v137
    %1039 = vmatprep.subr.mxu0 0.0
    %1040 = vmatpush1.msra.mxu0 %v138
    %1041 = vmatprep.subr.mxu0 0.0
    %1042 = vmatpush1.msra.mxu0 %v139
    %1043 = vmatprep.subr.mxu0 0.0
    %1044 = vmatpush1.msra.mxu0 %v140
    %1045 = vmatprep.subr.mxu0 0.0
    %1046 = vmatpush1.msra.mxu0 %v141
    %1047 = vmatprep.subr.mxu0 0.0
    %1048 = vmatpush1.msra.mxu0 %v142
    %1049 = vmatprep.subr.mxu0 0.0
    %1050 = vmatpush1.msra.mxu0 %v143
    %1051 = vmatprep.subr.mxu0 0.0
    %1052 = vmatpush1.msra.mxu0 %v144
    %1053 = vmatprep.subr.mxu0 0.0
    %1054 = vmatpush1.msra.mxu0 %v145
    %1055 = vmatprep.subr.mxu0 0.0
    %1056 = vmatpush1.msra.mxu0 %v146
    %1057 = vmatprep.subr.mxu0 0.0
    %1058 = vmatpush1.msra.mxu0 %v147
    %1059 = vmatprep.subr.mxu0 0.0
    %1060 = vmatpush1.msra.mxu0 %v148
    %1061 = vmatprep.subr.mxu0 0.0
    %1062 = vmatpush1.msra.mxu0 %v149
    %1063 = vmatprep.subr.mxu0 0.0
    %1064 = vmatpush1.msra.mxu0 %v150
    %1065 = vmatprep.subr.mxu0 0.0
    %1066 = vmatpush1.msra.mxu0 %v151
    %1067 = vmatprep.subr.mxu0 0.0
    %1068 = vmatpush1.msra.mxu0 %v152
    %1069 = vmatprep.subr.mxu0 0.0
    %1070 = vmatpush1.msra.mxu0 %v153
    %1071 = vmatprep.subr.mxu0 0.0
    %1072 = vmatpush1.msra.mxu0 %v154
    %1073 = vmatprep.subr.mxu0 0.0
    %1074 = vmatpush1.msra.mxu0 %v155
    %1075 = vmatprep.subr.mxu0 0.0
    %1076 = vmatpush1.msra.mxu0 %v156
    %1077 = vmatprep.subr.mxu0 0.0
    %1078 = vmatpush1.msra.mxu0 %v157
    %1079 = vmatprep.subr.mxu0 0.0
    %1080 = vmatpush1.msra.mxu0 %v158
    %1081 = vmatprep.subr.mxu0 0.0
    %1082 = vmatpush1.msra.mxu0 %v159
    %1083 = vmatprep.subr.mxu0 0.0
    %1084 = vmatpush1.msra.mxu0 %v160
    %1085 = vmatprep.subr.mxu0 0.0
    %1086 = vmatpush1.msra.mxu0 %v161
    %1087 = vmatprep.subr.mxu0 0.0
    %1088 = vmatpush1.msra.mxu0 %v162
    %1089 = vmatprep.subr.mxu0 0.0
    %1090 = vmatpush1.msra.mxu0 %v163
    %1091 = vmatprep.subr.mxu0 0.0
    %1092 = vmatpush1.msra.mxu0 %v164
    %1093 = vmatprep.subr.mxu0 0.0
    %1094 = vmatpush1.msra.mxu0 %v165
    %1095 = vmatprep.subr.mxu0 0.0
    %1096 = vmatpush1.msra.mxu0 %v166
    %1097 = vmatprep.subr.mxu0 0.0
    %1098 = vmatpush1.msra.mxu0 %v167
    %1099 = vmatprep.subr.mxu0 0.0
    %1100 = vmatpush1.msra.mxu0 %v168
    %1101 = vmatprep.mubr.f32.mxu0 %v1008
    %1102 = vmatmul.mubr.f32.gmra.mrb[0].mxu0 %v1007
    %v1103 = vpop.f32.mrb[0].mxu0
    %v1104 = vadd.f32 0.0, %v1103
    %v1105 = vpop.f32.mrb[0].mxu0
    %1106 = vmatprep.mubr.f32.mxu0 %v1023
    %1107 = vmatmul.mubr.f32.gmra.mrb[0].mxu0 %v1022
    %v1108 = vpop.f32.mrb[0].mxu0
    %v1109 = vadd.f32 0.0, %v1108
    %v1110 = vpop.f32.mrb[0].mxu0
    %1111 = vdwg.mxu0
    %1112 = vmatprep.subr.mxu0 0.0
    %1113 = vmatpush1.msra.mxu0 %v169
    %1114 = vmatprep.subr.mxu0 0.0
    %1115 = vmatpush1.msra.mxu0 %v170
    %1116 = vmatprep.subr.mxu0 0.0
    %1117 = vmatpush1.msra.mxu0 %v171
    %1118 = vmatprep.subr.mxu0 0.0
    %1119 = vmatpush1.msra.mxu0 %v172
    %1120 = vmatprep.subr.mxu0 0.0
    %1121 = vmatpush1.msra.mxu0 %v173
    %1122 = vmatprep.subr.mxu0 0.0
    %1123 = vmatpush1.msra.mxu0 %v174
    %1124 = vmatprep.subr.mxu0 0.0
    %1125 = vmatpush1.msra.mxu0 %v175
    %1126 = vmatprep.subr.mxu0 0.0
    %1127 = vmatpush1.msra.mxu0 %v176
    %1128 = vmatprep.subr.mxu0 0.0
    %1129 = vmatpush1.msra.mxu0 %v177
    %1130 = vmatprep.subr.mxu0 0.0
    %1131 = vmatpush1.msra.mxu0 %v178
    %1132 = vmatprep.subr.mxu0 0.0
    %1133 = vmatpush1.msra.mxu0 %v179
    %1134 = vmatprep.subr.mxu0 0.0
    %1135 = vmatpush1.msra.mxu0 %v180
    %1136 = vmatprep.subr.mxu0 0.0
    %1137 = vmatpush1.msra.mxu0 %v181
    %1138 = vmatprep.subr.mxu0 0.0
    %1139 = vmatpush1.msra.mxu0 %v182
    %1140 = vmatprep.subr.mxu0 0.0
    %1141 = vmatpush1.msra.mxu0 %v183
    %1142 = vmatprep.subr.mxu0 0.0
    %1143 = vmatpush1.msra.mxu0 %v184
    %1144 = vmatprep.subr.mxu0 0.0
    %1145 = vmatpush1.msra.mxu0 %v185
    %1146 = vmatprep.subr.mxu0 0.0
    %1147 = vmatpush1.msra.mxu0 %v186
    %1148 = vmatprep.subr.mxu0 0.0
    %1149 = vmatpush1.msra.mxu0 %v187
    %1150 = vmatprep.subr.mxu0 0.0
    %1151 = vmatpush1.msra.mxu0 %v188
    %1152 = vmatprep.subr.mxu0 0.0
    %1153 = vmatpush1.msra.mxu0 %v189
    %1154 = vmatprep.subr.mxu0 0.0
    %1155 = vmatpush1.msra.mxu0 %v190
    %1156 = vmatprep.subr.mxu0 0.0
    %1157 = vmatpush1.msra.mxu0 %v191
    %1158 = vmatprep.subr.mxu0 0.0
    %1159 = vmatpush1.msra.mxu0 %v192
    %1160 = vmatprep.subr.mxu0 0.0
    %1161 = vmatpush1.msra.mxu0 %v193
    %1162 = vmatprep.subr.mxu0 0.0
    %1163 = vmatpush1.msra.mxu0 %v194
    %1164 = vmatprep.subr.mxu0 0.0
    %1165 = vmatpush1.msra.mxu0 %v195
    %1166 = vmatprep.subr.mxu0 0.0
    %1167 = vmatpush1.msra.mxu0 %v196
    %1168 = vmatprep.subr.mxu0 0.0
    %1169 = vmatpush1.msra.mxu0 %v197
    %1170 = vmatprep.subr.mxu0 0.0
    %1171 = vmatpush1.msra.mxu0 %v198
    %1172 = vmatprep.subr.mxu0 0.0
    %1173 = vmatpush1.msra.mxu0 %v199
    %1174 = vmatprep.subr.mxu0 0.0
    %1175 = vmatpush1.msra.mxu0 %v200
    %1176 = vmatprep.mubr.f32.mxu0 %v1010
    %1177 = vmatmul.mubr.f32.gmra.mrb[0].mxu0 %v1009
    %v1178 = vpop.f32.mrb[0].mxu0
    %v1179 = vadd.f32 %v1104, %v1178
    %v1180 = vpop.f32.mrb[0].mxu0
    %1181 = vmatprep.mubr.f32.mxu0 %v1025
    %1182 = vmatmul.mubr.f32.gmra.mrb[0].mxu0 %v1024
    %v1183 = vpop.f32.mrb[0].mxu0
    %v1184 = vadd.f32 %v1109, %v1183
    %v1185 = vpop.f32.mrb[0].mxu0
    %1186 = vdwg.mxu0
    %1187 = vmatprep.subr.mxu0 0.0
    %1188 = vmatpush1.msra.mxu0 %v201
    %1189 = vmatprep.subr.mxu0 0.0
    %1190 = vmatpush1.msra.mxu0 %v202
    %1191 = vmatprep.subr.mxu0 0.0
    %1192 = vmatpush1.msra.mxu0 %v203
    %1193 = vmatprep.subr.mxu0 0.0
    %1194 = vmatpush1.msra.mxu0 %v204
    %1195 = vmatprep.subr.mxu0 0.0
    %1196 = vmatpush1.msra.mxu0 %v205
    %1197 = vmatprep.subr.mxu0 0.0
    %1198 = vmatpush1.msra.mxu0 %v206
    %1199 = vmatprep.subr.mxu0 0.0
    %1200 = vmatpush1.msra.mxu0 %v207
    %1201 = vmatprep.subr.mxu0 0.0
    %1202 = vmatpush1.msra.mxu0 %v208
    %1203 = vmatprep.subr.mxu0 0.0
    %1204 = vmatpush1.msra.mxu0 %v209
    %1205 = vmatprep.subr.mxu0 0.0
    %1206 = vmatpush1.msra.mxu0 %v210
    %1207 = vmatprep.subr.mxu0 0.0
    %1208 = vmatpush1.msra.mxu0 %v211
    %1209 = vmatprep.subr.mxu0 0.0
    %1210 = vmatpush1.msra.mxu0 %v212
    %1211 = vmatprep.subr.mxu0 0.0
    %1212 = vmatpush1.msra.mxu0 %v213
    %1213 = vmatprep.subr.mxu0 0.0
    %1214 = vmatpush1.msra.mxu0 %v214
    %1215 = vmatprep.subr.mxu0 0.0
    %1216 = vmatpush1.msra.mxu0 %v215
    %1217 = vmatprep.subr.mxu0 0.0
    %1218 = vmatpush1.msra.mxu0 %v216
    %1219 = vmatprep.subr.mxu0 0.0
    %1220 = vmatpush1.msra.mxu0 %v217
    %1221 = vmatprep.subr.mxu0 0.0
    %1222 = vmatpush1.msra.mxu0 %v218
    %1223 = vmatprep.subr.mxu0 0.0
    %1224 = vmatpush1.msra.mxu0 %v219
    %1225 = vmatprep.subr.mxu0 0.0
    %1226 = vmatpush1.msra.mxu0 %v220
    %1227 = vmatprep.subr.mxu0 0.0
    %1228 = vmatpush1.msra.mxu0 %v221
    %1229 = vmatprep.subr.mxu0 0.0
    %1230 = vmatpush1.msra.mxu0 %v222
    %1231 = vmatprep.subr.mxu0 0.0
    %1232 = vmatpush1.msra.mxu0 %v223
    %1233 = vmatprep.subr.mxu0 0.0
    %1234 = vmatpush1.msra.mxu0 %v224
    %1235 = vmatprep.subr.mxu0 0.0
    %1236 = vmatpush1.msra.mxu0 %v225
    %1237 = vmatprep.subr.mxu0 0.0
    %1238 = vmatpush1.msra.mxu0 %v226
    %1239 = vmatprep.subr.mxu0 0.0
    %1240 = vmatpush1.msra.mxu0 %v227
    %1241 = vmatprep.subr.mxu0 0.0
    %1242 = vmatpush1.msra.mxu0 %v228
    %1243 = vmatprep.subr.mxu0 0.0
    %1244 = vmatpush1.msra.mxu0 %v229
    %1245 = vmatprep.subr.mxu0 0.0
    %1246 = vmatpush1.msra.mxu0 %v230
    %1247 = vmatprep.subr.mxu0 0.0
    %1248 = vmatpush1.msra.mxu0 %v231
    %1249 = vmatprep.subr.mxu0 0.0
    %1250 = vmatpush1.msra.mxu0 %v232
    %1251 = vmatprep.mubr.f32.mxu0 %v1012
    %1252 = vmatmul.mubr.f32.gmra.mrb[0].mxu0 %v1011
    %v1253 = vpop.f32.mrb[0].mxu0
    %v1254 = vadd.f32 %v1179, %v1253
    %v1255 = vpop.f32.mrb[0].mxu0
    %1256 = vmatprep.mubr.f32.mxu0 %v1027
    %1257 = vmatmul.mubr.f32.gmra.mrb[0].mxu0 %v1026
    %v1258 = vpop.f32.mrb[0].mxu0
    %v1259 = vadd.f32 %v1184, %v1258
    %v1260 = vpop.f32.mrb[0].mxu0
    %1261 = vdwg.mxu0
    %1262 = vmatprep.subr.mxu0 0.0
    %1263 = vmatpush1.msra.mxu0 %v233
    %1264 = vmatprep.subr.mxu0 0.0
    %1265 = vmatpush1.msra.mxu0 %v234
    %1266 = vmatprep.subr.mxu0 0.0
    %1267 = vmatpush1.msra.mxu0 %v235
    %1268 = vmatprep.subr.mxu0 0.0
    %1269 = vmatpush1.msra.mxu0 %v236
    %1270 = vmatprep.subr.mxu0 0.0
    %1271 = vmatpush1.msra.mxu0 %v237
    %1272 = vmatprep.subr.mxu0 0.0
    %1273 = vmatpush1.msra.mxu0 %v238
    %1274 = vmatprep.subr.mxu0 0.0
    %1275 = vmatpush1.msra.mxu0 %v239
    %1276 = vmatprep.subr.mxu0 0.0
    %1277 = vmatpush1.msra.mxu0 %v240
    %1278 = vmatprep.subr.mxu0 0.0
    %1279 = vmatpush1.msra.mxu0 %v241
    %1280 = vmatprep.subr.mxu0 0.0
    %1281 = vmatpush1.msra.mxu0 %v242
    %1282 = vmatprep.subr.mxu0 0.0
    %1283 = vmatpush1.msra.mxu0 %v243
    %1284 = vmatprep.subr.mxu0 0.0
    %1285 = vmatpush1.msra.mxu0 %v244
    %1286 = vmatprep.subr.mxu0 0.0
    %1287 = vmatpush1.msra.mxu0 %v245
    %1288 = vmatprep.subr.mxu0 0.0
    %1289 = vmatpush1.msra.mxu0 %v246
    %1290 = vmatprep.subr.mxu0 0.0
    %1291 = vmatpush1.msra.mxu0 %v247
    %1292 = vmatprep.subr.mxu0 0.0
    %1293 = vmatpush1.msra.mxu0 %v248
    %1294 = vmatprep.subr.mxu0 0.0
    %1295 = vmatpush1.msra.mxu0 %v249
    %1296 = vmatprep.subr.mxu0 0.0
    %1297 = vmatpush1.msra.mxu0 %v250
    %1298 = vmatprep.subr.mxu0 0.0
    %1299 = vmatpush1.msra.mxu0 %v251
    %1300 = vmatprep.subr.mxu0 0.0
    %1301 = vmatpush1.msra.mxu0 %v252
    %1302 = vmatprep.subr.mxu0 0.0
    %1303 = vmatpush1.msra.mxu0 %v253
    %1304 = vmatprep.subr.mxu0 0.0
    %1305 = vmatpush1.msra.mxu0 %v254
    %1306 = vmatprep.subr.mxu0 0.0
    %1307 = vmatpush1.msra.mxu0 %v255
    %1308 = vmatprep.subr.mxu0 0.0
    %1309 = vmatpush1.msra.mxu0 %v256
    %1310 = vmatprep.subr.mxu0 0.0
    %1311 = vmatpush1.msra.mxu0 %v257
    %1312 = vmatprep.subr.mxu0 0.0
    %1313 = vmatpush1.msra.mxu0 %v258
    %1314 = vmatprep.subr.mxu0 0.0
    %1315 = vmatpush1.msra.mxu0 %v259
    %1316 = vmatprep.subr.mxu0 0.0
    %1317 = vmatpush1.msra.mxu0 %v260
    %1318 = vmatprep.subr.mxu0 0.0
    %1319 = vmatpush1.msra.mxu0 %v261
    %1320 = vmatprep.subr.mxu0 0.0
    %1321 = vmatpush1.msra.mxu0 %v262
    %1322 = vmatprep.subr.mxu0 0.0
    %1323 = vmatpush1.msra.mxu0 %v263
    %1324 = vmatprep.subr.mxu0 0.0
    %1325 = vmatpush1.msra.mxu0 %v264
    %1326 = vmatprep.mubr.f32.mxu0 %v1014
    %1327 = vmatmul.mubr.f32.gmra.mrb[0].mxu0 %v1013
    %v1328 = vpop.f32.mrb[0].mxu0
    %v1329 = vadd.f32 %v1254, %v1328
    %v1330 = vpop.f32.mrb[0].mxu0
    %1331 = vmatprep.mubr.f32.mxu0 %v1029
    %1332 = vmatmul.mubr.f32.gmra.mrb[0].mxu0 %v1028
    %v1333 = vpop.f32.mrb[0].mxu0
    %v1334 = vadd.f32 %v1259, %v1333
    %v1335 = vpop.f32.mrb[0].mxu0
    %1336 = vdwg.mxu0
    %1337 = vmatprep.subr.mxu0 0.0
    %1338 = vmatpush1.msra.mxu0 %v265
    %1339 = vmatprep.subr.mxu0 0.0
    %1340 = vmatpush1.msra.mxu0 %v266
    %1341 = vmatprep.subr.mxu0 0.0
    %1342 = vmatpush1.msra.mxu0 %v267
    %1343 = vmatprep.subr.mxu0 0.0
    %1344 = vmatpush1.msra.mxu0 %v268
    %1345 = vmatprep.subr.mxu0 0.0
    %1346 = vmatpush1.msra.mxu0 %v269
    %1347 = vmatprep.subr.mxu0 0.0
    %1348 = vmatpush1.msra.mxu0 %v270
    %1349 = vmatprep.subr.mxu0 0.0
    %1350 = vmatpush1.msra.mxu0 %v271
    %1351 = vmatprep.subr.mxu0 0.0
    %1352 = vmatpush1.msra.mxu0 %v272
    %1353 = vmatprep.subr.mxu0 0.0
    %1354 = vmatpush1.msra.mxu0 %v273
    %1355 = vmatprep.subr.mxu0 0.0
    %1356 = vmatpush1.msra.mxu0 %v274
    %1357 = vmatprep.subr.mxu0 0.0
    %1358 = vmatpush1.msra.mxu0 %v275
    %1359 = vmatprep.subr.mxu0 0.0
    %1360 = vmatpush1.msra.mxu0 %v276
    %1361 = vmatprep.subr.mxu0 0.0
    %1362 = vmatpush1.msra.mxu0 %v277
    %1363 = vmatprep.subr.mxu0 0.0
    %1364 = vmatpush1.msra.mxu0 %v278
    %1365 = vmatprep.subr.mxu0 0.0
    %1366 = vmatpush1.msra.mxu0 %v279
    %1367 = vmatprep.subr.mxu0 0.0
    %1368 = vmatpush1.msra.mxu0 %v280
    %1369 = vmatprep.subr.mxu0 0.0
    %1370 = vmatpush1.msra.mxu0 %v281
    %1371 = vmatprep.subr.mxu0 0.0
    %1372 = vmatpush1.msra.mxu0 %v282
    %1373 = vmatprep.subr.mxu0 0.0
    %1374 = vmatpush1.msra.mxu0 %v283
    %1375 = vmatprep.subr.mxu0 0.0
    %1376 = vmatpush1.msra.mxu0 %v284
    %1377 = vmatprep.subr.mxu0 0.0
    %1378 = vmatpush1.msra.mxu0 %v285
    %1379 = vmatprep.subr.mxu0 0.0
    %1380 = vmatpush1.msra.mxu0 %v286
    %1381 = vmatprep.subr.mxu0 0.0
    %1382 = vmatpush1.msra.mxu0 %v287
    %1383 = vmatprep.subr.mxu0 0.0
    %1384 = vmatpush1.msra.mxu0 %v288
    %1385 = vmatprep.subr.mxu0 0.0
    %1386 = vmatpush1.msra.mxu0 %v289
    %1387 = vmatprep.subr.mxu0 0.0
    %1388 = vmatpush1.msra.mxu0 %v290
    %1389 = vmatprep.subr.mxu0 0.0
    %1390 = vmatpush1.msra.mxu0 %v291
    %1391 = vmatprep.subr.mxu0 0.0
    %1392 = vmatpush1.msra.mxu0 %v292
    %1393 = vmatprep.subr.mxu0 0.0
    %1394 = vmatpush1.msra.mxu0 %v293
    %1395 = vmatprep.subr.mxu0 0.0
    %1396 = vmatpush1.msra.mxu0 %v294
    %1397 = vmatprep.subr.mxu0 0.0
    %1398 = vmatpush1.msra.mxu0 %v295
    %1399 = vmatprep.subr.mxu0 0.0
    %1400 = vmatpush1.msra.mxu0 %v296
    %1401 = vmatprep.mubr.f32.mxu0 %v1016
    %1402 = vmatmul.mubr.f32.gmra.mrb[0].mxu0 %v1015
    %v1403 = vpop.f32.mrb[0].mxu0
    %v1404 = vadd.f32 %v1329, %v1403
    %v1405 = vpop.f32.mrb[0].mxu0
    %1406 = vmatprep.mubr.f32.mxu0 %v1031
    %1407 = vmatmul.mubr.f32.gmra.mrb[0].mxu0 %v1030
    %v1408 = vpop.f32.mrb[0].mxu0
    %v1409 = vadd.f32 %v1334, %v1408
    %v1410 = vpop.f32.mrb[0].mxu0
    %1411 = vdwg.mxu0
    %1412 = vmatprep.subr.mxu0 0.0
    %1413 = vmatpush1.msra.mxu0 %v297
    %1414 = vmatprep.subr.mxu0 0.0
    %1415 = vmatpush1.msra.mxu0 %v298
    %1416 = vmatprep.subr.mxu0 0.0
    %1417 = vmatpush1.msra.mxu0 %v299
    %1418 = vmatprep.subr.mxu0 0.0
    %1419 = vmatpush1.msra.mxu0 %v300
    %1420 = vmatprep.subr.mxu0 0.0
    %1421 = vmatpush1.msra.mxu0 %v301
    %1422 = vmatprep.subr.mxu0 0.0
    %1423 = vmatpush1.msra.mxu0 %v302
    %1424 = vmatprep.subr.mxu0 0.0
    %1425 = vmatpush1.msra.mxu0 %v303
    %1426 = vmatprep.subr.mxu0 0.0
    %1427 = vmatpush1.msra.mxu0 %v304
    %1428 = vmatprep.subr.mxu0 0.0
    %1429 = vmatpush1.msra.mxu0 %v305
    %1430 = vmatprep.subr.mxu0 0.0
    %1431 = vmatpush1.msra.mxu0 %v306
    %1432 = vmatprep.subr.mxu0 0.0
    %1433 = vmatpush1.msra.mxu0 %v307
    %1434 = vmatprep.subr.mxu0 0.0
    %1435 = vmatpush1.msra.mxu0 %v308
    %1436 = vmatprep.subr.mxu0 0.0
    %1437 = vmatpush1.msra.mxu0 %v309
    %1438 = vmatprep.subr.mxu0 0.0
    %1439 = vmatpush1.msra.mxu0 %v310
    %1440 = vmatprep.subr.mxu0 0.0
    %1441 = vmatpush1.msra.mxu0 %v311
    %1442 = vmatprep.subr.mxu0 0.0
    %1443 = vmatpush1.msra.mxu0 %v312
    %1444 = vmatprep.subr.mxu0 0.0
    %1445 = vmatpush1.msra.mxu0 %v313
    %1446 = vmatprep.subr.mxu0 0.0
    %1447 = vmatpush1.msra.mxu0 %v314
    %1448 = vmatprep.subr.mxu0 0.0
    %1449 = vmatpush1.msra.mxu0 %v315
    %1450 = vmatprep.subr.mxu0 0.0
    %1451 = vmatpush1.msra.mxu0 %v316
    %1452 = vmatprep.subr.mxu0 0.0
    %1453 = vmatpush1.msra.mxu0 %v317
    %1454 = vmatprep.subr.mxu0 0.0
    %1455 = vmatpush1.msra.mxu0 %v318
    %1456 = vmatprep.subr.mxu0 0.0
    %1457 = vmatpush1.msra.mxu0 %v319
    %1458 = vmatprep.subr.mxu0 0.0
    %1459 = vmatpush1.msra.mxu0 %v320
    %1460 = vmatprep.subr.mxu0 0.0
    %1461 = vmatpush1.msra.mxu0 %v321
    %1462 = vmatprep.subr.mxu0 0.0
    %1463 = vmatpush1.msra.mxu0 %v322
    %1464 = vmatprep.subr.mxu0 0.0
    %1465 = vmatpush1.msra.mxu0 %v323
    %1466 = vmatprep.subr.mxu0 0.0
    %1467 = vmatpush1.msra.mxu0 %v324
    %1468 = vmatprep.subr.mxu0 0.0
    %1469 = vmatpush1.msra.mxu0 %v325
    %1470 = vmatprep.subr.mxu0 0.0
    %1471 = vmatpush1.msra.mxu0 %v326
    %1472 = vmatprep.subr.mxu0 0.0
    %1473 = vmatpush1.msra.mxu0 %v327
    %1474 = vmatprep.subr.mxu0 0.0
    %1475 = vmatpush1.msra.mxu0 %v328
    %1476 = vmatprep.mubr.f32.mxu0 %v1018
    %1477 = vmatmul.mubr.f32.gmra.mrb[0].mxu0 %v1017
    %v1478 = vpop.f32.mrb[0].mxu0
    %v1479 = vadd.f32 %v1404, %v1478
    %v1480 = vpop.f32.mrb[0].mxu0
    %1481 = vmatprep.mubr.f32.mxu0 %v1033
    %1482 = vmatmul.mubr.f32.gmra.mrb[0].mxu0 %v1032
    %v1483 = vpop.f32.mrb[0].mxu0
    %v1484 = vadd.f32 %v1409, %v1483
    %v1485 = vpop.f32.mrb[0].mxu0
    %1486 = vdwg.mxu0
    %1487 = vmatprep.subr.mxu0 0.0
    %1488 = vmatpush1.msra.mxu0 %v329
    %1489 = vmatprep.subr.mxu0 0.0
    %1490 = vmatpush1.msra.mxu0 %v330
    %1491 = vmatprep.subr.mxu0 0.0
    %1492 = vmatpush1.msra.mxu0 %v331
    %1493 = vmatprep.subr.mxu0 0.0
    %1494 = vmatpush1.msra.mxu0 %v332
    %1495 = vmatprep.subr.mxu0 0.0
    %1496 = vmatpush1.msra.mxu0 %v333
    %1497 = vmatprep.subr.mxu0 0.0
    %1498 = vmatpush1.msra.mxu0 %v334
    %1499 = vmatprep.subr.mxu0 0.0
    %1500 = vmatpush1.msra.mxu0 %v335
    %1501 = vmatprep.subr.mxu0 0.0
    %1502 = vmatpush1.msra.mxu0 %v336
    %1503 = vmatprep.subr.mxu0 0.0
    %1504 = vmatpush1.msra.mxu0 %v337
    %1505 = vmatprep.subr.mxu0 0.0
    %1506 = vmatpush1.msra.mxu0 %v338
    %1507 = vmatprep.subr.mxu0 0.0
    %1508 = vmatpush1.msra.mxu0 %v339
    %1509 = vmatprep.subr.mxu0 0.0
    %1510 = vmatpush1.msra.mxu0 %v340
    %1511 = vmatprep.subr.mxu0 0.0
    %1512 = vmatpush1.msra.mxu0 %v341
    %1513 = vmatprep.subr.mxu0 0.0
    %1514 = vmatpush1.msra.mxu0 %v342
    %1515 = vmatprep.subr.mxu0 0.0
    %1516 = vmatpush1.msra.mxu0 %v343
    %1517 = vmatprep.subr.mxu0 0.0
    %1518 = vmatpush1.msra.mxu0 %v344
    %1519 = vmatprep.subr.mxu0 0.0
    %1520 = vmatpush1.msra.mxu0 %v345
    %1521 = vmatprep.subr.mxu0 0.0
    %1522 = vmatpush1.msra.mxu0 %v346
    %1523 = vmatprep.subr.mxu0 0.0
    %1524 = vmatpush1.msra.mxu0 %v347
    %1525 = vmatprep.subr.mxu0 0.0
    %1526 = vmatpush1.msra.mxu0 %v348
    %1527 = vmatprep.subr.mxu0 0.0
    %1528 = vmatpush1.msra.mxu0 %v349
    %1529 = vmatprep.subr.mxu0 0.0
    %1530 = vmatpush1.msra.mxu0 %v350
    %1531 = vmatprep.subr.mxu0 0.0
    %1532 = vmatpush1.msra.mxu0 %v351
    %1533 = vmatprep.subr.mxu0 0.0
    %1534 = vmatpush1.msra.mxu0 %v352
    %1535 = vmatprep.subr.mxu0 0.0
    %1536 = vmatpush1.msra.mxu0 %v353
    %1537 = vmatprep.subr.mxu0 0.0
    %1538 = vmatpush1.msra.mxu0 %v354
    %1539 = vmatprep.subr.mxu0 0.0
    %1540 = vmatpush1.msra.mxu0 %v355
    %1541 = vmatprep.subr.mxu0 0.0
    %1542 = vmatpush1.msra.mxu0 %v356
    %1543 = vmatprep.subr.mxu0 0.0
    %1544 = vmatpush1.msra.mxu0 %v357
    %1545 = vmatprep.subr.mxu0 0.0
    %1546 = vmatpush1.msra.mxu0 %v358
    %1547 = vmatprep.subr.mxu0 0.0
    %1548 = vmatpush1.msra.mxu0 %v359
    %1549 = vmatprep.subr.mxu0 0.0
    %1550 = vmatpush1.msra.mxu0 %v360
    %1551 = vmatprep.mubr.f32.mxu0 %v1020
    %1552 = vmatmul.mubr.f32.gmra.mrb[0].mxu0 %v1019
    %v1553 = vpop.f32.mrb[0].mxu0
    %v1554 = vadd.f32 %v1479, %v1553
    %v1555 = vpop.f32.mrb[0].mxu0
    %1556 = vmatprep.mubr.f32.mxu0 %v1035
    %1557 = vmatmul.mubr.f32.gmra.mrb[0].mxu0 %v1034
    %v1558 = vpop.f32.mrb[0].mxu0
    %v1559 = vadd.f32 %v1484, %v1558
    %v1560 = vpop.f32.mrb[0].mxu0
    %1561 = vdwg.mxu0
    %1562 = vmatprep.subr.mxu0 0.0
    %1563 = vmatpush1.msra.mxu0 %v361
    %1564 = vmatprep.subr.mxu0 0.0
    %1565 = vmatpush1.msra.mxu0 %v362
    %1566 = vmatprep.subr.mxu0 0.0
    %1567 = vmatpush1.msra.mxu0 %v363
    %1568 = vmatprep.subr.mxu0 0.0
    %1569 = vmatpush1.msra.mxu0 %v364
    %1570 = vmatprep.subr.mxu0 0.0
    %1571 = vmatpush1.msra.mxu0 %v365
    %1572 = vmatprep.subr.mxu0 0.0
    %1573 = vmatpush1.msra.mxu0 %v366
    %1574 = vmatprep.subr.mxu0 0.0
    %1575 = vmatpush1.msra.mxu0 %v367
    %1576 = vmatprep.subr.mxu0 0.0
    %1577 = vmatpush1.msra.mxu0 %v368
    %1578 = vmatprep.subr.mxu0 0.0
    %1579 = vmatpush1.msra.mxu0 %v369
    %1580 = vmatprep.subr.mxu0 0.0
    %1581 = vmatpush1.msra.mxu0 %v370
    %1582 = vmatprep.subr.mxu0 0.0
    %1583 = vmatpush1.msra.mxu0 %v371
    %1584 = vmatprep.subr.mxu0 0.0
    %1585 = vmatpush1.msra.mxu0 %v372
    %1586 = vmatprep.subr.mxu0 0.0
    %1587 = vmatpush1.msra.mxu0 %v373
    %1588 = vmatprep.subr.mxu0 0.0
    %1589 = vmatpush1.msra.mxu0 %v374
    %1590 = vmatprep.subr.mxu0 0.0
    %1591 = vmatpush1.msra.mxu0 %v375
    %1592 = vmatprep.subr.mxu0 0.0
    %1593 = vmatpush1.msra.mxu0 %v376
    %1594 = vmatprep.subr.mxu0 0.0
    %1595 = vmatpush1.msra.mxu0 0.0
    %1596 = vmatprep.subr.mxu0 0.0
    %1597 = vmatpush1.msra.mxu0 0.0
    %1598 = vmatprep.subr.mxu0 0.0
    %1599 = vmatpush1.msra.mxu0 0.0
    %1600 = vmatprep.subr.mxu0 0.0
    %1601 = vmatpush1.msra.mxu0 0.0
    %1602 = vmatprep.subr.mxu0 0.0
    %1603 = vmatpush1.msra.mxu0 0.0
    %1604 = vmatprep.subr.mxu0 0.0
    %1605 = vmatpush1.msra.mxu0 0.0
    %1606 = vmatprep.subr.mxu0 0.0
    %1607 = vmatpush1.msra.mxu0 0.0
    %1608 = vmatprep.subr.mxu0 0.0
    %1609 = vmatpush1.msra.mxu0 0.0
    %1610 = vmatprep.subr.mxu0 0.0
    %1611 = vmatpush1.msra.mxu0 0.0
    %1612 = vmatprep.subr.mxu0 0.0
    %1613 = vmatpush1.msra.mxu0 0.0
    %1614 = vmatprep.subr.mxu0 0.0
    %1615 = vmatpush1.msra.mxu0 0.0
    %1616 = vmatprep.subr.mxu0 0.0
    %1617 = vmatpush1.msra.mxu0 0.0
    %1618 = vmatprep.subr.mxu0 0.0
    %1619 = vmatpush1.msra.mxu0 0.0
    %1620 = vmatprep.subr.mxu0 0.0
    %1621 = vmatpush1.msra.mxu0 0.0
    %1622 = vmatprep.subr.mxu0 0.0
    %1623 = vmatpush1.msra.mxu0 0.0
    %1624 = vmatprep.subr.mxu0 0.0
    %1625 = vmatpush1.msra.mxu0 0.0
    %1626 = vmatprep.mubr.f32.mxu0 0.0
    %1627 = vmatmul.mubr.f32.gmra.mrb[0].mxu0 %v1021
    %v1628 = vpop.f32.mrb[0].mxu0
    %v1629 = vadd.f32 %v1554, %v1628
    %v1630 = vpop.f32.mrb[0].mxu0
    %1631 = vmatprep.mubr.f32.mxu0 0.0
    %1632 = vmatmul.mubr.f32.gmra.mrb[0].mxu0 %v1036
    %v1633 = vpop.f32.mrb[0].mxu0
    %v1634 = vadd.f32 %v1559, %v1633
    %v1635 = vpop.f32.mrb[0].mxu0
    %1636 = vdwg.mxu0
    %v1637 = vld [vmem:[%s0 + $0xc0] sm:$0xff]
    %v1638 = vld [vmem:[%s0 + $0xc8] sm:$0xff]
    %v1639 = vld [vmem:[%s0 + $0xd0] sm:$0xff]
    %v1640 = vld [vmem:[%s0 + $0xd8] sm:$0xff]
    %v1641 = vld [vmem:[%s0 + $0xe0] sm:$0xff]
    %v1642 = vld [vmem:[%s0 + $0xe8] sm:$0xff]
    %v1643 = vld [vmem:[%s0 + $0xf0] sm:$0xff]
    %v1644 = vld [vmem:[%s0 + $0xf8] sm:$0xff]
    %v1645 = vld [vmem:[%s0 + $0x100] sm:$0xff]
    %v1646 = vld [vmem:[%s0 + $0x108] sm:$0xff]
    %v1647 = vld [vmem:[%s0 + $0x110] sm:$0xff]
    %v1648 = vld [vmem:[%s0 + $0x118] sm:$0xff]
    %v1649 = vld [vmem:[%s0 + $0x120] sm:$0xff]
    %v1650 = vld [vmem:[%s0 + $0x128] sm:$0xff]
    %v1651 = vld [vmem:[%s0 + $0x130] sm:$0xff]
    %v1652 = vld [vmem:[%s0 + $0x378] sm:$0xff]
    %v1653 = vld [vmem:[%s0 + $0x380] sm:$0xff]
    %v1654 = vld [vmem:[%s0 + $0x388] sm:$0xff]
    %v1655 = vld [vmem:[%s0 + $0x390] sm:$0xff]
    %v1656 = vld [vmem:[%s0 + $0x398] sm:$0xff]
    %v1657 = vld [vmem:[%s0 + $0x3a0] sm:$0xff]
    %v1658 = vld [vmem:[%s0 + $0x3a8] sm:$0xff]
    %v1659 = vld [vmem:[%s0 + $0x3b0] sm:$0xff]
    %v1660 = vld [vmem:[%s0 + $0x3b8] sm:$0xff]
    %v1661 = vld [vmem:[%s0 + $0x3c0] sm:$0xff]
    %v1662 = vld [vmem:[%s0 + $0x3c8] sm:$0xff]
    %v1663 = vld [vmem:[%s0 + $0x3d0] sm:$0xff]
    %v1664 = vld [vmem:[%s0 + $0x3d8] sm:$0xff]
    %v1665 = vld [vmem:[%s0 + $0x3e0] sm:$0xff]
    %v1666 = vld [vmem:[%s0 + $0x3e8] sm:$0xff]
    %1667 = vmatprep.subr.mxu0 0.0
    %1668 = vmatpush1.msra.mxu0 %v137
    %1669 = vmatprep.subr.mxu0 0.0
    %1670 = vmatpush1.msra.mxu0 %v138
    %1671 = vmatprep.subr.mxu0 0.0
    %1672 = vmatpush1.msra.mxu0 %v139
    %1673 = vmatprep.subr.mxu0 0.0
    %1674 = vmatpush1.msra.mxu0 %v140
    %1675 = vmatprep.subr.mxu0 0.0
    %1676 = vmatpush1.msra.mxu0 %v141
    %1677 = vmatprep.subr.mxu0 0.0
    %1678 = vmatpush1.msra.mxu0 %v142
    %1679 = vmatprep.subr.mxu0 0.0
    %1680 = vmatpush1.msra.mxu0 %v143
    %1681 = vmatprep.subr.mxu0 0.0
    %1682 = vmatpush1.msra.mxu0 %v144
    %1683 = vmatprep.subr.mxu0 0.0
    %1684 = vmatpush1.msra.mxu0 %v145
    %1685 = vmatprep.subr.mxu0 0.0
    %1686 = vmatpush1.msra.mxu0 %v146
    %1687 = vmatprep.subr.mxu0 0.0
    %1688 = vmatpush1.msra.mxu0 %v147
    %1689 = vmatprep.subr.mxu0 0.0
    %1690 = vmatpush1.msra.mxu0 %v148
    %1691 = vmatprep.subr.mxu0 0.0
    %1692 = vmatpush1.msra.mxu0 %v149
    %1693 = vmatprep.subr.mxu0 0.0
    %1694 = vmatpush1.msra.mxu0 %v150
    %1695 = vmatprep.subr.mxu0 0.0
    %1696 = vmatpush1.msra.mxu0 %v151
    %1697 = vmatprep.subr.mxu0 0.0
    %1698 = vmatpush1.msra.mxu0 %v152
    %1699 = vmatprep.subr.mxu0 0.0
    %1700 = vmatpush1.msra.mxu0 %v153
    %1701 = vmatprep.subr.mxu0 0.0
    %1702 = vmatpush1.msra.mxu0 %v154
    %1703 = vmatprep.subr.mxu0 0.0
    %1704 = vmatpush1.msra.mxu0 %v155
    %1705 = vmatprep.subr.mxu0 0.0
    %1706 = vmatpush1.msra.mxu0 %v156
    %1707 = vmatprep.subr.mxu0 0.0
    %1708 = vmatpush1.msra.mxu0 %v157
    %1709 = vmatprep.subr.mxu0 0.0
    %1710 = vmatpush1.msra.mxu0 %v158
    %1711 = vmatprep.subr.mxu0 0.0
    %1712 = vmatpush1.msra.mxu0 %v159
    %1713 = vmatprep.subr.mxu0 0.0
    %1714 = vmatpush1.msra.mxu0 %v160
    %1715 = vmatprep.subr.mxu0 0.0
    %1716 = vmatpush1.msra.mxu0 %v161
    %1717 = vmatprep.subr.mxu0 0.0
    %1718 = vmatpush1.msra.mxu0 %v162
    %1719 = vmatprep.subr.mxu0 0.0
    %1720 = vmatpush1.msra.mxu0 %v163
    %1721 = vmatprep.subr.mxu0 0.0
    %1722 = vmatpush1.msra.mxu0 %v164
    %1723 = vmatprep.subr.mxu0 0.0
    %1724 = vmatpush1.msra.mxu0 %v165
    %1725 = vmatprep.subr.mxu0 0.0
    %1726 = vmatpush1.msra.mxu0 %v166
    %1727 = vmatprep.subr.mxu0 0.0
    %1728 = vmatpush1.msra.mxu0 %v167
    %1729 = vmatprep.subr.mxu0 0.0
    %1730 = vmatpush1.msra.mxu0 %v168
    %1731 = vmatprep.mubr.f32.mxu0 %v1638
    %1732 = vmatmul.mubr.f32.gmra.mrb[0].mxu0 %v1637
    %v1733 = vpop.f32.mrb[0].mxu0
    %v1734 = vadd.f32 0.0, %v1733
    %v1735 = vpop.f32.mrb[0].mxu0
    %1736 = vmatprep.mubr.f32.mxu0 %v1653
    %1737 = vmatmul.mubr.f32.gmra.mrb[0].mxu0 %v1652
    %v1738 = vpop.f32.mrb[0].mxu0
    %v1739 = vadd.f32 0.0, %v1738
    %v1740 = vpop.f32.mrb[0].mxu0
    %1741 = vdwg.mxu0
    %1742 = vmatprep.subr.mxu0 0.0
    %1743 = vmatpush1.msra.mxu0 %v169
    %1744 = vmatprep.subr.mxu0 0.0
    %1745 = vmatpush1.msra.mxu0 %v170
    %1746 = vmatprep.subr.mxu0 0.0
    %1747 = vmatpush1.msra.mxu0 %v171
    %1748 = vmatprep.subr.mxu0 0.0
    %1749 = vmatpush1.msra.mxu0 %v172
    %1750 = vmatprep.subr.mxu0 0.0
    %1751 = vmatpush1.msra.mxu0 %v173
    %1752 = vmatprep.subr.mxu0 0.0
    %1753 = vmatpush1.msra.mxu0 %v174
    %1754 = vmatprep.subr.mxu0 0.0
    %1755 = vmatpush1.msra.mxu0 %v175
    %1756 = vmatprep.subr.mxu0 0.0
    %1757 = vmatpush1.msra.mxu0 %v176
    %1758 = vmatprep.subr.mxu0 0.0
    %1759 = vmatpush1.msra.mxu0 %v177
    %1760 = vmatprep.subr.mxu0 0.0
    %1761 = vmatpush1.msra.mxu0 %v178
    %1762 = vmatprep.subr.mxu0 0.0
    %1763 = vmatpush1.msra.mxu0 %v179
    %1764 = vmatprep.subr.mxu0 0.0
    %1765 = vmatpush1.msra.mxu0 %v180
    %1766 = vmatprep.subr.mxu0 0.0
    %1767 = vmatpush1.msra.mxu0 %v181
    %1768 = vmatprep.subr.mxu0 0.0
    %1769 = vmatpush1.msra.mxu0 %v182
    %1770 = vmatprep.subr.mxu0 0.0
    %1771 = vmatpush1.msra.mxu0 %v183
    %1772 = vmatprep.subr.mxu0 0.0
    %1773 = vmatpush1.msra.mxu0 %v184
    %1774 = vmatprep.subr.mxu0 0.0
    %1775 = vmatpush1.msra.mxu0 %v185
    %1776 = vmatprep.subr.mxu0 0.0
    %1777 = vmatpush1.msra.mxu0 %v186
    %1778 = vmatprep.subr.mxu0 0.0
    %1779 = vmatpush1.msra.mxu0 %v187
    %1780 = vmatprep.subr.mxu0 0.0
    %1781 = vmatpush1.msra.mxu0 %v188
    %1782 = vmatprep.subr.mxu0 0.0
    %1783 = vmatpush1.msra.mxu0 %v189
    %1784 = vmatprep.subr.mxu0 0.0
    %1785 = vmatpush1.msra.mxu0 %v190
    %1786 = vmatprep.subr.mxu0 0.0
    %1787 = vmatpush1.msra.mxu0 %v191
    %1788 = vmatprep.subr.mxu0 0.0
    %1789 = vmatpush1.msra.mxu0 %v192
    %1790 = vmatprep.subr.mxu0 0.0
    %1791 = vmatpush1.msra.mxu0 %v193
    %1792 = vmatprep.subr.mxu0 0.0
    %1793 = vmatpush1.msra.mxu0 %v194
    %1794 = vmatprep.subr.mxu0 0.0
    %1795 = vmatpush1.msra.mxu0 %v195
    %1796 = vmatprep.subr.mxu0 0.0
    %1797 = vmatpush1.msra.mxu0 %v196
    %1798 = vmatprep.subr.mxu0 0.0
    %1799 = vmatpush1.msra.mxu0 %v197
    %1800 = vmatprep.subr.mxu0 0.0
    %1801 = vmatpush1.msra.mxu0 %v198
    %1802 = vmatprep.subr.mxu0 0.0
    %1803 = vmatpush1.msra.mxu0 %v199
    %1804 = vmatprep.subr.mxu0 0.0
    %1805 = vmatpush1.msra.mxu0 %v200
    %1806 = vmatprep.mubr.f32.mxu0 %v1640
    %1807 = vmatmul.mubr.f32.gmra.mrb[0].mxu0 %v1639
    %v1808 = vpop.f32.mrb[0].mxu0
    %v1809 = vadd.f32 %v1734, %v1808
    %v1810 = vpop.f32.mrb[0].mxu0
    %1811 = vmatprep.mubr.f32.mxu0 %v1655
    %1812 = vmatmul.mubr.f32.gmra.mrb[0].mxu0 %v1654
    %v1813 = vpop.f32.mrb[0].mxu0
    %v1814 = vadd.f32 %v1739, %v1813
    %v1815 = vpop.f32.mrb[0].mxu0
    %1816 = vdwg.mxu0
    %1817 = vmatprep.subr.mxu0 0.0
    %1818 = vmatpush1.msra.mxu0 %v201
    %1819 = vmatprep.subr.mxu0 0.0
    %1820 = vmatpush1.msra.mxu0 %v202
    %1821 = vmatprep.subr.mxu0 0.0
    %1822 = vmatpush1.msra.mxu0 %v203
    %1823 = vmatprep.subr.mxu0 0.0
    %1824 = vmatpush1.msra.mxu0 %v204
    %1825 = vmatprep.subr.mxu0 0.0
    %1826 = vmatpush1.msra.mxu0 %v205
    %1827 = vmatprep.subr.mxu0 0.0
    %1828 = vmatpush1.msra.mxu0 %v206
    %1829 = vmatprep.subr.mxu0 0.0
    %1830 = vmatpush1.msra.mxu0 %v207
    %1831 = vmatprep.subr.mxu0 0.0
    %1832 = vmatpush1.msra.mxu0 %v208
    %1833 = vmatprep.subr.mxu0 0.0
    %1834 = vmatpush1.msra.mxu0 %v209
    %1835 = vmatprep.subr.mxu0 0.0
    %1836 = vmatpush1.msra.mxu0 %v210
    %1837 = vmatprep.subr.mxu0 0.0
    %1838 = vmatpush1.msra.mxu0 %v211
    %1839 = vmatprep.subr.mxu0 0.0
    %1840 = vmatpush1.msra.mxu0 %v212
    %1841 = vmatprep.subr.mxu0 0.0
    %1842 = vmatpush1.msra.mxu0 %v213
    %1843 = vmatprep.subr.mxu0 0.0
    %1844 = vmatpush1.msra.mxu0 %v214
    %1845 = vmatprep.subr.mxu0 0.0
    %1846 = vmatpush1.msra.mxu0 %v215
    %1847 = vmatprep.subr.mxu0 0.0
    %1848 = vmatpush1.msra.mxu0 %v216
    %1849 = vmatprep.subr.mxu0 0.0
    %1850 = vmatpush1.msra.mxu0 %v217
    %1851 = vmatprep.subr.mxu0 0.0
    %1852 = vmatpush1.msra.mxu0 %v218
    %1853 = vmatprep.subr.mxu0 0.0
    %1854 = vmatpush1.msra.mxu0 %v219
    %1855 = vmatprep.subr.mxu0 0.0
    %1856 = vmatpush1.msra.mxu0 %v220
    %1857 = vmatprep.subr.mxu0 0.0
    %1858 = vmatpush1.msra.mxu0 %v221
    %1859 = vmatprep.subr.mxu0 0.0
    %1860 = vmatpush1.msra.mxu0 %v222
    %1861 = vmatprep.subr.mxu0 0.0
    %1862 = vmatpush1.msra.mxu0 %v223
    %1863 = vmatprep.subr.mxu0 0.0
    %1864 = vmatpush1.msra.mxu0 %v224
    %1865 = vmatprep.subr.mxu0 0.0
    %1866 = vmatpush1.msra.mxu0 %v225
    %1867 = vmatprep.subr.mxu0 0.0
    %1868 = vmatpush1.msra.mxu0 %v226
    %1869 = vmatprep.subr.mxu0 0.0
    %1870 = vmatpush1.msra.mxu0 %v227
    %1871 = vmatprep.subr.mxu0 0.0
    %1872 = vmatpush1.msra.mxu0 %v228
    %1873 = vmatprep.subr.mxu0 0.0
    %1874 = vmatpush1.msra.mxu0 %v229
    %1875 = vmatprep.subr.mxu0 0.0
    %1876 = vmatpush1.msra.mxu0 %v230
    %1877 = vmatprep.subr.mxu0 0.0
    %1878 = vmatpush1.msra.mxu0 %v231
    %1879 = vmatprep.subr.mxu0 0.0
    %1880 = vmatpush1.msra.mxu0 %v232
    %1881 = vmatprep.mubr.f32.mxu0 %v1642
    %1882 = vmatmul.mubr.f32.gmra.mrb[0].mxu0 %v1641
    %v1883 = vpop.f32.mrb[0].mxu0
    %v1884 = vadd.f32 %v1809, %v1883
    %v1885 = vpop.f32.mrb[0].mxu0
    %1886 = vmatprep.mubr.f32.mxu0 %v1657
    %1887 = vmatmul.mubr.f32.gmra.mrb[0].mxu0 %v1656
    %v1888 = vpop.f32.mrb[0].mxu0
    %v1889 = vadd.f32 %v1814, %v1888
    %v1890 = vpop.f32.mrb[0].mxu0
    %1891 = vdwg.mxu0
    %1892 = vmatprep.subr.mxu0 0.0
    %1893 = vmatpush1.msra.mxu0 %v233
    %1894 = vmatprep.subr.mxu0 0.0
    %1895 = vmatpush1.msra.mxu0 %v234
    %1896 = vmatprep.subr.mxu0 0.0
    %1897 = vmatpush1.msra.mxu0 %v235
    %1898 = vmatprep.subr.mxu0 0.0
    %1899 = vmatpush1.msra.mxu0 %v236
    %1900 = vmatprep.subr.mxu0 0.0
    %1901 = vmatpush1.msra.mxu0 %v237
    %1902 = vmatprep.subr.mxu0 0.0
    %1903 = vmatpush1.msra.mxu0 %v238
    %1904 = vmatprep.subr.mxu0 0.0
    %1905 = vmatpush1.msra.mxu0 %v239
    %1906 = vmatprep.subr.mxu0 0.0
    %1907 = vmatpush1.msra.mxu0 %v240
    %1908 = vmatprep.subr.mxu0 0.0
    %1909 = vmatpush1.msra.mxu0 %v241
    %1910 = vmatprep.subr.mxu0 0.0
    %1911 = vmatpush1.msra.mxu0 %v242
    %1912 = vmatprep.subr.mxu0 0.0
    %1913 = vmatpush1.msra.mxu0 %v243
    %1914 = vmatprep.subr.mxu0 0.0
    %1915 = vmatpush1.msra.mxu0 %v244
    %1916 = vmatprep.subr.mxu0 0.0
    %1917 = vmatpush1.msra.mxu0 %v245
    %1918 = vmatprep.subr.mxu0 0.0
    %1919 = vmatpush1.msra.mxu0 %v246
    %1920 = vmatprep.subr.mxu0 0.0
    %1921 = vmatpush1.msra.mxu0 %v247
    %1922 = vmatprep.subr.mxu0 0.0
    %1923 = vmatpush1.msra.mxu0 %v248
    %1924 = vmatprep.subr.mxu0 0.0
    %1925 = vmatpush1.msra.mxu0 %v249
    %1926 = vmatprep.subr.mxu0 0.0
    %1927 = vmatpush1.msra.mxu0 %v250
    %1928 = vmatprep.subr.mxu0 0.0
    %1929 = vmatpush1.msra.mxu0 %v251
    %1930 = vmatprep.subr.mxu0 0.0
    %1931 = vmatpush1.msra.mxu0 %v252
    %1932 = vmatprep.subr.mxu0 0.0
    %1933 = vmatpush1.msra.mxu0 %v253
    %1934 = vmatprep.subr.mxu0 0.0
    %1935 = vmatpush1.msra.mxu0 %v254
    %1936 = vmatprep.subr.mxu0 0.0
    %1937 = vmatpush1.msra.mxu0 %v255
    %1938 = vmatprep.subr.mxu0 0.0
    %1939 = vmatpush1.msra.mxu0 %v256
    %1940 = vmatprep.subr.mxu0 0.0
    %1941 = vmatpush1.msra.mxu0 %v257
    %1942 = vmatprep.subr.mxu0 0.0
    %1943 = vmatpush1.msra.mxu0 %v258
    %1944 = vmatprep.subr.mxu0 0.0
    %1945 = vmatpush1.msra.mxu0 %v259
    %1946 = vmatprep.subr.mxu0 0.0
    %1947 = vmatpush1.msra.mxu0 %v260
    %1948 = vmatprep.subr.mxu0 0.0
    %1949 = vmatpush1.msra.mxu0 %v261
    %1950 = vmatprep.subr.mxu0 0.0
    %1951 = vmatpush1.msra.mxu0 %v262
    %1952 = vmatprep.subr.mxu0 0.0
    %1953 = vmatpush1.msra.mxu0 %v263
    %1954 = vmatprep.subr.mxu0 0.0
    %1955 = vmatpush1.msra.mxu0 %v264
    %1956 = vmatprep.mubr.f32.mxu0 %v1644
    %1957 = vmatmul.mubr.f32.gmra.mrb[0].mxu0 %v1643
    %v1958 = vpop.f32.mrb[0].mxu0
    %v1959 = vadd.f32 %v1884, %v1958
    %v1960 = vpop.f32.mrb[0].mxu0
    %1961 = vmatprep.mubr.f32.mxu0 %v1659
    %1962 = vmatmul.mubr.f32.gmra.mrb[0].mxu0 %v1658
    %v1963 = vpop.f32.mrb[0].mxu0
    %v1964 = vadd.f32 %v1889, %v1963
    %v1965 = vpop.f32.mrb[0].mxu0
    %1966 = vdwg.mxu0
    %1967 = vmatprep.subr.mxu0 0.0
    %1968 = vmatpush1.msra.mxu0 %v265
    %1969 = vmatprep.subr.mxu0 0.0
    %1970 = vmatpush1.msra.mxu0 %v266
    %1971 = vmatprep.subr.mxu0 0.0
    %1972 = vmatpush1.msra.mxu0 %v267
    %1973 = vmatprep.subr.mxu0 0.0
    %1974 = vmatpush1.msra.mxu0 %v268
    %1975 = vmatprep.subr.mxu0 0.0
    %1976 = vmatpush1.msra.mxu0 %v269
    %1977 = vmatprep.subr.mxu0 0.0
    %1978 = vmatpush1.msra.mxu0 %v270
    %1979 = vmatprep.subr.mxu0 0.0
    %1980 = vmatpush1.msra.mxu0 %v271
    %1981 = vmatprep.subr.mxu0 0.0
    %1982 = vmatpush1.msra.mxu0 %v272
    %1983 = vmatprep.subr.mxu0 0.0
    %1984 = vmatpush1.msra.mxu0 %v273
    %1985 = vmatprep.subr.mxu0 0.0
    %1986 = vmatpush1.msra.mxu0 %v274
    %1987 = vmatprep.subr.mxu0 0.0
    %1988 = vmatpush1.msra.mxu0 %v275
    %1989 = vmatprep.subr.mxu0 0.0
    %1990 = vmatpush1.msra.mxu0 %v276
    %1991 = vmatprep.subr.mxu0 0.0
    %1992 = vmatpush1.msra.mxu0 %v277
    %1993 = vmatprep.subr.mxu0 0.0
    %1994 = vmatpush1.msra.mxu0 %v278
    %1995 = vmatprep.subr.mxu0 0.0
    %1996 = vmatpush1.msra.mxu0 %v279
    %1997 = vmatprep.subr.mxu0 0.0
    %1998 = vmatpush1.msra.mxu0 %v280
    %1999 = vmatprep.subr.mxu0 0.0
    %2000 = vmatpush1.msra.mxu0 %v281
    %2001 = vmatprep.subr.mxu0 0.0
    %2002 = vmatpush1.msra.mxu0 %v282
    %2003 = vmatprep.subr.mxu0 0.0
    %2004 = vmatpush1.msra.mxu0 %v283
    %2005 = vmatprep.subr.mxu0 0.0
    %2006 = vmatpush1.msra.mxu0 %v284
    %2007 = vmatprep.subr.mxu0 0.0
    %2008 = vmatpush1.msra.mxu0 %v285
    %2009 = vmatprep.subr.mxu0 0.0
    %2010 = vmatpush1.msra.mxu0 %v286
    %2011 = vmatprep.subr.mxu0 0.0
    %2012 = vmatpush1.msra.mxu0 %v287
    %2013 = vmatprep.subr.mxu0 0.0
    %2014 = vmatpush1.msra.mxu0 %v288
    %2015 = vmatprep.subr.mxu0 0.0
    %2016 = vmatpush1.msra.mxu0 %v289
    %2017 = vmatprep.subr.mxu0 0.0
    %2018 = vmatpush1.msra.mxu0 %v290
    %2019 = vmatprep.subr.mxu0 0.0
    %2020 = vmatpush1.msra.mxu0 %v291
    %2021 = vmatprep.subr.mxu0 0.0
    %2022 = vmatpush1.msra.mxu0 %v292
    %2023 = vmatprep.subr.mxu0 0.0
    %2024 = vmatpush1.msra.mxu0 %v293
    %2025 = vmatprep.subr.mxu0 0.0
    %2026 = vmatpush1.msra.mxu0 %v294
    %2027 = vmatprep.subr.mxu0 0.0
    %2028 = vmatpush1.msra.mxu0 %v295
    %2029 = vmatprep.subr.mxu0 0.0
    %2030 = vmatpush1.msra.mxu0 %v296
    %2031 = vmatprep.mubr.f32.mxu0 %v1646
    %2032 = vmatmul.mubr.f32.gmra.mrb[0].mxu0 %v1645
    %v2033 = vpop.f32.mrb[0].mxu0
    %v2034 = vadd.f32 %v1959, %v2033
    %v2035 = vpop.f32.mrb[0].mxu0
    %2036 = vmatprep.mubr.f32.mxu0 %v1661
    %2037 = vmatmul.mubr.f32.gmra.mrb[0].mxu0 %v1660
    %v2038 = vpop.f32.mrb[0].mxu0
    %v2039 = vadd.f32 %v1964, %v2038
    %v2040 = vpop.f32.mrb[0].mxu0
    %2041 = vdwg.mxu0
    %2042 = vmatprep.subr.mxu0 0.0
    %2043 = vmatpush1.msra.mxu0 %v297
    %2044 = vmatprep.subr.mxu0 0.0
    %2045 = vmatpush1.msra.mxu0 %v298
    %2046 = vmatprep.subr.mxu0 0.0
    %2047 = vmatpush1.msra.mxu0 %v299
    %2048 = vmatprep.subr.mxu0 0.0
    %2049 = vmatpush1.msra.mxu0 %v300
    %2050 = vmatprep.subr.mxu0 0.0
    %2051 = vmatpush1.msra.mxu0 %v301
    %2052 = vmatprep.subr.mxu0 0.0
    %2053 = vmatpush1.msra.mxu0 %v302
    %2054 = vmatprep.subr.mxu0 0.0
    %2055 = vmatpush1.msra.mxu0 %v303
    %2056 = vmatprep.subr.mxu0 0.0
    %2057 = vmatpush1.msra.mxu0 %v304
    %2058 = vmatprep.subr.mxu0 0.0
    %2059 = vmatpush1.msra.mxu0 %v305
    %2060 = vmatprep.subr.mxu0 0.0
    %2061 = vmatpush1.msra.mxu0 %v306
    %2062 = vmatprep.subr.mxu0 0.0
    %2063 = vmatpush1.msra.mxu0 %v307
    %2064 = vmatprep.subr.mxu0 0.0
    %2065 = vmatpush1.msra.mxu0 %v308
    %2066 = vmatprep.subr.mxu0 0.0
    %2067 = vmatpush1.msra.mxu0 %v309
    %2068 = vmatprep.subr.mxu0 0.0
    %2069 = vmatpush1.msra.mxu0 %v310
    %2070 = vmatprep.subr.mxu0 0.0
    %2071 = vmatpush1.msra.mxu0 %v311
    %2072 = vmatprep.subr.mxu0 0.0
    %2073 = vmatpush1.msra.mxu0 %v312
    %2074 = vmatprep.subr.mxu0 0.0
    %2075 = vmatpush1.msra.mxu0 %v313
    %2076 = vmatprep.subr.mxu0 0.0
    %2077 = vmatpush1.msra.mxu0 %v314
    %2078 = vmatprep.subr.mxu0 0.0
    %2079 = vmatpush1.msra.mxu0 %v315
    %2080 = vmatprep.subr.mxu0 0.0
    %2081 = vmatpush1.msra.mxu0 %v316
    %2082 = vmatprep.subr.mxu0 0.0
    %2083 = vmatpush1.msra.mxu0 %v317
    %2084 = vmatprep.subr.mxu0 0.0
    %2085 = vmatpush1.msra.mxu0 %v318
    %2086 = vmatprep.subr.mxu0 0.0
    %2087 = vmatpush1.msra.mxu0 %v319
    %2088 = vmatprep.subr.mxu0 0.0
    %2089 = vmatpush1.msra.mxu0 %v320
    %2090 = vmatprep.subr.mxu0 0.0
    %2091 = vmatpush1.msra.mxu0 %v321
    %2092 = vmatprep.subr.mxu0 0.0
    %2093 = vmatpush1.msra.mxu0 %v322
    %2094 = vmatprep.subr.mxu0 0.0
    %2095 = vmatpush1.msra.mxu0 %v323
    %2096 = vmatprep.subr.mxu0 0.0
    %2097 = vmatpush1.msra.mxu0 %v324
    %2098 = vmatprep.subr.mxu0 0.0
    %2099 = vmatpush1.msra.mxu0 %v325
    %2100 = vmatprep.subr.mxu0 0.0
    %2101 = vmatpush1.msra.mxu0 %v326
    %2102 = vmatprep.subr.mxu0 0.0
    %2103 = vmatpush1.msra.mxu0 %v327
    %2104 = vmatprep.subr.mxu0 0.0
    %2105 = vmatpush1.msra.mxu0 %v328
    %2106 = vmatprep.mubr.f32.mxu0 %v1648
    %2107 = vmatmul.mubr.f32.gmra.mrb[0].mxu0 %v1647
    %v2108 = vpop.f32.mrb[0].mxu0
    %v2109 = vadd.f32 %v2034, %v2108
    %v2110 = vpop.f32.mrb[0].mxu0
    %2111 = vmatprep.mubr.f32.mxu0 %v1663
    %2112 = vmatmul.mubr.f32.gmra.mrb[0].mxu0 %v1662
    %v2113 = vpop.f32.mrb[0].mxu0
    %v2114 = vadd.f32 %v2039, %v2113
    %v2115 = vpop.f32.mrb[0].mxu0
    %2116 = vdwg.mxu0
    %2117 = vmatprep.subr.mxu0 0.0
    %2118 = vmatpush1.msra.mxu0 %v329
    %2119 = vmatprep.subr.mxu0 0.0
    %2120 = vmatpush1.msra.mxu0 %v330
    %2121 = vmatprep.subr.mxu0 0.0
    %2122 = vmatpush1.msra.mxu0 %v331
    %2123 = vmatprep.subr.mxu0 0.0
    %2124 = vmatpush1.msra.mxu0 %v332
    %2125 = vmatprep.subr.mxu0 0.0
    %2126 = vmatpush1.msra.mxu0 %v333
    %2127 = vmatprep.subr.mxu0 0.0
    %2128 = vmatpush1.msra.mxu0 %v334
    %2129 = vmatprep.subr.mxu0 0.0
    %2130 = vmatpush1.msra.mxu0 %v335
    %2131 = vmatprep.subr.mxu0 0.0
    %2132 = vmatpush1.msra.mxu0 %v336
    %2133 = vmatprep.subr.mxu0 0.0
    %2134 = vmatpush1.msra.mxu0 %v337
    %2135 = vmatprep.subr.mxu0 0.0
    %2136 = vmatpush1.msra.mxu0 %v338
    %2137 = vmatprep.subr.mxu0 0.0
    %2138 = vmatpush1.msra.mxu0 %v339
    %2139 = vmatprep.subr.mxu0 0.0
    %2140 = vmatpush1.msra.mxu0 %v340
    %2141 = vmatprep.subr.mxu0 0.0
    %2142 = vmatpush1.msra.mxu0 %v341
    %2143 = vmatprep.subr.mxu0 0.0
    %2144 = vmatpush1.msra.mxu0 %v342
    %2145 = vmatprep.subr.mxu0 0.0
    %2146 = vmatpush1.msra.mxu0 %v343
    %2147 = vmatprep.subr.mxu0 0.0
    %2148 = vmatpush1.msra.mxu0 %v344
    %2149 = vmatprep.subr.mxu0 0.0
    %2150 = vmatpush1.msra.mxu0 %v345
    %2151 = vmatprep.subr.mxu0 0.0
    %2152 = vmatpush1.msra.mxu0 %v346
    %2153 = vmatprep.subr.mxu0 0.0
    %2154 = vmatpush1.msra.mxu0 %v347
    %2155 = vmatprep.subr.mxu0 0.0
    %2156 = vmatpush1.msra.mxu0 %v348
    %2157 = vmatprep.subr.mxu0 0.0
    %2158 = vmatpush1.msra.mxu0 %v349
    %2159 = vmatprep.subr.mxu0 0.0
    %2160 = vmatpush1.msra.mxu0 %v350
    %2161 = vmatprep.subr.mxu0 0.0
    %2162 = vmatpush1.msra.mxu0 %v351
    %2163 = vmatprep.subr.mxu0 0.0
    %2164 = vmatpush1.msra.mxu0 %v352
    %2165 = vmatprep.subr.mxu0 0.0
    %2166 = vmatpush1.msra.mxu0 %v353
    %2167 = vmatprep.subr.mxu0 0.0
    %2168 = vmatpush1.msra.mxu0 %v354
    %2169 = vmatprep.subr.mxu0 0.0
    %2170 = vmatpush1.msra.mxu0 %v355
    %2171 = vmatprep.subr.mxu0 0.0
    %2172 = vmatpush1.msra.mxu0 %v356
    %2173 = vmatprep.subr.mxu0 0.0
    %2174 = vmatpush1.msra.mxu0 %v357
    %2175 = vmatprep.subr.mxu0 0.0
    %2176 = vmatpush1.msra.mxu0 %v358
    %2177 = vmatprep.subr.mxu0 0.0
    %2178 = vmatpush1.msra.mxu0 %v359
    %2179 = vmatprep.subr.mxu0 0.0
    %2180 = vmatpush1.msra.mxu0 %v360
    %2181 = vmatprep.mubr.f32.mxu0 %v1650
    %2182 = vmatmul.mubr.f32.gmra.mrb[0].mxu0 %v1649
    %v2183 = vpop.f32.mrb[0].mxu0
    %v2184 = vadd.f32 %v2109, %v2183
    %v2185 = vpop.f32.mrb[0].mxu0
    %2186 = vmatprep.mubr.f32.mxu0 %v1665
    %2187 = vmatmul.mubr.f32.gmra.mrb[0].mxu0 %v1664
    %v2188 = vpop.f32.mrb[0].mxu0
    %v2189 = vadd.f32 %v2114, %v2188
    %v2190 = vpop.f32.mrb[0].mxu0
    %2191 = vdwg.mxu0
    %2192 = vmatprep.subr.mxu0 0.0
    %2193 = vmatpush1.msra.mxu0 %v361
    %2194 = vmatprep.subr.mxu0 0.0
    %2195 = vmatpush1.msra.mxu0 %v362
    %2196 = vmatprep.subr.mxu0 0.0
    %2197 = vmatpush1.msra.mxu0 %v363
    %2198 = vmatprep.subr.mxu0 0.0
    %2199 = vmatpush1.msra.mxu0 %v364
    %2200 = vmatprep.subr.mxu0 0.0
    %2201 = vmatpush1.msra.mxu0 %v365
    %2202 = vmatprep.subr.mxu0 0.0
    %2203 = vmatpush1.msra.mxu0 %v366
    %2204 = vmatprep.subr.mxu0 0.0
    %2205 = vmatpush1.msra.mxu0 %v367
    %2206 = vmatprep.subr.mxu0 0.0
    %2207 = vmatpush1.msra.mxu0 %v368
    %2208 = vmatprep.subr.mxu0 0.0
    %2209 = vmatpush1.msra.mxu0 %v369
    %2210 = vmatprep.subr.mxu0 0.0
    %2211 = vmatpush1.msra.mxu0 %v370
    %2212 = vmatprep.subr.mxu0 0.0
    %2213 = vmatpush1.msra.mxu0 %v371
    %2214 = vmatprep.subr.mxu0 0.0
    %2215 = vmatpush1.msra.mxu0 %v372
    %2216 = vmatprep.subr.mxu0 0.0
    %2217 = vmatpush1.msra.mxu0 %v373
    %2218 = vmatprep.subr.mxu0 0.0
    %2219 = vmatpush1.msra.mxu0 %v374
    %2220 = vmatprep.subr.mxu0 0.0
    %2221 = vmatpush1.msra.mxu0 %v375
    %2222 = vmatprep.subr.mxu0 0.0
    %2223 = vmatpush1.msra.mxu0 %v376
    %2224 = vmatprep.subr.mxu0 0.0
    %2225 = vmatpush1.msra.mxu0 0.0
    %2226 = vmatprep.subr.mxu0 0.0
    %2227 = vmatpush1.msra.mxu0 0.0
    %2228 = vmatprep.subr.mxu0 0.0
    %2229 = vmatpush1.msra.mxu0 0.0
    %2230 = vmatprep.subr.mxu0 0.0
    %2231 = vmatpush1.msra.mxu0 0.0
    %2232 = vmatprep.subr.mxu0 0.0
    %2233 = vmatpush1.msra.mxu0 0.0
    %2234 = vmatprep.subr.mxu0 0.0
    %2235 = vmatpush1.msra.mxu0 0.0
    %2236 = vmatprep.subr.mxu0 0.0
    %2237 = vmatpush1.msra.mxu0 0.0
    %2238 = vmatprep.subr.mxu0 0.0
    %2239 = vmatpush1.msra.mxu0 0.0
    %2240 = vmatprep.subr.mxu0 0.0
    %2241 = vmatpush1.msra.mxu0 0.0
    %2242 = vmatprep.subr.mxu0 0.0
    %2243 = vmatpush1.msra.mxu0 0.0
    %2244 = vmatprep.subr.mxu0 0.0
    %2245 = vmatpush1.msra.mxu0 0.0
    %2246 = vmatprep.subr.mxu0 0.0
    %2247 = vmatpush1.msra.mxu0 0.0
    %2248 = vmatprep.subr.mxu0 0.0
    %2249 = vmatpush1.msra.mxu0 0.0
    %2250 = vmatprep.subr.mxu0 0.0
    %2251 = vmatpush1.msra.mxu0 0.0
    %2252 = vmatprep.subr.mxu0 0.0
    %2253 = vmatpush1.msra.mxu0 0.0
    %2254 = vmatprep.subr.mxu0 0.0
    %2255 = vmatpush1.msra.mxu0 0.0
    %2256 = vmatprep.mubr.f32.mxu0 0.0
    %2257 = vmatmul.mubr.f32.gmra.mrb[0].mxu0 %v1651
    %v2258 = vpop.f32.mrb[0].mxu0
    %v2259 = vadd.f32 %v2184, %v2258
    %v2260 = vpop.f32.mrb[0].mxu0
    %2261 = vmatprep.mubr.f32.mxu0 0.0
    %2262 = vmatmul.mubr.f32.gmra.mrb[0].mxu0 %v1666
    %v2263 = vpop.f32.mrb[0].mxu0
    %v2264 = vadd.f32 %v2189, %v2263
    %v2265 = vpop.f32.mrb[0].mxu0
    %2266 = vdwg.mxu0
    %v2267 = vld [vmem:[%s0 + $0x120] sm:$0xff]
    %v2268 = vld [vmem:[%s0 + $0x128] sm:$0xff]
    %v2269 = vld [vmem:[%s0 + $0x130] sm:$0xff]
    %v2270 = vld [vmem:[%s0 + $0x138] sm:$0xff]
    %v2271 = vld [vmem:[%s0 + $0x140] sm:$0xff]
    %v2272 = vld [vmem:[%s0 + $0x148] sm:$0xff]
    %v2273 = vld [vmem:[%s0 + $0x150] sm:$0xff]
    %v2274 = vld [vmem:[%s0 + $0x158] sm:$0xff]
    %v2275 = vld [vmem:[%s0 + $0x160] sm:$0xff]
    %v2276 = vld [vmem:[%s0 + $0x168] sm:$0xff]
    %v2277 = vld [vmem:[%s0 + $0x170] sm:$0xff]
    %v2278 = vld [vmem:[%s0 + $0x178] sm:$0xff]
    %v2279 = vld [vmem:[%s0 + $0x180] sm:$0xff]
    %v2280 = vld [vmem:[%s0 + $0x188] sm:$0xff]
    %v2281 = vld [vmem:[%s0 + $0x190] sm:$0xff]
    %v2282 = vld [vmem:[%s0 + $0x3d8] sm:$0xff]
    %v2283 = vld [vmem:[%s0 + $0x3e0] sm:$0xff]
    %v2284 = vld [vmem:[%s0 + $0x3e8] sm:$0xff]
    %v2285 = vld [vmem:[%s0 + $0x3f0] sm:$0xff]
    %v2286 = vld [vmem:[%s0 + $0x3f8] sm:$0xff]
    %v2287 = vld [vmem:[%s0 + $0x400] sm:$0xff]
    %v2288 = vld [vmem:[%s0 + $0x408] sm:$0xff]
    %v2289 = vld [vmem:[%s0 + $0x410] sm:$0xff]
    %v2290 = vld [vmem:[%s0 + $0x418] sm:$0xff]
    %v2291 = vld [vmem:[%s0 + $0x420] sm:$0xff]
    %v2292 = vld [vmem:[%s0 + $0x428] sm:$0xff]
    %v2293 = vld [vmem:[%s0 + $0x430] sm:$0xff]
    %v2294 = vld [vmem:[%s0 + $0x438] sm:$0xff]
    %v2295 = vld [vmem:[%s0 + $0x440] sm:$0xff]
    %v2296 = vld [vmem:[%s0 + $0x448] sm:$0xff]
    %2297 = vmatprep.subr.mxu0 0.0
    %2298 = vmatpush1.msra.mxu0 %v137
    %2299 = vmatprep.subr.mxu0 0.0
    %2300 = vmatpush1.msra.mxu0 %v138
    %2301 = vmatprep.subr.mxu0 0.0
    %2302 = vmatpush1.msra.mxu0 %v139
    %2303 = vmatprep.subr.mxu0 0.0
    %2304 = vmatpush1.msra.mxu0 %v140
    %2305 = vmatprep.subr.mxu0 0.0
    %2306 = vmatpush1.msra.mxu0 %v141
    %2307 = vmatprep.subr.mxu0 0.0
    %2308 = vmatpush1.msra.mxu0 %v142
    %2309 = vmatprep.subr.mxu0 0.0
    %2310 = vmatpush1.msra.mxu0 %v143
    %2311 = vmatprep.subr.mxu0 0.0
    %2312 = vmatpush1.msra.mxu0 %v144
    %2313 = vmatprep.subr.mxu0 0.0
    %2314 = vmatpush1.msra.mxu0 %v145
    %2315 = vmatprep.subr.mxu0 0.0
    %2316 = vmatpush1.msra.mxu0 %v146
    %2317 = vmatprep.subr.mxu0 0.0
    %2318 = vmatpush1.msra.mxu0 %v147
    %2319 = vmatprep.subr.mxu0 0.0
    %2320 = vmatpush1.msra.mxu0 %v148
    %2321 = vmatprep.subr.mxu0 0.0
    %2322 = vmatpush1.msra.mxu0 %v149
    %2323 = vmatprep.subr.mxu0 0.0
    %2324 = vmatpush1.msra.mxu0 %v150
    %2325 = vmatprep.subr.mxu0 0.0
    %2326 = vmatpush1.msra.mxu0 %v151
    %2327 = vmatprep.subr.mxu0 0.0
    %2328 = vmatpush1.msra.mxu0 %v152
    %2329 = vmatprep.subr.mxu0 0.0
    %2330 = vmatpush1.msra.mxu0 %v153
    %2331 = vmatprep.subr.mxu0 0.0
    %2332 = vmatpush1.msra.mxu0 %v154
    %2333 = vmatprep.subr.mxu0 0.0
    %2334 = vmatpush1.msra.mxu0 %v155
    %2335 = vmatprep.subr.mxu0 0.0
    %2336 = vmatpush1.msra.mxu0 %v156
    %2337 = vmatprep.subr.mxu0 0.0
    %2338 = vmatpush1.msra.mxu0 %v157
    %2339 = vmatprep.subr.mxu0 0.0
    %2340 = vmatpush1.msra.mxu0 %v158
    %2341 = vmatprep.subr.mxu0 0.0
    %2342 = vmatpush1.msra.mxu0 %v159
    %2343 = vmatprep.subr.mxu0 0.0
    %2344 = vmatpush1.msra.mxu0 %v160
    %2345 = vmatprep.subr.mxu0 0.0
    %2346 = vmatpush1.msra.mxu0 %v161
    %2347 = vmatprep.subr.mxu0 0.0
    %2348 = vmatpush1.msra.mxu0 %v162
    %2349 = vmatprep.subr.mxu0 0.0
    %2350 = vmatpush1.msra.mxu0 %v163
    %2351 = vmatprep.subr.mxu0 0.0
    %2352 = vmatpush1.msra.mxu0 %v164
    %2353 = vmatprep.subr.mxu0 0.0
    %2354 = vmatpush1.msra.mxu0 %v165
    %2355 = vmatprep.subr.mxu0 0.0
    %2356 = vmatpush1.msra.mxu0 %v166
    %2357 = vmatprep.subr.mxu0 0.0
    %2358 = vmatpush1.msra.mxu0 %v167
    %2359 = vmatprep.subr.mxu0 0.0
    %2360 = vmatpush1.msra.mxu0 %v168
    %2361 = vmatprep.mubr.f32.mxu0 %v2268
    %2362 = vmatmul.mubr.f32.gmra.mrb[0].mxu0 %v2267
    %v2363 = vpop.f32.mrb[0].mxu0
    %v2364 = vadd.f32 0.0, %v2363
    %v2365 = vpop.f32.mrb[0].mxu0
    %2366 = vmatprep.mubr.f32.mxu0 %v2283
    %2367 = vmatmul.mubr.f32.gmra.mrb[0].mxu0 %v2282
    %v2368 = vpop.f32.mrb[0].mxu0
    %v2369 = vadd.f32 0.0, %v2368
    %v2370 = vpop.f32.mrb[0].mxu0
    %2371 = vdwg.mxu0
    %2372 = vmatprep.subr.mxu0 0.0
    %2373 = vmatpush1.msra.mxu0 %v169
    %2374 = vmatprep.subr.mxu0 0.0
    %2375 = vmatpush1.msra.mxu0 %v170
    %2376 = vmatprep.subr.mxu0 0.0
    %2377 = vmatpush1.msra.mxu0 %v171
    %2378 = vmatprep.subr.mxu0 0.0
    %2379 = vmatpush1.msra.mxu0 %v172
    %2380 = vmatprep.subr.mxu0 0.0
    %2381 = vmatpush1.msra.mxu0 %v173
    %2382 = vmatprep.subr.mxu0 0.0
    %2383 = vmatpush1.msra.mxu0 %v174
    %2384 = vmatprep.subr.mxu0 0.0
    %2385 = vmatpush1.msra.mxu0 %v175
    %2386 = vmatprep.subr.mxu0 0.0
    %2387 = vmatpush1.msra.mxu0 %v176
    %2388 = vmatprep.subr.mxu0 0.0
    %2389 = vmatpush1.msra.mxu0 %v177
    %2390 = vmatprep.subr.mxu0 0.0
    %2391 = vmatpush1.msra.mxu0 %v178
    %2392 = vmatprep.subr.mxu0 0.0
    %2393 = vmatpush1.msra.mxu0 %v179
    %2394 = vmatprep.subr.mxu0 0.0
    %2395 = vmatpush1.msra.mxu0 %v180
    %2396 = vmatprep.subr.mxu0 0.0
    %2397 = vmatpush1.msra.mxu0 %v181
    %2398 = vmatprep.subr.mxu0 0.0
    %2399 = vmatpush1.msra.mxu0 %v182
    %2400 = vmatprep.subr.mxu0 0.0
    %2401 = vmatpush1.msra.mxu0 %v183
    %2402 = vmatprep.subr.mxu0 0.0
    %2403 = vmatpush1.msra.mxu0 %v184
    %2404 = vmatprep.subr.mxu0 0.0
    %2405 = vmatpush1.msra.mxu0 %v185
    %2406 = vmatprep.subr.mxu0 0.0
    %2407 = vmatpush1.msra.mxu0 %v186
    %2408 = vmatprep.subr.mxu0 0.0
    %2409 = vmatpush1.msra.mxu0 %v187
    %2410 = vmatprep.subr.mxu0 0.0
    %2411 = vmatpush1.msra.mxu0 %v188
    %2412 = vmatprep.subr.mxu0 0.0
    %2413 = vmatpush1.msra.mxu0 %v189
    %2414 = vmatprep.subr.mxu0 0.0
    %2415 = vmatpush1.msra.mxu0 %v190
    %2416 = vmatprep.subr.mxu0 0.0
    %2417 = vmatpush1.msra.mxu0 %v191
    %2418 = vmatprep.subr.mxu0 0.0
    %2419 = vmatpush1.msra.mxu0 %v192
    %2420 = vmatprep.subr.mxu0 0.0
    %2421 = vmatpush1.msra.mxu0 %v193
    %2422 = vmatprep.subr.mxu0 0.0
    %2423 = vmatpush1.msra.mxu0 %v194
    %2424 = vmatprep.subr.mxu0 0.0
    %2425 = vmatpush1.msra.mxu0 %v195
    %2426 = vmatprep.subr.mxu0 0.0
    %2427 = vmatpush1.msra.mxu0 %v196
    %2428 = vmatprep.subr.mxu0 0.0
    %2429 = vmatpush1.msra.mxu0 %v197
    %2430 = vmatprep.subr.mxu0 0.0
    %2431 = vmatpush1.msra.mxu0 %v198
    %2432 = vmatprep.subr.mxu0 0.0
    %2433 = vmatpush1.msra.mxu0 %v199
    %2434 = vmatprep.subr.mxu0 0.0
    %2435 = vmatpush1.msra.mxu0 %v200
    %2436 = vmatprep.mubr.f32.mxu0 %v2270
    %2437 = vmatmul.mubr.f32.gmra.mrb[0].mxu0 %v2269
    %v2438 = vpop.f32.mrb[0].mxu0
    %v2439 = vadd.f32 %v2364, %v2438
    %v2440 = vpop.f32.mrb[0].mxu0
    %2441 = vmatprep.mubr.f32.mxu0 %v2285
    %2442 = vmatmul.mubr.f32.gmra.mrb[0].mxu0 %v2284
    %v2443 = vpop.f32.mrb[0].mxu0
    %v2444 = vadd.f32 %v2369, %v2443
    %v2445 = vpop.f32.mrb[0].mxu0
    %2446 = vdwg.mxu0
    %2447 = vmatprep.subr.mxu0 0.0
    %2448 = vmatpush1.msra.mxu0 %v201
    %2449 = vmatprep.subr.mxu0 0.0
    %2450 = vmatpush1.msra.mxu0 %v202
    %2451 = vmatprep.subr.mxu0 0.0
    %2452 = vmatpush1.msra.mxu0 %v203
    %2453 = vmatprep.subr.mxu0 0.0
    %2454 = vmatpush1.msra.mxu0 %v204
    %2455 = vmatprep.subr.mxu0 0.0
    %2456 = vmatpush1.msra.mxu0 %v205
    %2457 = vmatprep.subr.mxu0 0.0
    %2458 = vmatpush1.msra.mxu0 %v206
    %2459 = vmatprep.subr.mxu0 0.0
    %2460 = vmatpush1.msra.mxu0 %v207
    %2461 = vmatprep.subr.mxu0 0.0
    %2462 = vmatpush1.msra.mxu0 %v208
    %2463 = vmatprep.subr.mxu0 0.0
    %2464 = vmatpush1.msra.mxu0 %v209
    %2465 = vmatprep.subr.mxu0 0.0
    %2466 = vmatpush1.msra.mxu0 %v210
    %2467 = vmatprep.subr.mxu0 0.0
    %2468 = vmatpush1.msra.mxu0 %v211
    %2469 = vmatprep.subr.mxu0 0.0
    %2470 = vmatpush1.msra.mxu0 %v212
    %2471 = vmatprep.subr.mxu0 0.0
    %2472 = vmatpush1.msra.mxu0 %v213
    %2473 = vmatprep.subr.mxu0 0.0
    %2474 = vmatpush1.msra.mxu0 %v214
    %2475 = vmatprep.subr.mxu0 0.0
    %2476 = vmatpush1.msra.mxu0 %v215
    %2477 = vmatprep.subr.mxu0 0.0
    %2478 = vmatpush1.msra.mxu0 %v216
    %2479 = vmatprep.subr.mxu0 0.0
    %2480 = vmatpush1.msra.mxu0 %v217
    %2481 = vmatprep.subr.mxu0 0.0
    %2482 = vmatpush1.msra.mxu0 %v218
    %2483 = vmatprep.subr.mxu0 0.0
    %2484 = vmatpush1.msra.mxu0 %v219
    %2485 = vmatprep.subr.mxu0 0.0
    %2486 = vmatpush1.msra.mxu0 %v220
    %2487 = vmatprep.subr.mxu0 0.0
    %2488 = vmatpush1.msra.mxu0 %v221
    %2489 = vmatprep.subr.mxu0 0.0
    %2490 = vmatpush1.msra.mxu0 %v222
    %2491 = vmatprep.subr.mxu0 0.0
    %2492 = vmatpush1.msra.mxu0 %v223
    %2493 = vmatprep.subr.mxu0 0.0
    %2494 = vmatpush1.msra.mxu0 %v224
    %2495 = vmatprep.subr.mxu0 0.0
    %2496 = vmatpush1.msra.mxu0 %v225
    %2497 = vmatprep.subr.mxu0 0.0
    %2498 = vmatpush1.msra.mxu0 %v226
    %2499 = vmatprep.subr.mxu0 0.0
    %2500 = vmatpush1.msra.mxu0 %v227
    %2501 = vmatprep.subr.mxu0 0.0
    %2502 = vmatpush1.msra.mxu0 %v228
    %2503 = vmatprep.subr.mxu0 0.0
    %2504 = vmatpush1.msra.mxu0 %v229
    %2505 = vmatprep.subr.mxu0 0.0
    %2506 = vmatpush1.msra.mxu0 %v230
    %2507 = vmatprep.subr.mxu0 0.0
    %2508 = vmatpush1.msra.mxu0 %v231
    %2509 = vmatprep.subr.mxu0 0.0
    %2510 = vmatpush1.msra.mxu0 %v232
    %2511 = vmatprep.mubr.f32.mxu0 %v2272
    %2512 = vmatmul.mubr.f32.gmra.mrb[0].mxu0 %v2271
    %v2513 = vpop.f32.mrb[0].mxu0
    %v2514 = vadd.f32 %v2439, %v2513
    %v2515 = vpop.f32.mrb[0].mxu0
    %2516 = vmatprep.mubr.f32.mxu0 %v2287
    %2517 = vmatmul.mubr.f32.gmra.mrb[0].mxu0 %v2286
    %v2518 = vpop.f32.mrb[0].mxu0
    %v2519 = vadd.f32 %v2444, %v2518
    %v2520 = vpop.f32.mrb[0].mxu0
    %2521 = vdwg.mxu0
    %2522 = vmatprep.subr.mxu0 0.0
    %2523 = vmatpush1.msra.mxu0 %v233
    %2524 = vmatprep.subr.mxu0 0.0
    %2525 = vmatpush1.msra.mxu0 %v234
    %2526 = vmatprep.subr.mxu0 0.0
    %2527 = vmatpush1.msra.mxu0 %v235
    %2528 = vmatprep.subr.mxu0 0.0
    %2529 = vmatpush1.msra.mxu0 %v236
    %2530 = vmatprep.subr.mxu0 0.0
    %2531 = vmatpush1.msra.mxu0 %v237
    %2532 = vmatprep.subr.mxu0 0.0
    %2533 = vmatpush1.msra.mxu0 %v238
    %2534 = vmatprep.subr.mxu0 0.0
    %2535 = vmatpush1.msra.mxu0 %v239
    %2536 = vmatprep.subr.mxu0 0.0
    %2537 = vmatpush1.msra.mxu0 %v240
    %2538 = vmatprep.subr.mxu0 0.0
    %2539 = vmatpush1.msra.mxu0 %v241
    %2540 = vmatprep.subr.mxu0 0.0
    %2541 = vmatpush1.msra.mxu0 %v242
    %2542 = vmatprep.subr.mxu0 0.0
    %2543 = vmatpush1.msra.mxu0 %v243
    %2544 = vmatprep.subr.mxu0 0.0
    %2545 = vmatpush1.msra.mxu0 %v244
    %2546 = vmatprep.subr.mxu0 0.0
    %2547 = vmatpush1.msra.mxu0 %v245
    %2548 = vmatprep.subr.mxu0 0.0
    %2549 = vmatpush1.msra.mxu0 %v246
    %2550 = vmatprep.subr.mxu0 0.0
    %2551 = vmatpush1.msra.mxu0 %v247
    %2552 = vmatprep.subr.mxu0 0.0
    %2553 = vmatpush1.msra.mxu0 %v248
    %2554 = vmatprep.subr.mxu0 0.0
    %2555 = vmatpush1.msra.mxu0 %v249
    %2556 = vmatprep.subr.mxu0 0.0
    %2557 = vmatpush1.msra.mxu0 %v250
    %2558 = vmatprep.subr.mxu0 0.0
    %2559 = vmatpush1.msra.mxu0 %v251
    %2560 = vmatprep.subr.mxu0 0.0
    %2561 = vmatpush1.msra.mxu0 %v252
    %2562 = vmatprep.subr.mxu0 0.0
    %2563 = vmatpush1.msra.mxu0 %v253
    %2564 = vmatprep.subr.mxu0 0.0
    %2565 = vmatpush1.msra.mxu0 %v254
    %2566 = vmatprep.subr.mxu0 0.0
    %2567 = vmatpush1.msra.mxu0 %v255
    %2568 = vmatprep.subr.mxu0 0.0
    %2569 = vmatpush1.msra.mxu0 %v256
    %2570 = vmatprep.subr.mxu0 0.0
    %2571 = vmatpush1.msra.mxu0 %v257
    %2572 = vmatprep.subr.mxu0 0.0
    %2573 = vmatpush1.msra.mxu0 %v258
    %2574 = vmatprep.subr.mxu0 0.0
    %2575 = vmatpush1.msra.mxu0 %v259
    %2576 = vmatprep.subr.mxu0 0.0
    %2577 = vmatpush1.msra.mxu0 %v260
    %2578 = vmatprep.subr.mxu0 0.0
    %2579 = vmatpush1.msra.mxu0 %v261
    %2580 = vmatprep.subr.mxu0 0.0
    %2581 = vmatpush1.msra.mxu0 %v262
    %2582 = vmatprep.subr.mxu0 0.0
    %2583 = vmatpush1.msra.mxu0 %v263
    %2584 = vmatprep.subr.mxu0 0.0
    %2585 = vmatpush1.msra.mxu0 %v264
    %2586 = vmatprep.mubr.f32.mxu0 %v2274
    %2587 = vmatmul.mubr.f32.gmra.mrb[0].mxu0 %v2273
    %v2588 = vpop.f32.mrb[0].mxu0
    %v2589 = vadd.f32 %v2514, %v2588
    %v2590 = vpop.f32.mrb[0].mxu0
    %2591 = vmatprep.mubr.f32.mxu0 %v2289
    %2592 = vmatmul.mubr.f32.gmra.mrb[0].mxu0 %v2288
    %v2593 = vpop.f32.mrb[0].mxu0
    %v2594 = vadd.f32 %v2519, %v2593
    %v2595 = vpop.f32.mrb[0].mxu0
    %2596 = vdwg.mxu0
    %2597 = vmatprep.subr.mxu0 0.0
    %2598 = vmatpush1.msra.mxu0 %v265
    %2599 = vmatprep.subr.mxu0 0.0
    %2600 = vmatpush1.msra.mxu0 %v266
    %2601 = vmatprep.subr.mxu0 0.0
    %2602 = vmatpush1.msra.mxu0 %v267
    %2603 = vmatprep.subr.mxu0 0.0
    %2604 = vmatpush1.msra.mxu0 %v268
    %2605 = vmatprep.subr.mxu0 0.0
    %2606 = vmatpush1.msra.mxu0 %v269
    %2607 = vmatprep.subr.mxu0 0.0
    %2608 = vmatpush1.msra.mxu0 %v270
    %2609 = vmatprep.subr.mxu0 0.0
    %2610 = vmatpush1.msra.mxu0 %v271
    %2611 = vmatprep.subr.mxu0 0.0
    %2612 = vmatpush1.msra.mxu0 %v272
    %2613 = vmatprep.subr.mxu0 0.0
    %2614 = vmatpush1.msra.mxu0 %v273
    %2615 = vmatprep.subr.mxu0 0.0
    %2616 = vmatpush1.msra.mxu0 %v274
    %2617 = vmatprep.subr.mxu0 0.0
    %2618 = vmatpush1.msra.mxu0 %v275
    %2619 = vmatprep.subr.mxu0 0.0
    %2620 = vmatpush1.msra.mxu0 %v276
    %2621 = vmatprep.subr.mxu0 0.0
    %2622 = vmatpush1.msra.mxu0 %v277
    %2623 = vmatprep.subr.mxu0 0.0
    %2624 = vmatpush1.msra.mxu0 %v278
    %2625 = vmatprep.subr.mxu0 0.0
    %2626 = vmatpush1.msra.mxu0 %v279
    %2627 = vmatprep.subr.mxu0 0.0
    %2628 = vmatpush1.msra.mxu0 %v280
    %2629 = vmatprep.subr.mxu0 0.0
    %2630 = vmatpush1.msra.mxu0 %v281
    %2631 = vmatprep.subr.mxu0 0.0
    %2632 = vmatpush1.msra.mxu0 %v282
    %2633 = vmatprep.subr.mxu0 0.0
    %2634 = vmatpush1.msra.mxu0 %v283
    %2635 = vmatprep.subr.mxu0 0.0
    %2636 = vmatpush1.msra.mxu0 %v284
    %2637 = vmatprep.subr.mxu0 0.0
    %2638 = vmatpush1.msra.mxu0 %v285
    %2639 = vmatprep.subr.mxu0 0.0
    %2640 = vmatpush1.msra.mxu0 %v286
    %2641 = vmatprep.subr.mxu0 0.0
    %2642 = vmatpush1.msra.mxu0 %v287
    %2643 = vmatprep.subr.mxu0 0.0
    %2644 = vmatpush1.msra.mxu0 %v288
    %2645 = vmatprep.subr.mxu0 0.0
    %2646 = vmatpush1.msra.mxu0 %v289
    %2647 = vmatprep.subr.mxu0 0.0
    %2648 = vmatpush1.msra.mxu0 %v290
    %2649 = vmatprep.subr.mxu0 0.0
    %2650 = vmatpush1.msra.mxu0 %v291
    %2651 = vmatprep.subr.mxu0 0.0
    %2652 = vmatpush1.msra.mxu0 %v292
    %2653 = vmatprep.subr.mxu0 0.0
    %2654 = vmatpush1.msra.mxu0 %v293
    %2655 = vmatprep.subr.mxu0 0.0
    %2656 = vmatpush1.msra.mxu0 %v294
    %2657 = vmatprep.subr.mxu0 0.0
    %2658 = vmatpush1.msra.mxu0 %v295
    %2659 = vmatprep.subr.mxu0 0.0
    %2660 = vmatpush1.msra.mxu0 %v296
    %2661 = vmatprep.mubr.f32.mxu0 %v2276
    %2662 = vmatmul.mubr.f32.gmra.mrb[0].mxu0 %v2275
    %v2663 = vpop.f32.mrb[0].mxu0
    %v2664 = vadd.f32 %v2589, %v2663
    %v2665 = vpop.f32.mrb[0].mxu0
    %2666 = vmatprep.mubr.f32.mxu0 %v2291
    %2667 = vmatmul.mubr.f32.gmra.mrb[0].mxu0 %v2290
    %v2668 = vpop.f32.mrb[0].mxu0
    %v2669 = vadd.f32 %v2594, %v2668
    %v2670 = vpop.f32.mrb[0].mxu0
    %2671 = vdwg.mxu0
    %2672 = vmatprep.subr.mxu0 0.0
    %2673 = vmatpush1.msra.mxu0 %v297
    %2674 = vmatprep.subr.mxu0 0.0
    %2675 = vmatpush1.msra.mxu0 %v298
    %2676 = vmatprep.subr.mxu0 0.0
    %2677 = vmatpush1.msra.mxu0 %v299
    %2678 = vmatprep.subr.mxu0 0.0
    %2679 = vmatpush1.msra.mxu0 %v300
    %2680 = vmatprep.subr.mxu0 0.0
    %2681 = vmatpush1.msra.mxu0 %v301
    %2682 = vmatprep.subr.mxu0 0.0
    %2683 = vmatpush1.msra.mxu0 %v302
    %2684 = vmatprep.subr.mxu0 0.0
    %2685 = vmatpush1.msra.mxu0 %v303
    %2686 = vmatprep.subr.mxu0 0.0
    %2687 = vmatpush1.msra.mxu0 %v304
    %2688 = vmatprep.subr.mxu0 0.0
    %2689 = vmatpush1.msra.mxu0 %v305
    %2690 = vmatprep.subr.mxu0 0.0
    %2691 = vmatpush1.msra.mxu0 %v306
    %2692 = vmatprep.subr.mxu0 0.0
    %2693 = vmatpush1.msra.mxu0 %v307
    %2694 = vmatprep.subr.mxu0 0.0
    %2695 = vmatpush1.msra.mxu0 %v308
    %2696 = vmatprep.subr.mxu0 0.0
    %2697 = vmatpush1.msra.mxu0 %v309
    %2698 = vmatprep.subr.mxu0 0.0
    %2699 = vmatpush1.msra.mxu0 %v310
    %2700 = vmatprep.subr.mxu0 0.0
    %2701 = vmatpush1.msra.mxu0 %v311
    %2702 = vmatprep.subr.mxu0 0.0
    %2703 = vmatpush1.msra.mxu0 %v312
    %2704 = vmatprep.subr.mxu0 0.0
    %2705 = vmatpush1.msra.mxu0 %v313
    %2706 = vmatprep.subr.mxu0 0.0
    %2707 = vmatpush1.msra.mxu0 %v314
    %2708 = vmatprep.subr.mxu0 0.0
    %2709 = vmatpush1.msra.mxu0 %v315
    %2710 = vmatprep.subr.mxu0 0.0
    %2711 = vmatpush1.msra.mxu0 %v316
    %2712 = vmatprep.subr.mxu0 0.0
    %2713 = vmatpush1.msra.mxu0 %v317
    %2714 = vmatprep.subr.mxu0 0.0
    %2715 = vmatpush1.msra.mxu0 %v318
    %2716 = vmatprep.subr.mxu0 0.0
    %2717 = vmatpush1.msra.mxu0 %v319
    %2718 = vmatprep.subr.mxu0 0.0
    %2719 = vmatpush1.msra.mxu0 %v320
    %2720 = vmatprep.subr.mxu0 0.0
    %2721 = vmatpush1.msra.mxu0 %v321
    %2722 = vmatprep.subr.mxu0 0.0
    %2723 = vmatpush1.msra.mxu0 %v322
    %2724 = vmatprep.subr.mxu0 0.0
    %2725 = vmatpush1.msra.mxu0 %v323
    %2726 = vmatprep.subr.mxu0 0.0
    %2727 = vmatpush1.msra.mxu0 %v324
    %2728 = vmatprep.subr.mxu0 0.0
    %2729 = vmatpush1.msra.mxu0 %v325
    %2730 = vmatprep.subr.mxu0 0.0
    %2731 = vmatpush1.msra.mxu0 %v326
    %2732 = vmatprep.subr.mxu0 0.0
    %2733 = vmatpush1.msra.mxu0 %v327
    %2734 = vmatprep.subr.mxu0 0.0
    %2735 = vmatpush1.msra.mxu0 %v328
    %2736 = vmatprep.mubr.f32.mxu0 %v2278
    %2737 = vmatmul.mubr.f32.gmra.mrb[0].mxu0 %v2277
    %v2738 = vpop.f32.mrb[0].mxu0
    %v2739 = vadd.f32 %v2664, %v2738
    %v2740 = vpop.f32.mrb[0].mxu0
    %2741 = vmatprep.mubr.f32.mxu0 %v2293
    %2742 = vmatmul.mubr.f32.gmra.mrb[0].mxu0 %v2292
    %v2743 = vpop.f32.mrb[0].mxu0
    %v2744 = vadd.f32 %v2669, %v2743
    %v2745 = vpop.f32.mrb[0].mxu0
    %2746 = vdwg.mxu0
    %2747 = vmatprep.subr.mxu0 0.0
    %2748 = vmatpush1.msra.mxu0 %v329
    %2749 = vmatprep.subr.mxu0 0.0
    %2750 = vmatpush1.msra.mxu0 %v330
    %2751 = vmatprep.subr.mxu0 0.0
    %2752 = vmatpush1.msra.mxu0 %v331
    %2753 = vmatprep.subr.mxu0 0.0
    %2754 = vmatpush1.msra.mxu0 %v332
    %2755 = vmatprep.subr.mxu0 0.0
    %2756 = vmatpush1.msra.mxu0 %v333
    %2757 = vmatprep.subr.mxu0 0.0
    %2758 = vmatpush1.msra.mxu0 %v334
    %2759 = vmatprep.subr.mxu0 0.0
    %2760 = vmatpush1.msra.mxu0 %v335
    %2761 = vmatprep.subr.mxu0 0.0
    %2762 = vmatpush1.msra.mxu0 %v336
    %2763 = vmatprep.subr.mxu0 0.0
    %2764 = vmatpush1.msra.mxu0 %v337
    %2765 = vmatprep.subr.mxu0 0.0
    %2766 = vmatpush1.msra.mxu0 %v338
    %2767 = vmatprep.subr.mxu0 0.0
    %2768 = vmatpush1.msra.mxu0 %v339
    %2769 = vmatprep.subr.mxu0 0.0
    %2770 = vmatpush1.msra.mxu0 %v340
    %2771 = vmatprep.subr.mxu0 0.0
    %2772 = vmatpush1.msra.mxu0 %v341
    %2773 = vmatprep.subr.mxu0 0.0
    %2774 = vmatpush1.msra.mxu0 %v342
    %2775 = vmatprep.subr.mxu0 0.0
    %2776 = vmatpush1.msra.mxu0 %v343
    %2777 = vmatprep.subr.mxu0 0.0
    %2778 = vmatpush1.msra.mxu0 %v344
    %2779 = vmatprep.subr.mxu0 0.0
    %2780 = vmatpush1.msra.mxu0 %v345
    %2781 = vmatprep.subr.mxu0 0.0
    %2782 = vmatpush1.msra.mxu0 %v346
    %2783 = vmatprep.subr.mxu0 0.0
    %2784 = vmatpush1.msra.mxu0 %v347
    %2785 = vmatprep.subr.mxu0 0.0
    %2786 = vmatpush1.msra.mxu0 %v348
    %2787 = vmatprep.subr.mxu0 0.0
    %2788 = vmatpush1.msra.mxu0 %v349
    %2789 = vmatprep.subr.mxu0 0.0
    %2790 = vmatpush1.msra.mxu0 %v350
    %2791 = vmatprep.subr.mxu0 0.0
    %2792 = vmatpush1.msra.mxu0 %v351
    %2793 = vmatprep.subr.mxu0 0.0
    %2794 = vmatpush1.msra.mxu0 %v352
    %2795 = vmatprep.subr.mxu0 0.0
    %2796 = vmatpush1.msra.mxu0 %v353
    %2797 = vmatprep.subr.mxu0 0.0
    %2798 = vmatpush1.msra.mxu0 %v354
    %2799 = vmatprep.subr.mxu0 0.0
    %2800 = vmatpush1.msra.mxu0 %v355
    %2801 = vmatprep.subr.mxu0 0.0
    %2802 = vmatpush1.msra.mxu0 %v356
    %2803 = vmatprep.subr.mxu0 0.0
    %2804 = vmatpush1.msra.mxu0 %v357
    %2805 = vmatprep.subr.mxu0 0.0
    %2806 = vmatpush1.msra.mxu0 %v358
    %2807 = vmatprep.subr.mxu0 0.0
    %2808 = vmatpush1.msra.mxu0 %v359
    %2809 = vmatprep.subr.mxu0 0.0
    %2810 = vmatpush1.msra.mxu0 %v360
    %2811 = vmatprep.mubr.f32.mxu0 %v2280
    %2812 = vmatmul.mubr.f32.gmra.mrb[0].mxu0 %v2279
    %v2813 = vpop.f32.mrb[0].mxu0
    %v2814 = vadd.f32 %v2739, %v2813
    %v2815 = vpop.f32.mrb[0].mxu0
    %2816 = vmatprep.mubr.f32.mxu0 %v2295
    %2817 = vmatmul.mubr.f32.gmra.mrb[0].mxu0 %v2294
    %v2818 = vpop.f32.mrb[0].mxu0
    %v2819 = vadd.f32 %v2744, %v2818
    %v2820 = vpop.f32.mrb[0].mxu0
    %2821 = vdwg.mxu0
    %2822 = vmatprep.subr.mxu0 0.0
    %2823 = vmatpush1.msra.mxu0 %v361
    %2824 = vmatprep.subr.mxu0 0.0
    %2825 = vmatpush1.msra.mxu0 %v362
    %2826 = vmatprep.subr.mxu0 0.0
    %2827 = vmatpush1.msra.mxu0 %v363
    %2828 = vmatprep.subr.mxu0 0.0
    %2829 = vmatpush1.msra.mxu0 %v364
    %2830 = vmatprep.subr.mxu0 0.0
    %2831 = vmatpush1.msra.mxu0 %v365
    %2832 = vmatprep.subr.mxu0 0.0
    %2833 = vmatpush1.msra.mxu0 %v366
    %2834 = vmatprep.subr.mxu0 0.0
    %2835 = vmatpush1.msra.mxu0 %v367
    %2836 = vmatprep.subr.mxu0 0.0
    %2837 = vmatpush1.msra.mxu0 %v368
    %2838 = vmatprep.subr.mxu0 0.0
    %2839 = vmatpush1.msra.mxu0 %v369
    %2840 = vmatprep.subr.mxu0 0.0
    %2841 = vmatpush1.msra.mxu0 %v370
    %2842 = vmatprep.subr.mxu0 0.0
    %2843 = vmatpush1.msra.mxu0 %v371
    %2844 = vmatprep.subr.mxu0 0.0
    %2845 = vmatpush1.msra.mxu0 %v372
    %2846 = vmatprep.subr.mxu0 0.0
    %2847 = vmatpush1.msra.mxu0 %v373
    %2848 = vmatprep.subr.mxu0 0.0
    %2849 = vmatpush1.msra.mxu0 %v374
    %2850 = vmatprep.subr.mxu0 0.0
    %2851 = vmatpush1.msra.mxu0 %v375
    %2852 = vmatprep.subr.mxu0 0.0
    %2853 = vmatpush1.msra.mxu0 %v376
    %2854 = vmatprep.subr.mxu0 0.0
    %2855 = vmatpush1.msra.mxu0 0.0
    %2856 = vmatprep.subr.mxu0 0.0
    %2857 = vmatpush1.msra.mxu0 0.0
    %2858 = vmatprep.subr.mxu0 0.0
    %2859 = vmatpush1.msra.mxu0 0.0
    %2860 = vmatprep.subr.mxu0 0.0
    %2861 = vmatpush1.msra.mxu0 0.0
    %2862 = vmatprep.subr.mxu0 0.0
    %2863 = vmatpush1.msra.mxu0 0.0
    %2864 = vmatprep.subr.mxu0 0.0
    %2865 = vmatpush1.msra.mxu0 0.0
    %2866 = vmatprep.subr.mxu0 0.0
    %2867 = vmatpush1.msra.mxu0 0.0
    %2868 = vmatprep.subr.mxu0 0.0
    %2869 = vmatpush1.msra.mxu0 0.0
    %2870 = vmatprep.subr.mxu0 0.0
    %2871 = vmatpush1.msra.mxu0 0.0
    %2872 = vmatprep.subr.mxu0 0.0
    %2873 = vmatpush1.msra.mxu0 0.0
    %2874 = vmatprep.subr.mxu0 0.0
    %2875 = vmatpush1.msra.mxu0 0.0
    %2876 = vmatprep.subr.mxu0 0.0
    %2877 = vmatpush1.msra.mxu0 0.0
    %2878 = vmatprep.subr.mxu0 0.0
    %2879 = vmatpush1.msra.mxu0 0.0
    %2880 = vmatprep.subr.mxu0 0.0
    %2881 = vmatpush1.msra.mxu0 0.0
    %2882 = vmatprep.subr.mxu0 0.0
    %2883 = vmatpush1.msra.mxu0 0.0
    %2884 = vmatprep.subr.mxu0 0.0
    %2885 = vmatpush1.msra.mxu0 0.0
    %2886 = vmatprep.mubr.f32.mxu0 0.0
    %2887 = vmatmul.mubr.f32.gmra.mrb[0].mxu0 %v2281
    %v2888 = vpop.f32.mrb[0].mxu0
    %v2889 = vadd.f32 %v2814, %v2888
    %v2890 = vpop.f32.mrb[0].mxu0
    %2891 = vmatprep.mubr.f32.mxu0 0.0
    %2892 = vmatmul.mubr.f32.gmra.mrb[0].mxu0 %v2296
    %v2893 = vpop.f32.mrb[0].mxu0
    %v2894 = vadd.f32 %v2819, %v2893
    %v2895 = vpop.f32.mrb[0].mxu0
    %2896 = vdwg.mxu0
    %v2897 = vld [vmem:[%s0 + $0x180] sm:$0xff]
    %v2898 = vld [vmem:[%s0 + $0x188] sm:$0xff]
    %v2899 = vld [vmem:[%s0 + $0x190] sm:$0xff]
    %v2900 = vld [vmem:[%s0 + $0x198] sm:$0xff]
    %v2901 = vld [vmem:[%s0 + $0x1a0] sm:$0xff]
    %v2902 = vld [vmem:[%s0 + $0x1a8] sm:$0xff]
    %v2903 = vld [vmem:[%s0 + $0x1b0] sm:$0xff]
    %v2904 = vld [vmem:[%s0 + $0x1b8] sm:$0xff]
    %v2905 = vld [vmem:[%s0 + $0x1c0] sm:$0xff]
    %v2906 = vld [vmem:[%s0 + $0x1c8] sm:$0xff]
    %v2907 = vld [vmem:[%s0 + $0x1d0] sm:$0xff]
    %v2908 = vld [vmem:[%s0 + $0x1d8] sm:$0xff]
    %v2909 = vld [vmem:[%s0 + $0x1e0] sm:$0xff]
    %v2910 = vld [vmem:[%s0 + $0x1e8] sm:$0xff]
    %v2911 = vld [vmem:[%s0 + $0x1f0] sm:$0xff]
    %v2912 = vld [vmem:[%s0 + $0x438] sm:$0xff]
    %v2913 = vld [vmem:[%s0 + $0x440] sm:$0xff]
    %v2914 = vld [vmem:[%s0 + $0x448] sm:$0xff]
    %v2915 = vld [vmem:[%s0 + $0x450] sm:$0xff]
    %v2916 = vld [vmem:[%s0 + $0x458] sm:$0xff]
    %v2917 = vld [vmem:[%s0 + $0x460] sm:$0xff]
    %v2918 = vld [vmem:[%s0 + $0x468] sm:$0xff]
    %v2919 = vld [vmem:[%s0 + $0x470] sm:$0xff]
    %v2920 = vld [vmem:[%s0 + $0x478] sm:$0xff]
    %v2921 = vld [vmem:[%s0 + $0x480] sm:$0xff]
    %v2922 = vld [vmem:[%s0 + $0x488] sm:$0xff]
    %v2923 = vld [vmem:[%s0 + $0x490] sm:$0xff]
    %v2924 = vld [vmem:[%s0 + $0x498] sm:$0xff]
    %v2925 = vld [vmem:[%s0 + $0x4a0] sm:$0xff]
    %v2926 = vld [vmem:[%s0 + $0x4a8] sm:$0xff]
    %2927 = vmatprep.subr.mxu0 0.0
    %2928 = vmatpush1.msra.mxu0 %v137
    %2929 = vmatprep.subr.mxu0 0.0
    %2930 = vmatpush1.msra.mxu0 %v138
    %2931 = vmatprep.subr.mxu0 0.0
    %2932 = vmatpush1.msra.mxu0 %v139
    %2933 = vmatprep.subr.mxu0 0.0
    %2934 = vmatpush1.msra.mxu0 %v140
    %2935 = vmatprep.subr.mxu0 0.0
    %2936 = vmatpush1.msra.mxu0 %v141
    %2937 = vmatprep.subr.mxu0 0.0
    %2938 = vmatpush1.msra.mxu0 %v142
    %2939 = vmatprep.subr.mxu0 0.0
    %2940 = vmatpush1.msra.mxu0 %v143
    %2941 = vmatprep.subr.mxu0 0.0
    %2942 = vmatpush1.msra.mxu0 %v144
    %2943 = vmatprep.subr.mxu0 0.0
    %2944 = vmatpush1.msra.mxu0 %v145
    %2945 = vmatprep.subr.mxu0 0.0
    %2946 = vmatpush1.msra.mxu0 %v146
    %2947 = vmatprep.subr.mxu0 0.0
    %2948 = vmatpush1.msra.mxu0 %v147
    %2949 = vmatprep.subr.mxu0 0.0
    %2950 = vmatpush1.msra.mxu0 %v148
    %2951 = vmatprep.subr.mxu0 0.0
    %2952 = vmatpush1.msra.mxu0 %v149
    %2953 = vmatprep.subr.mxu0 0.0
    %2954 = vmatpush1.msra.mxu0 %v150
    %2955 = vmatprep.subr.mxu0 0.0
    %2956 = vmatpush1.msra.mxu0 %v151
    %2957 = vmatprep.subr.mxu0 0.0
    %2958 = vmatpush1.msra.mxu0 %v152
    %2959 = vmatprep.subr.mxu0 0.0
    %2960 = vmatpush1.msra.mxu0 %v153
    %2961 = vmatprep.subr.mxu0 0.0
    %2962 = vmatpush1.msra.mxu0 %v154
    %2963 = vmatprep.subr.mxu0 0.0
    %2964 = vmatpush1.msra.mxu0 %v155
    %2965 = vmatprep.subr.mxu0 0.0
    %2966 = vmatpush1.msra.mxu0 %v156
    %2967 = vmatprep.subr.mxu0 0.0
    %2968 = vmatpush1.msra.mxu0 %v157
    %2969 = vmatprep.subr.mxu0 0.0
    %2970 = vmatpush1.msra.mxu0 %v158
    %2971 = vmatprep.subr.mxu0 0.0
    %2972 = vmatpush1.msra.mxu0 %v159
    %2973 = vmatprep.subr.mxu0 0.0
    %2974 = vmatpush1.msra.mxu0 %v160
    %2975 = vmatprep.subr.mxu0 0.0
    %2976 = vmatpush1.msra.mxu0 %v161
    %2977 = vmatprep.subr.mxu0 0.0
    %2978 = vmatpush1.msra.mxu0 %v162
    %2979 = vmatprep.subr.mxu0 0.0
    %2980 = vmatpush1.msra.mxu0 %v163
    %2981 = vmatprep.subr.mxu0 0.0
    %2982 = vmatpush1.msra.mxu0 %v164
    %2983 = vmatprep.subr.mxu0 0.0
    %2984 = vmatpush1.msra.mxu0 %v165
    %2985 = vmatprep.subr.mxu0 0.0
    %2986 = vmatpush1.msra.mxu0 %v166
    %2987 = vmatprep.subr.mxu0 0.0
    %2988 = vmatpush1.msra.mxu0 %v167
    %2989 = vmatprep.subr.mxu0 0.0
    %2990 = vmatpush1.msra.mxu0 %v168
    %2991 = vmatprep.mubr.f32.mxu0 %v2898
    %2992 = vmatmul.mubr.f32.gmra.mrb[0].mxu0 %v2897
    %v2993 = vpop.f32.mrb[0].mxu0
    %v2994 = vadd.f32 0.0, %v2993
    %v2995 = vpop.f32.mrb[0].mxu0
    %2996 = vmatprep.mubr.f32.mxu0 %v2913
    %2997 = vmatmul.mubr.f32.gmra.mrb[0].mxu0 %v2912
    %v2998 = vpop.f32.mrb[0].mxu0
    %v2999 = vadd.f32 0.0, %v2998
    %v3000 = vpop.f32.mrb[0].mxu0
    %3001 = vdwg.mxu0
    %3002 = vmatprep.subr.mxu0 0.0
    %3003 = vmatpush1.msra.mxu0 %v169
    %3004 = vmatprep.subr.mxu0 0.0
    %3005 = vmatpush1.msra.mxu0 %v170
    %3006 = vmatprep.subr.mxu0 0.0
    %3007 = vmatpush1.msra.mxu0 %v171
    %3008 = vmatprep.subr.mxu0 0.0
    %3009 = vmatpush1.msra.mxu0 %v172
    %3010 = vmatprep.subr.mxu0 0.0
    %3011 = vmatpush1.msra.mxu0 %v173
    %3012 = vmatprep.subr.mxu0 0.0
    %3013 = vmatpush1.msra.mxu0 %v174
    %3014 = vmatprep.subr.mxu0 0.0
    %3015 = vmatpush1.msra.mxu0 %v175
    %3016 = vmatprep.subr.mxu0 0.0
    %3017 = vmatpush1.msra.mxu0 %v176
    %3018 = vmatprep.subr.mxu0 0.0
    %3019 = vmatpush1.msra.mxu0 %v177
    %3020 = vmatprep.subr.mxu0 0.0
    %3021 = vmatpush1.msra.mxu0 %v178
    %3022 = vmatprep.subr.mxu0 0.0
    %3023 = vmatpush1.msra.mxu0 %v179
    %3024 = vmatprep.subr.mxu0 0.0
    %3025 = vmatpush1.msra.mxu0 %v180
    %3026 = vmatprep.subr.mxu0 0.0
    %3027 = vmatpush1.msra.mxu0 %v181
    %3028 = vmatprep.subr.mxu0 0.0
    %3029 = vmatpush1.msra.mxu0 %v182
    %3030 = vmatprep.subr.mxu0 0.0
    %3031 = vmatpush1.msra.mxu0 %v183
    %3032 = vmatprep.subr.mxu0 0.0
    %3033 = vmatpush1.msra.mxu0 %v184
    %3034 = vmatprep.subr.mxu0 0.0
    %3035 = vmatpush1.msra.mxu0 %v185
    %3036 = vmatprep.subr.mxu0 0.0
    %3037 = vmatpush1.msra.mxu0 %v186
    %3038 = vmatprep.subr.mxu0 0.0
    %3039 = vmatpush1.msra.mxu0 %v187
    %3040 = vmatprep.subr.mxu0 0.0
    %3041 = vmatpush1.msra.mxu0 %v188
    %3042 = vmatprep.subr.mxu0 0.0
    %3043 = vmatpush1.msra.mxu0 %v189
    %3044 = vmatprep.subr.mxu0 0.0
    %3045 = vmatpush1.msra.mxu0 %v190
    %3046 = vmatprep.subr.mxu0 0.0
    %3047 = vmatpush1.msra.mxu0 %v191
    %3048 = vmatprep.subr.mxu0 0.0
    %3049 = vmatpush1.msra.mxu0 %v192
    %3050 = vmatprep.subr.mxu0 0.0
    %3051 = vmatpush1.msra.mxu0 %v193
    %3052 = vmatprep.subr.mxu0 0.0
    %3053 = vmatpush1.msra.mxu0 %v194
    %3054 = vmatprep.subr.mxu0 0.0
    %3055 = vmatpush1.msra.mxu0 %v195
    %3056 = vmatprep.subr.mxu0 0.0
    %3057 = vmatpush1.msra.mxu0 %v196
    %3058 = vmatprep.subr.mxu0 0.0
    %3059 = vmatpush1.msra.mxu0 %v197
    %3060 = vmatprep.subr.mxu0 0.0
    %3061 = vmatpush1.msra.mxu0 %v198
    %3062 = vmatprep.subr.mxu0 0.0
    %3063 = vmatpush1.msra.mxu0 %v199
    %3064 = vmatprep.subr.mxu0 0.0
    %3065 = vmatpush1.msra.mxu0 %v200
    %3066 = vmatprep.mubr.f32.mxu0 %v2900
    %3067 = vmatmul.mubr.f32.gmra.mrb[0].mxu0 %v2899
    %v3068 = vpop.f32.mrb[0].mxu0
    %v3069 = vadd.f32 %v2994, %v3068
    %v3070 = vpop.f32.mrb[0].mxu0
    %3071 = vmatprep.mubr.f32.mxu0 %v2915
    %3072 = vmatmul.mubr.f32.gmra.mrb[0].mxu0 %v2914
    %v3073 = vpop.f32.mrb[0].mxu0
    %v3074 = vadd.f32 %v2999, %v3073
    %v3075 = vpop.f32.mrb[0].mxu0
    %3076 = vdwg.mxu0
    %3077 = vmatprep.subr.mxu0 0.0
    %3078 = vmatpush1.msra.mxu0 %v201
    %3079 = vmatprep.subr.mxu0 0.0
    %3080 = vmatpush1.msra.mxu0 %v202
    %3081 = vmatprep.subr.mxu0 0.0
    %3082 = vmatpush1.msra.mxu0 %v203
    %3083 = vmatprep.subr.mxu0 0.0
    %3084 = vmatpush1.msra.mxu0 %v204
    %3085 = vmatprep.subr.mxu0 0.0
    %3086 = vmatpush1.msra.mxu0 %v205
    %3087 = vmatprep.subr.mxu0 0.0
    %3088 = vmatpush1.msra.mxu0 %v206
    %3089 = vmatprep.subr.mxu0 0.0
    %3090 = vmatpush1.msra.mxu0 %v207
    %3091 = vmatprep.subr.mxu0 0.0
    %3092 = vmatpush1.msra.mxu0 %v208
    %3093 = vmatprep.subr.mxu0 0.0
    %3094 = vmatpush1.msra.mxu0 %v209
    %3095 = vmatprep.subr.mxu0 0.0
    %3096 = vmatpush1.msra.mxu0 %v210
    %3097 = vmatprep.subr.mxu0 0.0
    %3098 = vmatpush1.msra.mxu0 %v211
    %3099 = vmatprep.subr.mxu0 0.0
    %3100 = vmatpush1.msra.mxu0 %v212
    %3101 = vmatprep.subr.mxu0 0.0
    %3102 = vmatpush1.msra.mxu0 %v213
    %3103 = vmatprep.subr.mxu0 0.0
    %3104 = vmatpush1.msra.mxu0 %v214
    %3105 = vmatprep.subr.mxu0 0.0
    %3106 = vmatpush1.msra.mxu0 %v215
    %3107 = vmatprep.subr.mxu0 0.0
    %3108 = vmatpush1.msra.mxu0 %v216
    %3109 = vmatprep.subr.mxu0 0.0
    %3110 = vmatpush1.msra.mxu0 %v217
    %3111 = vmatprep.subr.mxu0 0.0
    %3112 = vmatpush1.msra.mxu0 %v218
    %3113 = vmatprep.subr.mxu0 0.0
    %3114 = vmatpush1.msra.mxu0 %v219
    %3115 = vmatprep.subr.mxu0 0.0
    %3116 = vmatpush1.msra.mxu0 %v220
    %3117 = vmatprep.subr.mxu0 0.0
    %3118 = vmatpush1.msra.mxu0 %v221
    %3119 = vmatprep.subr.mxu0 0.0
    %3120 = vmatpush1.msra.mxu0 %v222
    %3121 = vmatprep.subr.mxu0 0.0
    %3122 = vmatpush1.msra.mxu0 %v223
    %3123 = vmatprep.subr.mxu0 0.0
    %3124 = vmatpush1.msra.mxu0 %v224
    %3125 = vmatprep.subr.mxu0 0.0
    %3126 = vmatpush1.msra.mxu0 %v225
    %3127 = vmatprep.subr.mxu0 0.0
    %3128 = vmatpush1.msra.mxu0 %v226
    %3129 = vmatprep.subr.mxu0 0.0
    %3130 = vmatpush1.msra.mxu0 %v227
    %3131 = vmatprep.subr.mxu0 0.0
    %3132 = vmatpush1.msra.mxu0 %v228
    %3133 = vmatprep.subr.mxu0 0.0
    %3134 = vmatpush1.msra.mxu0 %v229
    %3135 = vmatprep.subr.mxu0 0.0
    %3136 = vmatpush1.msra.mxu0 %v230
    %3137 = vmatprep.subr.mxu0 0.0
    %3138 = vmatpush1.msra.mxu0 %v231
    %3139 = vmatprep.subr.mxu0 0.0
    %3140 = vmatpush1.msra.mxu0 %v232
    %3141 = vmatprep.mubr.f32.mxu0 %v2902
    %3142 = vmatmul.mubr.f32.gmra.mrb[0].mxu0 %v2901
    %v3143 = vpop.f32.mrb[0].mxu0
    %v3144 = vadd.f32 %v3069, %v3143
    %v3145 = vpop.f32.mrb[0].mxu0
    %3146 = vmatprep.mubr.f32.mxu0 %v2917
    %3147 = vmatmul.mubr.f32.gmra.mrb[0].mxu0 %v2916
    %v3148 = vpop.f32.mrb[0].mxu0
    %v3149 = vadd.f32 %v3074, %v3148
    %v3150 = vpop.f32.mrb[0].mxu0
    %3151 = vdwg.mxu0
    %3152 = vmatprep.subr.mxu0 0.0
    %3153 = vmatpush1.msra.mxu0 %v233
    %3154 = vmatprep.subr.mxu0 0.0
    %3155 = vmatpush1.msra.mxu0 %v234
    %3156 = vmatprep.subr.mxu0 0.0
    %3157 = vmatpush1.msra.mxu0 %v235
    %3158 = vmatprep.subr.mxu0 0.0
    %3159 = vmatpush1.msra.mxu0 %v236
    %3160 = vmatprep.subr.mxu0 0.0
    %3161 = vmatpush1.msra.mxu0 %v237
    %3162 = vmatprep.subr.mxu0 0.0
    %3163 = vmatpush1.msra.mxu0 %v238
    %3164 = vmatprep.subr.mxu0 0.0
    %3165 = vmatpush1.msra.mxu0 %v239
    %3166 = vmatprep.subr.mxu0 0.0
    %3167 = vmatpush1.msra.mxu0 %v240
    %3168 = vmatprep.subr.mxu0 0.0
    %3169 = vmatpush1.msra.mxu0 %v241
    %3170 = vmatprep.subr.mxu0 0.0
    %3171 = vmatpush1.msra.mxu0 %v242
    %3172 = vmatprep.subr.mxu0 0.0
    %3173 = vmatpush1.msra.mxu0 %v243
    %3174 = vmatprep.subr.mxu0 0.0
    %3175 = vmatpush1.msra.mxu0 %v244
    %3176 = vmatprep.subr.mxu0 0.0
    %3177 = vmatpush1.msra.mxu0 %v245
    %3178 = vmatprep.subr.mxu0 0.0
    %3179 = vmatpush1.msra.mxu0 %v246
    %3180 = vmatprep.subr.mxu0 0.0
    %3181 = vmatpush1.msra.mxu0 %v247
    %3182 = vmatprep.subr.mxu0 0.0
    %3183 = vmatpush1.msra.mxu0 %v248
    %3184 = vmatprep.subr.mxu0 0.0
    %3185 = vmatpush1.msra.mxu0 %v249
    %3186 = vmatprep.subr.mxu0 0.0
    %3187 = vmatpush1.msra.mxu0 %v250
    %3188 = vmatprep.subr.mxu0 0.0
    %3189 = vmatpush1.msra.mxu0 %v251
    %3190 = vmatprep.subr.mxu0 0.0
    %3191 = vmatpush1.msra.mxu0 %v252
    %3192 = vmatprep.subr.mxu0 0.0
    %3193 = vmatpush1.msra.mxu0 %v253
    %3194 = vmatprep.subr.mxu0 0.0
    %3195 = vmatpush1.msra.mxu0 %v254
    %3196 = vmatprep.subr.mxu0 0.0
    %3197 = vmatpush1.msra.mxu0 %v255
    %3198 = vmatprep.subr.mxu0 0.0
    %3199 = vmatpush1.msra.mxu0 %v256
    %3200 = vmatprep.subr.mxu0 0.0
    %3201 = vmatpush1.msra.mxu0 %v257
    %3202 = vmatprep.subr.mxu0 0.0
    %3203 = vmatpush1.msra.mxu0 %v258
    %3204 = vmatprep.subr.mxu0 0.0
    %3205 = vmatpush1.msra.mxu0 %v259
    %3206 = vmatprep.subr.mxu0 0.0
    %3207 = vmatpush1.msra.mxu0 %v260
    %3208 = vmatprep.subr.mxu0 0.0
    %3209 = vmatpush1.msra.mxu0 %v261
    %3210 = vmatprep.subr.mxu0 0.0
    %3211 = vmatpush1.msra.mxu0 %v262
    %3212 = vmatprep.subr.mxu0 0.0
    %3213 = vmatpush1.msra.mxu0 %v263
    %3214 = vmatprep.subr.mxu0 0.0
    %3215 = vmatpush1.msra.mxu0 %v264
    %3216 = vmatprep.mubr.f32.mxu0 %v2904
    %3217 = vmatmul.mubr.f32.gmra.mrb[0].mxu0 %v2903
    %v3218 = vpop.f32.mrb[0].mxu0
    %v3219 = vadd.f32 %v3144, %v3218
    %v3220 = vpop.f32.mrb[0].mxu0
    %3221 = vmatprep.mubr.f32.mxu0 %v2919
    %3222 = vmatmul.mubr.f32.gmra.mrb[0].mxu0 %v2918
    %v3223 = vpop.f32.mrb[0].mxu0
    %v3224 = vadd.f32 %v3149, %v3223
    %v3225 = vpop.f32.mrb[0].mxu0
    %3226 = vdwg.mxu0
    %3227 = vmatprep.subr.mxu0 0.0
    %3228 = vmatpush1.msra.mxu0 %v265
    %3229 = vmatprep.subr.mxu0 0.0
    %3230 = vmatpush1.msra.mxu0 %v266
    %3231 = vmatprep.subr.mxu0 0.0
    %3232 = vmatpush1.msra.mxu0 %v267
    %3233 = vmatprep.subr.mxu0 0.0
    %3234 = vmatpush1.msra.mxu0 %v268
    %3235 = vmatprep.subr.mxu0 0.0
    %3236 = vmatpush1.msra.mxu0 %v269
    %3237 = vmatprep.subr.mxu0 0.0
    %3238 = vmatpush1.msra.mxu0 %v270
    %3239 = vmatprep.subr.mxu0 0.0
    %3240 = vmatpush1.msra.mxu0 %v271
    %3241 = vmatprep.subr.mxu0 0.0
    %3242 = vmatpush1.msra.mxu0 %v272
    %3243 = vmatprep.subr.mxu0 0.0
    %3244 = vmatpush1.msra.mxu0 %v273
    %3245 = vmatprep.subr.mxu0 0.0
    %3246 = vmatpush1.msra.mxu0 %v274
    %3247 = vmatprep.subr.mxu0 0.0
    %3248 = vmatpush1.msra.mxu0 %v275
    %3249 = vmatprep.subr.mxu0 0.0
    %3250 = vmatpush1.msra.mxu0 %v276
    %3251 = vmatprep.subr.mxu0 0.0
    %3252 = vmatpush1.msra.mxu0 %v277
    %3253 = vmatprep.subr.mxu0 0.0
    %3254 = vmatpush1.msra.mxu0 %v278
    %3255 = vmatprep.subr.mxu0 0.0
    %3256 = vmatpush1.msra.mxu0 %v279
    %3257 = vmatprep.subr.mxu0 0.0
    %3258 = vmatpush1.msra.mxu0 %v280
    %3259 = vmatprep.subr.mxu0 0.0
    %3260 = vmatpush1.msra.mxu0 %v281
    %3261 = vmatprep.subr.mxu0 0.0
    %3262 = vmatpush1.msra.mxu0 %v282
    %3263 = vmatprep.subr.mxu0 0.0
    %3264 = vmatpush1.msra.mxu0 %v283
    %3265 = vmatprep.subr.mxu0 0.0
    %3266 = vmatpush1.msra.mxu0 %v284
    %3267 = vmatprep.subr.mxu0 0.0
    %3268 = vmatpush1.msra.mxu0 %v285
    %3269 = vmatprep.subr.mxu0 0.0
    %3270 = vmatpush1.msra.mxu0 %v286
    %3271 = vmatprep.subr.mxu0 0.0
    %3272 = vmatpush1.msra.mxu0 %v287
    %3273 = vmatprep.subr.mxu0 0.0
    %3274 = vmatpush1.msra.mxu0 %v288
    %3275 = vmatprep.subr.mxu0 0.0
    %3276 = vmatpush1.msra.mxu0 %v289
    %3277 = vmatprep.subr.mxu0 0.0
    %3278 = vmatpush1.msra.mxu0 %v290
    %3279 = vmatprep.subr.mxu0 0.0
    %3280 = vmatpush1.msra.mxu0 %v291
    %3281 = vmatprep.subr.mxu0 0.0
    %3282 = vmatpush1.msra.mxu0 %v292
    %3283 = vmatprep.subr.mxu0 0.0
    %3284 = vmatpush1.msra.mxu0 %v293
    %3285 = vmatprep.subr.mxu0 0.0
    %3286 = vmatpush1.msra.mxu0 %v294
    %3287 = vmatprep.subr.mxu0 0.0
    %3288 = vmatpush1.msra.mxu0 %v295
    %3289 = vmatprep.subr.mxu0 0.0
    %3290 = vmatpush1.msra.mxu0 %v296
    %3291 = vmatprep.mubr.f32.mxu0 %v2906
    %3292 = vmatmul.mubr.f32.gmra.mrb[0].mxu0 %v2905
    %v3293 = vpop.f32.mrb[0].mxu0
    %v3294 = vadd.f32 %v3219, %v3293
    %v3295 = vpop.f32.mrb[0].mxu0
    %3296 = vmatprep.mubr.f32.mxu0 %v2921
    %3297 = vmatmul.mubr.f32.gmra.mrb[0].mxu0 %v2920
    %v3298 = vpop.f32.mrb[0].mxu0
    %v3299 = vadd.f32 %v3224, %v3298
    %v3300 = vpop.f32.mrb[0].mxu0
    %3301 = vdwg.mxu0
    %3302 = vmatprep.subr.mxu0 0.0
    %3303 = vmatpush1.msra.mxu0 %v297
    %3304 = vmatprep.subr.mxu0 0.0
    %3305 = vmatpush1.msra.mxu0 %v298
    %3306 = vmatprep.subr.mxu0 0.0
    %3307 = vmatpush1.msra.mxu0 %v299
    %3308 = vmatprep.subr.mxu0 0.0
    %3309 = vmatpush1.msra.mxu0 %v300
    %3310 = vmatprep.subr.mxu0 0.0
    %3311 = vmatpush1.msra.mxu0 %v301
    %3312 = vmatprep.subr.mxu0 0.0
    %3313 = vmatpush1.msra.mxu0 %v302
    %3314 = vmatprep.subr.mxu0 0.0
    %3315 = vmatpush1.msra.mxu0 %v303
    %3316 = vmatprep.subr.mxu0 0.0
    %3317 = vmatpush1.msra.mxu0 %v304
    %3318 = vmatprep.subr.mxu0 0.0
    %3319 = vmatpush1.msra.mxu0 %v305
    %3320 = vmatprep.subr.mxu0 0.0
    %3321 = vmatpush1.msra.mxu0 %v306
    %3322 = vmatprep.subr.mxu0 0.0
    %3323 = vmatpush1.msra.mxu0 %v307
    %3324 = vmatprep.subr.mxu0 0.0
    %3325 = vmatpush1.msra.mxu0 %v308
    %3326 = vmatprep.subr.mxu0 0.0
    %3327 = vmatpush1.msra.mxu0 %v309
    %3328 = vmatprep.subr.mxu0 0.0
    %3329 = vmatpush1.msra.mxu0 %v310
    %3330 = vmatprep.subr.mxu0 0.0
    %3331 = vmatpush1.msra.mxu0 %v311
    %3332 = vmatprep.subr.mxu0 0.0
    %3333 = vmatpush1.msra.mxu0 %v312
    %3334 = vmatprep.subr.mxu0 0.0
    %3335 = vmatpush1.msra.mxu0 %v313
    %3336 = vmatprep.subr.mxu0 0.0
    %3337 = vmatpush1.msra.mxu0 %v314
    %3338 = vmatprep.subr.mxu0 0.0
    %3339 = vmatpush1.msra.mxu0 %v315
    %3340 = vmatprep.subr.mxu0 0.0
    %3341 = vmatpush1.msra.mxu0 %v316
    %3342 = vmatprep.subr.mxu0 0.0
    %3343 = vmatpush1.msra.mxu0 %v317
    %3344 = vmatprep.subr.mxu0 0.0
    %3345 = vmatpush1.msra.mxu0 %v318
    %3346 = vmatprep.subr.mxu0 0.0
    %3347 = vmatpush1.msra.mxu0 %v319
    %3348 = vmatprep.subr.mxu0 0.0
    %3349 = vmatpush1.msra.mxu0 %v320
    %3350 = vmatprep.subr.mxu0 0.0
    %3351 = vmatpush1.msra.mxu0 %v321
    %3352 = vmatprep.subr.mxu0 0.0
    %3353 = vmatpush1.msra.mxu0 %v322
    %3354 = vmatprep.subr.mxu0 0.0
    %3355 = vmatpush1.msra.mxu0 %v323
    %3356 = vmatprep.subr.mxu0 0.0
    %3357 = vmatpush1.msra.mxu0 %v324
    %3358 = vmatprep.subr.mxu0 0.0
    %3359 = vmatpush1.msra.mxu0 %v325
    %3360 = vmatprep.subr.mxu0 0.0
    %3361 = vmatpush1.msra.mxu0 %v326
    %3362 = vmatprep.subr.mxu0 0.0
    %3363 = vmatpush1.msra.mxu0 %v327
    %3364 = vmatprep.subr.mxu0 0.0
    %3365 = vmatpush1.msra.mxu0 %v328
    %3366 = vmatprep.mubr.f32.mxu0 %v2908
    %3367 = vmatmul.mubr.f32.gmra.mrb[0].mxu0 %v2907
    %v3368 = vpop.f32.mrb[0].mxu0
    %v3369 = vadd.f32 %v3294, %v3368
    %v3370 = vpop.f32.mrb[0].mxu0
    %3371 = vmatprep.mubr.f32.mxu0 %v2923
    %3372 = vmatmul.mubr.f32.gmra.mrb[0].mxu0 %v2922
    %v3373 = vpop.f32.mrb[0].mxu0
    %v3374 = vadd.f32 %v3299, %v3373
    %v3375 = vpop.f32.mrb[0].mxu0
    %3376 = vdwg.mxu0
    %3377 = vmatprep.subr.mxu0 0.0
    %3378 = vmatpush1.msra.mxu0 %v329
    %3379 = vmatprep.subr.mxu0 0.0
    %3380 = vmatpush1.msra.mxu0 %v330
    %3381 = vmatprep.subr.mxu0 0.0
    %3382 = vmatpush1.msra.mxu0 %v331
    %3383 = vmatprep.subr.mxu0 0.0
    %3384 = vmatpush1.msra.mxu0 %v332
    %3385 = vmatprep.subr.mxu0 0.0
    %3386 = vmatpush1.msra.mxu0 %v333
    %3387 = vmatprep.subr.mxu0 0.0
    %3388 = vmatpush1.msra.mxu0 %v334
    %3389 = vmatprep.subr.mxu0 0.0
    %3390 = vmatpush1.msra.mxu0 %v335
    %3391 = vmatprep.subr.mxu0 0.0
    %3392 = vmatpush1.msra.mxu0 %v336
    %3393 = vmatprep.subr.mxu0 0.0
    %3394 = vmatpush1.msra.mxu0 %v337
    %3395 = vmatprep.subr.mxu0 0.0
    %3396 = vmatpush1.msra.mxu0 %v338
    %3397 = vmatprep.subr.mxu0 0.0
    %3398 = vmatpush1.msra.mxu0 %v339
    %3399 = vmatprep.subr.mxu0 0.0
    %3400 = vmatpush1.msra.mxu0 %v340
    %3401 = vmatprep.subr.mxu0 0.0
    %3402 = vmatpush1.msra.mxu0 %v341
    %3403 = vmatprep.subr.mxu0 0.0
    %3404 = vmatpush1.msra.mxu0 %v342
    %3405 = vmatprep.subr.mxu0 0.0
    %3406 = vmatpush1.msra.mxu0 %v343
    %3407 = vmatprep.subr.mxu0 0.0
    %3408 = vmatpush1.msra.mxu0 %v344
    %3409 = vmatprep.subr.mxu0 0.0
    %3410 = vmatpush1.msra.mxu0 %v345
    %3411 = vmatprep.subr.mxu0 0.0
    %3412 = vmatpush1.msra.mxu0 %v346
    %3413 = vmatprep.subr.mxu0 0.0
    %3414 = vmatpush1.msra.mxu0 %v347
    %3415 = vmatprep.subr.mxu0 0.0
    %3416 = vmatpush1.msra.mxu0 %v348
    %3417 = vmatprep.subr.mxu0 0.0
    %3418 = vmatpush1.msra.mxu0 %v349
    %3419 = vmatprep.subr.mxu0 0.0
    %3420 = vmatpush1.msra.mxu0 %v350
    %3421 = vmatprep.subr.mxu0 0.0
    %3422 = vmatpush1.msra.mxu0 %v351
    %3423 = vmatprep.subr.mxu0 0.0
    %3424 = vmatpush1.msra.mxu0 %v352
    %3425 = vmatprep.subr.mxu0 0.0
    %3426 = vmatpush1.msra.mxu0 %v353
    %3427 = vmatprep.subr.mxu0 0.0
    %3428 = vmatpush1.msra.mxu0 %v354
    %3429 = vmatprep.subr.mxu0 0.0
    %3430 = vmatpush1.msra.mxu0 %v355
    %3431 = vmatprep.subr.mxu0 0.0
    %3432 = vmatpush1.msra.mxu0 %v356
    %3433 = vmatprep.subr.mxu0 0.0
    %3434 = vmatpush1.msra.mxu0 %v357
    %3435 = vmatprep.subr.mxu0 0.0
    %3436 = vmatpush1.msra.mxu0 %v358
    %3437 = vmatprep.subr.mxu0 0.0
    %3438 = vmatpush1.msra.mxu0 %v359
    %3439 = vmatprep.subr.mxu0 0.0
    %3440 = vmatpush1.msra.mxu0 %v360
    %3441 = vmatprep.mubr.f32.mxu0 %v2910
    %3442 = vmatmul.mubr.f32.gmra.mrb[0].mxu0 %v2909
    %v3443 = vpop.f32.mrb[0].mxu0
    %v3444 = vadd.f32 %v3369, %v3443
    %v3445 = vpop.f32.mrb[0].mxu0
    %3446 = vmatprep.mubr.f32.mxu0 %v2925
    %3447 = vmatmul.mubr.f32.gmra.mrb[0].mxu0 %v2924
    %v3448 = vpop.f32.mrb[0].mxu0
    %v3449 = vadd.f32 %v3374, %v3448
    %v3450 = vpop.f32.mrb[0].mxu0
    %3451 = vdwg.mxu0
    %3452 = vmatprep.subr.mxu0 0.0
    %3453 = vmatpush1.msra.mxu0 %v361
    %3454 = vmatprep.subr.mxu0 0.0
    %3455 = vmatpush1.msra.mxu0 %v362
    %3456 = vmatprep.subr.mxu0 0.0
    %3457 = vmatpush1.msra.mxu0 %v363
    %3458 = vmatprep.subr.mxu0 0.0
    %3459 = vmatpush1.msra.mxu0 %v364
    %3460 = vmatprep.subr.mxu0 0.0
    %3461 = vmatpush1.msra.mxu0 %v365
    %3462 = vmatprep.subr.mxu0 0.0
    %3463 = vmatpush1.msra.mxu0 %v366
    %3464 = vmatprep.subr.mxu0 0.0
    %3465 = vmatpush1.msra.mxu0 %v367
    %3466 = vmatprep.subr.mxu0 0.0
    %3467 = vmatpush1.msra.mxu0 %v368
    %3468 = vmatprep.subr.mxu0 0.0
    %3469 = vmatpush1.msra.mxu0 %v369
    %3470 = vmatprep.subr.mxu0 0.0
    %3471 = vmatpush1.msra.mxu0 %v370
    %3472 = vmatprep.subr.mxu0 0.0
    %3473 = vmatpush1.msra.mxu0 %v371
    %3474 = vmatprep.subr.mxu0 0.0
    %3475 = vmatpush1.msra.mxu0 %v372
    %3476 = vmatprep.subr.mxu0 0.0
    %3477 = vmatpush1.msra.mxu0 %v373
    %3478 = vmatprep.subr.mxu0 0.0
    %3479 = vmatpush1.msra.mxu0 %v374
    %3480 = vmatprep.subr.mxu0 0.0
    %3481 = vmatpush1.msra.mxu0 %v375
    %3482 = vmatprep.subr.mxu0 0.0
    %3483 = vmatpush1.msra.mxu0 %v376
    %3484 = vmatprep.subr.mxu0 0.0
    %3485 = vmatpush1.msra.mxu0 0.0
    %3486 = vmatprep.subr.mxu0 0.0
    %3487 = vmatpush1.msra.mxu0 0.0
    %3488 = vmatprep.subr.mxu0 0.0
    %3489 = vmatpush1.msra.mxu0 0.0
    %3490 = vmatprep.subr.mxu0 0.0
    %3491 = vmatpush1.msra.mxu0 0.0
    %3492 = vmatprep.subr.mxu0 0.0
    %3493 = vmatpush1.msra.mxu0 0.0
    %3494 = vmatprep.subr.mxu0 0.0
    %3495 = vmatpush1.msra.mxu0 0.0
    %3496 = vmatprep.subr.mxu0 0.0
    %3497 = vmatpush1.msra.mxu0 0.0
    %3498 = vmatprep.subr.mxu0 0.0
    %3499 = vmatpush1.msra.mxu0 0.0
    %3500 = vmatprep.subr.mxu0 0.0
    %3501 = vmatpush1.msra.mxu0 0.0
    %3502 = vmatprep.subr.mxu0 0.0
    %3503 = vmatpush1.msra.mxu0 0.0
    %3504 = vmatprep.subr.mxu0 0.0
    %3505 = vmatpush1.msra.mxu0 0.0
    %3506 = vmatprep.subr.mxu0 0.0
    %3507 = vmatpush1.msra.mxu0 0.0
    %3508 = vmatprep.subr.mxu0 0.0
    %3509 = vmatpush1.msra.mxu0 0.0
    %3510 = vmatprep.subr.mxu0 0.0
    %3511 = vmatpush1.msra.mxu0 0.0
    %3512 = vmatprep.subr.mxu0 0.0
    %3513 = vmatpush1.msra.mxu0 0.0
    %3514 = vmatprep.subr.mxu0 0.0
    %3515 = vmatpush1.msra.mxu0 0.0
    %3516 = vmatprep.mubr.f32.mxu0 0.0
    %3517 = vmatmul.mubr.f32.gmra.mrb[0].mxu0 %v2911
    %v3518 = vpop.f32.mrb[0].mxu0
    %v3519 = vadd.f32 %v3444, %v3518
    %v3520 = vpop.f32.mrb[0].mxu0
    %3521 = vmatprep.mubr.f32.mxu0 0.0
    %3522 = vmatmul.mubr.f32.gmra.mrb[0].mxu0 %v2926
    %v3523 = vpop.f32.mrb[0].mxu0
    %v3524 = vadd.f32 %v3449, %v3523
    %v3525 = vpop.f32.mrb[0].mxu0
    %3526 = vdwg.mxu0
    %v3527 = vld [vmem:[%s0 + $0x1e0] sm:$0xff]
    %v3528 = vld [vmem:[%s0 + $0x1e8] sm:$0xff]
    %v3529 = vld [vmem:[%s0 + $0x1f0] sm:$0xff]
    %v3530 = vld [vmem:[%s0 + $0x1f8] sm:$0xff]
    %v3531 = vld [vmem:[%s0 + $0x200] sm:$0xff]
    %v3532 = vld [vmem:[%s0 + $0x208] sm:$0xff]
    %v3533 = vld [vmem:[%s0 + $0x210] sm:$0xff]
    %v3534 = vld [vmem:[%s0 + $0x218] sm:$0xff]
    %v3535 = vld [vmem:[%s0 + $0x220] sm:$0xff]
    %v3536 = vld [vmem:[%s0 + $0x228] sm:$0xff]
    %v3537 = vld [vmem:[%s0 + $0x230] sm:$0xff]
    %v3538 = vld [vmem:[%s0 + $0x238] sm:$0xff]
    %v3539 = vld [vmem:[%s0 + $0x240] sm:$0xff]
    %v3540 = vld [vmem:[%s0 + $0x248] sm:$0xff]
    %v3541 = vld [vmem:[%s0 + $0x250] sm:$0xff]
    %v3542 = vld [vmem:[%s0 + $0x498] sm:$0xff]
    %v3543 = vld [vmem:[%s0 + $0x4a0] sm:$0xff]
    %v3544 = vld [vmem:[%s0 + $0x4a8] sm:$0xff]
    %v3545 = vld [vmem:[%s0 + $0x4b0] sm:$0xff]
    %v3546 = vld [vmem:[%s0 + $0x4b8] sm:$0xff]
    %v3547 = vld [vmem:[%s0 + $0x4c0] sm:$0xff]
    %v3548 = vld [vmem:[%s0 + $0x4c8] sm:$0xff]
    %v3549 = vld [vmem:[%s0 + $0x4d0] sm:$0xff]
    %v3550 = vld [vmem:[%s0 + $0x4d8] sm:$0xff]
    %v3551 = vld [vmem:[%s0 + $0x4e0] sm:$0xff]
    %v3552 = vld [vmem:[%s0 + $0x4e8] sm:$0xff]
    %v3553 = vld [vmem:[%s0 + $0x4f0] sm:$0xff]
    %v3554 = vld [vmem:[%s0 + $0x4f8] sm:$0xff]
    %v3555 = vld [vmem:[%s0 + $0x500] sm:$0xff]
    %v3556 = vld [vmem:[%s0 + $0x508] sm:$0xff]
    %3557 = vmatprep.subr.mxu0 0.0
    %3558 = vmatpush1.msra.mxu0 %v137
    %3559 = vmatprep.subr.mxu0 0.0
    %3560 = vmatpush1.msra.mxu0 %v138
    %3561 = vmatprep.subr.mxu0 0.0
    %3562 = vmatpush1.msra.mxu0 %v139
    %3563 = vmatprep.subr.mxu0 0.0
    %3564 = vmatpush1.msra.mxu0 %v140
    %3565 = vmatprep.subr.mxu0 0.0
    %3566 = vmatpush1.msra.mxu0 %v141
    %3567 = vmatprep.subr.mxu0 0.0
    %3568 = vmatpush1.msra.mxu0 %v142
    %3569 = vmatprep.subr.mxu0 0.0
    %3570 = vmatpush1.msra.mxu0 %v143
    %3571 = vmatprep.subr.mxu0 0.0
    %3572 = vmatpush1.msra.mxu0 %v144
    %3573 = vmatprep.subr.mxu0 0.0
    %3574 = vmatpush1.msra.mxu0 %v145
    %3575 = vmatprep.subr.mxu0 0.0
    %3576 = vmatpush1.msra.mxu0 %v146
    %3577 = vmatprep.subr.mxu0 0.0
    %3578 = vmatpush1.msra.mxu0 %v147
    %3579 = vmatprep.subr.mxu0 0.0
    %3580 = vmatpush1.msra.mxu0 %v148
    %3581 = vmatprep.subr.mxu0 0.0
    %3582 = vmatpush1.msra.mxu0 %v149
    %3583 = vmatprep.subr.mxu0 0.0
    %3584 = vmatpush1.msra.mxu0 %v150
    %3585 = vmatprep.subr.mxu0 0.0
    %3586 = vmatpush1.msra.mxu0 %v151
    %3587 = vmatprep.subr.mxu0 0.0
    %3588 = vmatpush1.msra.mxu0 %v152
    %3589 = vmatprep.subr.mxu0 0.0
    %3590 = vmatpush1.msra.mxu0 %v153
    %3591 = vmatprep.subr.mxu0 0.0
    %3592 = vmatpush1.msra.mxu0 %v154
    %3593 = vmatprep.subr.mxu0 0.0
    %3594 = vmatpush1.msra.mxu0 %v155
    %3595 = vmatprep.subr.mxu0 0.0
    %3596 = vmatpush1.msra.mxu0 %v156
    %3597 = vmatprep.subr.mxu0 0.0
    %3598 = vmatpush1.msra.mxu0 %v157
    %3599 = vmatprep.subr.mxu0 0.0
    %3600 = vmatpush1.msra.mxu0 %v158
    %3601 = vmatprep.subr.mxu0 0.0
    %3602 = vmatpush1.msra.mxu0 %v159
    %3603 = vmatprep.subr.mxu0 0.0
    %3604 = vmatpush1.msra.mxu0 %v160
    %3605 = vmatprep.subr.mxu0 0.0
    %3606 = vmatpush1.msra.mxu0 %v161
    %3607 = vmatprep.subr.mxu0 0.0
    %3608 = vmatpush1.msra.mxu0 %v162
    %3609 = vmatprep.subr.mxu0 0.0
    %3610 = vmatpush1.msra.mxu0 %v163
    %3611 = vmatprep.subr.mxu0 0.0
    %3612 = vmatpush1.msra.mxu0 %v164
    %3613 = vmatprep.subr.mxu0 0.0
    %3614 = vmatpush1.msra.mxu0 %v165
    %3615 = vmatprep.subr.mxu0 0.0
    %3616 = vmatpush1.msra.mxu0 %v166
    %3617 = vmatprep.subr.mxu0 0.0
    %3618 = vmatpush1.msra.mxu0 %v167
    %3619 = vmatprep.subr.mxu0 0.0
    %3620 = vmatpush1.msra.mxu0 %v168
    %3621 = vmatprep.mubr.f32.mxu0 %v3528
    %3622 = vmatmul.mubr.f32.gmra.mrb[0].mxu0 %v3527
    %v3623 = vpop.f32.mrb[0].mxu0
    %v3624 = vadd.f32 0.0, %v3623
    %v3625 = vpop.f32.mrb[0].mxu0
    %3626 = vmatprep.mubr.f32.mxu0 %v3543
    %3627 = vmatmul.mubr.f32.gmra.mrb[0].mxu0 %v3542
    %v3628 = vpop.f32.mrb[0].mxu0
    %v3629 = vadd.f32 0.0, %v3628
    %v3630 = vpop.f32.mrb[0].mxu0
    %3631 = vdwg.mxu0
    %3632 = vmatprep.subr.mxu0 0.0
    %3633 = vmatpush1.msra.mxu0 %v169
    %3634 = vmatprep.subr.mxu0 0.0
    %3635 = vmatpush1.msra.mxu0 %v170
    %3636 = vmatprep.subr.mxu0 0.0
    %3637 = vmatpush1.msra.mxu0 %v171
    %3638 = vmatprep.subr.mxu0 0.0
    %3639 = vmatpush1.msra.mxu0 %v172
    %3640 = vmatprep.subr.mxu0 0.0
    %3641 = vmatpush1.msra.mxu0 %v173
    %3642 = vmatprep.subr.mxu0 0.0
    %3643 = vmatpush1.msra.mxu0 %v174
    %3644 = vmatprep.subr.mxu0 0.0
    %3645 = vmatpush1.msra.mxu0 %v175
    %3646 = vmatprep.subr.mxu0 0.0
    %3647 = vmatpush1.msra.mxu0 %v176
    %3648 = vmatprep.subr.mxu0 0.0
    %3649 = vmatpush1.msra.mxu0 %v177
    %3650 = vmatprep.subr.mxu0 0.0
    %3651 = vmatpush1.msra.mxu0 %v178
    %3652 = vmatprep.subr.mxu0 0.0
    %3653 = vmatpush1.msra.mxu0 %v179
    %3654 = vmatprep.subr.mxu0 0.0
    %3655 = vmatpush1.msra.mxu0 %v180
    %3656 = vmatprep.subr.mxu0 0.0
    %3657 = vmatpush1.msra.mxu0 %v181
    %3658 = vmatprep.subr.mxu0 0.0
    %3659 = vmatpush1.msra.mxu0 %v182
    %3660 = vmatprep.subr.mxu0 0.0
    %3661 = vmatpush1.msra.mxu0 %v183
    %3662 = vmatprep.subr.mxu0 0.0
    %3663 = vmatpush1.msra.mxu0 %v184
    %3664 = vmatprep.subr.mxu0 0.0
    %3665 = vmatpush1.msra.mxu0 %v185
    %3666 = vmatprep.subr.mxu0 0.0
    %3667 = vmatpush1.msra.mxu0 %v186
    %3668 = vmatprep.subr.mxu0 0.0
    %3669 = vmatpush1.msra.mxu0 %v187
    %3670 = vmatprep.subr.mxu0 0.0
    %3671 = vmatpush1.msra.mxu0 %v188
    %3672 = vmatprep.subr.mxu0 0.0
    %3673 = vmatpush1.msra.mxu0 %v189
    %3674 = vmatprep.subr.mxu0 0.0
    %3675 = vmatpush1.msra.mxu0 %v190
    %3676 = vmatprep.subr.mxu0 0.0
    %3677 = vmatpush1.msra.mxu0 %v191
    %3678 = vmatprep.subr.mxu0 0.0
    %3679 = vmatpush1.msra.mxu0 %v192
    %3680 = vmatprep.subr.mxu0 0.0
    %3681 = vmatpush1.msra.mxu0 %v193
    %3682 = vmatprep.subr.mxu0 0.0
    %3683 = vmatpush1.msra.mxu0 %v194
    %3684 = vmatprep.subr.mxu0 0.0
    %3685 = vmatpush1.msra.mxu0 %v195
    %3686 = vmatprep.subr.mxu0 0.0
    %3687 = vmatpush1.msra.mxu0 %v196
    %3688 = vmatprep.subr.mxu0 0.0
    %3689 = vmatpush1.msra.mxu0 %v197
    %3690 = vmatprep.subr.mxu0 0.0
    %3691 = vmatpush1.msra.mxu0 %v198
    %3692 = vmatprep.subr.mxu0 0.0
    %3693 = vmatpush1.msra.mxu0 %v199
    %3694 = vmatprep.subr.mxu0 0.0
    %3695 = vmatpush1.msra.mxu0 %v200
    %3696 = vmatprep.mubr.f32.mxu0 %v3530
    %3697 = vmatmul.mubr.f32.gmra.mrb[0].mxu0 %v3529
    %v3698 = vpop.f32.mrb[0].mxu0
    %v3699 = vadd.f32 %v3624, %v3698
    %v3700 = vpop.f32.mrb[0].mxu0
    %3701 = vmatprep.mubr.f32.mxu0 %v3545
    %3702 = vmatmul.mubr.f32.gmra.mrb[0].mxu0 %v3544
    %v3703 = vpop.f32.mrb[0].mxu0
    %v3704 = vadd.f32 %v3629, %v3703
    %v3705 = vpop.f32.mrb[0].mxu0
    %3706 = vdwg.mxu0
    %3707 = vmatprep.subr.mxu0 0.0
    %3708 = vmatpush1.msra.mxu0 %v201
    %3709 = vmatprep.subr.mxu0 0.0
    %3710 = vmatpush1.msra.mxu0 %v202
    %3711 = vmatprep.subr.mxu0 0.0
    %3712 = vmatpush1.msra.mxu0 %v203
    %3713 = vmatprep.subr.mxu0 0.0
    %3714 = vmatpush1.msra.mxu0 %v204
    %3715 = vmatprep.subr.mxu0 0.0
    %3716 = vmatpush1.msra.mxu0 %v205
    %3717 = vmatprep.subr.mxu0 0.0
    %3718 = vmatpush1.msra.mxu0 %v206
    %3719 = vmatprep.subr.mxu0 0.0
    %3720 = vmatpush1.msra.mxu0 %v207
    %3721 = vmatprep.subr.mxu0 0.0
    %3722 = vmatpush1.msra.mxu0 %v208
    %3723 = vmatprep.subr.mxu0 0.0
    %3724 = vmatpush1.msra.mxu0 %v209
    %3725 = vmatprep.subr.mxu0 0.0
    %3726 = vmatpush1.msra.mxu0 %v210
    %3727 = vmatprep.subr.mxu0 0.0
    %3728 = vmatpush1.msra.mxu0 %v211
    %3729 = vmatprep.subr.mxu0 0.0
    %3730 = vmatpush1.msra.mxu0 %v212
    %3731 = vmatprep.subr.mxu0 0.0
    %3732 = vmatpush1.msra.mxu0 %v213
    %3733 = vmatprep.subr.mxu0 0.0
    %3734 = vmatpush1.msra.mxu0 %v214
    %3735 = vmatprep.subr.mxu0 0.0
    %3736 = vmatpush1.msra.mxu0 %v215
    %3737 = vmatprep.subr.mxu0 0.0
    %3738 = vmatpush1.msra.mxu0 %v216
    %3739 = vmatprep.subr.mxu0 0.0
    %3740 = vmatpush1.msra.mxu0 %v217
    %3741 = vmatprep.subr.mxu0 0.0
    %3742 = vmatpush1.msra.mxu0 %v218
    %3743 = vmatprep.subr.mxu0 0.0
    %3744 = vmatpush1.msra.mxu0 %v219
    %3745 = vmatprep.subr.mxu0 0.0
    %3746 = vmatpush1.msra.mxu0 %v220
    %3747 = vmatprep.subr.mxu0 0.0
    %3748 = vmatpush1.msra.mxu0 %v221
    %3749 = vmatprep.subr.mxu0 0.0
    %3750 = vmatpush1.msra.mxu0 %v222
    %3751 = vmatprep.subr.mxu0 0.0
    %3752 = vmatpush1.msra.mxu0 %v223
    %3753 = vmatprep.subr.mxu0 0.0
    %3754 = vmatpush1.msra.mxu0 %v224
    %3755 = vmatprep.subr.mxu0 0.0
    %3756 = vmatpush1.msra.mxu0 %v225
    %3757 = vmatprep.subr.mxu0 0.0
    %3758 = vmatpush1.msra.mxu0 %v226
    %3759 = vmatprep.subr.mxu0 0.0
    %3760 = vmatpush1.msra.mxu0 %v227
    %3761 = vmatprep.subr.mxu0 0.0
    %3762 = vmatpush1.msra.mxu0 %v228
    %3763 = vmatprep.subr.mxu0 0.0
    %3764 = vmatpush1.msra.mxu0 %v229
    %3765 = vmatprep.subr.mxu0 0.0
    %3766 = vmatpush1.msra.mxu0 %v230
    %3767 = vmatprep.subr.mxu0 0.0
    %3768 = vmatpush1.msra.mxu0 %v231
    %3769 = vmatprep.subr.mxu0 0.0
    %3770 = vmatpush1.msra.mxu0 %v232
    %3771 = vmatprep.mubr.f32.mxu0 %v3532
    %3772 = vmatmul.mubr.f32.gmra.mrb[0].mxu0 %v3531
    %v3773 = vpop.f32.mrb[0].mxu0
    %v3774 = vadd.f32 %v3699, %v3773
    %v3775 = vpop.f32.mrb[0].mxu0
    %3776 = vmatprep.mubr.f32.mxu0 %v3547
    %3777 = vmatmul.mubr.f32.gmra.mrb[0].mxu0 %v3546
    %v3778 = vpop.f32.mrb[0].mxu0
    %v3779 = vadd.f32 %v3704, %v3778
    %v3780 = vpop.f32.mrb[0].mxu0
    %3781 = vdwg.mxu0
    %3782 = vmatprep.subr.mxu0 0.0
    %3783 = vmatpush1.msra.mxu0 %v233
    %3784 = vmatprep.subr.mxu0 0.0
    %3785 = vmatpush1.msra.mxu0 %v234
    %3786 = vmatprep.subr.mxu0 0.0
    %3787 = vmatpush1.msra.mxu0 %v235
    %3788 = vmatprep.subr.mxu0 0.0
    %3789 = vmatpush1.msra.mxu0 %v236
    %3790 = vmatprep.subr.mxu0 0.0
    %3791 = vmatpush1.msra.mxu0 %v237
    %3792 = vmatprep.subr.mxu0 0.0
    %3793 = vmatpush1.msra.mxu0 %v238
    %3794 = vmatprep.subr.mxu0 0.0
    %3795 = vmatpush1.msra.mxu0 %v239
    %3796 = vmatprep.subr.mxu0 0.0
    %3797 = vmatpush1.msra.mxu0 %v240
    %3798 = vmatprep.subr.mxu0 0.0
    %3799 = vmatpush1.msra.mxu0 %v241
    %3800 = vmatprep.subr.mxu0 0.0
    %3801 = vmatpush1.msra.mxu0 %v242
    %3802 = vmatprep.subr.mxu0 0.0
    %3803 = vmatpush1.msra.mxu0 %v243
    %3804 = vmatprep.subr.mxu0 0.0
    %3805 = vmatpush1.msra.mxu0 %v244
    %3806 = vmatprep.subr.mxu0 0.0
    %3807 = vmatpush1.msra.mxu0 %v245
    %3808 = vmatprep.subr.mxu0 0.0
    %3809 = vmatpush1.msra.mxu0 %v246
    %3810 = vmatprep.subr.mxu0 0.0
    %3811 = vmatpush1.msra.mxu0 %v247
    %3812 = vmatprep.subr.mxu0 0.0
    %3813 = vmatpush1.msra.mxu0 %v248
    %3814 = vmatprep.subr.mxu0 0.0
    %3815 = vmatpush1.msra.mxu0 %v249
    %3816 = vmatprep.subr.mxu0 0.0
    %3817 = vmatpush1.msra.mxu0 %v250
    %3818 = vmatprep.subr.mxu0 0.0
    %3819 = vmatpush1.msra.mxu0 %v251
    %3820 = vmatprep.subr.mxu0 0.0
    %3821 = vmatpush1.msra.mxu0 %v252
    %3822 = vmatprep.subr.mxu0 0.0
    %3823 = vmatpush1.msra.mxu0 %v253
    %3824 = vmatprep.subr.mxu0 0.0
    %3825 = vmatpush1.msra.mxu0 %v254
    %3826 = vmatprep.subr.mxu0 0.0
    %3827 = vmatpush1.msra.mxu0 %v255
    %3828 = vmatprep.subr.mxu0 0.0
    %3829 = vmatpush1.msra.mxu0 %v256
    %3830 = vmatprep.subr.mxu0 0.0
    %3831 = vmatpush1.msra.mxu0 %v257
    %3832 = vmatprep.subr.mxu0 0.0
    %3833 = vmatpush1.msra.mxu0 %v258
    %3834 = vmatprep.subr.mxu0 0.0
    %3835 = vmatpush1.msra.mxu0 %v259
    %3836 = vmatprep.subr.mxu0 0.0
    %3837 = vmatpush1.msra.mxu0 %v260
    %3838 = vmatprep.subr.mxu0 0.0
    %3839 = vmatpush1.msra.mxu0 %v261
    %3840 = vmatprep.subr.mxu0 0.0
    %3841 = vmatpush1.msra.mxu0 %v262
    %3842 = vmatprep.subr.mxu0 0.0
    %3843 = vmatpush1.msra.mxu0 %v263
    %3844 = vmatprep.subr.mxu0 0.0
    %3845 = vmatpush1.msra.mxu0 %v264
    %3846 = vmatprep.mubr.f32.mxu0 %v3534
    %3847 = vmatmul.mubr.f32.gmra.mrb[0].mxu0 %v3533
    %v3848 = vpop.f32.mrb[0].mxu0
    %v3849 = vadd.f32 %v3774, %v3848
    %v3850 = vpop.f32.mrb[0].mxu0
    %3851 = vmatprep.mubr.f32.mxu0 %v3549
    %3852 = vmatmul.mubr.f32.gmra.mrb[0].mxu0 %v3548
    %v3853 = vpop.f32.mrb[0].mxu0
    %v3854 = vadd.f32 %v3779, %v3853
    %v3855 = vpop.f32.mrb[0].mxu0
    %3856 = vdwg.mxu0
    %3857 = vmatprep.subr.mxu0 0.0
    %3858 = vmatpush1.msra.mxu0 %v265
    %3859 = vmatprep.subr.mxu0 0.0
    %3860 = vmatpush1.msra.mxu0 %v266
    %3861 = vmatprep.subr.mxu0 0.0
    %3862 = vmatpush1.msra.mxu0 %v267
    %3863 = vmatprep.subr.mxu0 0.0
    %3864 = vmatpush1.msra.mxu0 %v268
    %3865 = vmatprep.subr.mxu0 0.0
    %3866 = vmatpush1.msra.mxu0 %v269
    %3867 = vmatprep.subr.mxu0 0.0
    %3868 = vmatpush1.msra.mxu0 %v270
    %3869 = vmatprep.subr.mxu0 0.0
    %3870 = vmatpush1.msra.mxu0 %v271
    %3871 = vmatprep.subr.mxu0 0.0
    %3872 = vmatpush1.msra.mxu0 %v272
    %3873 = vmatprep.subr.mxu0 0.0
    %3874 = vmatpush1.msra.mxu0 %v273
    %3875 = vmatprep.subr.mxu0 0.0
    %3876 = vmatpush1.msra.mxu0 %v274
    %3877 = vmatprep.subr.mxu0 0.0
    %3878 = vmatpush1.msra.mxu0 %v275
    %3879 = vmatprep.subr.mxu0 0.0
    %3880 = vmatpush1.msra.mxu0 %v276
    %3881 = vmatprep.subr.mxu0 0.0
    %3882 = vmatpush1.msra.mxu0 %v277
    %3883 = vmatprep.subr.mxu0 0.0
    %3884 = vmatpush1.msra.mxu0 %v278
    %3885 = vmatprep.subr.mxu0 0.0
    %3886 = vmatpush1.msra.mxu0 %v279
    %3887 = vmatprep.subr.mxu0 0.0
    %3888 = vmatpush1.msra.mxu0 %v280
    %3889 = vmatprep.subr.mxu0 0.0
    %3890 = vmatpush1.msra.mxu0 %v281
    %3891 = vmatprep.subr.mxu0 0.0
    %3892 = vmatpush1.msra.mxu0 %v282
    %3893 = vmatprep.subr.mxu0 0.0
    %3894 = vmatpush1.msra.mxu0 %v283
    %3895 = vmatprep.subr.mxu0 0.0
    %3896 = vmatpush1.msra.mxu0 %v284
    %3897 = vmatprep.subr.mxu0 0.0
    %3898 = vmatpush1.msra.mxu0 %v285
    %3899 = vmatprep.subr.mxu0 0.0
    %3900 = vmatpush1.msra.mxu0 %v286
    %3901 = vmatprep.subr.mxu0 0.0
    %3902 = vmatpush1.msra.mxu0 %v287
    %3903 = vmatprep.subr.mxu0 0.0
    %3904 = vmatpush1.msra.mxu0 %v288
    %3905 = vmatprep.subr.mxu0 0.0
    %3906 = vmatpush1.msra.mxu0 %v289
    %3907 = vmatprep.subr.mxu0 0.0
    %3908 = vmatpush1.msra.mxu0 %v290
    %3909 = vmatprep.subr.mxu0 0.0
    %3910 = vmatpush1.msra.mxu0 %v291
    %3911 = vmatprep.subr.mxu0 0.0
    %3912 = vmatpush1.msra.mxu0 %v292
    %3913 = vmatprep.subr.mxu0 0.0
    %3914 = vmatpush1.msra.mxu0 %v293
    %3915 = vmatprep.subr.mxu0 0.0
    %3916 = vmatpush1.msra.mxu0 %v294
    %3917 = vmatprep.subr.mxu0 0.0
    %3918 = vmatpush1.msra.mxu0 %v295
    %3919 = vmatprep.subr.mxu0 0.0
    %3920 = vmatpush1.msra.mxu0 %v296
    %3921 = vmatprep.mubr.f32.mxu0 %v3536
    %3922 = vmatmul.mubr.f32.gmra.mrb[0].mxu0 %v3535
    %v3923 = vpop.f32.mrb[0].mxu0
    %v3924 = vadd.f32 %v3849, %v3923
    %v3925 = vpop.f32.mrb[0].mxu0
    %3926 = vmatprep.mubr.f32.mxu0 %v3551
    %3927 = vmatmul.mubr.f32.gmra.mrb[0].mxu0 %v3550
    %v3928 = vpop.f32.mrb[0].mxu0
    %v3929 = vadd.f32 %v3854, %v3928
    %v3930 = vpop.f32.mrb[0].mxu0
    %3931 = vdwg.mxu0
    %3932 = vmatprep.subr.mxu0 0.0
    %3933 = vmatpush1.msra.mxu0 %v297
    %3934 = vmatprep.subr.mxu0 0.0
    %3935 = vmatpush1.msra.mxu0 %v298
    %3936 = vmatprep.subr.mxu0 0.0
    %3937 = vmatpush1.msra.mxu0 %v299
    %3938 = vmatprep.subr.mxu0 0.0
    %3939 = vmatpush1.msra.mxu0 %v300
    %3940 = vmatprep.subr.mxu0 0.0
    %3941 = vmatpush1.msra.mxu0 %v301
    %3942 = vmatprep.subr.mxu0 0.0
    %3943 = vmatpush1.msra.mxu0 %v302
    %3944 = vmatprep.subr.mxu0 0.0
    %3945 = vmatpush1.msra.mxu0 %v303
    %3946 = vmatprep.subr.mxu0 0.0
    %3947 = vmatpush1.msra.mxu0 %v304
    %3948 = vmatprep.subr.mxu0 0.0
    %3949 = vmatpush1.msra.mxu0 %v305
    %3950 = vmatprep.subr.mxu0 0.0
    %3951 = vmatpush1.msra.mxu0 %v306
    %3952 = vmatprep.subr.mxu0 0.0
    %3953 = vmatpush1.msra.mxu0 %v307
    %3954 = vmatprep.subr.mxu0 0.0
    %3955 = vmatpush1.msra.mxu0 %v308
    %3956 = vmatprep.subr.mxu0 0.0
    %3957 = vmatpush1.msra.mxu0 %v309
    %3958 = vmatprep.subr.mxu0 0.0
    %3959 = vmatpush1.msra.mxu0 %v310
    %3960 = vmatprep.subr.mxu0 0.0
    %3961 = vmatpush1.msra.mxu0 %v311
    %3962 = vmatprep.subr.mxu0 0.0
    %3963 = vmatpush1.msra.mxu0 %v312
    %3964 = vmatprep.subr.mxu0 0.0
    %3965 = vmatpush1.msra.mxu0 %v313
    %3966 = vmatprep.subr.mxu0 0.0
    %3967 = vmatpush1.msra.mxu0 %v314
    %3968 = vmatprep.subr.mxu0 0.0
    %3969 = vmatpush1.msra.mxu0 %v315
    %3970 = vmatprep.subr.mxu0 0.0
    %3971 = vmatpush1.msra.mxu0 %v316
    %3972 = vmatprep.subr.mxu0 0.0
    %3973 = vmatpush1.msra.mxu0 %v317
    %3974 = vmatprep.subr.mxu0 0.0
    %3975 = vmatpush1.msra.mxu0 %v318
    %3976 = vmatprep.subr.mxu0 0.0
    %3977 = vmatpush1.msra.mxu0 %v319
    %3978 = vmatprep.subr.mxu0 0.0
    %3979 = vmatpush1.msra.mxu0 %v320
    %3980 = vmatprep.subr.mxu0 0.0
    %3981 = vmatpush1.msra.mxu0 %v321
    %3982 = vmatprep.subr.mxu0 0.0
    %3983 = vmatpush1.msra.mxu0 %v322
    %3984 = vmatprep.subr.mxu0 0.0
    %3985 = vmatpush1.msra.mxu0 %v323
    %3986 = vmatprep.subr.mxu0 0.0
    %3987 = vmatpush1.msra.mxu0 %v324
    %3988 = vmatprep.subr.mxu0 0.0
    %3989 = vmatpush1.msra.mxu0 %v325
    %3990 = vmatprep.subr.mxu0 0.0
    %3991 = vmatpush1.msra.mxu0 %v326
    %3992 = vmatprep.subr.mxu0 0.0
    %3993 = vmatpush1.msra.mxu0 %v327
    %3994 = vmatprep.subr.mxu0 0.0
    %3995 = vmatpush1.msra.mxu0 %v328
    %3996 = vmatprep.mubr.f32.mxu0 %v3538
    %3997 = vmatmul.mubr.f32.gmra.mrb[0].mxu0 %v3537
    %v3998 = vpop.f32.mrb[0].mxu0
    %v3999 = vadd.f32 %v3924, %v3998
    %v4000 = vpop.f32.mrb[0].mxu0
    %4001 = vmatprep.mubr.f32.mxu0 %v3553
    %4002 = vmatmul.mubr.f32.gmra.mrb[0].mxu0 %v3552
    %v4003 = vpop.f32.mrb[0].mxu0
    %v4004 = vadd.f32 %v3929, %v4003
    %v4005 = vpop.f32.mrb[0].mxu0
    %4006 = vdwg.mxu0
    %4007 = vmatprep.subr.mxu0 0.0
    %4008 = vmatpush1.msra.mxu0 %v329
    %4009 = vmatprep.subr.mxu0 0.0
    %4010 = vmatpush1.msra.mxu0 %v330
    %4011 = vmatprep.subr.mxu0 0.0
    %4012 = vmatpush1.msra.mxu0 %v331
    %4013 = vmatprep.subr.mxu0 0.0
    %4014 = vmatpush1.msra.mxu0 %v332
    %4015 = vmatprep.subr.mxu0 0.0
    %4016 = vmatpush1.msra.mxu0 %v333
    %4017 = vmatprep.subr.mxu0 0.0
    %4018 = vmatpush1.msra.mxu0 %v334
    %4019 = vmatprep.subr.mxu0 0.0
    %4020 = vmatpush1.msra.mxu0 %v335
    %4021 = vmatprep.subr.mxu0 0.0
    %4022 = vmatpush1.msra.mxu0 %v336
    %4023 = vmatprep.subr.mxu0 0.0
    %4024 = vmatpush1.msra.mxu0 %v337
    %4025 = vmatprep.subr.mxu0 0.0
    %4026 = vmatpush1.msra.mxu0 %v338
    %4027 = vmatprep.subr.mxu0 0.0
    %4028 = vmatpush1.msra.mxu0 %v339
    %4029 = vmatprep.subr.mxu0 0.0
    %4030 = vmatpush1.msra.mxu0 %v340
    %4031 = vmatprep.subr.mxu0 0.0
    %4032 = vmatpush1.msra.mxu0 %v341
    %4033 = vmatprep.subr.mxu0 0.0
    %4034 = vmatpush1.msra.mxu0 %v342
    %4035 = vmatprep.subr.mxu0 0.0
    %4036 = vmatpush1.msra.mxu0 %v343
    %4037 = vmatprep.subr.mxu0 0.0
    %4038 = vmatpush1.msra.mxu0 %v344
    %4039 = vmatprep.subr.mxu0 0.0
    %4040 = vmatpush1.msra.mxu0 %v345
    %4041 = vmatprep.subr.mxu0 0.0
    %4042 = vmatpush1.msra.mxu0 %v346
    %4043 = vmatprep.subr.mxu0 0.0
    %4044 = vmatpush1.msra.mxu0 %v347
    %4045 = vmatprep.subr.mxu0 0.0
    %4046 = vmatpush1.msra.mxu0 %v348
    %4047 = vmatprep.subr.mxu0 0.0
    %4048 = vmatpush1.msra.mxu0 %v349
    %4049 = vmatprep.subr.mxu0 0.0
    %4050 = vmatpush1.msra.mxu0 %v350
    %4051 = vmatprep.subr.mxu0 0.0
    %4052 = vmatpush1.msra.mxu0 %v351
    %4053 = vmatprep.subr.mxu0 0.0
    %4054 = vmatpush1.msra.mxu0 %v352
    %4055 = vmatprep.subr.mxu0 0.0
    %4056 = vmatpush1.msra.mxu0 %v353
    %4057 = vmatprep.subr.mxu0 0.0
    %4058 = vmatpush1.msra.mxu0 %v354
    %4059 = vmatprep.subr.mxu0 0.0
    %4060 = vmatpush1.msra.mxu0 %v355
    %4061 = vmatprep.subr.mxu0 0.0
    %4062 = vmatpush1.msra.mxu0 %v356
    %4063 = vmatprep.subr.mxu0 0.0
    %4064 = vmatpush1.msra.mxu0 %v357
    %4065 = vmatprep.subr.mxu0 0.0
    %4066 = vmatpush1.msra.mxu0 %v358
    %4067 = vmatprep.subr.mxu0 0.0
    %4068 = vmatpush1.msra.mxu0 %v359
    %4069 = vmatprep.subr.mxu0 0.0
    %4070 = vmatpush1.msra.mxu0 %v360
    %4071 = vmatprep.mubr.f32.mxu0 %v3540
    %4072 = vmatmul.mubr.f32.gmra.mrb[0].mxu0 %v3539
    %v4073 = vpop.f32.mrb[0].mxu0
    %v4074 = vadd.f32 %v3999, %v4073
    %v4075 = vpop.f32.mrb[0].mxu0
    %4076 = vmatprep.mubr.f32.mxu0 %v3555
    %4077 = vmatmul.mubr.f32.gmra.mrb[0].mxu0 %v3554
    %v4078 = vpop.f32.mrb[0].mxu0
    %v4079 = vadd.f32 %v4004, %v4078
    %v4080 = vpop.f32.mrb[0].mxu0
    %4081 = vdwg.mxu0
    %4082 = vmatprep.subr.mxu0 0.0
    %4083 = vmatpush1.msra.mxu0 %v361
    %4084 = vmatprep.subr.mxu0 0.0
    %4085 = vmatpush1.msra.mxu0 %v362
    %4086 = vmatprep.subr.mxu0 0.0
    %4087 = vmatpush1.msra.mxu0 %v363
    %4088 = vmatprep.subr.mxu0 0.0
    %4089 = vmatpush1.msra.mxu0 %v364
    %4090 = vmatprep.subr.mxu0 0.0
    %4091 = vmatpush1.msra.mxu0 %v365
    %4092 = vmatprep.subr.mxu0 0.0
    %4093 = vmatpush1.msra.mxu0 %v366
    %4094 = vmatprep.subr.mxu0 0.0
    %4095 = vmatpush1.msra.mxu0 %v367
    %4096 = vmatprep.subr.mxu0 0.0
    %4097 = vmatpush1.msra.mxu0 %v368
    %4098 = vmatprep.subr.mxu0 0.0
    %4099 = vmatpush1.msra.mxu0 %v369
    %4100 = vmatprep.subr.mxu0 0.0
    %4101 = vmatpush1.msra.mxu0 %v370
    %4102 = vmatprep.subr.mxu0 0.0
    %4103 = vmatpush1.msra.mxu0 %v371
    %4104 = vmatprep.subr.mxu0 0.0
    %4105 = vmatpush1.msra.mxu0 %v372
    %4106 = vmatprep.subr.mxu0 0.0
    %4107 = vmatpush1.msra.mxu0 %v373
    %4108 = vmatprep.subr.mxu0 0.0
    %4109 = vmatpush1.msra.mxu0 %v374
    %4110 = vmatprep.subr.mxu0 0.0
    %4111 = vmatpush1.msra.mxu0 %v375
    %4112 = vmatprep.subr.mxu0 0.0
    %4113 = vmatpush1.msra.mxu0 %v376
    %4114 = vmatprep.subr.mxu0 0.0
    %4115 = vmatpush1.msra.mxu0 0.0
    %4116 = vmatprep.subr.mxu0 0.0
    %4117 = vmatpush1.msra.mxu0 0.0
    %4118 = vmatprep.subr.mxu0 0.0
    %4119 = vmatpush1.msra.mxu0 0.0
    %4120 = vmatprep.subr.mxu0 0.0
    %4121 = vmatpush1.msra.mxu0 0.0
    %4122 = vmatprep.subr.mxu0 0.0
    %4123 = vmatpush1.msra.mxu0 0.0
    %4124 = vmatprep.subr.mxu0 0.0
    %4125 = vmatpush1.msra.mxu0 0.0
    %4126 = vmatprep.subr.mxu0 0.0
    %4127 = vmatpush1.msra.mxu0 0.0
    %4128 = vmatprep.subr.mxu0 0.0
    %4129 = vmatpush1.msra.mxu0 0.0
    %4130 = vmatprep.subr.mxu0 0.0
    %4131 = vmatpush1.msra.mxu0 0.0
    %4132 = vmatprep.subr.mxu0 0.0
    %4133 = vmatpush1.msra.mxu0 0.0
    %4134 = vmatprep.subr.mxu0 0.0
    %4135 = vmatpush1.msra.mxu0 0.0
    %4136 = vmatprep.subr.mxu0 0.0
    %4137 = vmatpush1.msra.mxu0 0.0
    %4138 = vmatprep.subr.mxu0 0.0
    %4139 = vmatpush1.msra.mxu0 0.0
    %4140 = vmatprep.subr.mxu0 0.0
    %4141 = vmatpush1.msra.mxu0 0.0
    %4142 = vmatprep.subr.mxu0 0.0
    %4143 = vmatpush1.msra.mxu0 0.0
    %4144 = vmatprep.subr.mxu0 0.0
    %4145 = vmatpush1.msra.mxu0 0.0
    %4146 = vmatprep.mubr.f32.mxu0 0.0
    %4147 = vmatmul.mubr.f32.gmra.mrb[0].mxu0 %v3541
    %v4148 = vpop.f32.mrb[0].mxu0
    %v4149 = vadd.f32 %v4074, %v4148
    %v4150 = vpop.f32.mrb[0].mxu0
    %4151 = vmatprep.mubr.f32.mxu0 0.0
    %4152 = vmatmul.mubr.f32.gmra.mrb[0].mxu0 %v3556
    %v4153 = vpop.f32.mrb[0].mxu0
    %v4154 = vadd.f32 %v4079, %v4153
    %v4155 = vpop.f32.mrb[0].mxu0
    %4156 = vdwg.mxu0
    %v4157 = vld [vmem:[%s0 + $0x240] sm:$0xff]
    %v4158 = vld [vmem:[%s0 + $0x248] sm:$0xff]
    %v4159 = vld [vmem:[%s0 + $0x250] sm:$0xff]
    %v4160 = vld [vmem:[%s0 + $0x258] sm:$0xff]
    %v4161 = vld [vmem:[%s0 + $0x260] sm:$0xff]
    %v4162 = vld [vmem:[%s0 + $0x268] sm:$0xff]
    %v4163 = vld [vmem:[%s0 + $0x270] sm:$0xff]
    %v4164 = vld [vmem:[%s0 + $0x278] sm:$0xff]
    %v4165 = vld [vmem:[%s0 + $0x280] sm:$0xff]
    %v4166 = vld [vmem:[%s0 + $0x288] sm:$0xff]
    %v4167 = vld [vmem:[%s0 + $0x290] sm:$0xff]
    %v4168 = vld [vmem:[%s0 + $0x298] sm:$0xff]
    %v4169 = vld [vmem:[%s0 + $0x2a0] sm:$0xff]
    %v4170 = vld [vmem:[%s0 + $0x2a8] sm:$0xff]
    %v4171 = vld [vmem:[%s0 + $0x2b0] sm:$0xff]
    %v4172 = vld [vmem:[%s0 + $0x4f8] sm:$0xff]
    %v4173 = vld [vmem:[%s0 + $0x500] sm:$0xff]
    %v4174 = vld [vmem:[%s0 + $0x508] sm:$0xff]
    %v4175 = vld [vmem:[%s0 + $0x510] sm:$0xff]
    %v4176 = vld [vmem:[%s0 + $0x518] sm:$0xff]
    %v4177 = vld [vmem:[%s0 + $0x520] sm:$0xff]
    %v4178 = vld [vmem:[%s0 + $0x528] sm:$0xff]
    %v4179 = vld [vmem:[%s0 + $0x530] sm:$0xff]
    %v4180 = vld [vmem:[%s0 + $0x538] sm:$0xff]
    %v4181 = vld [vmem:[%s0 + $0x540] sm:$0xff]
    %v4182 = vld [vmem:[%s0 + $0x548] sm:$0xff]
    %v4183 = vld [vmem:[%s0 + $0x550] sm:$0xff]
    %v4184 = vld [vmem:[%s0 + $0x558] sm:$0xff]
    %v4185 = vld [vmem:[%s0 + $0x560] sm:$0xff]
    %v4186 = vld [vmem:[%s0 + $0x568] sm:$0xff]
    %4187 = vmatprep.subr.mxu0 0.0
    %4188 = vmatpush1.msra.mxu0 %v137
    %4189 = vmatprep.subr.mxu0 0.0
    %4190 = vmatpush1.msra.mxu0 %v138
    %4191 = vmatprep.subr.mxu0 0.0
    %4192 = vmatpush1.msra.mxu0 %v139
    %4193 = vmatprep.subr.mxu0 0.0
    %4194 = vmatpush1.msra.mxu0 %v140
    %4195 = vmatprep.subr.mxu0 0.0
    %4196 = vmatpush1.msra.mxu0 %v141
    %4197 = vmatprep.subr.mxu0 0.0
    %4198 = vmatpush1.msra.mxu0 %v142
    %4199 = vmatprep.subr.mxu0 0.0
    %4200 = vmatpush1.msra.mxu0 %v143
    %4201 = vmatprep.subr.mxu0 0.0
    %4202 = vmatpush1.msra.mxu0 %v144
    %4203 = vmatprep.subr.mxu0 0.0
    %4204 = vmatpush1.msra.mxu0 %v145
    %4205 = vmatprep.subr.mxu0 0.0
    %4206 = vmatpush1.msra.mxu0 %v146
    %4207 = vmatprep.subr.mxu0 0.0
    %4208 = vmatpush1.msra.mxu0 %v147
    %4209 = vmatprep.subr.mxu0 0.0
    %4210 = vmatpush1.msra.mxu0 %v148
    %4211 = vmatprep.subr.mxu0 0.0
    %4212 = vmatpush1.msra.mxu0 %v149
    %4213 = vmatprep.subr.mxu0 0.0
    %4214 = vmatpush1.msra.mxu0 %v150
    %4215 = vmatprep.subr.mxu0 0.0
    %4216 = vmatpush1.msra.mxu0 %v151
    %4217 = vmatprep.subr.mxu0 0.0
    %4218 = vmatpush1.msra.mxu0 %v152
    %4219 = vmatprep.subr.mxu0 0.0
    %4220 = vmatpush1.msra.mxu0 %v153
    %4221 = vmatprep.subr.mxu0 0.0
    %4222 = vmatpush1.msra.mxu0 %v154
    %4223 = vmatprep.subr.mxu0 0.0
    %4224 = vmatpush1.msra.mxu0 %v155
    %4225 = vmatprep.subr.mxu0 0.0
    %4226 = vmatpush1.msra.mxu0 %v156
    %4227 = vmatprep.subr.mxu0 0.0
    %4228 = vmatpush1.msra.mxu0 %v157
    %4229 = vmatprep.subr.mxu0 0.0
    %4230 = vmatpush1.msra.mxu0 %v158
    %4231 = vmatprep.subr.mxu0 0.0
    %4232 = vmatpush1.msra.mxu0 %v159
    %4233 = vmatprep.subr.mxu0 0.0
    %4234 = vmatpush1.msra.mxu0 %v160
    %4235 = vmatprep.subr.mxu0 0.0
    %4236 = vmatpush1.msra.mxu0 %v161
    %4237 = vmatprep.subr.mxu0 0.0
    %4238 = vmatpush1.msra.mxu0 %v162
    %4239 = vmatprep.subr.mxu0 0.0
    %4240 = vmatpush1.msra.mxu0 %v163
    %4241 = vmatprep.subr.mxu0 0.0
    %4242 = vmatpush1.msra.mxu0 %v164
    %4243 = vmatprep.subr.mxu0 0.0
    %4244 = vmatpush1.msra.mxu0 %v165
    %4245 = vmatprep.subr.mxu0 0.0
    %4246 = vmatpush1.msra.mxu0 %v166
    %4247 = vmatprep.subr.mxu0 0.0
    %4248 = vmatpush1.msra.mxu0 %v167
    %4249 = vmatprep.subr.mxu0 0.0
    %4250 = vmatpush1.msra.mxu0 %v168
    %4251 = vmatprep.mubr.f32.mxu0 %v4158
    %4252 = vmatmul.mubr.f32.gmra.mrb[0].mxu0 %v4157
    %v4253 = vpop.f32.mrb[0].mxu0
    %v4254 = vadd.f32 0.0, %v4253
    %v4255 = vpop.f32.mrb[0].mxu0
    %4256 = vmatprep.mubr.f32.mxu0 %v4173
    %4257 = vmatmul.mubr.f32.gmra.mrb[0].mxu0 %v4172
    %v4258 = vpop.f32.mrb[0].mxu0
    %v4259 = vadd.f32 0.0, %v4258
    %v4260 = vpop.f32.mrb[0].mxu0
    %4261 = vdwg.mxu0
    %4262 = vmatprep.subr.mxu0 0.0
    %4263 = vmatpush1.msra.mxu0 %v169
    %4264 = vmatprep.subr.mxu0 0.0
    %4265 = vmatpush1.msra.mxu0 %v170
    %4266 = vmatprep.subr.mxu0 0.0
    %4267 = vmatpush1.msra.mxu0 %v171
    %4268 = vmatprep.subr.mxu0 0.0
    %4269 = vmatpush1.msra.mxu0 %v172
    %4270 = vmatprep.subr.mxu0 0.0
    %4271 = vmatpush1.msra.mxu0 %v173
    %4272 = vmatprep.subr.mxu0 0.0
    %4273 = vmatpush1.msra.mxu0 %v174
    %4274 = vmatprep.subr.mxu0 0.0
    %4275 = vmatpush1.msra.mxu0 %v175
    %4276 = vmatprep.subr.mxu0 0.0
    %4277 = vmatpush1.msra.mxu0 %v176
    %4278 = vmatprep.subr.mxu0 0.0
    %4279 = vmatpush1.msra.mxu0 %v177
    %4280 = vmatprep.subr.mxu0 0.0
    %4281 = vmatpush1.msra.mxu0 %v178
    %4282 = vmatprep.subr.mxu0 0.0
    %4283 = vmatpush1.msra.mxu0 %v179
    %4284 = vmatprep.subr.mxu0 0.0
    %4285 = vmatpush1.msra.mxu0 %v180
    %4286 = vmatprep.subr.mxu0 0.0
    %4287 = vmatpush1.msra.mxu0 %v181
    %4288 = vmatprep.subr.mxu0 0.0
    %4289 = vmatpush1.msra.mxu0 %v182
    %4290 = vmatprep.subr.mxu0 0.0
    %4291 = vmatpush1.msra.mxu0 %v183
    %4292 = vmatprep.subr.mxu0 0.0
    %4293 = vmatpush1.msra.mxu0 %v184
    %4294 = vmatprep.subr.mxu0 0.0
    %4295 = vmatpush1.msra.mxu0 %v185
    %4296 = vmatprep.subr.mxu0 0.0
    %4297 = vmatpush1.msra.mxu0 %v186
    %4298 = vmatprep.subr.mxu0 0.0
    %4299 = vmatpush1.msra.mxu0 %v187
    %4300 = vmatprep.subr.mxu0 0.0
    %4301 = vmatpush1.msra.mxu0 %v188
    %4302 = vmatprep.subr.mxu0 0.0
    %4303 = vmatpush1.msra.mxu0 %v189
    %4304 = vmatprep.subr.mxu0 0.0
    %4305 = vmatpush1.msra.mxu0 %v190
    %4306 = vmatprep.subr.mxu0 0.0
    %4307 = vmatpush1.msra.mxu0 %v191
    %4308 = vmatprep.subr.mxu0 0.0
    %4309 = vmatpush1.msra.mxu0 %v192
    %4310 = vmatprep.subr.mxu0 0.0
    %4311 = vmatpush1.msra.mxu0 %v193
    %4312 = vmatprep.subr.mxu0 0.0
    %4313 = vmatpush1.msra.mxu0 %v194
    %4314 = vmatprep.subr.mxu0 0.0
    %4315 = vmatpush1.msra.mxu0 %v195
    %4316 = vmatprep.subr.mxu0 0.0
    %4317 = vmatpush1.msra.mxu0 %v196
    %4318 = vmatprep.subr.mxu0 0.0
    %4319 = vmatpush1.msra.mxu0 %v197
    %4320 = vmatprep.subr.mxu0 0.0
    %4321 = vmatpush1.msra.mxu0 %v198
    %4322 = vmatprep.subr.mxu0 0.0
    %4323 = vmatpush1.msra.mxu0 %v199
    %4324 = vmatprep.subr.mxu0 0.0
    %4325 = vmatpush1.msra.mxu0 %v200
    %4326 = vmatprep.mubr.f32.mxu0 %v4160
    %4327 = vmatmul.mubr.f32.gmra.mrb[0].mxu0 %v4159
    %v4328 = vpop.f32.mrb[0].mxu0
    %v4329 = vadd.f32 %v4254, %v4328
    %v4330 = vpop.f32.mrb[0].mxu0
    %4331 = vmatprep.mubr.f32.mxu0 %v4175
    %4332 = vmatmul.mubr.f32.gmra.mrb[0].mxu0 %v4174
    %v4333 = vpop.f32.mrb[0].mxu0
    %v4334 = vadd.f32 %v4259, %v4333
    %v4335 = vpop.f32.mrb[0].mxu0
    %4336 = vdwg.mxu0
    %4337 = vmatprep.subr.mxu0 0.0
    %4338 = vmatpush1.msra.mxu0 %v201
    %4339 = vmatprep.subr.mxu0 0.0
    %4340 = vmatpush1.msra.mxu0 %v202
    %4341 = vmatprep.subr.mxu0 0.0
    %4342 = vmatpush1.msra.mxu0 %v203
    %4343 = vmatprep.subr.mxu0 0.0
    %4344 = vmatpush1.msra.mxu0 %v204
    %4345 = vmatprep.subr.mxu0 0.0
    %4346 = vmatpush1.msra.mxu0 %v205
    %4347 = vmatprep.subr.mxu0 0.0
    %4348 = vmatpush1.msra.mxu0 %v206
    %4349 = vmatprep.subr.mxu0 0.0
    %4350 = vmatpush1.msra.mxu0 %v207
    %4351 = vmatprep.subr.mxu0 0.0
    %4352 = vmatpush1.msra.mxu0 %v208
    %4353 = vmatprep.subr.mxu0 0.0
    %4354 = vmatpush1.msra.mxu0 %v209
    %4355 = vmatprep.subr.mxu0 0.0
    %4356 = vmatpush1.msra.mxu0 %v210
    %4357 = vmatprep.subr.mxu0 0.0
    %4358 = vmatpush1.msra.mxu0 %v211
    %4359 = vmatprep.subr.mxu0 0.0
    %4360 = vmatpush1.msra.mxu0 %v212
    %4361 = vmatprep.subr.mxu0 0.0
    %4362 = vmatpush1.msra.mxu0 %v213
    %4363 = vmatprep.subr.mxu0 0.0
    %4364 = vmatpush1.msra.mxu0 %v214
    %4365 = vmatprep.subr.mxu0 0.0
    %4366 = vmatpush1.msra.mxu0 %v215
    %4367 = vmatprep.subr.mxu0 0.0
    %4368 = vmatpush1.msra.mxu0 %v216
    %4369 = vmatprep.subr.mxu0 0.0
    %4370 = vmatpush1.msra.mxu0 %v217
    %4371 = vmatprep.subr.mxu0 0.0
    %4372 = vmatpush1.msra.mxu0 %v218
    %4373 = vmatprep.subr.mxu0 0.0
    %4374 = vmatpush1.msra.mxu0 %v219
    %4375 = vmatprep.subr.mxu0 0.0
    %4376 = vmatpush1.msra.mxu0 %v220
    %4377 = vmatprep.subr.mxu0 0.0
    %4378 = vmatpush1.msra.mxu0 %v221
    %4379 = vmatprep.subr.mxu0 0.0
    %4380 = vmatpush1.msra.mxu0 %v222
    %4381 = vmatprep.subr.mxu0 0.0
    %4382 = vmatpush1.msra.mxu0 %v223
    %4383 = vmatprep.subr.mxu0 0.0
    %4384 = vmatpush1.msra.mxu0 %v224
    %4385 = vmatprep.subr.mxu0 0.0
    %4386 = vmatpush1.msra.mxu0 %v225
    %4387 = vmatprep.subr.mxu0 0.0
    %4388 = vmatpush1.msra.mxu0 %v226
    %4389 = vmatprep.subr.mxu0 0.0
    %4390 = vmatpush1.msra.mxu0 %v227
    %4391 = vmatprep.subr.mxu0 0.0
    %4392 = vmatpush1.msra.mxu0 %v228
    %4393 = vmatprep.subr.mxu0 0.0
    %4394 = vmatpush1.msra.mxu0 %v229
    %4395 = vmatprep.subr.mxu0 0.0
    %4396 = vmatpush1.msra.mxu0 %v230
    %4397 = vmatprep.subr.mxu0 0.0
    %4398 = vmatpush1.msra.mxu0 %v231
    %4399 = vmatprep.subr.mxu0 0.0
    %4400 = vmatpush1.msra.mxu0 %v232
    %4401 = vmatprep.mubr.f32.mxu0 %v4162
    %4402 = vmatmul.mubr.f32.gmra.mrb[0].mxu0 %v4161
    %v4403 = vpop.f32.mrb[0].mxu0
    %v4404 = vadd.f32 %v4329, %v4403
    %v4405 = vpop.f32.mrb[0].mxu0
    %4406 = vmatprep.mubr.f32.mxu0 %v4177
    %4407 = vmatmul.mubr.f32.gmra.mrb[0].mxu0 %v4176
    %v4408 = vpop.f32.mrb[0].mxu0
    %v4409 = vadd.f32 %v4334, %v4408
    %v4410 = vpop.f32.mrb[0].mxu0
    %4411 = vdwg.mxu0
    %4412 = vmatprep.subr.mxu0 0.0
    %4413 = vmatpush1.msra.mxu0 %v233
    %4414 = vmatprep.subr.mxu0 0.0
    %4415 = vmatpush1.msra.mxu0 %v234
    %4416 = vmatprep.subr.mxu0 0.0
    %4417 = vmatpush1.msra.mxu0 %v235
    %4418 = vmatprep.subr.mxu0 0.0
    %4419 = vmatpush1.msra.mxu0 %v236
    %4420 = vmatprep.subr.mxu0 0.0
    %4421 = vmatpush1.msra.mxu0 %v237
    %4422 = vmatprep.subr.mxu0 0.0
    %4423 = vmatpush1.msra.mxu0 %v238
    %4424 = vmatprep.subr.mxu0 0.0
    %4425 = vmatpush1.msra.mxu0 %v239
    %4426 = vmatprep.subr.mxu0 0.0
    %4427 = vmatpush1.msra.mxu0 %v240
    %4428 = vmatprep.subr.mxu0 0.0
    %4429 = vmatpush1.msra.mxu0 %v241
    %4430 = vmatprep.subr.mxu0 0.0
    %4431 = vmatpush1.msra.mxu0 %v242
    %4432 = vmatprep.subr.mxu0 0.0
    %4433 = vmatpush1.msra.mxu0 %v243
    %4434 = vmatprep.subr.mxu0 0.0
    %4435 = vmatpush1.msra.mxu0 %v244
    %4436 = vmatprep.subr.mxu0 0.0
    %4437 = vmatpush1.msra.mxu0 %v245
    %4438 = vmatprep.subr.mxu0 0.0
    %4439 = vmatpush1.msra.mxu0 %v246
    %4440 = vmatprep.subr.mxu0 0.0
    %4441 = vmatpush1.msra.mxu0 %v247
    %4442 = vmatprep.subr.mxu0 0.0
    %4443 = vmatpush1.msra.mxu0 %v248
    %4444 = vmatprep.subr.mxu0 0.0
    %4445 = vmatpush1.msra.mxu0 %v249
    %4446 = vmatprep.subr.mxu0 0.0
    %4447 = vmatpush1.msra.mxu0 %v250
    %4448 = vmatprep.subr.mxu0 0.0
    %4449 = vmatpush1.msra.mxu0 %v251
    %4450 = vmatprep.subr.mxu0 0.0
    %4451 = vmatpush1.msra.mxu0 %v252
    %4452 = vmatprep.subr.mxu0 0.0
    %4453 = vmatpush1.msra.mxu0 %v253
    %4454 = vmatprep.subr.mxu0 0.0
    %4455 = vmatpush1.msra.mxu0 %v254
    %4456 = vmatprep.subr.mxu0 0.0
    %4457 = vmatpush1.msra.mxu0 %v255
    %4458 = vmatprep.subr.mxu0 0.0
    %4459 = vmatpush1.msra.mxu0 %v256
    %4460 = vmatprep.subr.mxu0 0.0
    %4461 = vmatpush1.msra.mxu0 %v257
    %4462 = vmatprep.subr.mxu0 0.0
    %4463 = vmatpush1.msra.mxu0 %v258
    %4464 = vmatprep.subr.mxu0 0.0
    %4465 = vmatpush1.msra.mxu0 %v259
    %4466 = vmatprep.subr.mxu0 0.0
    %4467 = vmatpush1.msra.mxu0 %v260
    %4468 = vmatprep.subr.mxu0 0.0
    %4469 = vmatpush1.msra.mxu0 %v261
    %4470 = vmatprep.subr.mxu0 0.0
    %4471 = vmatpush1.msra.mxu0 %v262
    %4472 = vmatprep.subr.mxu0 0.0
    %4473 = vmatpush1.msra.mxu0 %v263
    %4474 = vmatprep.subr.mxu0 0.0
    %4475 = vmatpush1.msra.mxu0 %v264
    %4476 = vmatprep.mubr.f32.mxu0 %v4164
    %4477 = vmatmul.mubr.f32.gmra.mrb[0].mxu0 %v4163
    %v4478 = vpop.f32.mrb[0].mxu0
    %v4479 = vadd.f32 %v4404, %v4478
    %v4480 = vpop.f32.mrb[0].mxu0
    %4481 = vmatprep.mubr.f32.mxu0 %v4179
    %4482 = vmatmul.mubr.f32.gmra.mrb[0].mxu0 %v4178
    %v4483 = vpop.f32.mrb[0].mxu0
    %v4484 = vadd.f32 %v4409, %v4483
    %v4485 = vpop.f32.mrb[0].mxu0
    %4486 = vdwg.mxu0
    %4487 = vmatprep.subr.mxu0 0.0
    %4488 = vmatpush1.msra.mxu0 %v265
    %4489 = vmatprep.subr.mxu0 0.0
    %4490 = vmatpush1.msra.mxu0 %v266
    %4491 = vmatprep.subr.mxu0 0.0
    %4492 = vmatpush1.msra.mxu0 %v267
    %4493 = vmatprep.subr.mxu0 0.0
    %4494 = vmatpush1.msra.mxu0 %v268
    %4495 = vmatprep.subr.mxu0 0.0
    %4496 = vmatpush1.msra.mxu0 %v269
    %4497 = vmatprep.subr.mxu0 0.0
    %4498 = vmatpush1.msra.mxu0 %v270
    %4499 = vmatprep.subr.mxu0 0.0
    %4500 = vmatpush1.msra.mxu0 %v271
    %4501 = vmatprep.subr.mxu0 0.0
    %4502 = vmatpush1.msra.mxu0 %v272
    %4503 = vmatprep.subr.mxu0 0.0
    %4504 = vmatpush1.msra.mxu0 %v273
    %4505 = vmatprep.subr.mxu0 0.0
    %4506 = vmatpush1.msra.mxu0 %v274
    %4507 = vmatprep.subr.mxu0 0.0
    %4508 = vmatpush1.msra.mxu0 %v275
    %4509 = vmatprep.subr.mxu0 0.0
    %4510 = vmatpush1.msra.mxu0 %v276
    %4511 = vmatprep.subr.mxu0 0.0
    %4512 = vmatpush1.msra.mxu0 %v277
    %4513 = vmatprep.subr.mxu0 0.0
    %4514 = vmatpush1.msra.mxu0 %v278
    %4515 = vmatprep.subr.mxu0 0.0
    %4516 = vmatpush1.msra.mxu0 %v279
    %4517 = vmatprep.subr.mxu0 0.0
    %4518 = vmatpush1.msra.mxu0 %v280
    %4519 = vmatprep.subr.mxu0 0.0
    %4520 = vmatpush1.msra.mxu0 %v281
    %4521 = vmatprep.subr.mxu0 0.0
    %4522 = vmatpush1.msra.mxu0 %v282
    %4523 = vmatprep.subr.mxu0 0.0
    %4524 = vmatpush1.msra.mxu0 %v283
    %4525 = vmatprep.subr.mxu0 0.0
    %4526 = vmatpush1.msra.mxu0 %v284
    %4527 = vmatprep.subr.mxu0 0.0
    %4528 = vmatpush1.msra.mxu0 %v285
    %4529 = vmatprep.subr.mxu0 0.0
    %4530 = vmatpush1.msra.mxu0 %v286
    %4531 = vmatprep.subr.mxu0 0.0
    %4532 = vmatpush1.msra.mxu0 %v287
    %4533 = vmatprep.subr.mxu0 0.0
    %4534 = vmatpush1.msra.mxu0 %v288
    %4535 = vmatprep.subr.mxu0 0.0
    %4536 = vmatpush1.msra.mxu0 %v289
    %4537 = vmatprep.subr.mxu0 0.0
    %4538 = vmatpush1.msra.mxu0 %v290
    %4539 = vmatprep.subr.mxu0 0.0
    %4540 = vmatpush1.msra.mxu0 %v291
    %4541 = vmatprep.subr.mxu0 0.0
    %4542 = vmatpush1.msra.mxu0 %v292
    %4543 = vmatprep.subr.mxu0 0.0
    %4544 = vmatpush1.msra.mxu0 %v293
    %4545 = vmatprep.subr.mxu0 0.0
    %4546 = vmatpush1.msra.mxu0 %v294
    %4547 = vmatprep.subr.mxu0 0.0
    %4548 = vmatpush1.msra.mxu0 %v295
    %4549 = vmatprep.subr.mxu0 0.0
    %4550 = vmatpush1.msra.mxu0 %v296
    %4551 = vmatprep.mubr.f32.mxu0 %v4166
    %4552 = vmatmul.mubr.f32.gmra.mrb[0].mxu0 %v4165
    %v4553 = vpop.f32.mrb[0].mxu0
    %v4554 = vadd.f32 %v4479, %v4553
    %v4555 = vpop.f32.mrb[0].mxu0
    %4556 = vmatprep.mubr.f32.mxu0 %v4181
    %4557 = vmatmul.mubr.f32.gmra.mrb[0].mxu0 %v4180
    %v4558 = vpop.f32.mrb[0].mxu0
    %v4559 = vadd.f32 %v4484, %v4558
    %v4560 = vpop.f32.mrb[0].mxu0
    %4561 = vdwg.mxu0
    %4562 = vmatprep.subr.mxu0 0.0
    %4563 = vmatpush1.msra.mxu0 %v297
    %4564 = vmatprep.subr.mxu0 0.0
    %4565 = vmatpush1.msra.mxu0 %v298
    %4566 = vmatprep.subr.mxu0 0.0
    %4567 = vmatpush1.msra.mxu0 %v299
    %4568 = vmatprep.subr.mxu0 0.0
    %4569 = vmatpush1.msra.mxu0 %v300
    %4570 = vmatprep.subr.mxu0 0.0
    %4571 = vmatpush1.msra.mxu0 %v301
    %4572 = vmatprep.subr.mxu0 0.0
    %4573 = vmatpush1.msra.mxu0 %v302
    %4574 = vmatprep.subr.mxu0 0.0
    %4575 = vmatpush1.msra.mxu0 %v303
    %4576 = vmatprep.subr.mxu0 0.0
    %4577 = vmatpush1.msra.mxu0 %v304
    %4578 = vmatprep.subr.mxu0 0.0
    %4579 = vmatpush1.msra.mxu0 %v305
    %4580 = vmatprep.subr.mxu0 0.0
    %4581 = vmatpush1.msra.mxu0 %v306
    %4582 = vmatprep.subr.mxu0 0.0
    %4583 = vmatpush1.msra.mxu0 %v307
    %4584 = vmatprep.subr.mxu0 0.0
    %4585 = vmatpush1.msra.mxu0 %v308
    %4586 = vmatprep.subr.mxu0 0.0
    %4587 = vmatpush1.msra.mxu0 %v309
    %4588 = vmatprep.subr.mxu0 0.0
    %4589 = vmatpush1.msra.mxu0 %v310
    %4590 = vmatprep.subr.mxu0 0.0
    %4591 = vmatpush1.msra.mxu0 %v311
    %4592 = vmatprep.subr.mxu0 0.0
    %4593 = vmatpush1.msra.mxu0 %v312
    %4594 = vmatprep.subr.mxu0 0.0
    %4595 = vmatpush1.msra.mxu0 %v313
    %4596 = vmatprep.subr.mxu0 0.0
    %4597 = vmatpush1.msra.mxu0 %v314
    %4598 = vmatprep.subr.mxu0 0.0
    %4599 = vmatpush1.msra.mxu0 %v315
    %4600 = vmatprep.subr.mxu0 0.0
    %4601 = vmatpush1.msra.mxu0 %v316
    %4602 = vmatprep.subr.mxu0 0.0
    %4603 = vmatpush1.msra.mxu0 %v317
    %4604 = vmatprep.subr.mxu0 0.0
    %4605 = vmatpush1.msra.mxu0 %v318
    %4606 = vmatprep.subr.mxu0 0.0
    %4607 = vmatpush1.msra.mxu0 %v319
    %4608 = vmatprep.subr.mxu0 0.0
    %4609 = vmatpush1.msra.mxu0 %v320
    %4610 = vmatprep.subr.mxu0 0.0
    %4611 = vmatpush1.msra.mxu0 %v321
    %4612 = vmatprep.subr.mxu0 0.0
    %4613 = vmatpush1.msra.mxu0 %v322
    %4614 = vmatprep.subr.mxu0 0.0
    %4615 = vmatpush1.msra.mxu0 %v323
    %4616 = vmatprep.subr.mxu0 0.0
    %4617 = vmatpush1.msra.mxu0 %v324
    %4618 = vmatprep.subr.mxu0 0.0
    %4619 = vmatpush1.msra.mxu0 %v325
    %4620 = vmatprep.subr.mxu0 0.0
    %4621 = vmatpush1.msra.mxu0 %v326
    %4622 = vmatprep.subr.mxu0 0.0
    %4623 = vmatpush1.msra.mxu0 %v327
    %4624 = vmatprep.subr.mxu0 0.0
    %4625 = vmatpush1.msra.mxu0 %v328
    %4626 = vmatprep.mubr.f32.mxu0 %v4168
    %4627 = vmatmul.mubr.f32.gmra.mrb[0].mxu0 %v4167
    %v4628 = vpop.f32.mrb[0].mxu0
    %v4629 = vadd.f32 %v4554, %v4628
    %v4630 = vpop.f32.mrb[0].mxu0
    %4631 = vmatprep.mubr.f32.mxu0 %v4183
    %4632 = vmatmul.mubr.f32.gmra.mrb[0].mxu0 %v4182
    %v4633 = vpop.f32.mrb[0].mxu0
    %v4634 = vadd.f32 %v4559, %v4633
    %v4635 = vpop.f32.mrb[0].mxu0
    %4636 = vdwg.mxu0
    %4637 = vmatprep.subr.mxu0 0.0
    %4638 = vmatpush1.msra.mxu0 %v329
    %4639 = vmatprep.subr.mxu0 0.0
    %4640 = vmatpush1.msra.mxu0 %v330
    %4641 = vmatprep.subr.mxu0 0.0
    %4642 = vmatpush1.msra.mxu0 %v331
    %4643 = vmatprep.subr.mxu0 0.0
    %4644 = vmatpush1.msra.mxu0 %v332
    %4645 = vmatprep.subr.mxu0 0.0
    %4646 = vmatpush1.msra.mxu0 %v333
    %4647 = vmatprep.subr.mxu0 0.0
    %4648 = vmatpush1.msra.mxu0 %v334
    %4649 = vmatprep.subr.mxu0 0.0
    %4650 = vmatpush1.msra.mxu0 %v335
    %4651 = vmatprep.subr.mxu0 0.0
    %4652 = vmatpush1.msra.mxu0 %v336
    %4653 = vmatprep.subr.mxu0 0.0
    %4654 = vmatpush1.msra.mxu0 %v337
    %4655 = vmatprep.subr.mxu0 0.0
    %4656 = vmatpush1.msra.mxu0 %v338
    %4657 = vmatprep.subr.mxu0 0.0
    %4658 = vmatpush1.msra.mxu0 %v339
    %4659 = vmatprep.subr.mxu0 0.0
    %4660 = vmatpush1.msra.mxu0 %v340
    %4661 = vmatprep.subr.mxu0 0.0
    %4662 = vmatpush1.msra.mxu0 %v341
    %4663 = vmatprep.subr.mxu0 0.0
    %4664 = vmatpush1.msra.mxu0 %v342
    %4665 = vmatprep.subr.mxu0 0.0
    %4666 = vmatpush1.msra.mxu0 %v343
    %4667 = vmatprep.subr.mxu0 0.0
    %4668 = vmatpush1.msra.mxu0 %v344
    %4669 = vmatprep.subr.mxu0 0.0
    %4670 = vmatpush1.msra.mxu0 %v345
    %4671 = vmatprep.subr.mxu0 0.0
    %4672 = vmatpush1.msra.mxu0 %v346
    %4673 = vmatprep.subr.mxu0 0.0
    %4674 = vmatpush1.msra.mxu0 %v347
    %4675 = vmatprep.subr.mxu0 0.0
    %4676 = vmatpush1.msra.mxu0 %v348
    %4677 = vmatprep.subr.mxu0 0.0
    %4678 = vmatpush1.msra.mxu0 %v349
    %4679 = vmatprep.subr.mxu0 0.0
    %4680 = vmatpush1.msra.mxu0 %v350
    %4681 = vmatprep.subr.mxu0 0.0
    %4682 = vmatpush1.msra.mxu0 %v351
    %4683 = vmatprep.subr.mxu0 0.0
    %4684 = vmatpush1.msra.mxu0 %v352
    %4685 = vmatprep.subr.mxu0 0.0
    %4686 = vmatpush1.msra.mxu0 %v353
    %4687 = vmatprep.subr.mxu0 0.0
    %4688 = vmatpush1.msra.mxu0 %v354
    %4689 = vmatprep.subr.mxu0 0.0
    %4690 = vmatpush1.msra.mxu0 %v355
    %4691 = vmatprep.subr.mxu0 0.0
    %4692 = vmatpush1.msra.mxu0 %v356
    %4693 = vmatprep.subr.mxu0 0.0
    %4694 = vmatpush1.msra.mxu0 %v357
    %4695 = vmatprep.subr.mxu0 0.0
    %4696 = vmatpush1.msra.mxu0 %v358
    %4697 = vmatprep.subr.mxu0 0.0
    %4698 = vmatpush1.msra.mxu0 %v359
    %4699 = vmatprep.subr.mxu0 0.0
    %4700 = vmatpush1.msra.mxu0 %v360
    %4701 = vmatprep.mubr.f32.mxu0 %v4170
    %4702 = vmatmul.mubr.f32.gmra.mrb[0].mxu0 %v4169
    %v4703 = vpop.f32.mrb[0].mxu0
    %v4704 = vadd.f32 %v4629, %v4703
    %v4705 = vpop.f32.mrb[0].mxu0
    %4706 = vmatprep.mubr.f32.mxu0 %v4185
    %4707 = vmatmul.mubr.f32.gmra.mrb[0].mxu0 %v4184
    %v4708 = vpop.f32.mrb[0].mxu0
    %v4709 = vadd.f32 %v4634, %v4708
    %v4710 = vpop.f32.mrb[0].mxu0
    %4711 = vdwg.mxu0
    %4712 = vmatprep.subr.mxu0 0.0
    %4713 = vmatpush1.msra.mxu0 %v361
    %4714 = vmatprep.subr.mxu0 0.0
    %4715 = vmatpush1.msra.mxu0 %v362
    %4716 = vmatprep.subr.mxu0 0.0
    %4717 = vmatpush1.msra.mxu0 %v363
    %4718 = vmatprep.subr.mxu0 0.0
    %4719 = vmatpush1.msra.mxu0 %v364
    %4720 = vmatprep.subr.mxu0 0.0
    %4721 = vmatpush1.msra.mxu0 %v365
    %4722 = vmatprep.subr.mxu0 0.0
    %4723 = vmatpush1.msra.mxu0 %v366
    %4724 = vmatprep.subr.mxu0 0.0
    %4725 = vmatpush1.msra.mxu0 %v367
    %4726 = vmatprep.subr.mxu0 0.0
    %4727 = vmatpush1.msra.mxu0 %v368
    %4728 = vmatprep.subr.mxu0 0.0
    %4729 = vmatpush1.msra.mxu0 %v369
    %4730 = vmatprep.subr.mxu0 0.0
    %4731 = vmatpush1.msra.mxu0 %v370
    %4732 = vmatprep.subr.mxu0 0.0
    %4733 = vmatpush1.msra.mxu0 %v371
    %4734 = vmatprep.subr.mxu0 0.0
    %4735 = vmatpush1.msra.mxu0 %v372
    %4736 = vmatprep.subr.mxu0 0.0
    %4737 = vmatpush1.msra.mxu0 %v373
    %4738 = vmatprep.subr.mxu0 0.0
    %4739 = vmatpush1.msra.mxu0 %v374
    %4740 = vmatprep.subr.mxu0 0.0
    %4741 = vmatpush1.msra.mxu0 %v375
    %4742 = vmatprep.subr.mxu0 0.0
    %4743 = vmatpush1.msra.mxu0 %v376
    %4744 = vmatprep.subr.mxu0 0.0
    %4745 = vmatpush1.msra.mxu0 0.0
    %4746 = vmatprep.subr.mxu0 0.0
    %4747 = vmatpush1.msra.mxu0 0.0
    %4748 = vmatprep.subr.mxu0 0.0
    %4749 = vmatpush1.msra.mxu0 0.0
    %4750 = vmatprep.subr.mxu0 0.0
    %4751 = vmatpush1.msra.mxu0 0.0
    %4752 = vmatprep.subr.mxu0 0.0
    %4753 = vmatpush1.msra.mxu0 0.0
    %4754 = vmatprep.subr.mxu0 0.0
    %4755 = vmatpush1.msra.mxu0 0.0
    %4756 = vmatprep.subr.mxu0 0.0
    %4757 = vmatpush1.msra.mxu0 0.0
    %4758 = vmatprep.subr.mxu0 0.0
    %4759 = vmatpush1.msra.mxu0 0.0
    %4760 = vmatprep.subr.mxu0 0.0
    %4761 = vmatpush1.msra.mxu0 0.0
    %4762 = vmatprep.subr.mxu0 0.0
    %4763 = vmatpush1.msra.mxu0 0.0
    %4764 = vmatprep.subr.mxu0 0.0
    %4765 = vmatpush1.msra.mxu0 0.0
    %4766 = vmatprep.subr.mxu0 0.0
    %4767 = vmatpush1.msra.mxu0 0.0
    %4768 = vmatprep.subr.mxu0 0.0
    %4769 = vmatpush1.msra.mxu0 0.0
    %4770 = vmatprep.subr.mxu0 0.0
    %4771 = vmatpush1.msra.mxu0 0.0
    %4772 = vmatprep.subr.mxu0 0.0
    %4773 = vmatpush1.msra.mxu0 0.0
    %4774 = vmatprep.subr.mxu0 0.0
    %4775 = vmatpush1.msra.mxu0 0.0
    %4776 = vmatprep.mubr.f32.mxu0 0.0
    %4777 = vmatmul.mubr.f32.gmra.mrb[0].mxu0 %v4171
    %v4778 = vpop.f32.mrb[0].mxu0
    %v4779 = vadd.f32 %v4704, %v4778
    %v4780 = vpop.f32.mrb[0].mxu0
    %4781 = vmatprep.mubr.f32.mxu0 0.0
    %4782 = vmatmul.mubr.f32.gmra.mrb[0].mxu0 %v4186
    %v4783 = vpop.f32.mrb[0].mxu0
    %v4784 = vadd.f32 %v4709, %v4783
    %v4785 = vpop.f32.mrb[0].mxu0
    %4786 = vdwg.mxu0
    %v4787 = vld [vmem:[#allocation7] sm:$0xff]
    %v4789 = vlaneseq
    %v4790 = vshrl.u32 %v4789, 7
    %v4791 = vsub.s32 0, %v4790
    %v4792 = vrot.slane %v4787, %v4791
    %v4793 = vlaneseq
    %v4794 = vshrl.u32 %v4793, 7
    %v4795 = vsub.s32 1, %v4794
    %v4796 = vrot.slane %v4787, %v4795
    %v4797 = vlaneseq
    %v4798 = vshrl.u32 %v4797, 7
    %v4799 = vsub.s32 2, %v4798
    %v4800 = vrot.slane %v4787, %v4799
    %v4801 = vlaneseq
    %v4802 = vshrl.u32 %v4801, 7
    %v4803 = vsub.s32 3, %v4802
    %v4804 = vrot.slane %v4787, %v4803
    %v4805 = vlaneseq
    %v4806 = vshrl.u32 %v4805, 7
    %v4807 = vsub.s32 4, %v4806
    %v4808 = vrot.slane %v4787, %v4807
    %v4809 = vlaneseq
    %v4810 = vshrl.u32 %v4809, 7
    %v4811 = vsub.s32 5, %v4810
    %v4812 = vrot.slane %v4787, %v4811
    %v4813 = vlaneseq
    %v4814 = vshrl.u32 %v4813, 7
    %v4815 = vsub.s32 6, %v4814
    %v4816 = vrot.slane %v4787, %v4815
    %v4824 = vadd.f32 %v999, %v4792
    %v4825 = vadd.f32 %v1629, %v4796
    %v4826 = vadd.f32 %v2259, %v4800
    %v4827 = vadd.f32 %v2889, %v4804
    %v4828 = vadd.f32 %v3519, %v4808
    %v4829 = vadd.f32 %v4149, %v4812
    %v4830 = vadd.f32 %v4779, %v4816
    %v4831 = vadd.f32 %v1004, %v4792
    %v4832 = vadd.f32 %v1634, %v4796
    %v4833 = vadd.f32 %v2264, %v4800
    %v4834 = vadd.f32 %v2894, %v4804
    %v4835 = vadd.f32 %v3524, %v4808
    %v4836 = vadd.f32 %v4154, %v4812
    %v4837 = vadd.f32 %v4784, %v4816
    %v4838 = vmax.f32 %v4824, 0.0
    %v4839 = vmax.f32 %v4825, 0.0
    %v4840 = vmax.f32 %v4826, 0.0
    %v4841 = vmax.f32 %v4827, 0.0
    %v4842 = vmax.f32 %v4828, 0.0
    %v4843 = vmax.f32 %v4829, 0.0
    %v4844 = vmax.f32 %v4830, 0.0
    %v4845 = vmax.f32 %v4831, 0.0
    %v4846 = vmax.f32 %v4832, 0.0
    %v4847 = vmax.f32 %v4833, 0.0
    %v4848 = vmax.f32 %v4834, 0.0
    %v4849 = vmax.f32 %v4835, 0.0
    %v4850 = vmax.f32 %v4836, 0.0
    %v4851 = vmax.f32 %v4837, 0.0
    %v4852 = vld [vmem:[#allocation4] sm:$0xff]
    %v4853 = vld [vmem:[#allocation4 + $0x8] sm:$0xff]
    %v4854 = vld [vmem:[#allocation4 + $0x10] sm:$0xff]
    %v4855 = vld [vmem:[#allocation4 + $0x18] sm:$0xff]
    %v4856 = vld [vmem:[#allocation4 + $0x20] sm:$0xff]
    %v4857 = vld [vmem:[#allocation4 + $0x28] sm:$0xff]
    %v4858 = vld [vmem:[#allocation4 + $0x30] sm:$0xff]
    %v4859 = vld [vmem:[#allocation4 + $0x38] sm:$0xff]
    %v4860 = vld [vmem:[#allocation4 + $0x40] sm:$0xff]
    %v4861 = vld [vmem:[#allocation4 + $0x48] sm:$0xff]
    %v4862 = vld [vmem:[#allocation4 + $0x50] sm:$0xff]
    %v4863 = vld [vmem:[#allocation4 + $0x58] sm:$0xff]
    %v4864 = vld [vmem:[#allocation4 + $0x60] sm:$0xff]
    %v4865 = vld [vmem:[#allocation4 + $0x68] sm:$0xff]
    %v4866 = vld [vmem:[#allocation4 + $0x70] sm:$0xff]
    %v4867 = vld [vmem:[#allocation4 + $0x78] sm:$0xff]
    %v4868 = vld [vmem:[#allocation4 + $0x80] sm:$0xff]
    %v4869 = vld [vmem:[#allocation4 + $0x88] sm:$0xff]
    %v4870 = vld [vmem:[#allocation4 + $0x90] sm:$0xff]
    %v4871 = vld [vmem:[#allocation4 + $0x98] sm:$0xff]
    %v4872 = vld [vmem:[#allocation4 + $0xa0] sm:$0xff]
    %v4873 = vld [vmem:[#allocation4 + $0xa8] sm:$0xff]
    %v4874 = vld [vmem:[#allocation4 + $0xb0] sm:$0xff]
    %v4875 = vld [vmem:[#allocation4 + $0xb8] sm:$0xff]
    %v4876 = vld [vmem:[#allocation4 + $0xc0] sm:$0xff]
    %v4877 = vld [vmem:[#allocation4 + $0xc8] sm:$0xff]
    %v4878 = vld [vmem:[#allocation4 + $0xd0] sm:$0xff]
    %v4879 = vld [vmem:[#allocation4 + $0xd8] sm:$0xff]
    %v4880 = vld [vmem:[#allocation4 + $0xe0] sm:$0xff]
    %v4881 = vld [vmem:[#allocation4 + $0xe8] sm:$0xff]
    %v4882 = vld [vmem:[#allocation4 + $0xf0] sm:$0xff]
    %v4883 = vld [vmem:[#allocation4 + $0xf8] sm:$0xff]
    %v4884 = vld [vmem:[#allocation4 + $0x100] sm:$0xff]
    %v4885 = vld [vmem:[#allocation4 + $0x108] sm:$0xff]
    %v4886 = vld [vmem:[#allocation4 + $0x110] sm:$0xff]
    %v4887 = vld [vmem:[#allocation4 + $0x118] sm:$0xff]
    %v4888 = vld [vmem:[#allocation4 + $0x120] sm:$0xff]
    %v4889 = vld [vmem:[#allocation4 + $0x128] sm:$0xff]
    %v4890 = vld [vmem:[#allocation4 + $0x130] sm:$0xff]
    %v4891 = vld [vmem:[#allocation4 + $0x138] sm:$0xff]
    %v4892 = vld [vmem:[#allocation4 + $0x140] sm:$0xff]
    %v4893 = vld [vmem:[#allocation4 + $0x148] sm:$0xff]
    %v4894 = vld [vmem:[#allocation4 + $0x150] sm:$0xff]
    %v4895 = vld [vmem:[#allocation4 + $0x158] sm:$0xff]
    %v4896 = vld [vmem:[#allocation4 + $0x160] sm:$0xff]
    %v4897 = vld [vmem:[#allocation4 + $0x168] sm:$0xff]
    %v4898 = vld [vmem:[#allocation4 + $0x170] sm:$0xff]
    %v4899 = vld [vmem:[#allocation4 + $0x178] sm:$0xff]
    %v4900 = vld [vmem:[#allocation4 + $0x180] sm:$0xff]
    %v4901 = vld [vmem:[#allocation4 + $0x188] sm:$0xff]
    %v4902 = vld [vmem:[#allocation4 + $0x190] sm:$0xff]
    %v4903 = vld [vmem:[#allocation4 + $0x198] sm:$0xff]
    %v4904 = vld [vmem:[#allocation4 + $0x1a0] sm:$0xff]
    %v4905 = vld [vmem:[#allocation4 + $0x1a8] sm:$0xff]
    %v4906 = vld [vmem:[#allocation4 + $0x1b0] sm:$0xff]
    %v4907 = vld [vmem:[#allocation4 + $0x1b8] sm:$0xff]
    %v4908 = vld [vmem:[#allocation4 + $0x1c0] sm:$0xff]
    %v4909 = vld [vmem:[#allocation4 + $0x1c8] sm:$0xff]
    %v4910 = vld [vmem:[#allocation4 + $0x1d0] sm:$0xff]
    %v4911 = vld [vmem:[#allocation4 + $0x1d8] sm:$0xff]
    %v4912 = vld [vmem:[#allocation4 + $0x1e0] sm:$0xff]
    %v4913 = vld [vmem:[#allocation4 + $0x1e8] sm:$0xff]
    %v4914 = vld [vmem:[#allocation4 + $0x1f0] sm:$0xff]
    %v4915 = vld [vmem:[#allocation4 + $0x1f8] sm:$0xff]
    %v4916 = vld [vmem:[#allocation4 + $0x200] sm:$0xff]
    %v4917 = vld [vmem:[#allocation4 + $0x208] sm:$0xff]
    %v4918 = vld [vmem:[#allocation4 + $0x210] sm:$0xff]
    %v4919 = vld [vmem:[#allocation4 + $0x218] sm:$0xff]
    %v4920 = vld [vmem:[#allocation4 + $0x220] sm:$0xff]
    %v4921 = vld [vmem:[#allocation4 + $0x228] sm:$0xff]
    %v4922 = vld [vmem:[#allocation4 + $0x230] sm:$0xff]
    %v4923 = vld [vmem:[#allocation4 + $0x238] sm:$0xff]
    %v4924 = vld [vmem:[#allocation4 + $0x240] sm:$0xff]
    %v4925 = vld [vmem:[#allocation4 + $0x248] sm:$0xff]
    %v4926 = vld [vmem:[#allocation4 + $0x250] sm:$0xff]
    %v4927 = vld [vmem:[#allocation4 + $0x258] sm:$0xff]
    %v4928 = vld [vmem:[#allocation4 + $0x260] sm:$0xff]
    %v4929 = vld [vmem:[#allocation4 + $0x268] sm:$0xff]
    %v4930 = vld [vmem:[#allocation4 + $0x270] sm:$0xff]
    %v4931 = vld [vmem:[#allocation4 + $0x278] sm:$0xff]
    %v4932 = vld [vmem:[#allocation4 + $0x280] sm:$0xff]
    %v4933 = vld [vmem:[#allocation4 + $0x288] sm:$0xff]
    %v4934 = vld [vmem:[#allocation4 + $0x290] sm:$0xff]
    %v4935 = vld [vmem:[#allocation4 + $0x298] sm:$0xff]
    %v4936 = vld [vmem:[#allocation4 + $0x2a0] sm:$0xff]
    %v4937 = vld [vmem:[#allocation4 + $0x2a8] sm:$0xff]
    %v4938 = vld [vmem:[#allocation4 + $0x2b0] sm:$0xff]
    %v4939 = vld [vmem:[#allocation4 + $0x2b8] sm:$0xff]
    %v4940 = vld [vmem:[#allocation4 + $0x2c0] sm:$0xff]
    %v4941 = vld [vmem:[#allocation4 + $0x2c8] sm:$0xff]
    %v4942 = vld [vmem:[#allocation4 + $0x2d0] sm:$0xff]
    %v4943 = vld [vmem:[#allocation4 + $0x2d8] sm:$0xff]
    %v4944 = vld [vmem:[#allocation4 + $0x2e0] sm:$0xff]
    %v4945 = vld [vmem:[#allocation4 + $0x2e8] sm:$0xff]
    %v4946 = vld [vmem:[#allocation4 + $0x2f0] sm:$0xff]
    %v4947 = vld [vmem:[#allocation4 + $0x2f8] sm:$0xff]
    %v4948 = vld [vmem:[#allocation4 + $0x300] sm:$0xff]
    %v4949 = vld [vmem:[#allocation4 + $0x308] sm:$0xff]
    %v4950 = vld [vmem:[#allocation4 + $0x310] sm:$0xff]
    %v4951 = vld [vmem:[#allocation4 + $0x318] sm:$0xff]
    %v4952 = vld [vmem:[#allocation4 + $0x320] sm:$0xff]
    %v4953 = vld [vmem:[#allocation4 + $0x328] sm:$0xff]
    %v4954 = vld [vmem:[#allocation4 + $0x330] sm:$0xff]
    %v4955 = vld [vmem:[#allocation4 + $0x338] sm:$0xff]
    %v4956 = vld [vmem:[#allocation4 + $0x340] sm:$0xff]
    %v4957 = vld [vmem:[#allocation4 + $0x348] sm:$0xff]
    %v4958 = vld [vmem:[#allocation4 + $0x350] sm:$0xff]
    %v4959 = vld [vmem:[#allocation4 + $0x358] sm:$0xff]
    %v4960 = vld [vmem:[#allocation4 + $0x360] sm:$0xff]
    %v4961 = vld [vmem:[#allocation4 + $0x368] sm:$0xff]
    %v4962 = vld [vmem:[#allocation4 + $0x370] sm:$0xff]
    %v4963 = vld [vmem:[#allocation4 + $0x378] sm:$0xff]
    %v4964 = vld [vmem:[#allocation4 + $0x380] sm:$0xff]
    %v4965 = vld [vmem:[#allocation4 + $0x388] sm:$0xff]
    %v4966 = vld [vmem:[#allocation4 + $0x390] sm:$0xff]
    %v4967 = vld [vmem:[#allocation4 + $0x398] sm:$0xff]
    %v4968 = vld [vmem:[#allocation4 + $0x3a0] sm:$0xff]
    %v4969 = vld [vmem:[#allocation4 + $0x3a8] sm:$0xff]
    %v4970 = vld [vmem:[#allocation4 + $0x3b0] sm:$0xff]
    %v4971 = vld [vmem:[#allocation4 + $0x3b8] sm:$0xff]
    %v4972 = vld [vmem:[#allocation4 + $0x3c0] sm:$0xff]
    %v4973 = vld [vmem:[#allocation4 + $0x3c8] sm:$0xff]
    %v4974 = vld [vmem:[#allocation4 + $0x3d0] sm:$0xff]
    %v4975 = vld [vmem:[#allocation4 + $0x3d8] sm:$0xff]
    %v4976 = vld [vmem:[#allocation4 + $0x3e0] sm:$0xff]
    %v4977 = vld [vmem:[#allocation4 + $0x3e8] sm:$0xff]
    %v4978 = vld [vmem:[#allocation4 + $0x3f0] sm:$0xff]
    %v4979 = vld [vmem:[#allocation4 + $0x3f8] sm:$0xff]
    %v4980 = vld [vmem:[#allocation4 + $0x400] sm:$0xff]
    %v4981 = vld [vmem:[#allocation4 + $0x408] sm:$0xff]
    %v4982 = vld [vmem:[#allocation4 + $0x410] sm:$0xff]
    %v4983 = vld [vmem:[#allocation4 + $0x418] sm:$0xff]
    %v4984 = vld [vmem:[#allocation4 + $0x420] sm:$0xff]
    %v4985 = vld [vmem:[#allocation4 + $0x428] sm:$0xff]
    %v4986 = vld [vmem:[#allocation4 + $0x430] sm:$0xff]
    %v4987 = vld [vmem:[#allocation4 + $0x438] sm:$0xff]
    %v4988 = vld [vmem:[#allocation4 + $0x440] sm:$0xff]
    %v4989 = vld [vmem:[#allocation4 + $0x448] sm:$0xff]
    %v4990 = vld [vmem:[#allocation4 + $0x450] sm:$0xff]
    %v4991 = vld [vmem:[#allocation4 + $0x458] sm:$0xff]
    %v4992 = vld [vmem:[#allocation4 + $0x460] sm:$0xff]
    %v4993 = vld [vmem:[#allocation4 + $0x468] sm:$0xff]
    %v4994 = vld [vmem:[#allocation4 + $0x470] sm:$0xff]
    %v4995 = vld [vmem:[#allocation4 + $0x478] sm:$0xff]
    %v4996 = vld [vmem:[#allocation4 + $0x480] sm:$0xff]
    %v4997 = vld [vmem:[#allocation4 + $0x488] sm:$0xff]
    %v4998 = vld [vmem:[#allocation4 + $0x490] sm:$0xff]
    %v4999 = vld [vmem:[#allocation4 + $0x498] sm:$0xff]
    %v5000 = vld [vmem:[#allocation4 + $0x4a0] sm:$0xff]
    %v5001 = vld [vmem:[#allocation4 + $0x4a8] sm:$0xff]
    %v5002 = vld [vmem:[#allocation4 + $0x4b0] sm:$0xff]
    %v5003 = vld [vmem:[#allocation4 + $0x4b8] sm:$0xff]
    %v5004 = vld [vmem:[#allocation4 + $0x4c0] sm:$0xff]
    %v5005 = vld [vmem:[#allocation4 + $0x4c8] sm:$0xff]
    %v5006 = vld [vmem:[#allocation4 + $0x4d0] sm:$0xff]
    %v5007 = vld [vmem:[#allocation4 + $0x4d8] sm:$0xff]
    %v5008 = vld [vmem:[#allocation4 + $0x4e0] sm:$0xff]
    %v5009 = vld [vmem:[#allocation4 + $0x4e8] sm:$0xff]
    %v5010 = vld [vmem:[#allocation4 + $0x4f0] sm:$0xff]
    %v5011 = vld [vmem:[#allocation4 + $0x4f8] sm:$0xff]
    %v5012 = vld [vmem:[#allocation4 + $0x500] sm:$0xff]
    %v5013 = vld [vmem:[#allocation4 + $0x508] sm:$0xff]
    %v5014 = vld [vmem:[#allocation4 + $0x510] sm:$0xff]
    %v5015 = vld [vmem:[#allocation4 + $0x518] sm:$0xff]
    %v5016 = vld [vmem:[#allocation4 + $0x520] sm:$0xff]
    %v5017 = vld [vmem:[#allocation4 + $0x528] sm:$0xff]
    %v5018 = vld [vmem:[#allocation4 + $0x530] sm:$0xff]
    %v5019 = vld [vmem:[#allocation4 + $0x538] sm:$0xff]
    %v5020 = vld [vmem:[#allocation4 + $0x540] sm:$0xff]
    %v5021 = vld [vmem:[#allocation4 + $0x548] sm:$0xff]
    %v5022 = vld [vmem:[#allocation4 + $0x550] sm:$0xff]
    %v5023 = vld [vmem:[#allocation4 + $0x558] sm:$0xff]
    %v5024 = vld [vmem:[#allocation4 + $0x560] sm:$0xff]
    %v5025 = vld [vmem:[#allocation4 + $0x568] sm:$0xff]
    %v5026 = vld [vmem:[#allocation4 + $0x570] sm:$0xff]
    %v5027 = vld [vmem:[#allocation4 + $0x578] sm:$0xff]
    %v5028 = vld [vmem:[#allocation4 + $0x580] sm:$0xff]
    %v5029 = vld [vmem:[#allocation4 + $0x588] sm:$0xff]
    %v5030 = vld [vmem:[#allocation4 + $0x590] sm:$0xff]
    %v5031 = vld [vmem:[#allocation4 + $0x598] sm:$0xff]
    %v5032 = vld [vmem:[#allocation4 + $0x5a0] sm:$0xff]
    %v5033 = vld [vmem:[#allocation4 + $0x5a8] sm:$0xff]
    %v5034 = vld [vmem:[#allocation4 + $0x5b0] sm:$0xff]
    %v5035 = vld [vmem:[#allocation4 + $0x5b8] sm:$0xff]
    %v5036 = vld [vmem:[#allocation4 + $0x5c0] sm:$0xff]
    %v5037 = vld [vmem:[#allocation4 + $0x5c8] sm:$0xff]
    %v5038 = vld [vmem:[#allocation4 + $0x5d0] sm:$0xff]
    %v5039 = vld [vmem:[#allocation4 + $0x5d8] sm:$0xff]
    %v5040 = vld [vmem:[#allocation4 + $0x5e0] sm:$0xff]
    %v5041 = vld [vmem:[#allocation4 + $0x5e8] sm:$0xff]
    %v5042 = vld [vmem:[#allocation4 + $0x5f0] sm:$0xff]
    %v5043 = vld [vmem:[#allocation4 + $0x5f8] sm:$0xff]
    %v5044 = vld [vmem:[#allocation4 + $0x600] sm:$0xff]
    %v5045 = vld [vmem:[#allocation4 + $0x608] sm:$0xff]
    %v5046 = vld [vmem:[#allocation4 + $0x610] sm:$0xff]
    %v5047 = vld [vmem:[#allocation4 + $0x618] sm:$0xff]
    %v5048 = vld [vmem:[#allocation4 + $0x620] sm:$0xff]
    %v5049 = vld [vmem:[#allocation4 + $0x628] sm:$0xff]
    %v5050 = vld [vmem:[#allocation4 + $0x630] sm:$0xff]
    %v5051 = vld [vmem:[#allocation4 + $0x638] sm:$0xff]
    %v5052 = vld [vmem:[#allocation4 + $0x640] sm:$0xff]
    %v5053 = vld [vmem:[#allocation4 + $0x648] sm:$0xff]
    %v5054 = vld [vmem:[#allocation4 + $0x650] sm:$0xff]
    %v5055 = vld [vmem:[#allocation4 + $0x658] sm:$0xff]
    %v5056 = vld [vmem:[#allocation4 + $0x660] sm:$0xff]
    %v5057 = vld [vmem:[#allocation4 + $0x668] sm:$0xff]
    %v5058 = vld [vmem:[#allocation4 + $0x670] sm:$0xff]
    %v5059 = vld [vmem:[#allocation4 + $0x678] sm:$0xff]
    %v5060 = vld [vmem:[#allocation4 + $0x680] sm:$0xff]
    %v5061 = vld [vmem:[#allocation4 + $0x688] sm:$0xff]
    %v5062 = vld [vmem:[#allocation4 + $0x690] sm:$0xff]
    %v5063 = vld [vmem:[#allocation4 + $0x698] sm:$0xff]
    %v5064 = vld [vmem:[#allocation4 + $0x6a0] sm:$0xff]
    %v5065 = vld [vmem:[#allocation4 + $0x6a8] sm:$0xff]
    %v5066 = vld [vmem:[#allocation4 + $0x6b0] sm:$0xff]
    %v5067 = vld [vmem:[#allocation4 + $0x6b8] sm:$0xff]
    %v5068 = vld [vmem:[#allocation4 + $0x6c0] sm:$0xff]
    %v5069 = vld [vmem:[#allocation4 + $0x6c8] sm:$0xff]
    %v5070 = vld [vmem:[#allocation4 + $0x6d0] sm:$0xff]
    %v5071 = vld [vmem:[#allocation4 + $0x6d8] sm:$0xff]
    %v5072 = vld [vmem:[#allocation4 + $0x6e0] sm:$0xff]
    %v5073 = vld [vmem:[#allocation4 + $0x6e8] sm:$0xff]
    %v5074 = vld [vmem:[#allocation4 + $0x6f0] sm:$0xff]
    %v5075 = vld [vmem:[#allocation4 + $0x6f8] sm:$0xff]
    %v5076 = vld [vmem:[#allocation4 + $0x700] sm:$0xff]
    %v5077 = vld [vmem:[#allocation4 + $0x708] sm:$0xff]
    %v5078 = vld [vmem:[#allocation4 + $0x710] sm:$0xff]
    %v5079 = vld [vmem:[#allocation4 + $0x718] sm:$0xff]
    %v5080 = vld [vmem:[#allocation4 + $0x720] sm:$0xff]
    %v5081 = vld [vmem:[#allocation4 + $0x728] sm:$0xff]
    %v5082 = vld [vmem:[#allocation4 + $0x730] sm:$0xff]
    %v5083 = vld [vmem:[#allocation4 + $0x738] sm:$0xff]
    %v5084 = vld [vmem:[#allocation4 + $0x740] sm:$0xff]
    %v5085 = vld [vmem:[#allocation4 + $0x748] sm:$0xff]
    %v5086 = vld [vmem:[#allocation4 + $0x750] sm:$0xff]
    %v5087 = vld [vmem:[#allocation4 + $0x758] sm:$0xff]
    %v5088 = vld [vmem:[#allocation4 + $0x760] sm:$0xff]
    %v5089 = vld [vmem:[#allocation4 + $0x768] sm:$0xff]
    %v5090 = vld [vmem:[#allocation4 + $0x770] sm:$0xff]
    %v5091 = vld [vmem:[#allocation4 + $0x778] sm:$0xff]
    %v5092 = vld [vmem:[#allocation4 + $0x780] sm:$0xff]
    %v5093 = vld [vmem:[#allocation4 + $0x788] sm:$0xff]
    %v5094 = vld [vmem:[#allocation4 + $0x790] sm:$0xff]
    %v5095 = vld [vmem:[#allocation4 + $0x798] sm:$0xff]
    %v5096 = vld [vmem:[#allocation4 + $0x7a0] sm:$0xff]
    %v5097 = vld [vmem:[#allocation4 + $0x7a8] sm:$0xff]
    %v5098 = vld [vmem:[#allocation4 + $0x7b0] sm:$0xff]
    %v5099 = vld [vmem:[#allocation4 + $0x7b8] sm:$0xff]
    %v5100 = vld [vmem:[#allocation4 + $0x7c0] sm:$0xff]
    %v5101 = vld [vmem:[#allocation4 + $0x7c8] sm:$0xff]
    %v5102 = vld [vmem:[#allocation4 + $0x7d0] sm:$0xff]
    %v5103 = vld [vmem:[#allocation4 + $0x7d8] sm:$0xff]
    %v5104 = vld [vmem:[#allocation4 + $0x7e0] sm:$0xff]
    %v5105 = vld [vmem:[#allocation4 + $0x7e8] sm:$0xff]
    %v5106 = vld [vmem:[#allocation4 + $0x7f0] sm:$0xff]
    %v5107 = vld [vmem:[#allocation4 + $0x7f8] sm:$0xff]
    %v5108 = vld [vmem:[#allocation4 + $0x800] sm:$0xff]
    %v5109 = vld [vmem:[#allocation4 + $0x808] sm:$0xff]
    %v5110 = vld [vmem:[#allocation4 + $0x810] sm:$0xff]
    %v5111 = vld [vmem:[#allocation4 + $0x818] sm:$0xff]
    %v5112 = vld [vmem:[#allocation4 + $0x820] sm:$0xff]
    %v5113 = vld [vmem:[#allocation4 + $0x828] sm:$0xff]
    %v5114 = vld [vmem:[#allocation4 + $0x830] sm:$0xff]
    %v5115 = vld [vmem:[#allocation4 + $0x838] sm:$0xff]
    %v5116 = vld [vmem:[#allocation4 + $0x840] sm:$0xff]
    %v5117 = vld [vmem:[#allocation4 + $0x848] sm:$0xff]
    %v5118 = vld [vmem:[#allocation4 + $0x850] sm:$0xff]
    %v5119 = vld [vmem:[#allocation4 + $0x858] sm:$0xff]
    %v5120 = vld [vmem:[#allocation4 + $0x860] sm:$0xff]
    %v5121 = vld [vmem:[#allocation4 + $0x868] sm:$0xff]
    %v5122 = vld [vmem:[#allocation4 + $0x870] sm:$0xff]
    %v5123 = vld [vmem:[#allocation4 + $0x878] sm:$0xff]
    %v5124 = vld [vmem:[#allocation4 + $0x880] sm:$0xff]
    %v5125 = vld [vmem:[#allocation4 + $0x888] sm:$0xff]
    %v5126 = vld [vmem:[#allocation4 + $0x890] sm:$0xff]
    %v5127 = vld [vmem:[#allocation4 + $0x898] sm:$0xff]
    %v5128 = vld [vmem:[#allocation4 + $0x8a0] sm:$0xff]
    %v5129 = vld [vmem:[#allocation4 + $0x8a8] sm:$0xff]
    %v5130 = vld [vmem:[#allocation4 + $0x8b0] sm:$0xff]
    %v5131 = vld [vmem:[#allocation4 + $0x8b8] sm:$0xff]
    %v5132 = vld [vmem:[#allocation4 + $0x8c0] sm:$0xff]
    %v5133 = vld [vmem:[#allocation4 + $0x8c8] sm:$0xff]
    %v5134 = vld [vmem:[#allocation4 + $0x8d0] sm:$0xff]
    %v5135 = vld [vmem:[#allocation4 + $0x8d8] sm:$0xff]
    %v5136 = vld [vmem:[#allocation4 + $0x8e0] sm:$0xff]
    %v5137 = vld [vmem:[#allocation4 + $0x8e8] sm:$0xff]
    %v5138 = vld [vmem:[#allocation4 + $0x8f0] sm:$0xff]
    %v5139 = vld [vmem:[#allocation4 + $0x8f8] sm:$0xff]
    %v5140 = vld [vmem:[#allocation4 + $0x900] sm:$0xff]
    %v5141 = vld [vmem:[#allocation4 + $0x908] sm:$0xff]
    %v5142 = vld [vmem:[#allocation4 + $0x910] sm:$0xff]
    %v5143 = vld [vmem:[#allocation4 + $0x918] sm:$0xff]
    %v5144 = vld [vmem:[#allocation4 + $0x920] sm:$0xff]
    %v5145 = vld [vmem:[#allocation4 + $0x928] sm:$0xff]
    %v5146 = vld [vmem:[#allocation4 + $0x930] sm:$0xff]
    %v5147 = vld [vmem:[#allocation4 + $0x938] sm:$0xff]
    %v5148 = vld [vmem:[#allocation4 + $0x940] sm:$0xff]
    %v5149 = vld [vmem:[#allocation4 + $0x948] sm:$0xff]
    %v5150 = vld [vmem:[#allocation4 + $0x950] sm:$0xff]
    %v5151 = vld [vmem:[#allocation4 + $0x958] sm:$0xff]
    %v5152 = vld [vmem:[#allocation4 + $0x960] sm:$0xff]
    %v5153 = vld [vmem:[#allocation4 + $0x968] sm:$0xff]
    %v5154 = vld [vmem:[#allocation4 + $0x970] sm:$0xff]
    %v5155 = vld [vmem:[#allocation4 + $0x978] sm:$0xff]
    %v5156 = vld [vmem:[#allocation4 + $0x980] sm:$0xff]
    %v5157 = vld [vmem:[#allocation4 + $0x988] sm:$0xff]
    %v5158 = vld [vmem:[#allocation4 + $0x990] sm:$0xff]
    %v5159 = vld [vmem:[#allocation4 + $0x998] sm:$0xff]
    %v5160 = vld [vmem:[#allocation4 + $0x9a0] sm:$0xff]
    %v5161 = vld [vmem:[#allocation4 + $0x9a8] sm:$0xff]
    %v5162 = vld [vmem:[#allocation4 + $0x9b0] sm:$0xff]
    %v5163 = vld [vmem:[#allocation4 + $0x9b8] sm:$0xff]
    %v5164 = vld [vmem:[#allocation4 + $0x9c0] sm:$0xff]
    %v5165 = vld [vmem:[#allocation4 + $0x9c8] sm:$0xff]
    %v5166 = vld [vmem:[#allocation4 + $0x9d0] sm:$0xff]
    %v5167 = vld [vmem:[#allocation4 + $0x9d8] sm:$0xff]
    %v5168 = vld [vmem:[#allocation4 + $0x9e0] sm:$0xff]
    %v5169 = vld [vmem:[#allocation4 + $0x9e8] sm:$0xff]
    %v5170 = vld [vmem:[#allocation4 + $0x9f0] sm:$0xff]
    %v5171 = vld [vmem:[#allocation4 + $0x9f8] sm:$0xff]
    %v5172 = vld [vmem:[#allocation4 + $0xa00] sm:$0xff]
    %v5173 = vld [vmem:[#allocation4 + $0xa08] sm:$0xff]
    %v5174 = vld [vmem:[#allocation4 + $0xa10] sm:$0xff]
    %v5175 = vld [vmem:[#allocation4 + $0xa18] sm:$0xff]
    %v5176 = vld [vmem:[#allocation4 + $0xa20] sm:$0xff]
    %v5177 = vld [vmem:[#allocation4 + $0xa28] sm:$0xff]
    %v5178 = vld [vmem:[#allocation4 + $0xa30] sm:$0xff]
    %v5179 = vld [vmem:[#allocation4 + $0xa38] sm:$0xff]
    %v5180 = vld [vmem:[#allocation4 + $0xa40] sm:$0xff]
    %v5181 = vld [vmem:[#allocation4 + $0xa48] sm:$0xff]
    %v5182 = vld [vmem:[#allocation4 + $0xa50] sm:$0xff]
    %v5183 = vld [vmem:[#allocation4 + $0xa58] sm:$0xff]
    %v5184 = vld [vmem:[#allocation4 + $0xa60] sm:$0xff]
    %v5185 = vld [vmem:[#allocation4 + $0xa68] sm:$0xff]
    %v5186 = vld [vmem:[#allocation4 + $0xa70] sm:$0xff]
    %v5187 = vld [vmem:[#allocation4 + $0xa78] sm:$0xff]
    %v5188 = vld [vmem:[#allocation4 + $0xa80] sm:$0xff]
    %v5189 = vld [vmem:[#allocation4 + $0xa88] sm:$0xff]
    %v5190 = vld [vmem:[#allocation4 + $0xa90] sm:$0xff]
    %v5191 = vld [vmem:[#allocation4 + $0xa98] sm:$0xff]
    %v5192 = vld [vmem:[#allocation4 + $0xaa0] sm:$0xff]
    %v5193 = vld [vmem:[#allocation4 + $0xaa8] sm:$0xff]
    %v5194 = vld [vmem:[#allocation4 + $0xab0] sm:$0xff]
    %v5195 = vld [vmem:[#allocation4 + $0xab8] sm:$0xff]
    %v5196 = vld [vmem:[#allocation4 + $0xac0] sm:$0xff]
    %v5197 = vld [vmem:[#allocation4 + $0xac8] sm:$0xff]
    %v5198 = vld [vmem:[#allocation4 + $0xad0] sm:$0xff]
    %v5199 = vld [vmem:[#allocation4 + $0xad8] sm:$0xff]
    %v5200 = vld [vmem:[#allocation4 + $0xae0] sm:$0xff]
    %v5201 = vld [vmem:[#allocation4 + $0xae8] sm:$0xff]
    %v5202 = vld [vmem:[#allocation4 + $0xaf0] sm:$0xff]
    %v5203 = vld [vmem:[#allocation4 + $0xaf8] sm:$0xff]
    %v5204 = vld [vmem:[#allocation4 + $0xb00] sm:$0xff]
    %v5205 = vld [vmem:[#allocation4 + $0xb08] sm:$0xff]
    %v5206 = vld [vmem:[#allocation4 + $0xb10] sm:$0xff]
    %v5207 = vld [vmem:[#allocation4 + $0xb18] sm:$0xff]
    %v5208 = vld [vmem:[#allocation4 + $0xb20] sm:$0xff]
    %v5209 = vld [vmem:[#allocation4 + $0xb28] sm:$0xff]
    %v5210 = vld [vmem:[#allocation4 + $0xb30] sm:$0xff]
    %v5211 = vld [vmem:[#allocation4 + $0xb38] sm:$0xff]
    %v5212 = vld [vmem:[#allocation4 + $0xb40] sm:$0xff]
    %v5213 = vld [vmem:[#allocation4 + $0xb48] sm:$0xff]
    %v5214 = vld [vmem:[#allocation4 + $0xb50] sm:$0xff]
    %v5215 = vld [vmem:[#allocation4 + $0xb58] sm:$0xff]
    %v5216 = vld [vmem:[#allocation4 + $0xb60] sm:$0xff]
    %v5217 = vld [vmem:[#allocation4 + $0xb68] sm:$0xff]
    %v5218 = vld [vmem:[#allocation4 + $0xb70] sm:$0xff]
    %v5219 = vld [vmem:[#allocation4 + $0xb78] sm:$0xff]
    %v5220 = vld [vmem:[#allocation4 + $0xb80] sm:$0xff]
    %v5221 = vld [vmem:[#allocation4 + $0xb88] sm:$0xff]
    %v5222 = vld [vmem:[#allocation4 + $0xb90] sm:$0xff]
    %v5223 = vld [vmem:[#allocation4 + $0xb98] sm:$0xff]
    %v5224 = vld [vmem:[#allocation4 + $0xba0] sm:$0xff]
    %v5225 = vld [vmem:[#allocation4 + $0xba8] sm:$0xff]
    %v5226 = vld [vmem:[#allocation4 + $0xbb0] sm:$0xff]
    %v5227 = vld [vmem:[#allocation4 + $0xbb8] sm:$0xff]
    %v5228 = vld [vmem:[#allocation4 + $0xbc0] sm:$0xff]
    %v5229 = vld [vmem:[#allocation4 + $0xbc8] sm:$0xff]
    %v5230 = vld [vmem:[#allocation4 + $0xbd0] sm:$0xff]
    %v5231 = vld [vmem:[#allocation4 + $0xbd8] sm:$0xff]
    %v5232 = vld [vmem:[#allocation4 + $0xbe0] sm:$0xff]
    %v5233 = vld [vmem:[#allocation4 + $0xbe8] sm:$0xff]
    %v5234 = vld [vmem:[#allocation4 + $0xbf0] sm:$0xff]
    %v5235 = vld [vmem:[#allocation4 + $0xbf8] sm:$0xff]
    %v5236 = vld [vmem:[#allocation4 + $0xc00] sm:$0xff]
    %v5237 = vld [vmem:[#allocation4 + $0xc08] sm:$0xff]
    %v5238 = vld [vmem:[#allocation4 + $0xc10] sm:$0xff]
    %v5239 = vld [vmem:[#allocation4 + $0xc18] sm:$0xff]
    %v5240 = vld [vmem:[#allocation4 + $0xc20] sm:$0xff]
    %v5241 = vld [vmem:[#allocation4 + $0xc28] sm:$0xff]
    %v5242 = vld [vmem:[#allocation4 + $0xc30] sm:$0xff]
    %v5243 = vld [vmem:[#allocation4 + $0xc38] sm:$0xff]
    %v5244 = vld [vmem:[#allocation4 + $0xc40] sm:$0xff]
    %v5245 = vld [vmem:[#allocation4 + $0xc48] sm:$0xff]
    %v5246 = vld [vmem:[#allocation4 + $0xc50] sm:$0xff]
    %v5247 = vld [vmem:[#allocation4 + $0xc58] sm:$0xff]
    %v5248 = vld [vmem:[#allocation4 + $0xc60] sm:$0xff]
    %v5249 = vld [vmem:[#allocation4 + $0xc68] sm:$0xff]
    %v5250 = vld [vmem:[#allocation4 + $0xc70] sm:$0xff]
    %v5251 = vld [vmem:[#allocation4 + $0xc78] sm:$0xff]
    %v5252 = vld [vmem:[#allocation4 + $0xc80] sm:$0xff]
    %v5253 = vld [vmem:[#allocation4 + $0xc88] sm:$0xff]
    %v5254 = vld [vmem:[#allocation4 + $0xc90] sm:$0xff]
    %v5255 = vld [vmem:[#allocation4 + $0xc98] sm:$0xff]
    %v5256 = vld [vmem:[#allocation4 + $0xca0] sm:$0xff]
    %v5257 = vld [vmem:[#allocation4 + $0xca8] sm:$0xff]
    %v5258 = vld [vmem:[#allocation4 + $0xcb0] sm:$0xff]
    %v5259 = vld [vmem:[#allocation4 + $0xcb8] sm:$0xff]
    %v5260 = vld [vmem:[#allocation4 + $0xcc0] sm:$0xff]
    %v5261 = vld [vmem:[#allocation4 + $0xcc8] sm:$0xff]
    %v5262 = vld [vmem:[#allocation4 + $0xcd0] sm:$0xff]
    %v5263 = vld [vmem:[#allocation4 + $0xcd8] sm:$0xff]
    %v5264 = vld [vmem:[#allocation4 + $0xce0] sm:$0xff]
    %v5265 = vld [vmem:[#allocation4 + $0xce8] sm:$0xff]
    %v5266 = vld [vmem:[#allocation4 + $0xcf0] sm:$0xff]
    %v5267 = vld [vmem:[#allocation4 + $0xcf8] sm:$0xff]
    %v5268 = vld [vmem:[#allocation4 + $0xd00] sm:$0xff]
    %v5269 = vld [vmem:[#allocation4 + $0xd08] sm:$0xff]
    %v5270 = vld [vmem:[#allocation4 + $0xd10] sm:$0xff]
    %v5271 = vld [vmem:[#allocation4 + $0xd18] sm:$0xff]
    %v5272 = vld [vmem:[#allocation4 + $0xd20] sm:$0xff]
    %v5273 = vld [vmem:[#allocation4 + $0xd28] sm:$0xff]
    %v5274 = vld [vmem:[#allocation4 + $0xd30] sm:$0xff]
    %v5275 = vld [vmem:[#allocation4 + $0xd38] sm:$0xff]
    %v5276 = vld [vmem:[#allocation4 + $0xd40] sm:$0xff]
    %v5277 = vld [vmem:[#allocation4 + $0xd48] sm:$0xff]
    %v5278 = vld [vmem:[#allocation4 + $0xd50] sm:$0xff]
    %v5279 = vld [vmem:[#allocation4 + $0xd58] sm:$0xff]
    %v5280 = vld [vmem:[#allocation4 + $0xd60] sm:$0xff]
    %v5281 = vld [vmem:[#allocation4 + $0xd68] sm:$0xff]
    %v5282 = vld [vmem:[#allocation4 + $0xd70] sm:$0xff]
    %v5283 = vld [vmem:[#allocation4 + $0xd78] sm:$0xff]
    %v5284 = vld [vmem:[#allocation4 + $0xd80] sm:$0xff]
    %v5285 = vld [vmem:[#allocation4 + $0xd88] sm:$0xff]
    %v5286 = vld [vmem:[#allocation4 + $0xd90] sm:$0xff]
    %v5287 = vld [vmem:[#allocation4 + $0xd98] sm:$0xff]
    %v5288 = vld [vmem:[#allocation4 + $0xda0] sm:$0xff]
    %v5289 = vld [vmem:[#allocation4 + $0xda8] sm:$0xff]
    %v5290 = vld [vmem:[#allocation4 + $0xdb0] sm:$0xff]
    %v5291 = vld [vmem:[#allocation4 + $0xdb8] sm:$0xff]
    %v5292 = vld [vmem:[#allocation4 + $0xdc0] sm:$0xff]
    %v5293 = vld [vmem:[#allocation4 + $0xdc8] sm:$0xff]
    %v5294 = vld [vmem:[#allocation4 + $0xdd0] sm:$0xff]
    %v5295 = vld [vmem:[#allocation4 + $0xdd8] sm:$0xff]
    %v5296 = vld [vmem:[#allocation4 + $0xde0] sm:$0xff]
    %v5297 = vld [vmem:[#allocation4 + $0xde8] sm:$0xff]
    %v5298 = vld [vmem:[#allocation4 + $0xdf0] sm:$0xff]
    %v5299 = vld [vmem:[#allocation4 + $0xdf8] sm:$0xff]
    %v5300 = vld [vmem:[#allocation4 + $0xe00] sm:$0xff]
    %v5301 = vld [vmem:[#allocation4 + $0xe08] sm:$0xff]
    %v5302 = vld [vmem:[#allocation4 + $0xe10] sm:$0xff]
    %v5303 = vld [vmem:[#allocation4 + $0xe18] sm:$0xff]
    %v5304 = vld [vmem:[#allocation4 + $0xe20] sm:$0xff]
    %v5305 = vld [vmem:[#allocation4 + $0xe28] sm:$0xff]
    %v5306 = vld [vmem:[#allocation4 + $0xe30] sm:$0xff]
    %v5307 = vld [vmem:[#allocation4 + $0xe38] sm:$0xff]
    %v5308 = vld [vmem:[#allocation4 + $0xe40] sm:$0xff]
    %v5309 = vld [vmem:[#allocation4 + $0xe48] sm:$0xff]
    %v5310 = vld [vmem:[#allocation4 + $0xe50] sm:$0xff]
    %v5311 = vld [vmem:[#allocation4 + $0xe58] sm:$0xff]
    %v5312 = vld [vmem:[#allocation4 + $0xe60] sm:$0xff]
    %v5313 = vld [vmem:[#allocation4 + $0xe68] sm:$0xff]
    %v5314 = vld [vmem:[#allocation4 + $0xe70] sm:$0xff]
    %v5315 = vld [vmem:[#allocation4 + $0xe78] sm:$0xff]
    %v5316 = vld [vmem:[#allocation4 + $0xe80] sm:$0xff]
    %v5317 = vld [vmem:[#allocation4 + $0xe88] sm:$0xff]
    %v5318 = vld [vmem:[#allocation4 + $0xe90] sm:$0xff]
    %v5319 = vld [vmem:[#allocation4 + $0xe98] sm:$0xff]
    %v5320 = vld [vmem:[#allocation4 + $0xea0] sm:$0xff]
    %v5321 = vld [vmem:[#allocation4 + $0xea8] sm:$0xff]
    %v5322 = vld [vmem:[#allocation4 + $0xeb0] sm:$0xff]
    %v5323 = vld [vmem:[#allocation4 + $0xeb8] sm:$0xff]
    %v5324 = vld [vmem:[#allocation4 + $0xec0] sm:$0xff]
    %v5325 = vld [vmem:[#allocation4 + $0xec8] sm:$0xff]
    %v5326 = vld [vmem:[#allocation4 + $0xed0] sm:$0xff]
    %v5327 = vld [vmem:[#allocation4 + $0xed8] sm:$0xff]
    %v5328 = vld [vmem:[#allocation4 + $0xee0] sm:$0xff]
    %v5329 = vld [vmem:[#allocation4 + $0xee8] sm:$0xff]
    %v5330 = vld [vmem:[#allocation4 + $0xef0] sm:$0xff]
    %v5331 = vld [vmem:[#allocation4 + $0xef8] sm:$0xff]
    %v5332 = vld [vmem:[#allocation4 + $0xf00] sm:$0xff]
    %v5333 = vld [vmem:[#allocation4 + $0xf08] sm:$0xff]
    %v5334 = vld [vmem:[#allocation4 + $0xf10] sm:$0xff]
    %v5335 = vld [vmem:[#allocation4 + $0xf18] sm:$0xff]
    %v5336 = vld [vmem:[#allocation4 + $0xf20] sm:$0xff]
    %v5337 = vld [vmem:[#allocation4 + $0xf28] sm:$0xff]
    %v5338 = vld [vmem:[#allocation4 + $0xf30] sm:$0xff]
    %v5339 = vld [vmem:[#allocation4 + $0xf38] sm:$0xff]
    %v5340 = vld [vmem:[#allocation4 + $0xf40] sm:$0xff]
    %v5341 = vld [vmem:[#allocation4 + $0xf48] sm:$0xff]
    %v5342 = vld [vmem:[#allocation4 + $0xf50] sm:$0xff]
    %v5343 = vld [vmem:[#allocation4 + $0xf58] sm:$0xff]
    %v5344 = vld [vmem:[#allocation4 + $0xf60] sm:$0xff]
    %v5345 = vld [vmem:[#allocation4 + $0xf68] sm:$0xff]
    %v5346 = vld [vmem:[#allocation4 + $0xf70] sm:$0xff]
    %v5347 = vld [vmem:[#allocation4 + $0xf78] sm:$0xff]
    %v5348 = vld [vmem:[#allocation4 + $0xf80] sm:$0xff]
    %v5349 = vld [vmem:[#allocation4 + $0xf88] sm:$0xff]
    %v5350 = vld [vmem:[#allocation4 + $0xf90] sm:$0xff]
    %v5351 = vld [vmem:[#allocation4 + $0xf98] sm:$0xff]
    %v5352 = vld [vmem:[#allocation4 + $0xfa0] sm:$0xff]
    %v5353 = vld [vmem:[#allocation4 + $0xfa8] sm:$0xff]
    %v5354 = vld [vmem:[#allocation4 + $0xfb0] sm:$0xff]
    %v5355 = vld [vmem:[#allocation4 + $0xfb8] sm:$0xff]
    %v5356 = vld [vmem:[#allocation4 + $0xfc0] sm:$0xff]
    %v5357 = vld [vmem:[#allocation4 + $0xfc8] sm:$0xff]
    %v5358 = vld [vmem:[#allocation4 + $0xfd0] sm:$0xff]
    %v5359 = vld [vmem:[#allocation4 + $0xfd8] sm:$0xff]
    %v5360 = vld [vmem:[#allocation4 + $0xfe0] sm:$0xff]
    %v5361 = vld [vmem:[#allocation4 + $0xfe8] sm:$0xff]
    %v5362 = vld [vmem:[#allocation4 + $0xff0] sm:$0xff]
    %v5363 = vld [vmem:[#allocation4 + $0xff8] sm:$0xff]
    %v5364 = vld [vmem:[#allocation4 + $0x1000] sm:$0xff]
    %v5365 = vld [vmem:[#allocation4 + $0x1008] sm:$0xff]
    %v5366 = vld [vmem:[#allocation4 + $0x1010] sm:$0xff]
    %v5367 = vld [vmem:[#allocation4 + $0x1018] sm:$0xff]
    %v5368 = vld [vmem:[#allocation4 + $0x1020] sm:$0xff]
    %v5369 = vld [vmem:[#allocation4 + $0x1028] sm:$0xff]
    %v5370 = vld [vmem:[#allocation4 + $0x1030] sm:$0xff]
    %v5371 = vld [vmem:[#allocation4 + $0x1038] sm:$0xff]
    %v5372 = vld [vmem:[#allocation4 + $0x1040] sm:$0xff]
    %v5373 = vld [vmem:[#allocation4 + $0x1048] sm:$0xff]
    %v5374 = vld [vmem:[#allocation4 + $0x1050] sm:$0xff]
    %v5375 = vld [vmem:[#allocation4 + $0x1058] sm:$0xff]
    %v5376 = vld [vmem:[#allocation4 + $0x1060] sm:$0xff]
    %v5377 = vld [vmem:[#allocation4 + $0x1068] sm:$0xff]
    %v5378 = vld [vmem:[#allocation4 + $0x1070] sm:$0xff]
    %v5379 = vld [vmem:[#allocation4 + $0x1078] sm:$0xff]
    %v5380 = vld [vmem:[#allocation4 + $0x1080] sm:$0xff]
    %v5381 = vld [vmem:[#allocation4 + $0x1088] sm:$0xff]
    %v5382 = vld [vmem:[#allocation4 + $0x1090] sm:$0xff]
    %v5383 = vld [vmem:[#allocation4 + $0x1098] sm:$0xff]
    %v5384 = vld [vmem:[#allocation4 + $0x10a0] sm:$0xff]
    %v5385 = vld [vmem:[#allocation4 + $0x10a8] sm:$0xff]
    %v5386 = vld [vmem:[#allocation4 + $0x10b0] sm:$0xff]
    %v5387 = vld [vmem:[#allocation4 + $0x10b8] sm:$0xff]
    %v5388 = vld [vmem:[#allocation4 + $0x10c0] sm:$0xff]
    %v5389 = vld [vmem:[#allocation4 + $0x10c8] sm:$0xff]
    %v5390 = vld [vmem:[#allocation4 + $0x10d0] sm:$0xff]
    %v5391 = vld [vmem:[#allocation4 + $0x10d8] sm:$0xff]
    %v5392 = vld [vmem:[#allocation4 + $0x10e0] sm:$0xff]
    %v5393 = vld [vmem:[#allocation4 + $0x10e8] sm:$0xff]
    %v5394 = vld [vmem:[#allocation4 + $0x10f0] sm:$0xff]
    %v5395 = vld [vmem:[#allocation4 + $0x10f8] sm:$0xff]
    %v5396 = vld [vmem:[#allocation4 + $0x1100] sm:$0xff]
    %v5397 = vld [vmem:[#allocation4 + $0x1108] sm:$0xff]
    %v5398 = vld [vmem:[#allocation4 + $0x1110] sm:$0xff]
    %v5399 = vld [vmem:[#allocation4 + $0x1118] sm:$0xff]
    %v5400 = vld [vmem:[#allocation4 + $0x1120] sm:$0xff]
    %v5401 = vld [vmem:[#allocation4 + $0x1128] sm:$0xff]
    %v5402 = vld [vmem:[#allocation4 + $0x1130] sm:$0xff]
    %v5403 = vld [vmem:[#allocation4 + $0x1138] sm:$0xff]
    %v5404 = vld [vmem:[#allocation4 + $0x1140] sm:$0xff]
    %v5405 = vld [vmem:[#allocation4 + $0x1148] sm:$0xff]
    %v5406 = vld [vmem:[#allocation4 + $0x1150] sm:$0xff]
    %v5407 = vld [vmem:[#allocation4 + $0x1158] sm:$0xff]
    %v5408 = vld [vmem:[#allocation4 + $0x1160] sm:$0xff]
    %v5409 = vld [vmem:[#allocation4 + $0x1168] sm:$0xff]
    %v5410 = vld [vmem:[#allocation4 + $0x1170] sm:$0xff]
    %v5411 = vld [vmem:[#allocation4 + $0x1178] sm:$0xff]
    %v5412 = vld [vmem:[#allocation4 + $0x1180] sm:$0xff]
    %v5413 = vld [vmem:[#allocation4 + $0x1188] sm:$0xff]
    %v5414 = vld [vmem:[#allocation4 + $0x1190] sm:$0xff]
    %v5415 = vld [vmem:[#allocation4 + $0x1198] sm:$0xff]
    %v5416 = vld [vmem:[#allocation4 + $0x11a0] sm:$0xff]
    %v5417 = vld [vmem:[#allocation4 + $0x11a8] sm:$0xff]
    %v5418 = vld [vmem:[#allocation4 + $0x11b0] sm:$0xff]
    %v5419 = vld [vmem:[#allocation4 + $0x11b8] sm:$0xff]
    %v5420 = vld [vmem:[#allocation4 + $0x11c0] sm:$0xff]
    %v5421 = vld [vmem:[#allocation4 + $0x11c8] sm:$0xff]
    %v5422 = vld [vmem:[#allocation4 + $0x11d0] sm:$0xff]
    %v5423 = vld [vmem:[#allocation4 + $0x11d8] sm:$0xff]
    %v5424 = vld [vmem:[#allocation4 + $0x11e0] sm:$0xff]
    %v5425 = vld [vmem:[#allocation4 + $0x11e8] sm:$0xff]
    %v5426 = vld [vmem:[#allocation4 + $0x11f0] sm:$0xff]
    %v5427 = vld [vmem:[#allocation4 + $0x11f8] sm:$0xff]
    %v5428 = vld [vmem:[#allocation4 + $0x1200] sm:$0xff]
    %v5429 = vld [vmem:[#allocation4 + $0x1208] sm:$0xff]
    %v5430 = vld [vmem:[#allocation4 + $0x1210] sm:$0xff]
    %v5431 = vld [vmem:[#allocation4 + $0x1218] sm:$0xff]
    %v5432 = vld [vmem:[#allocation4 + $0x1220] sm:$0xff]
    %v5433 = vld [vmem:[#allocation4 + $0x1228] sm:$0xff]
    %v5434 = vld [vmem:[#allocation4 + $0x1230] sm:$0xff]
    %v5435 = vld [vmem:[#allocation4 + $0x1238] sm:$0xff]
    %v5436 = vld [vmem:[#allocation4 + $0x1240] sm:$0xff]
    %v5437 = vld [vmem:[#allocation4 + $0x1248] sm:$0xff]
    %v5438 = vld [vmem:[#allocation4 + $0x1250] sm:$0xff]
    %v5439 = vld [vmem:[#allocation4 + $0x1258] sm:$0xff]
    %v5440 = vld [vmem:[#allocation4 + $0x1260] sm:$0xff]
    %v5441 = vld [vmem:[#allocation4 + $0x1268] sm:$0xff]
    %v5442 = vld [vmem:[#allocation4 + $0x1270] sm:$0xff]
    %v5443 = vld [vmem:[#allocation4 + $0x1278] sm:$0xff]
    %v5444 = vld [vmem:[#allocation4 + $0x1280] sm:$0xff]
    %v5445 = vld [vmem:[#allocation4 + $0x1288] sm:$0xff]
    %v5446 = vld [vmem:[#allocation4 + $0x1290] sm:$0xff]
    %v5447 = vld [vmem:[#allocation4 + $0x1298] sm:$0xff]
    %v5448 = vld [vmem:[#allocation4 + $0x12a0] sm:$0xff]
    %v5449 = vld [vmem:[#allocation4 + $0x12a8] sm:$0xff]
    %v5450 = vld [vmem:[#allocation4 + $0x12b0] sm:$0xff]
    %v5451 = vld [vmem:[#allocation4 + $0x12b8] sm:$0xff]
    %v5452 = vld [vmem:[#allocation4 + $0x12c0] sm:$0xff]
    %v5453 = vld [vmem:[#allocation4 + $0x12c8] sm:$0xff]
    %v5454 = vld [vmem:[#allocation4 + $0x12d0] sm:$0xff]
    %v5455 = vld [vmem:[#allocation4 + $0x12d8] sm:$0xff]
    %v5456 = vld [vmem:[#allocation4 + $0x12e0] sm:$0xff]
    %v5457 = vld [vmem:[#allocation4 + $0x12e8] sm:$0xff]
    %v5458 = vld [vmem:[#allocation4 + $0x12f0] sm:$0xff]
    %v5459 = vld [vmem:[#allocation4 + $0x12f8] sm:$0xff]
    %v5460 = vld [vmem:[#allocation4 + $0x1300] sm:$0xff]
    %v5461 = vld [vmem:[#allocation4 + $0x1308] sm:$0xff]
    %v5462 = vld [vmem:[#allocation4 + $0x1310] sm:$0xff]
    %v5463 = vld [vmem:[#allocation4 + $0x1318] sm:$0xff]
    %v5464 = vld [vmem:[#allocation4 + $0x1320] sm:$0xff]
    %v5465 = vld [vmem:[#allocation4 + $0x1328] sm:$0xff]
    %v5466 = vld [vmem:[#allocation4 + $0x1330] sm:$0xff]
    %v5467 = vld [vmem:[#allocation4 + $0x1338] sm:$0xff]
    %v5468 = vld [vmem:[#allocation4 + $0x1340] sm:$0xff]
    %v5469 = vld [vmem:[#allocation4 + $0x1348] sm:$0xff]
    %v5470 = vld [vmem:[#allocation4 + $0x1350] sm:$0xff]
    %v5471 = vld [vmem:[#allocation4 + $0x1358] sm:$0xff]
    %v5472 = vld [vmem:[#allocation4 + $0x1360] sm:$0xff]
    %v5473 = vld [vmem:[#allocation4 + $0x1368] sm:$0xff]
    %v5474 = vld [vmem:[#allocation4 + $0x1370] sm:$0xff]
    %v5475 = vld [vmem:[#allocation4 + $0x1378] sm:$0xff]
    %v5476 = vld [vmem:[#allocation4 + $0x1380] sm:$0xff]
    %v5477 = vld [vmem:[#allocation4 + $0x1388] sm:$0xff]
    %v5478 = vld [vmem:[#allocation4 + $0x1390] sm:$0xff]
    %v5479 = vld [vmem:[#allocation4 + $0x1398] sm:$0xff]
    %v5480 = vld [vmem:[#allocation4 + $0x13a0] sm:$0xff]
    %v5481 = vld [vmem:[#allocation4 + $0x13a8] sm:$0xff]
    %v5482 = vld [vmem:[#allocation4 + $0x13b0] sm:$0xff]
    %v5483 = vld [vmem:[#allocation4 + $0x13b8] sm:$0xff]
    %v5484 = vld [vmem:[#allocation4 + $0x13c0] sm:$0xff]
    %v5485 = vld [vmem:[#allocation4 + $0x13c8] sm:$0xff]
    %v5486 = vld [vmem:[#allocation4 + $0x13d0] sm:$0xff]
    %v5487 = vld [vmem:[#allocation4 + $0x13d8] sm:$0xff]
    %v5488 = vld [vmem:[#allocation4 + $0x13e0] sm:$0xff]
    %v5489 = vld [vmem:[#allocation4 + $0x13e8] sm:$0xff]
    %v5490 = vld [vmem:[#allocation4 + $0x13f0] sm:$0xff]
    %v5491 = vld [vmem:[#allocation4 + $0x13f8] sm:$0xff]
    %v5492 = vld [vmem:[#allocation4 + $0x1400] sm:$0xff]
    %v5493 = vld [vmem:[#allocation4 + $0x1408] sm:$0xff]
    %v5494 = vld [vmem:[#allocation4 + $0x1410] sm:$0xff]
    %v5495 = vld [vmem:[#allocation4 + $0x1418] sm:$0xff]
    %v5496 = vld [vmem:[#allocation4 + $0x1420] sm:$0xff]
    %v5497 = vld [vmem:[#allocation4 + $0x1428] sm:$0xff]
    %v5498 = vld [vmem:[#allocation4 + $0x1430] sm:$0xff]
    %v5499 = vld [vmem:[#allocation4 + $0x1438] sm:$0xff]
    %v5500 = vld [vmem:[#allocation4 + $0x1440] sm:$0xff]
    %v5501 = vld [vmem:[#allocation4 + $0x1448] sm:$0xff]
    %v5502 = vld [vmem:[#allocation4 + $0x1450] sm:$0xff]
    %v5503 = vld [vmem:[#allocation4 + $0x1458] sm:$0xff]
    %v5504 = vld [vmem:[#allocation4 + $0x1460] sm:$0xff]
    %v5505 = vld [vmem:[#allocation4 + $0x1468] sm:$0xff]
    %v5506 = vld [vmem:[#allocation4 + $0x1470] sm:$0xff]
    %v5507 = vld [vmem:[#allocation4 + $0x1478] sm:$0xff]
    %v5508 = vld [vmem:[#allocation4 + $0x1480] sm:$0xff]
    %v5509 = vld [vmem:[#allocation4 + $0x1488] sm:$0xff]
    %v5510 = vld [vmem:[#allocation4 + $0x1490] sm:$0xff]
    %v5511 = vld [vmem:[#allocation4 + $0x1498] sm:$0xff]
    %v5512 = vld [vmem:[#allocation4 + $0x14a0] sm:$0xff]
    %v5513 = vld [vmem:[#allocation4 + $0x14a8] sm:$0xff]
    %v5514 = vld [vmem:[#allocation4 + $0x14b0] sm:$0xff]
    %v5515 = vld [vmem:[#allocation4 + $0x14b8] sm:$0xff]
    %v5516 = vld [vmem:[#allocation4 + $0x14c0] sm:$0xff]
    %v5517 = vld [vmem:[#allocation4 + $0x14c8] sm:$0xff]
    %v5518 = vld [vmem:[#allocation4 + $0x14d0] sm:$0xff]
    %v5519 = vld [vmem:[#allocation4 + $0x14d8] sm:$0xff]
    %v5520 = vld [vmem:[#allocation4 + $0x14e0] sm:$0xff]
    %v5521 = vld [vmem:[#allocation4 + $0x14e8] sm:$0xff]
    %v5522 = vld [vmem:[#allocation4 + $0x14f0] sm:$0xff]
    %v5523 = vld [vmem:[#allocation4 + $0x14f8] sm:$0xff]
    %v5524 = vld [vmem:[#allocation4 + $0x1500] sm:$0xff]
    %v5525 = vld [vmem:[#allocation4 + $0x1508] sm:$0xff]
    %v5526 = vld [vmem:[#allocation4 + $0x1510] sm:$0xff]
    %v5527 = vld [vmem:[#allocation4 + $0x1518] sm:$0xff]
    %v5528 = vld [vmem:[#allocation4 + $0x1520] sm:$0xff]
    %v5529 = vld [vmem:[#allocation4 + $0x1528] sm:$0xff]
    %v5530 = vld [vmem:[#allocation4 + $0x1530] sm:$0xff]
    %v5531 = vld [vmem:[#allocation4 + $0x1538] sm:$0xff]
    %v5532 = vld [vmem:[#allocation4 + $0x1540] sm:$0xff]
    %v5533 = vld [vmem:[#allocation4 + $0x1548] sm:$0xff]
    %v5534 = vld [vmem:[#allocation4 + $0x1550] sm:$0xff]
    %v5535 = vld [vmem:[#allocation4 + $0x1558] sm:$0xff]
    %v5536 = vld [vmem:[#allocation4 + $0x1560] sm:$0xff]
    %v5537 = vld [vmem:[#allocation4 + $0x1568] sm:$0xff]
    %v5538 = vld [vmem:[#allocation4 + $0x1570] sm:$0xff]
    %v5539 = vld [vmem:[#allocation4 + $0x1578] sm:$0xff]
    %v5540 = vld [vmem:[#allocation4 + $0x1580] sm:$0xff]
    %v5541 = vld [vmem:[#allocation4 + $0x1588] sm:$0xff]
    %v5542 = vld [vmem:[#allocation4 + $0x1590] sm:$0xff]
    %v5543 = vld [vmem:[#allocation4 + $0x1598] sm:$0xff]
    %v5544 = vld [vmem:[#allocation4 + $0x15a0] sm:$0xff]
    %v5545 = vld [vmem:[#allocation4 + $0x15a8] sm:$0xff]
    %v5546 = vld [vmem:[#allocation4 + $0x15b0] sm:$0xff]
    %v5547 = vld [vmem:[#allocation4 + $0x15b8] sm:$0xff]
    %v5548 = vld [vmem:[#allocation4 + $0x15c0] sm:$0xff]
    %v5549 = vld [vmem:[#allocation4 + $0x15c8] sm:$0xff]
    %v5550 = vld [vmem:[#allocation4 + $0x15d0] sm:$0xff]
    %v5551 = vld [vmem:[#allocation4 + $0x15d8] sm:$0xff]
    %v5552 = vld [vmem:[#allocation4 + $0x15e0] sm:$0xff]
    %v5553 = vld [vmem:[#allocation4 + $0x15e8] sm:$0xff]
    %v5554 = vld [vmem:[#allocation4 + $0x15f0] sm:$0xff]
    %v5555 = vld [vmem:[#allocation4 + $0x15f8] sm:$0xff]
    %v5556 = vld [vmem:[#allocation4 + $0x1600] sm:$0xff]
    %v5557 = vld [vmem:[#allocation4 + $0x1608] sm:$0xff]
    %v5558 = vld [vmem:[#allocation4 + $0x1610] sm:$0xff]
    %v5559 = vld [vmem:[#allocation4 + $0x1618] sm:$0xff]
    %v5560 = vld [vmem:[#allocation4 + $0x1620] sm:$0xff]
    %v5561 = vld [vmem:[#allocation4 + $0x1628] sm:$0xff]
    %v5562 = vld [vmem:[#allocation4 + $0x1630] sm:$0xff]
    %v5563 = vld [vmem:[#allocation4 + $0x1638] sm:$0xff]
    %v5564 = vld [vmem:[#allocation4 + $0x1640] sm:$0xff]
    %v5565 = vld [vmem:[#allocation4 + $0x1648] sm:$0xff]
    %v5566 = vld [vmem:[#allocation4 + $0x1650] sm:$0xff]
    %v5567 = vld [vmem:[#allocation4 + $0x1658] sm:$0xff]
    %v5568 = vld [vmem:[#allocation4 + $0x1660] sm:$0xff]
    %v5569 = vld [vmem:[#allocation4 + $0x1668] sm:$0xff]
    %v5570 = vld [vmem:[#allocation4 + $0x1670] sm:$0xff]
    %v5571 = vld [vmem:[#allocation4 + $0x1678] sm:$0xff]
    %v5572 = vld [vmem:[#allocation4 + $0x1680] sm:$0xff]
    %v5573 = vld [vmem:[#allocation4 + $0x1688] sm:$0xff]
    %v5574 = vld [vmem:[#allocation4 + $0x1690] sm:$0xff]
    %v5575 = vld [vmem:[#allocation4 + $0x1698] sm:$0xff]
    %v5576 = vld [vmem:[#allocation4 + $0x16a0] sm:$0xff]
    %v5577 = vld [vmem:[#allocation4 + $0x16a8] sm:$0xff]
    %v5578 = vld [vmem:[#allocation4 + $0x16b0] sm:$0xff]
    %v5579 = vld [vmem:[#allocation4 + $0x16b8] sm:$0xff]
    %v5580 = vld [vmem:[#allocation4 + $0x16c0] sm:$0xff]
    %v5581 = vld [vmem:[#allocation4 + $0x16c8] sm:$0xff]
    %v5582 = vld [vmem:[#allocation4 + $0x16d0] sm:$0xff]
    %v5583 = vld [vmem:[#allocation4 + $0x16d8] sm:$0xff]
    %v5584 = vld [vmem:[#allocation4 + $0x16e0] sm:$0xff]
    %v5585 = vld [vmem:[#allocation4 + $0x16e8] sm:$0xff]
    %v5586 = vld [vmem:[#allocation4 + $0x16f0] sm:$0xff]
    %v5587 = vld [vmem:[#allocation4 + $0x16f8] sm:$0xff]
    %v5588 = vld [vmem:[#allocation4 + $0x1700] sm:$0xff]
    %v5589 = vld [vmem:[#allocation4 + $0x1708] sm:$0xff]
    %v5590 = vld [vmem:[#allocation4 + $0x1710] sm:$0xff]
    %v5591 = vld [vmem:[#allocation4 + $0x1718] sm:$0xff]
    %v5592 = vld [vmem:[#allocation4 + $0x1720] sm:$0xff]
    %v5593 = vld [vmem:[#allocation4 + $0x1728] sm:$0xff]
    %v5594 = vld [vmem:[#allocation4 + $0x1730] sm:$0xff]
    %v5595 = vld [vmem:[#allocation4 + $0x1738] sm:$0xff]
    %v5596 = vld [vmem:[#allocation4 + $0x1740] sm:$0xff]
    %v5597 = vld [vmem:[#allocation4 + $0x1748] sm:$0xff]
    %v5598 = vld [vmem:[#allocation4 + $0x1750] sm:$0xff]
    %v5599 = vld [vmem:[#allocation4 + $0x1758] sm:$0xff]
    %v5600 = vld [vmem:[#allocation4 + $0x1760] sm:$0xff]
    %v5601 = vld [vmem:[#allocation4 + $0x1768] sm:$0xff]
    %v5602 = vld [vmem:[#allocation4 + $0x1770] sm:$0xff]
    %v5603 = vld [vmem:[#allocation4 + $0x1778] sm:$0xff]
    %v5604 = vld [vmem:[#allocation4 + $0x1780] sm:$0xff]
    %v5605 = vld [vmem:[#allocation4 + $0x1788] sm:$0xff]
    %v5606 = vld [vmem:[#allocation4 + $0x1790] sm:$0xff]
    %v5607 = vld [vmem:[#allocation4 + $0x1798] sm:$0xff]
    %v5608 = vld [vmem:[#allocation4 + $0x17a0] sm:$0xff]
    %v5609 = vld [vmem:[#allocation4 + $0x17a8] sm:$0xff]
    %v5610 = vld [vmem:[#allocation4 + $0x17b0] sm:$0xff]
    %v5611 = vld [vmem:[#allocation4 + $0x17b8] sm:$0xff]
    %v5612 = vld [vmem:[#allocation4 + $0x17c0] sm:$0xff]
    %v5613 = vld [vmem:[#allocation4 + $0x17c8] sm:$0xff]
    %v5614 = vld [vmem:[#allocation4 + $0x17d0] sm:$0xff]
    %v5615 = vld [vmem:[#allocation4 + $0x17d8] sm:$0xff]
    %v5616 = vld [vmem:[#allocation4 + $0x17e0] sm:$0xff]
    %v5617 = vld [vmem:[#allocation4 + $0x17e8] sm:$0xff]
    %v5618 = vld [vmem:[#allocation4 + $0x17f0] sm:$0xff]
    %v5619 = vld [vmem:[#allocation4 + $0x17f8] sm:$0xff]
    %v5620 = vld [vmem:[#allocation4 + $0x1800] sm:$0xff]
    %v5621 = vld [vmem:[#allocation4 + $0x1808] sm:$0xff]
    %v5622 = vld [vmem:[#allocation4 + $0x1810] sm:$0xff]
    %v5623 = vld [vmem:[#allocation4 + $0x1818] sm:$0xff]
    %v5624 = vld [vmem:[#allocation4 + $0x1820] sm:$0xff]
    %v5625 = vld [vmem:[#allocation4 + $0x1828] sm:$0xff]
    %v5626 = vld [vmem:[#allocation4 + $0x1830] sm:$0xff]
    %v5627 = vld [vmem:[#allocation4 + $0x1838] sm:$0xff]
    %v5628 = vld [vmem:[#allocation4 + $0x1840] sm:$0xff]
    %v5629 = vld [vmem:[#allocation4 + $0x1848] sm:$0xff]
    %v5630 = vld [vmem:[#allocation4 + $0x1850] sm:$0xff]
    %v5631 = vld [vmem:[#allocation4 + $0x1858] sm:$0xff]
    %v5632 = vld [vmem:[#allocation4 + $0x1860] sm:$0xff]
    %v5633 = vld [vmem:[#allocation4 + $0x1868] sm:$0xff]
    %v5634 = vld [vmem:[#allocation4 + $0x1870] sm:$0xff]
    %v5635 = vld [vmem:[#allocation4 + $0x1878] sm:$0xff]
    %v5636 = vld [vmem:[#allocation4 + $0x1880] sm:$0xff]
    %v5637 = vld [vmem:[#allocation4 + $0x1888] sm:$0xff]
    %v5638 = vld [vmem:[#allocation4 + $0x1890] sm:$0xff]
    %v5639 = vld [vmem:[#allocation4 + $0x1898] sm:$0xff]
    %v5640 = vld [vmem:[#allocation4 + $0x18a0] sm:$0xff]
    %v5641 = vld [vmem:[#allocation4 + $0x18a8] sm:$0xff]
    %v5642 = vld [vmem:[#allocation4 + $0x18b0] sm:$0xff]
    %v5643 = vld [vmem:[#allocation4 + $0x18b8] sm:$0xff]
    %v5644 = vld [vmem:[#allocation4 + $0x18c0] sm:$0xff]
    %v5645 = vld [vmem:[#allocation4 + $0x18c8] sm:$0xff]
    %v5646 = vld [vmem:[#allocation4 + $0x18d0] sm:$0xff]
    %v5647 = vld [vmem:[#allocation4 + $0x18d8] sm:$0xff]
    %v5648 = vld [vmem:[#allocation4 + $0x18e0] sm:$0xff]
    %v5649 = vld [vmem:[#allocation4 + $0x18e8] sm:$0xff]
    %v5650 = vld [vmem:[#allocation4 + $0x18f0] sm:$0xff]
    %v5651 = vld [vmem:[#allocation4 + $0x18f8] sm:$0xff]
    %v5652 = vld [vmem:[#allocation4 + $0x1900] sm:$0xff]
    %v5653 = vld [vmem:[#allocation4 + $0x1908] sm:$0xff]
    %v5654 = vld [vmem:[#allocation4 + $0x1910] sm:$0xff]
    %v5655 = vld [vmem:[#allocation4 + $0x1918] sm:$0xff]
    %v5656 = vld [vmem:[#allocation4 + $0x1920] sm:$0xff]
    %v5657 = vld [vmem:[#allocation4 + $0x1928] sm:$0xff]
    %v5658 = vld [vmem:[#allocation4 + $0x1930] sm:$0xff]
    %v5659 = vld [vmem:[#allocation4 + $0x1938] sm:$0xff]
    %v5660 = vld [vmem:[#allocation4 + $0x1940] sm:$0xff]
    %v5661 = vld [vmem:[#allocation4 + $0x1948] sm:$0xff]
    %v5662 = vld [vmem:[#allocation4 + $0x1950] sm:$0xff]
    %v5663 = vld [vmem:[#allocation4 + $0x1958] sm:$0xff]
    %v5664 = vld [vmem:[#allocation4 + $0x1960] sm:$0xff]
    %v5665 = vld [vmem:[#allocation4 + $0x1968] sm:$0xff]
    %v5666 = vld [vmem:[#allocation4 + $0x1970] sm:$0xff]
    %v5667 = vld [vmem:[#allocation4 + $0x1978] sm:$0xff]
    %v5668 = vld [vmem:[#allocation4 + $0x1980] sm:$0xff]
    %v5669 = vld [vmem:[#allocation4 + $0x1988] sm:$0xff]
    %v5670 = vld [vmem:[#allocation4 + $0x1990] sm:$0xff]
    %v5671 = vld [vmem:[#allocation4 + $0x1998] sm:$0xff]
    %v5672 = vld [vmem:[#allocation4 + $0x19a0] sm:$0xff]
    %v5673 = vld [vmem:[#allocation4 + $0x19a8] sm:$0xff]
    %v5674 = vld [vmem:[#allocation4 + $0x19b0] sm:$0xff]
    %v5675 = vld [vmem:[#allocation4 + $0x19b8] sm:$0xff]
    %v5676 = vld [vmem:[#allocation4 + $0x19c0] sm:$0xff]
    %v5677 = vld [vmem:[#allocation4 + $0x19c8] sm:$0xff]
    %v5678 = vld [vmem:[#allocation4 + $0x19d0] sm:$0xff]
    %v5679 = vld [vmem:[#allocation4 + $0x19d8] sm:$0xff]
    %v5680 = vld [vmem:[#allocation4 + $0x19e0] sm:$0xff]
    %v5681 = vld [vmem:[#allocation4 + $0x19e8] sm:$0xff]
    %v5682 = vld [vmem:[#allocation4 + $0x19f0] sm:$0xff]
    %v5683 = vld [vmem:[#allocation4 + $0x19f8] sm:$0xff]
    %v5684 = vld [vmem:[#allocation4 + $0x1a00] sm:$0xff]
    %v5685 = vld [vmem:[#allocation4 + $0x1a08] sm:$0xff]
    %v5686 = vld [vmem:[#allocation4 + $0x1a10] sm:$0xff]
    %v5687 = vld [vmem:[#allocation4 + $0x1a18] sm:$0xff]
    %v5688 = vld [vmem:[#allocation4 + $0x1a20] sm:$0xff]
    %v5689 = vld [vmem:[#allocation4 + $0x1a28] sm:$0xff]
    %v5690 = vld [vmem:[#allocation4 + $0x1a30] sm:$0xff]
    %v5691 = vld [vmem:[#allocation4 + $0x1a38] sm:$0xff]
    %v5692 = vld [vmem:[#allocation4 + $0x1a40] sm:$0xff]
    %v5693 = vld [vmem:[#allocation4 + $0x1a48] sm:$0xff]
    %v5694 = vld [vmem:[#allocation4 + $0x1a50] sm:$0xff]
    %v5695 = vld [vmem:[#allocation4 + $0x1a58] sm:$0xff]
    %v5696 = vld [vmem:[#allocation4 + $0x1a60] sm:$0xff]
    %v5697 = vld [vmem:[#allocation4 + $0x1a68] sm:$0xff]
    %v5698 = vld [vmem:[#allocation4 + $0x1a70] sm:$0xff]
    %v5699 = vld [vmem:[#allocation4 + $0x1a78] sm:$0xff]
    %v5700 = vld [vmem:[#allocation4 + $0x1a80] sm:$0xff]
    %v5701 = vld [vmem:[#allocation4 + $0x1a88] sm:$0xff]
    %v5702 = vld [vmem:[#allocation4 + $0x1a90] sm:$0xff]
    %v5703 = vld [vmem:[#allocation4 + $0x1a98] sm:$0xff]
    %v5704 = vld [vmem:[#allocation4 + $0x1aa0] sm:$0xff]
    %v5705 = vld [vmem:[#allocation4 + $0x1aa8] sm:$0xff]
    %v5706 = vld [vmem:[#allocation4 + $0x1ab0] sm:$0xff]
    %v5707 = vld [vmem:[#allocation4 + $0x1ab8] sm:$0xff]
    %v5708 = vld [vmem:[#allocation4 + $0x1ac0] sm:$0xff]
    %v5709 = vld [vmem:[#allocation4 + $0x1ac8] sm:$0xff]
    %v5710 = vld [vmem:[#allocation4 + $0x1ad0] sm:$0xff]
    %v5711 = vld [vmem:[#allocation4 + $0x1ad8] sm:$0xff]
    %v5712 = vld [vmem:[#allocation4 + $0x1ae0] sm:$0xff]
    %v5713 = vld [vmem:[#allocation4 + $0x1ae8] sm:$0xff]
    %v5714 = vld [vmem:[#allocation4 + $0x1af0] sm:$0xff]
    %v5715 = vld [vmem:[#allocation4 + $0x1af8] sm:$0xff]
    %v5716 = vld [vmem:[#allocation4 + $0x1b00] sm:$0xff]
    %v5717 = vld [vmem:[#allocation4 + $0x1b08] sm:$0xff]
    %v5718 = vld [vmem:[#allocation4 + $0x1b10] sm:$0xff]
    %v5719 = vld [vmem:[#allocation4 + $0x1b18] sm:$0xff]
    %v5720 = vld [vmem:[#allocation4 + $0x1b20] sm:$0xff]
    %v5721 = vld [vmem:[#allocation4 + $0x1b28] sm:$0xff]
    %v5722 = vld [vmem:[#allocation4 + $0x1b30] sm:$0xff]
    %v5723 = vld [vmem:[#allocation4 + $0x1b38] sm:$0xff]
    %v5724 = vld [vmem:[#allocation4 + $0x1b40] sm:$0xff]
    %v5725 = vld [vmem:[#allocation4 + $0x1b48] sm:$0xff]
    %v5726 = vld [vmem:[#allocation4 + $0x1b50] sm:$0xff]
    %v5727 = vld [vmem:[#allocation4 + $0x1b58] sm:$0xff]
    %v5728 = vld [vmem:[#allocation4 + $0x1b60] sm:$0xff]
    %v5729 = vld [vmem:[#allocation4 + $0x1b68] sm:$0xff]
    %v5730 = vld [vmem:[#allocation4 + $0x1b70] sm:$0xff]
    %v5731 = vld [vmem:[#allocation4 + $0x1b78] sm:$0xff]
    %v5732 = vld [vmem:[#allocation4 + $0x1b80] sm:$0xff]
    %v5733 = vld [vmem:[#allocation4 + $0x1b88] sm:$0xff]
    %v5734 = vld [vmem:[#allocation4 + $0x1b90] sm:$0xff]
    %v5735 = vld [vmem:[#allocation4 + $0x1b98] sm:$0xff]
    %v5736 = vld [vmem:[#allocation4 + $0x1ba0] sm:$0xff]
    %v5737 = vld [vmem:[#allocation4 + $0x1ba8] sm:$0xff]
    %v5738 = vld [vmem:[#allocation4 + $0x1bb0] sm:$0xff]
    %v5739 = vld [vmem:[#allocation4 + $0x1bb8] sm:$0xff]
    %v5740 = vld [vmem:[#allocation4 + $0x1bc0] sm:$0xff]
    %v5741 = vld [vmem:[#allocation4 + $0x1bc8] sm:$0xff]
    %v5742 = vld [vmem:[#allocation4 + $0x1bd0] sm:$0xff]
    %v5743 = vld [vmem:[#allocation4 + $0x1bd8] sm:$0xff]
    %v5744 = vld [vmem:[#allocation4 + $0x1be0] sm:$0xff]
    %v5745 = vld [vmem:[#allocation4 + $0x1be8] sm:$0xff]
    %v5746 = vld [vmem:[#allocation4 + $0x1bf0] sm:$0xff]
    %v5747 = vld [vmem:[#allocation4 + $0x1bf8] sm:$0xff]
    %v5748 = vld [vmem:[#allocation4 + $0x1c00] sm:$0xff]
    %v5749 = vld [vmem:[#allocation4 + $0x1c08] sm:$0xff]
    %v5750 = vld [vmem:[#allocation4 + $0x1c10] sm:$0xff]
    %v5751 = vld [vmem:[#allocation4 + $0x1c18] sm:$0xff]
    %v5752 = vld [vmem:[#allocation4 + $0x1c20] sm:$0xff]
    %v5753 = vld [vmem:[#allocation4 + $0x1c28] sm:$0xff]
    %v5754 = vld [vmem:[#allocation4 + $0x1c30] sm:$0xff]
    %v5755 = vld [vmem:[#allocation4 + $0x1c38] sm:$0xff]
    %v5756 = vld [vmem:[#allocation4 + $0x1c40] sm:$0xff]
    %v5757 = vld [vmem:[#allocation4 + $0x1c48] sm:$0xff]
    %v5758 = vld [vmem:[#allocation4 + $0x1c50] sm:$0xff]
    %v5759 = vld [vmem:[#allocation4 + $0x1c58] sm:$0xff]
    %v5760 = vld [vmem:[#allocation4 + $0x1c60] sm:$0xff]
    %v5761 = vld [vmem:[#allocation4 + $0x1c68] sm:$0xff]
    %v5762 = vld [vmem:[#allocation4 + $0x1c70] sm:$0xff]
    %v5763 = vld [vmem:[#allocation4 + $0x1c78] sm:$0xff]
    %v5764 = vld [vmem:[#allocation4 + $0x1c80] sm:$0xff]
    %v5765 = vld [vmem:[#allocation4 + $0x1c88] sm:$0xff]
    %v5766 = vld [vmem:[#allocation4 + $0x1c90] sm:$0xff]
    %v5767 = vld [vmem:[#allocation4 + $0x1c98] sm:$0xff]
    %v5768 = vld [vmem:[#allocation4 + $0x1ca0] sm:$0xff]
    %v5769 = vld [vmem:[#allocation4 + $0x1ca8] sm:$0xff]
    %v5770 = vld [vmem:[#allocation4 + $0x1cb0] sm:$0xff]
    %v5771 = vld [vmem:[#allocation4 + $0x1cb8] sm:$0xff]
    %v5772 = vld [vmem:[#allocation4 + $0x1cc0] sm:$0xff]
    %v5773 = vld [vmem:[#allocation4 + $0x1cc8] sm:$0xff]
    %v5774 = vld [vmem:[#allocation4 + $0x1cd0] sm:$0xff]
    %v5775 = vld [vmem:[#allocation4 + $0x1cd8] sm:$0xff]
    %v5776 = vld [vmem:[#allocation4 + $0x1ce0] sm:$0xff]
    %v5777 = vld [vmem:[#allocation4 + $0x1ce8] sm:$0xff]
    %v5778 = vld [vmem:[#allocation4 + $0x1cf0] sm:$0xff]
    %v5779 = vld [vmem:[#allocation4 + $0x1cf8] sm:$0xff]
    %v5780 = vld [vmem:[#allocation4 + $0x1d00] sm:$0xff]
    %v5781 = vld [vmem:[#allocation4 + $0x1d08] sm:$0xff]
    %v5782 = vld [vmem:[#allocation4 + $0x1d10] sm:$0xff]
    %v5783 = vld [vmem:[#allocation4 + $0x1d18] sm:$0xff]
    %v5784 = vld [vmem:[#allocation4 + $0x1d20] sm:$0xff]
    %v5785 = vld [vmem:[#allocation4 + $0x1d28] sm:$0xff]
    %v5786 = vld [vmem:[#allocation4 + $0x1d30] sm:$0xff]
    %v5787 = vld [vmem:[#allocation4 + $0x1d38] sm:$0xff]
    %v5788 = vld [vmem:[#allocation4 + $0x1d40] sm:$0xff]
    %v5789 = vld [vmem:[#allocation4 + $0x1d48] sm:$0xff]
    %v5790 = vld [vmem:[#allocation4 + $0x1d50] sm:$0xff]
    %v5791 = vld [vmem:[#allocation4 + $0x1d58] sm:$0xff]
    %v5792 = vld [vmem:[#allocation4 + $0x1d60] sm:$0xff]
    %v5793 = vld [vmem:[#allocation4 + $0x1d68] sm:$0xff]
    %v5794 = vld [vmem:[#allocation4 + $0x1d70] sm:$0xff]
    %v5795 = vld [vmem:[#allocation4 + $0x1d78] sm:$0xff]
    %v5796 = vld [vmem:[#allocation4 + $0x1d80] sm:$0xff]
    %v5797 = vld [vmem:[#allocation4 + $0x1d88] sm:$0xff]
    %v5798 = vld [vmem:[#allocation4 + $0x1d90] sm:$0xff]
    %v5799 = vld [vmem:[#allocation4 + $0x1d98] sm:$0xff]
    %v5800 = vld [vmem:[#allocation4 + $0x1da0] sm:$0xff]
    %v5801 = vld [vmem:[#allocation4 + $0x1da8] sm:$0xff]
    %v5802 = vld [vmem:[#allocation4 + $0x1db0] sm:$0xff]
    %v5803 = vld [vmem:[#allocation4 + $0x1db8] sm:$0xff]
    %v5804 = vld [vmem:[#allocation4 + $0x1dc0] sm:$0xff]
    %v5805 = vld [vmem:[#allocation4 + $0x1dc8] sm:$0xff]
    %v5806 = vld [vmem:[#allocation4 + $0x1dd0] sm:$0xff]
    %v5807 = vld [vmem:[#allocation4 + $0x1dd8] sm:$0xff]
    %v5808 = vld [vmem:[#allocation4 + $0x1de0] sm:$0xff]
    %v5809 = vld [vmem:[#allocation4 + $0x1de8] sm:$0xff]
    %v5810 = vld [vmem:[#allocation4 + $0x1df0] sm:$0xff]
    %v5811 = vld [vmem:[#allocation4 + $0x1df8] sm:$0xff]
    %v5812 = vld [vmem:[#allocation4 + $0x1e00] sm:$0xff]
    %v5813 = vld [vmem:[#allocation4 + $0x1e08] sm:$0xff]
    %v5814 = vld [vmem:[#allocation4 + $0x1e10] sm:$0xff]
    %v5815 = vld [vmem:[#allocation4 + $0x1e18] sm:$0xff]
    %v5816 = vld [vmem:[#allocation4 + $0x1e20] sm:$0xff]
    %v5817 = vld [vmem:[#allocation4 + $0x1e28] sm:$0xff]
    %v5818 = vld [vmem:[#allocation4 + $0x1e30] sm:$0xff]
    %v5819 = vld [vmem:[#allocation4 + $0x1e38] sm:$0xff]
    %v5820 = vld [vmem:[#allocation4 + $0x1e40] sm:$0xff]
    %v5821 = vld [vmem:[#allocation4 + $0x1e48] sm:$0xff]
    %v5822 = vld [vmem:[#allocation4 + $0x1e50] sm:$0xff]
    %v5823 = vld [vmem:[#allocation4 + $0x1e58] sm:$0xff]
    %v5824 = vld [vmem:[#allocation4 + $0x1e60] sm:$0xff]
    %v5825 = vld [vmem:[#allocation4 + $0x1e68] sm:$0xff]
    %v5826 = vld [vmem:[#allocation4 + $0x1e70] sm:$0xff]
    %v5827 = vld [vmem:[#allocation4 + $0x1e78] sm:$0xff]
    %v5828 = vld [vmem:[#allocation4 + $0x1e80] sm:$0xff]
    %v5829 = vld [vmem:[#allocation4 + $0x1e88] sm:$0xff]
    %v5830 = vld [vmem:[#allocation4 + $0x1e90] sm:$0xff]
    %v5831 = vld [vmem:[#allocation4 + $0x1e98] sm:$0xff]
    %v5832 = vld [vmem:[#allocation4 + $0x1ea0] sm:$0xff]
    %v5833 = vld [vmem:[#allocation4 + $0x1ea8] sm:$0xff]
    %v5834 = vld [vmem:[#allocation4 + $0x1eb0] sm:$0xff]
    %v5835 = vld [vmem:[#allocation4 + $0x1eb8] sm:$0xff]
    %v5836 = vld [vmem:[#allocation4 + $0x1ec0] sm:$0xff]
    %v5837 = vld [vmem:[#allocation4 + $0x1ec8] sm:$0xff]
    %v5838 = vld [vmem:[#allocation4 + $0x1ed0] sm:$0xff]
    %v5839 = vld [vmem:[#allocation4 + $0x1ed8] sm:$0xff]
    %v5840 = vld [vmem:[#allocation4 + $0x1ee0] sm:$0xff]
    %v5841 = vld [vmem:[#allocation4 + $0x1ee8] sm:$0xff]
    %v5842 = vld [vmem:[#allocation4 + $0x1ef0] sm:$0xff]
    %v5843 = vld [vmem:[#allocation4 + $0x1ef8] sm:$0xff]
    %v5844 = vld [vmem:[#allocation4 + $0x1f00] sm:$0xff]
    %v5845 = vld [vmem:[#allocation4 + $0x1f08] sm:$0xff]
    %v5846 = vld [vmem:[#allocation4 + $0x1f10] sm:$0xff]
    %v5847 = vld [vmem:[#allocation4 + $0x1f18] sm:$0xff]
    %v5848 = vld [vmem:[#allocation4 + $0x1f20] sm:$0xff]
    %v5849 = vld [vmem:[#allocation4 + $0x1f28] sm:$0xff]
    %v5850 = vld [vmem:[#allocation4 + $0x1f30] sm:$0xff]
    %v5851 = vld [vmem:[#allocation4 + $0x1f38] sm:$0xff]
    %v5852 = vld [vmem:[#allocation4 + $0x1f40] sm:$0xff]
    %v5853 = vld [vmem:[#allocation4 + $0x1f48] sm:$0xff]
    %v5854 = vld [vmem:[#allocation4 + $0x1f50] sm:$0xff]
    %v5855 = vld [vmem:[#allocation4 + $0x1f58] sm:$0xff]
    %v5856 = vld [vmem:[#allocation4 + $0x1f60] sm:$0xff]
    %v5857 = vld [vmem:[#allocation4 + $0x1f68] sm:$0xff]
    %v5858 = vld [vmem:[#allocation4 + $0x1f70] sm:$0xff]
    %v5859 = vld [vmem:[#allocation4 + $0x1f78] sm:$0xff]
    %v5860 = vld [vmem:[#allocation4 + $0x1f80] sm:$0xff]
    %v5861 = vld [vmem:[#allocation4 + $0x1f88] sm:$0xff]
    %v5862 = vld [vmem:[#allocation4 + $0x1f90] sm:$0xff]
    %v5863 = vld [vmem:[#allocation4 + $0x1f98] sm:$0xff]
    %v5864 = vld [vmem:[#allocation4 + $0x1fa0] sm:$0xff]
    %v5865 = vld [vmem:[#allocation4 + $0x1fa8] sm:$0xff]
    %v5866 = vld [vmem:[#allocation4 + $0x1fb0] sm:$0xff]
    %v5867 = vld [vmem:[#allocation4 + $0x1fb8] sm:$0xff]
    %v5868 = vld [vmem:[#allocation4 + $0x1fc0] sm:$0xff]
    %v5869 = vld [vmem:[#allocation4 + $0x1fc8] sm:$0xff]
    %v5870 = vld [vmem:[#allocation4 + $0x1fd0] sm:$0xff]
    %v5871 = vld [vmem:[#allocation4 + $0x1fd8] sm:$0xff]
    %v5872 = vld [vmem:[#allocation4 + $0x1fe0] sm:$0xff]
    %v5873 = vld [vmem:[#allocation4 + $0x1fe8] sm:$0xff]
    %v5874 = vld [vmem:[#allocation4 + $0x1ff0] sm:$0xff]
    %v5875 = vld [vmem:[#allocation4 + $0x1ff8] sm:$0xff]
    %v5876 = vld [vmem:[#allocation4 + $0x2000] sm:$0xff]
    %v5877 = vld [vmem:[#allocation4 + $0x2008] sm:$0xff]
    %v5878 = vld [vmem:[#allocation4 + $0x2010] sm:$0xff]
    %v5879 = vld [vmem:[#allocation4 + $0x2018] sm:$0xff]
    %v5880 = vld [vmem:[#allocation4 + $0x2020] sm:$0xff]
    %v5881 = vld [vmem:[#allocation4 + $0x2028] sm:$0xff]
    %v5882 = vld [vmem:[#allocation4 + $0x2030] sm:$0xff]
    %v5883 = vld [vmem:[#allocation4 + $0x2038] sm:$0xff]
    %v5884 = vld [vmem:[#allocation4 + $0x2040] sm:$0xff]
    %v5885 = vld [vmem:[#allocation4 + $0x2048] sm:$0xff]
    %v5886 = vld [vmem:[#allocation4 + $0x2050] sm:$0xff]
    %v5887 = vld [vmem:[#allocation4 + $0x2058] sm:$0xff]
    %v5888 = vld [vmem:[#allocation4 + $0x2060] sm:$0xff]
    %v5889 = vld [vmem:[#allocation4 + $0x2068] sm:$0xff]
    %v5890 = vld [vmem:[#allocation4 + $0x2070] sm:$0xff]
    %v5891 = vld [vmem:[#allocation4 + $0x2078] sm:$0xff]
    %v5892 = vld [vmem:[#allocation4 + $0x2080] sm:$0xff]
    %v5893 = vld [vmem:[#allocation4 + $0x2088] sm:$0xff]
    %v5894 = vld [vmem:[#allocation4 + $0x2090] sm:$0xff]
    %v5895 = vld [vmem:[#allocation4 + $0x2098] sm:$0xff]
    %v5896 = vld [vmem:[#allocation4 + $0x20a0] sm:$0xff]
    %v5897 = vld [vmem:[#allocation4 + $0x20a8] sm:$0xff]
    %v5898 = vld [vmem:[#allocation4 + $0x20b0] sm:$0xff]
    %v5899 = vld [vmem:[#allocation4 + $0x20b8] sm:$0xff]
    %v5900 = vld [vmem:[#allocation4 + $0x20c0] sm:$0xff]
    %v5901 = vld [vmem:[#allocation4 + $0x20c8] sm:$0xff]
    %v5902 = vld [vmem:[#allocation4 + $0x20d0] sm:$0xff]
    %v5903 = vld [vmem:[#allocation4 + $0x20d8] sm:$0xff]
    %v5904 = vld [vmem:[#allocation4 + $0x20e0] sm:$0xff]
    %v5905 = vld [vmem:[#allocation4 + $0x20e8] sm:$0xff]
    %v5906 = vld [vmem:[#allocation4 + $0x20f0] sm:$0xff]
    %v5907 = vld [vmem:[#allocation4 + $0x20f8] sm:$0xff]
    %v5908 = vld [vmem:[#allocation4 + $0x2100] sm:$0xff]
    %v5909 = vld [vmem:[#allocation4 + $0x2108] sm:$0xff]
    %v5910 = vld [vmem:[#allocation4 + $0x2110] sm:$0xff]
    %v5911 = vld [vmem:[#allocation4 + $0x2118] sm:$0xff]
    %v5912 = vld [vmem:[#allocation4 + $0x2120] sm:$0xff]
    %v5913 = vld [vmem:[#allocation4 + $0x2128] sm:$0xff]
    %v5914 = vld [vmem:[#allocation4 + $0x2130] sm:$0xff]
    %v5915 = vld [vmem:[#allocation4 + $0x2138] sm:$0xff]
    %v5916 = vld [vmem:[#allocation4 + $0x2140] sm:$0xff]
    %v5917 = vld [vmem:[#allocation4 + $0x2148] sm:$0xff]
    %v5918 = vld [vmem:[#allocation4 + $0x2150] sm:$0xff]
    %v5919 = vld [vmem:[#allocation4 + $0x2158] sm:$0xff]
    %v5920 = vld [vmem:[#allocation4 + $0x2160] sm:$0xff]
    %v5921 = vld [vmem:[#allocation4 + $0x2168] sm:$0xff]
    %v5922 = vld [vmem:[#allocation4 + $0x2170] sm:$0xff]
    %v5923 = vld [vmem:[#allocation4 + $0x2178] sm:$0xff]
    %v5924 = vld [vmem:[#allocation4 + $0x2180] sm:$0xff]
    %v5925 = vld [vmem:[#allocation4 + $0x2188] sm:$0xff]
    %v5926 = vld [vmem:[#allocation4 + $0x2190] sm:$0xff]
    %v5927 = vld [vmem:[#allocation4 + $0x2198] sm:$0xff]
    %v5928 = vld [vmem:[#allocation4 + $0x21a0] sm:$0xff]
    %v5929 = vld [vmem:[#allocation4 + $0x21a8] sm:$0xff]
    %v5930 = vld [vmem:[#allocation4 + $0x21b0] sm:$0xff]
    %v5931 = vld [vmem:[#allocation4 + $0x21b8] sm:$0xff]
    %v5932 = vld [vmem:[#allocation4 + $0x21c0] sm:$0xff]
    %v5933 = vld [vmem:[#allocation4 + $0x21c8] sm:$0xff]
    %v5934 = vld [vmem:[#allocation4 + $0x21d0] sm:$0xff]
    %v5935 = vld [vmem:[#allocation4 + $0x21d8] sm:$0xff]
    %v5936 = vld [vmem:[#allocation4 + $0x21e0] sm:$0xff]
    %v5937 = vld [vmem:[#allocation4 + $0x21e8] sm:$0xff]
    %v5938 = vld [vmem:[#allocation4 + $0x21f0] sm:$0xff]
    %v5939 = vld [vmem:[#allocation4 + $0x21f8] sm:$0xff]
    %v5940 = vld [vmem:[#allocation4 + $0x2200] sm:$0xff]
    %v5941 = vld [vmem:[#allocation4 + $0x2208] sm:$0xff]
    %v5942 = vld [vmem:[#allocation4 + $0x2210] sm:$0xff]
    %v5943 = vld [vmem:[#allocation4 + $0x2218] sm:$0xff]
    %v5944 = vld [vmem:[#allocation4 + $0x2220] sm:$0xff]
    %v5945 = vld [vmem:[#allocation4 + $0x2228] sm:$0xff]
    %v5946 = vld [vmem:[#allocation4 + $0x2230] sm:$0xff]
    %v5947 = vld [vmem:[#allocation4 + $0x2238] sm:$0xff]
    %v5948 = vld [vmem:[#allocation4 + $0x2240] sm:$0xff]
    %v5949 = vld [vmem:[#allocation4 + $0x2248] sm:$0xff]
    %v5950 = vld [vmem:[#allocation4 + $0x2250] sm:$0xff]
    %v5951 = vld [vmem:[#allocation4 + $0x2258] sm:$0xff]
    %v5952 = vld [vmem:[#allocation4 + $0x2260] sm:$0xff]
    %v5953 = vld [vmem:[#allocation4 + $0x2268] sm:$0xff]
    %v5954 = vld [vmem:[#allocation4 + $0x2270] sm:$0xff]
    %v5955 = vld [vmem:[#allocation4 + $0x2278] sm:$0xff]
    %v5956 = vld [vmem:[#allocation4 + $0x2280] sm:$0xff]
    %v5957 = vld [vmem:[#allocation4 + $0x2288] sm:$0xff]
    %v5958 = vld [vmem:[#allocation4 + $0x2290] sm:$0xff]
    %v5959 = vld [vmem:[#allocation4 + $0x2298] sm:$0xff]
    %v5960 = vld [vmem:[#allocation4 + $0x22a0] sm:$0xff]
    %v5961 = vld [vmem:[#allocation4 + $0x22a8] sm:$0xff]
    %v5962 = vld [vmem:[#allocation4 + $0x22b0] sm:$0xff]
    %v5963 = vld [vmem:[#allocation4 + $0x22b8] sm:$0xff]
    %v5964 = vld [vmem:[#allocation4 + $0x22c0] sm:$0xff]
    %v5965 = vld [vmem:[#allocation4 + $0x22c8] sm:$0xff]
    %v5966 = vld [vmem:[#allocation4 + $0x22d0] sm:$0xff]
    %v5967 = vld [vmem:[#allocation4 + $0x22d8] sm:$0xff]
    %v5968 = vld [vmem:[#allocation4 + $0x22e0] sm:$0xff]
    %v5969 = vld [vmem:[#allocation4 + $0x22e8] sm:$0xff]
    %v5970 = vld [vmem:[#allocation4 + $0x22f0] sm:$0xff]
    %v5971 = vld [vmem:[#allocation4 + $0x22f8] sm:$0xff]
    %v5972 = vld [vmem:[#allocation4 + $0x2300] sm:$0xff]
    %v5973 = vld [vmem:[#allocation4 + $0x2308] sm:$0xff]
    %v5974 = vld [vmem:[#allocation4 + $0x2310] sm:$0xff]
    %v5975 = vld [vmem:[#allocation4 + $0x2318] sm:$0xff]
    %v5976 = vld [vmem:[#allocation4 + $0x2320] sm:$0xff]
    %v5977 = vld [vmem:[#allocation4 + $0x2328] sm:$0xff]
    %v5978 = vld [vmem:[#allocation4 + $0x2330] sm:$0xff]
    %v5979 = vld [vmem:[#allocation4 + $0x2338] sm:$0xff]
    %v5980 = vld [vmem:[#allocation4 + $0x2340] sm:$0xff]
    %v5981 = vld [vmem:[#allocation4 + $0x2348] sm:$0xff]
    %v5982 = vld [vmem:[#allocation4 + $0x2350] sm:$0xff]
    %v5983 = vld [vmem:[#allocation4 + $0x2358] sm:$0xff]
    %v5984 = vld [vmem:[#allocation4 + $0x2360] sm:$0xff]
    %v5985 = vld [vmem:[#allocation4 + $0x2368] sm:$0xff]
    %v5986 = vld [vmem:[#allocation4 + $0x2370] sm:$0xff]
    %v5987 = vld [vmem:[#allocation4 + $0x2378] sm:$0xff]
    %v5988 = vld [vmem:[#allocation4 + $0x2380] sm:$0xff]
    %v5989 = vld [vmem:[#allocation4 + $0x2388] sm:$0xff]
    %v5990 = vld [vmem:[#allocation4 + $0x2390] sm:$0xff]
    %v5991 = vld [vmem:[#allocation4 + $0x2398] sm:$0xff]
    %v5992 = vld [vmem:[#allocation4 + $0x23a0] sm:$0xff]
    %v5993 = vld [vmem:[#allocation4 + $0x23a8] sm:$0xff]
    %v5994 = vld [vmem:[#allocation4 + $0x23b0] sm:$0xff]
    %v5995 = vld [vmem:[#allocation4 + $0x23b8] sm:$0xff]
    %v5996 = vld [vmem:[#allocation4 + $0x23c0] sm:$0xff]
    %v5997 = vld [vmem:[#allocation4 + $0x23c8] sm:$0xff]
    %v5998 = vld [vmem:[#allocation4 + $0x23d0] sm:$0xff]
    %v5999 = vld [vmem:[#allocation4 + $0x23d8] sm:$0xff]
    %v6000 = vld [vmem:[#allocation4 + $0x23e0] sm:$0xff]
    %v6001 = vld [vmem:[#allocation4 + $0x23e8] sm:$0xff]
    %v6002 = vld [vmem:[#allocation4 + $0x23f0] sm:$0xff]
    %v6003 = vld [vmem:[#allocation4 + $0x23f8] sm:$0xff]
    %v6004 = vld [vmem:[#allocation4 + $0x2400] sm:$0xff]
    %v6005 = vld [vmem:[#allocation4 + $0x2408] sm:$0xff]
    %v6006 = vld [vmem:[#allocation4 + $0x2410] sm:$0xff]
    %v6007 = vld [vmem:[#allocation4 + $0x2418] sm:$0xff]
    %v6008 = vld [vmem:[#allocation4 + $0x2420] sm:$0xff]
    %v6009 = vld [vmem:[#allocation4 + $0x2428] sm:$0xff]
    %v6010 = vld [vmem:[#allocation4 + $0x2430] sm:$0xff]
    %v6011 = vld [vmem:[#allocation4 + $0x2438] sm:$0xff]
    %v6012 = vld [vmem:[#allocation4 + $0x2440] sm:$0xff]
    %v6013 = vld [vmem:[#allocation4 + $0x2448] sm:$0xff]
    %v6014 = vld [vmem:[#allocation4 + $0x2450] sm:$0xff]
    %v6015 = vld [vmem:[#allocation4 + $0x2458] sm:$0xff]
    %v6016 = vld [vmem:[#allocation4 + $0x2460] sm:$0xff]
    %v6017 = vld [vmem:[#allocation4 + $0x2468] sm:$0xff]
    %v6018 = vld [vmem:[#allocation4 + $0x2470] sm:$0xff]
    %v6019 = vld [vmem:[#allocation4 + $0x2478] sm:$0xff]
    %v6020 = vld [vmem:[#allocation4 + $0x2480] sm:$0xff]
    %v6021 = vld [vmem:[#allocation4 + $0x2488] sm:$0xff]
    %v6022 = vld [vmem:[#allocation4 + $0x2490] sm:$0xff]
    %v6023 = vld [vmem:[#allocation4 + $0x2498] sm:$0xff]
    %v6024 = vld [vmem:[#allocation4 + $0x24a0] sm:$0xff]
    %v6025 = vld [vmem:[#allocation4 + $0x24a8] sm:$0xff]
    %v6026 = vld [vmem:[#allocation4 + $0x24b0] sm:$0xff]
    %v6027 = vld [vmem:[#allocation4 + $0x24b8] sm:$0xff]
    %v6028 = vld [vmem:[#allocation4 + $0x24c0] sm:$0xff]
    %v6029 = vld [vmem:[#allocation4 + $0x24c8] sm:$0xff]
    %v6030 = vld [vmem:[#allocation4 + $0x24d0] sm:$0xff]
    %v6031 = vld [vmem:[#allocation4 + $0x24d8] sm:$0xff]
    %v6032 = vld [vmem:[#allocation4 + $0x24e0] sm:$0xff]
    %v6033 = vld [vmem:[#allocation4 + $0x24e8] sm:$0xff]
    %v6034 = vld [vmem:[#allocation4 + $0x24f0] sm:$0xff]
    %v6035 = vld [vmem:[#allocation4 + $0x24f8] sm:$0xff]
    %v6036 = vld [vmem:[#allocation4 + $0x2500] sm:$0xff]
    %v6037 = vld [vmem:[#allocation4 + $0x2508] sm:$0xff]
    %v6038 = vld [vmem:[#allocation4 + $0x2510] sm:$0xff]
    %v6039 = vld [vmem:[#allocation4 + $0x2518] sm:$0xff]
    %v6040 = vld [vmem:[#allocation4 + $0x2520] sm:$0xff]
    %v6041 = vld [vmem:[#allocation4 + $0x2528] sm:$0xff]
    %v6042 = vld [vmem:[#allocation4 + $0x2530] sm:$0xff]
    %v6043 = vld [vmem:[#allocation4 + $0x2538] sm:$0xff]
    %v6044 = vld [vmem:[#allocation4 + $0x2540] sm:$0xff]
    %v6045 = vld [vmem:[#allocation4 + $0x2548] sm:$0xff]
    %v6046 = vld [vmem:[#allocation4 + $0x2550] sm:$0xff]
    %v6047 = vld [vmem:[#allocation4 + $0x2558] sm:$0xff]
    %v6048 = vld [vmem:[#allocation4 + $0x2560] sm:$0xff]
    %v6049 = vld [vmem:[#allocation4 + $0x2568] sm:$0xff]
    %v6050 = vld [vmem:[#allocation4 + $0x2570] sm:$0xff]
    %v6051 = vld [vmem:[#allocation4 + $0x2578] sm:$0xff]
    %v6052 = vld [vmem:[#allocation4 + $0x2580] sm:$0xff]
    %v6053 = vld [vmem:[#allocation4 + $0x2588] sm:$0xff]
    %v6054 = vld [vmem:[#allocation4 + $0x2590] sm:$0xff]
    %v6055 = vld [vmem:[#allocation4 + $0x2598] sm:$0xff]
    %v6056 = vld [vmem:[#allocation4 + $0x25a0] sm:$0xff]
    %v6057 = vld [vmem:[#allocation4 + $0x25a8] sm:$0xff]
    %v6058 = vld [vmem:[#allocation4 + $0x25b0] sm:$0xff]
    %v6059 = vld [vmem:[#allocation4 + $0x25b8] sm:$0xff]
    %v6060 = vld [vmem:[#allocation4 + $0x25c0] sm:$0xff]
    %v6061 = vld [vmem:[#allocation4 + $0x25c8] sm:$0xff]
    %v6062 = vld [vmem:[#allocation4 + $0x25d0] sm:$0xff]
    %v6063 = vld [vmem:[#allocation4 + $0x25d8] sm:$0xff]
    %v6064 = vld [vmem:[#allocation4 + $0x25e0] sm:$0xff]
    %v6065 = vld [vmem:[#allocation4 + $0x25e8] sm:$0xff]
    %v6066 = vld [vmem:[#allocation4 + $0x25f0] sm:$0xff]
    %v6067 = vld [vmem:[#allocation4 + $0x25f8] sm:$0xff]
    %v6068 = vld [vmem:[#allocation4 + $0x2600] sm:$0xff]
    %v6069 = vld [vmem:[#allocation4 + $0x2608] sm:$0xff]
    %v6070 = vld [vmem:[#allocation4 + $0x2610] sm:$0xff]
    %v6071 = vld [vmem:[#allocation4 + $0x2618] sm:$0xff]
    %v6072 = vld [vmem:[#allocation4 + $0x2620] sm:$0xff]
    %v6073 = vld [vmem:[#allocation4 + $0x2628] sm:$0xff]
    %v6074 = vld [vmem:[#allocation4 + $0x2630] sm:$0xff]
    %v6075 = vld [vmem:[#allocation4 + $0x2638] sm:$0xff]
    %v6076 = vld [vmem:[#allocation4 + $0x2640] sm:$0xff]
    %v6077 = vld [vmem:[#allocation4 + $0x2648] sm:$0xff]
    %v6078 = vld [vmem:[#allocation4 + $0x2650] sm:$0xff]
    %v6079 = vld [vmem:[#allocation4 + $0x2658] sm:$0xff]
    %v6080 = vld [vmem:[#allocation4 + $0x2660] sm:$0xff]
    %v6081 = vld [vmem:[#allocation4 + $0x2668] sm:$0xff]
    %v6082 = vld [vmem:[#allocation4 + $0x2670] sm:$0xff]
    %v6083 = vld [vmem:[#allocation4 + $0x2678] sm:$0xff]
    %v6084 = vld [vmem:[#allocation4 + $0x2680] sm:$0xff]
    %v6085 = vld [vmem:[#allocation4 + $0x2688] sm:$0xff]
    %v6086 = vld [vmem:[#allocation4 + $0x2690] sm:$0xff]
    %v6087 = vld [vmem:[#allocation4 + $0x2698] sm:$0xff]
    %v6088 = vld [vmem:[#allocation4 + $0x26a0] sm:$0xff]
    %v6089 = vld [vmem:[#allocation4 + $0x26a8] sm:$0xff]
    %v6090 = vld [vmem:[#allocation4 + $0x26b0] sm:$0xff]
    %v6091 = vld [vmem:[#allocation4 + $0x26b8] sm:$0xff]
    %v6092 = vld [vmem:[#allocation4 + $0x26c0] sm:$0xff]
    %v6093 = vld [vmem:[#allocation4 + $0x26c8] sm:$0xff]
    %v6094 = vld [vmem:[#allocation4 + $0x26d0] sm:$0xff]
    %v6095 = vld [vmem:[#allocation4 + $0x26d8] sm:$0xff]
    %v6096 = vld [vmem:[#allocation4 + $0x26e0] sm:$0xff]
    %v6097 = vld [vmem:[#allocation4 + $0x26e8] sm:$0xff]
    %v6098 = vld [vmem:[#allocation4 + $0x26f0] sm:$0xff]
    %v6099 = vld [vmem:[#allocation4 + $0x26f8] sm:$0xff]
    %v6100 = vld [vmem:[#allocation4 + $0x2700] sm:$0xff]
    %v6101 = vld [vmem:[#allocation4 + $0x2708] sm:$0xff]
    %v6102 = vld [vmem:[#allocation4 + $0x2710] sm:$0xff]
    %v6103 = vld [vmem:[#allocation4 + $0x2718] sm:$0xff]
    %v6104 = vld [vmem:[#allocation4 + $0x2720] sm:$0xff]
    %v6105 = vld [vmem:[#allocation4 + $0x2728] sm:$0xff]
    %v6106 = vld [vmem:[#allocation4 + $0x2730] sm:$0xff]
    %v6107 = vld [vmem:[#allocation4 + $0x2738] sm:$0xff]
    %v6108 = vld [vmem:[#allocation4 + $0x2740] sm:$0xff]
    %v6109 = vld [vmem:[#allocation4 + $0x2748] sm:$0xff]
    %v6110 = vld [vmem:[#allocation4 + $0x2750] sm:$0xff]
    %v6111 = vld [vmem:[#allocation4 + $0x2758] sm:$0xff]
    %v6112 = vld [vmem:[#allocation4 + $0x2760] sm:$0xff]
    %v6113 = vld [vmem:[#allocation4 + $0x2768] sm:$0xff]
    %v6114 = vld [vmem:[#allocation4 + $0x2770] sm:$0xff]
    %v6115 = vld [vmem:[#allocation4 + $0x2778] sm:$0xff]
    %v6116 = vld [vmem:[#allocation4 + $0x2780] sm:$0xff]
    %v6117 = vld [vmem:[#allocation4 + $0x2788] sm:$0xff]
    %v6118 = vld [vmem:[#allocation4 + $0x2790] sm:$0xff]
    %v6119 = vld [vmem:[#allocation4 + $0x2798] sm:$0xff]
    %v6120 = vld [vmem:[#allocation4 + $0x27a0] sm:$0xff]
    %v6121 = vld [vmem:[#allocation4 + $0x27a8] sm:$0xff]
    %v6122 = vld [vmem:[#allocation4 + $0x27b0] sm:$0xff]
    %v6123 = vld [vmem:[#allocation4 + $0x27b8] sm:$0xff]
    %v6124 = vld [vmem:[#allocation4 + $0x27c0] sm:$0xff]
    %v6125 = vld [vmem:[#allocation4 + $0x27c8] sm:$0xff]
    %v6126 = vld [vmem:[#allocation4 + $0x27d0] sm:$0xff]
    %v6127 = vld [vmem:[#allocation4 + $0x27d8] sm:$0xff]
    %v6128 = vld [vmem:[#allocation4 + $0x27e0] sm:$0xff]
    %v6129 = vld [vmem:[#allocation4 + $0x27e8] sm:$0xff]
    %v6130 = vld [vmem:[#allocation4 + $0x27f0] sm:$0xff]
    %v6131 = vld [vmem:[#allocation4 + $0x27f8] sm:$0xff]
    %v6132 = vld [vmem:[#allocation4 + $0x2800] sm:$0xff]
    %v6133 = vld [vmem:[#allocation4 + $0x2808] sm:$0xff]
    %v6134 = vld [vmem:[#allocation4 + $0x2810] sm:$0xff]
    %v6135 = vld [vmem:[#allocation4 + $0x2818] sm:$0xff]
    %v6136 = vld [vmem:[#allocation4 + $0x2820] sm:$0xff]
    %v6137 = vld [vmem:[#allocation4 + $0x2828] sm:$0xff]
    %v6138 = vld [vmem:[#allocation4 + $0x2830] sm:$0xff]
    %v6139 = vld [vmem:[#allocation4 + $0x2838] sm:$0xff]
    %v6140 = vld [vmem:[#allocation4 + $0x2840] sm:$0xff]
    %v6141 = vld [vmem:[#allocation4 + $0x2848] sm:$0xff]
    %v6142 = vld [vmem:[#allocation4 + $0x2850] sm:$0xff]
    %v6143 = vld [vmem:[#allocation4 + $0x2858] sm:$0xff]
    %v6144 = vld [vmem:[#allocation4 + $0x2860] sm:$0xff]
    %v6145 = vld [vmem:[#allocation4 + $0x2868] sm:$0xff]
    %v6146 = vld [vmem:[#allocation4 + $0x2870] sm:$0xff]
    %v6147 = vld [vmem:[#allocation4 + $0x2878] sm:$0xff]
    %v6148 = vld [vmem:[#allocation4 + $0x2880] sm:$0xff]
    %v6149 = vld [vmem:[#allocation4 + $0x2888] sm:$0xff]
    %v6150 = vld [vmem:[#allocation4 + $0x2890] sm:$0xff]
    %v6151 = vld [vmem:[#allocation4 + $0x2898] sm:$0xff]
    %v6152 = vld [vmem:[#allocation4 + $0x28a0] sm:$0xff]
    %v6153 = vld [vmem:[#allocation4 + $0x28a8] sm:$0xff]
    %v6154 = vld [vmem:[#allocation4 + $0x28b0] sm:$0xff]
    %v6155 = vld [vmem:[#allocation4 + $0x28b8] sm:$0xff]
    %v6156 = vld [vmem:[#allocation4 + $0x28c0] sm:$0xff]
    %v6157 = vld [vmem:[#allocation4 + $0x28c8] sm:$0xff]
    %v6158 = vld [vmem:[#allocation4 + $0x28d0] sm:$0xff]
    %v6159 = vld [vmem:[#allocation4 + $0x28d8] sm:$0xff]
    %v6160 = vld [vmem:[#allocation4 + $0x28e0] sm:$0xff]
    %v6161 = vld [vmem:[#allocation4 + $0x28e8] sm:$0xff]
    %v6162 = vld [vmem:[#allocation4 + $0x28f0] sm:$0xff]
    %v6163 = vld [vmem:[#allocation4 + $0x28f8] sm:$0xff]
    %v6164 = vld [vmem:[#allocation4 + $0x2900] sm:$0xff]
    %v6165 = vld [vmem:[#allocation4 + $0x2908] sm:$0xff]
    %v6166 = vld [vmem:[#allocation4 + $0x2910] sm:$0xff]
    %v6167 = vld [vmem:[#allocation4 + $0x2918] sm:$0xff]
    %v6168 = vld [vmem:[#allocation4 + $0x2920] sm:$0xff]
    %v6169 = vld [vmem:[#allocation4 + $0x2928] sm:$0xff]
    %v6170 = vld [vmem:[#allocation4 + $0x2930] sm:$0xff]
    %v6171 = vld [vmem:[#allocation4 + $0x2938] sm:$0xff]
    %v6172 = vld [vmem:[#allocation4 + $0x2940] sm:$0xff]
    %v6173 = vld [vmem:[#allocation4 + $0x2948] sm:$0xff]
    %v6174 = vld [vmem:[#allocation4 + $0x2950] sm:$0xff]
    %v6175 = vld [vmem:[#allocation4 + $0x2958] sm:$0xff]
    %v6176 = vld [vmem:[#allocation4 + $0x2960] sm:$0xff]
    %v6177 = vld [vmem:[#allocation4 + $0x2968] sm:$0xff]
    %v6178 = vld [vmem:[#allocation4 + $0x2970] sm:$0xff]
    %v6179 = vld [vmem:[#allocation4 + $0x2978] sm:$0xff]
    %v6180 = vld [vmem:[#allocation4 + $0x2980] sm:$0xff]
    %v6181 = vld [vmem:[#allocation4 + $0x2988] sm:$0xff]
    %v6182 = vld [vmem:[#allocation4 + $0x2990] sm:$0xff]
    %v6183 = vld [vmem:[#allocation4 + $0x2998] sm:$0xff]
    %v6184 = vld [vmem:[#allocation4 + $0x29a0] sm:$0xff]
    %v6185 = vld [vmem:[#allocation4 + $0x29a8] sm:$0xff]
    %v6186 = vld [vmem:[#allocation4 + $0x29b0] sm:$0xff]
    %v6187 = vld [vmem:[#allocation4 + $0x29b8] sm:$0xff]
    %v6188 = vld [vmem:[#allocation4 + $0x29c0] sm:$0xff]
    %v6189 = vld [vmem:[#allocation4 + $0x29c8] sm:$0xff]
    %v6190 = vld [vmem:[#allocation4 + $0x29d0] sm:$0xff]
    %v6191 = vld [vmem:[#allocation4 + $0x29d8] sm:$0xff]
    %v6192 = vld [vmem:[#allocation4 + $0x29e0] sm:$0xff]
    %v6193 = vld [vmem:[#allocation4 + $0x29e8] sm:$0xff]
    %v6194 = vld [vmem:[#allocation4 + $0x29f0] sm:$0xff]
    %v6195 = vld [vmem:[#allocation4 + $0x29f8] sm:$0xff]
    %v6196 = vld [vmem:[#allocation9] sm:$0xff]
    %v6197 = vld [vmem:[#allocation9 + $0x8] sm:$0xf]
    %v6200 = vlaneseq
    %v6201 = vshrl.u32 %v6200, 7
    %v6202 = vsub.s32 0, %v6201
    %v6203 = vrot.slane %v6196, %v6202
    %v6204 = vlaneseq
    %v6205 = vshrl.u32 %v6204, 7
    %v6206 = vsub.s32 1, %v6205
    %v6207 = vrot.slane %v6196, %v6206
    %v6208 = vlaneseq
    %v6209 = vshrl.u32 %v6208, 7
    %v6210 = vsub.s32 2, %v6209
    %v6211 = vrot.slane %v6196, %v6210
    %v6212 = vlaneseq
    %v6213 = vshrl.u32 %v6212, 7
    %v6214 = vsub.s32 3, %v6213
    %v6215 = vrot.slane %v6196, %v6214
    %v6216 = vlaneseq
    %v6217 = vshrl.u32 %v6216, 7
    %v6218 = vsub.s32 4, %v6217
    %v6219 = vrot.slane %v6196, %v6218
    %v6220 = vlaneseq
    %v6221 = vshrl.u32 %v6220, 7
    %v6222 = vsub.s32 5, %v6221
    %v6223 = vrot.slane %v6196, %v6222
    %v6224 = vlaneseq
    %v6225 = vshrl.u32 %v6224, 7
    %v6226 = vsub.s32 6, %v6225
    %v6227 = vrot.slane %v6196, %v6226
    %v6228 = vlaneseq
    %v6229 = vshrl.u32 %v6228, 7
    %v6230 = vsub.s32 7, %v6229
    %v6231 = vrot.slane %v6196, %v6230
    %v6232 = vlaneseq
    %v6233 = vshrl.u32 %v6232, 7
    %v6234 = vsub.s32 0, %v6233
    %v6235 = vrot.slane %v6197, %v6234
    %v6236 = vlaneseq
    %v6237 = vshrl.u32 %v6236, 7
    %v6238 = vsub.s32 1, %v6237
    %v6239 = vrot.slane %v6197, %v6238
    %v6240 = vlaneseq
    %v6241 = vshrl.u32 %v6240, 7
    %v6242 = vsub.s32 2, %v6241
    %v6243 = vrot.slane %v6197, %v6242
    %v6244 = vlaneseq
    %v6245 = vshrl.u32 %v6244, 7
    %v6246 = vsub.s32 3, %v6245
    %v6247 = vrot.slane %v6197, %v6246
    %6260 = vmatprep.subr.mxu0 %v4853
    %6261 = vmatpush1.msra.mxu0 %v4852
    %6262 = vmatprep.subr.mxu0 %v4865
    %6263 = vmatpush1.msra.mxu0 %v4864
    %6264 = vmatprep.subr.mxu0 %v4877
    %6265 = vmatpush1.msra.mxu0 %v4876
    %6266 = vmatprep.subr.mxu0 %v4889
    %6267 = vmatpush1.msra.mxu0 %v4888
    %6268 = vmatprep.subr.mxu0 %v4901
    %6269 = vmatpush1.msra.mxu0 %v4900
    %6270 = vmatprep.subr.mxu0 %v4913
    %6271 = vmatpush1.msra.mxu0 %v4912
    %6272 = vmatprep.subr.mxu0 %v4925
    %6273 = vmatpush1.msra.mxu0 %v4924
    %6274 = vmatprep.subr.mxu0 %v4937
    %6275 = vmatpush1.msra.mxu0 %v4936
    %6276 = vmatprep.subr.mxu0 %v4949
    %6277 = vmatpush1.msra.mxu0 %v4948
    %6278 = vmatprep.subr.mxu0 %v4961
    %6279 = vmatpush1.msra.mxu0 %v4960
    %6280 = vmatprep.subr.mxu0 %v4973
    %6281 = vmatpush1.msra.mxu0 %v4972
    %6282 = vmatprep.subr.mxu0 %v4985
    %6283 = vmatpush1.msra.mxu0 %v4984
    %6284 = vmatprep.subr.mxu0 %v4997
    %6285 = vmatpush1.msra.mxu0 %v4996
    %6286 = vmatprep.subr.mxu0 %v5009
    %6287 = vmatpush1.msra.mxu0 %v5008
    %6288 = vmatprep.subr.mxu0 %v5021
    %6289 = vmatpush1.msra.mxu0 %v5020
    %6290 = vmatprep.subr.mxu0 %v5033
    %6291 = vmatpush1.msra.mxu0 %v5032
    %6292 = vmatprep.subr.mxu0 %v5045
    %6293 = vmatpush1.msra.mxu0 %v5044
    %6294 = vmatprep.subr.mxu0 %v5057
    %6295 = vmatpush1.msra.mxu0 %v5056
    %6296 = vmatprep.subr.mxu0 %v5069
    %6297 = vmatpush1.msra.mxu0 %v5068
    %6298 = vmatprep.subr.mxu0 %v5081
    %6299 = vmatpush1.msra.mxu0 %v5080
    %6300 = vmatprep.subr.mxu0 %v5093
    %6301 = vmatpush1.msra.mxu0 %v5092
    %6302 = vmatprep.subr.mxu0 %v5105
    %6303 = vmatpush1.msra.mxu0 %v5104
    %6304 = vmatprep.subr.mxu0 %v5117
    %6305 = vmatpush1.msra.mxu0 %v5116
    %6306 = vmatprep.subr.mxu0 %v5129
    %6307 = vmatpush1.msra.mxu0 %v5128
    %6308 = vmatprep.subr.mxu0 %v5141
    %6309 = vmatpush1.msra.mxu0 %v5140
    %6310 = vmatprep.subr.mxu0 %v5153
    %6311 = vmatpush1.msra.mxu0 %v5152
    %6312 = vmatprep.subr.mxu0 %v5165
    %6313 = vmatpush1.msra.mxu0 %v5164
    %6314 = vmatprep.subr.mxu0 %v5177
    %6315 = vmatpush1.msra.mxu0 %v5176
    %6316 = vmatprep.subr.mxu0 %v5189
    %6317 = vmatpush1.msra.mxu0 %v5188
    %6318 = vmatprep.subr.mxu0 %v5201
    %6319 = vmatpush1.msra.mxu0 %v5200
    %6320 = vmatprep.subr.mxu0 %v5213
    %6321 = vmatpush1.msra.mxu0 %v5212
    %6322 = vmatprep.subr.mxu0 %v5225
    %6323 = vmatpush1.msra.mxu0 %v5224
    %6324 = vmatprep.mubr.f32.mxu0 %v4839
    %6325 = vmatmul.mubr.f32.gmra.mrb[0].mxu0 %v4838
    %v6326 = vpop.f32.mrb[0].mxu0
    %v6327 = vadd.f32 %v6203, %v6326
    %v6328 = vpop.f32.mrb[0].mxu0
    %v6329 = vadd.f32 %v6207, %v6328
    %6330 = vmatprep.mubr.f32.mxu0 %v4846
    %6331 = vmatmul.mubr.f32.gmra.mrb[0].mxu0 %v4845
    %v6332 = vpop.f32.mrb[0].mxu0
    %v6333 = vadd.f32 %v6203, %v6332
    %v6334 = vpop.f32.mrb[0].mxu0
    %v6335 = vadd.f32 %v6207, %v6334
    %6336 = vdwg.mxu0
    %6337 = vmatprep.subr.mxu0 %v5237
    %6338 = vmatpush1.msra.mxu0 %v5236
    %6339 = vmatprep.subr.mxu0 %v5249
    %6340 = vmatpush1.msra.mxu0 %v5248
    %6341 = vmatprep.subr.mxu0 %v5261
    %6342 = vmatpush1.msra.mxu0 %v5260
    %6343 = vmatprep.subr.mxu0 %v5273
    %6344 = vmatpush1.msra.mxu0 %v5272
    %6345 = vmatprep.subr.mxu0 %v5285
    %6346 = vmatpush1.msra.mxu0 %v5284
    %6347 = vmatprep.subr.mxu0 %v5297
    %6348 = vmatpush1.msra.mxu0 %v5296
    %6349 = vmatprep.subr.mxu0 %v5309
    %6350 = vmatpush1.msra.mxu0 %v5308
    %6351 = vmatprep.subr.mxu0 %v5321
    %6352 = vmatpush1.msra.mxu0 %v5320
    %6353 = vmatprep.subr.mxu0 %v5333
    %6354 = vmatpush1.msra.mxu0 %v5332
    %6355 = vmatprep.subr.mxu0 %v5345
    %6356 = vmatpush1.msra.mxu0 %v5344
    %6357 = vmatprep.subr.mxu0 %v5357
    %6358 = vmatpush1.msra.mxu0 %v5356
    %6359 = vmatprep.subr.mxu0 %v5369
    %6360 = vmatpush1.msra.mxu0 %v5368
    %6361 = vmatprep.subr.mxu0 %v5381
    %6362 = vmatpush1.msra.mxu0 %v5380
    %6363 = vmatprep.subr.mxu0 %v5393
    %6364 = vmatpush1.msra.mxu0 %v5392
    %6365 = vmatprep.subr.mxu0 %v5405
    %6366 = vmatpush1.msra.mxu0 %v5404
    %6367 = vmatprep.subr.mxu0 %v5417
    %6368 = vmatpush1.msra.mxu0 %v5416
    %6369 = vmatprep.subr.mxu0 %v5429
    %6370 = vmatpush1.msra.mxu0 %v5428
    %6371 = vmatprep.subr.mxu0 %v5441
    %6372 = vmatpush1.msra.mxu0 %v5440
    %6373 = vmatprep.subr.mxu0 %v5453
    %6374 = vmatpush1.msra.mxu0 %v5452
    %6375 = vmatprep.subr.mxu0 %v5465
    %6376 = vmatpush1.msra.mxu0 %v5464
    %6377 = vmatprep.subr.mxu0 %v5477
    %6378 = vmatpush1.msra.mxu0 %v5476
    %6379 = vmatprep.subr.mxu0 %v5489
    %6380 = vmatpush1.msra.mxu0 %v5488
    %6381 = vmatprep.subr.mxu0 %v5501
    %6382 = vmatpush1.msra.mxu0 %v5500
    %6383 = vmatprep.subr.mxu0 %v5513
    %6384 = vmatpush1.msra.mxu0 %v5512
    %6385 = vmatprep.subr.mxu0 %v5525
    %6386 = vmatpush1.msra.mxu0 %v5524
    %6387 = vmatprep.subr.mxu0 %v5537
    %6388 = vmatpush1.msra.mxu0 %v5536
    %6389 = vmatprep.subr.mxu0 %v5549
    %6390 = vmatpush1.msra.mxu0 %v5548
    %6391 = vmatprep.subr.mxu0 %v5561
    %6392 = vmatpush1.msra.mxu0 %v5560
    %6393 = vmatprep.subr.mxu0 %v5573
    %6394 = vmatpush1.msra.mxu0 %v5572
    %6395 = vmatprep.subr.mxu0 %v5585
    %6396 = vmatpush1.msra.mxu0 %v5584
    %6397 = vmatprep.subr.mxu0 %v5597
    %6398 = vmatpush1.msra.mxu0 %v5596
    %6399 = vmatprep.subr.mxu0 %v5609
    %6400 = vmatpush1.msra.mxu0 %v5608
    %6401 = vmatprep.mubr.f32.mxu0 %v4841
    %6402 = vmatmul.mubr.f32.gmra.mrb[0].mxu0 %v4840
    %v6403 = vpop.f32.mrb[0].mxu0
    %v6404 = vadd.f32 %v6327, %v6403
    %v6405 = vpop.f32.mrb[0].mxu0
    %v6406 = vadd.f32 %v6329, %v6405
    %6407 = vmatprep.mubr.f32.mxu0 %v4848
    %6408 = vmatmul.mubr.f32.gmra.mrb[0].mxu0 %v4847
    %v6409 = vpop.f32.mrb[0].mxu0
    %v6410 = vadd.f32 %v6333, %v6409
    %v6411 = vpop.f32.mrb[0].mxu0
    %v6412 = vadd.f32 %v6335, %v6411
    %6413 = vdwg.mxu0
    %6414 = vmatprep.subr.mxu0 %v5621
    %6415 = vmatpush1.msra.mxu0 %v5620
    %6416 = vmatprep.subr.mxu0 %v5633
    %6417 = vmatpush1.msra.mxu0 %v5632
    %6418 = vmatprep.subr.mxu0 %v5645
    %6419 = vmatpush1.msra.mxu0 %v5644
    %6420 = vmatprep.subr.mxu0 %v5657
    %6421 = vmatpush1.msra.mxu0 %v5656
    %6422 = vmatprep.subr.mxu0 %v5669
    %6423 = vmatpush1.msra.mxu0 %v5668
    %6424 = vmatprep.subr.mxu0 %v5681
    %6425 = vmatpush1.msra.mxu0 %v5680
    %6426 = vmatprep.subr.mxu0 %v5693
    %6427 = vmatpush1.msra.mxu0 %v5692
    %6428 = vmatprep.subr.mxu0 %v5705
    %6429 = vmatpush1.msra.mxu0 %v5704
    %6430 = vmatprep.subr.mxu0 %v5717
    %6431 = vmatpush1.msra.mxu0 %v5716
    %6432 = vmatprep.subr.mxu0 %v5729
    %6433 = vmatpush1.msra.mxu0 %v5728
    %6434 = vmatprep.subr.mxu0 %v5741
    %6435 = vmatpush1.msra.mxu0 %v5740
    %6436 = vmatprep.subr.mxu0 %v5753
    %6437 = vmatpush1.msra.mxu0 %v5752
    %6438 = vmatprep.subr.mxu0 %v5765
    %6439 = vmatpush1.msra.mxu0 %v5764
    %6440 = vmatprep.subr.mxu0 %v5777
    %6441 = vmatpush1.msra.mxu0 %v5776
    %6442 = vmatprep.subr.mxu0 %v5789
    %6443 = vmatpush1.msra.mxu0 %v5788
    %6444 = vmatprep.subr.mxu0 %v5801
    %6445 = vmatpush1.msra.mxu0 %v5800
    %6446 = vmatprep.subr.mxu0 %v5813
    %6447 = vmatpush1.msra.mxu0 %v5812
    %6448 = vmatprep.subr.mxu0 %v5825
    %6449 = vmatpush1.msra.mxu0 %v5824
    %6450 = vmatprep.subr.mxu0 %v5837
    %6451 = vmatpush1.msra.mxu0 %v5836
    %6452 = vmatprep.subr.mxu0 %v5849
    %6453 = vmatpush1.msra.mxu0 %v5848
    %6454 = vmatprep.subr.mxu0 %v5861
    %6455 = vmatpush1.msra.mxu0 %v5860
    %6456 = vmatprep.subr.mxu0 %v5873
    %6457 = vmatpush1.msra.mxu0 %v5872
    %6458 = vmatprep.subr.mxu0 %v5885
    %6459 = vmatpush1.msra.mxu0 %v5884
    %6460 = vmatprep.subr.mxu0 %v5897
    %6461 = vmatpush1.msra.mxu0 %v5896
    %6462 = vmatprep.subr.mxu0 %v5909
    %6463 = vmatpush1.msra.mxu0 %v5908
    %6464 = vmatprep.subr.mxu0 %v5921
    %6465 = vmatpush1.msra.mxu0 %v5920
    %6466 = vmatprep.subr.mxu0 %v5933
    %6467 = vmatpush1.msra.mxu0 %v5932
    %6468 = vmatprep.subr.mxu0 %v5945
    %6469 = vmatpush1.msra.mxu0 %v5944
    %6470 = vmatprep.subr.mxu0 %v5957
    %6471 = vmatpush1.msra.mxu0 %v5956
    %6472 = vmatprep.subr.mxu0 %v5969
    %6473 = vmatpush1.msra.mxu0 %v5968
    %6474 = vmatprep.subr.mxu0 %v5981
    %6475 = vmatpush1.msra.mxu0 %v5980
    %6476 = vmatprep.subr.mxu0 %v5993
    %6477 = vmatpush1.msra.mxu0 %v5992
    %6478 = vmatprep.mubr.f32.mxu0 %v4843
    %6479 = vmatmul.mubr.f32.gmra.mrb[0].mxu0 %v4842
    %v6480 = vpop.f32.mrb[0].mxu0
    %v6481 = vadd.f32 %v6404, %v6480
    %v6482 = vpop.f32.mrb[0].mxu0
    %v6483 = vadd.f32 %v6406, %v6482
    %6484 = vmatprep.mubr.f32.mxu0 %v4850
    %6485 = vmatmul.mubr.f32.gmra.mrb[0].mxu0 %v4849
    %v6486 = vpop.f32.mrb[0].mxu0
    %v6487 = vadd.f32 %v6410, %v6486
    %v6488 = vpop.f32.mrb[0].mxu0
    %v6489 = vadd.f32 %v6412, %v6488
    %6490 = vdwg.mxu0
    %6491 = vmatprep.subr.mxu0 %v6005
    %6492 = vmatpush1.msra.mxu0 %v6004
    %6493 = vmatprep.subr.mxu0 %v6017
    %6494 = vmatpush1.msra.mxu0 %v6016
    %6495 = vmatprep.subr.mxu0 %v6029
    %6496 = vmatpush1.msra.mxu0 %v6028
    %6497 = vmatprep.subr.mxu0 %v6041
    %6498 = vmatpush1.msra.mxu0 %v6040
    %6499 = vmatprep.subr.mxu0 %v6053
    %6500 = vmatpush1.msra.mxu0 %v6052
    %6501 = vmatprep.subr.mxu0 %v6065
    %6502 = vmatpush1.msra.mxu0 %v6064
    %6503 = vmatprep.subr.mxu0 %v6077
    %6504 = vmatpush1.msra.mxu0 %v6076
    %6505 = vmatprep.subr.mxu0 %v6089
    %6506 = vmatpush1.msra.mxu0 %v6088
    %6507 = vmatprep.subr.mxu0 %v6101
    %6508 = vmatpush1.msra.mxu0 %v6100
    %6509 = vmatprep.subr.mxu0 %v6113
    %6510 = vmatpush1.msra.mxu0 %v6112
    %6511 = vmatprep.subr.mxu0 %v6125
    %6512 = vmatpush1.msra.mxu0 %v6124
    %6513 = vmatprep.subr.mxu0 %v6137
    %6514 = vmatpush1.msra.mxu0 %v6136
    %6515 = vmatprep.subr.mxu0 %v6149
    %6516 = vmatpush1.msra.mxu0 %v6148
    %6517 = vmatprep.subr.mxu0 %v6161
    %6518 = vmatpush1.msra.mxu0 %v6160
    %6519 = vmatprep.subr.mxu0 %v6173
    %6520 = vmatpush1.msra.mxu0 %v6172
    %6521 = vmatprep.subr.mxu0 %v6185
    %6522 = vmatpush1.msra.mxu0 %v6184
    %6523 = vmatprep.subr.mxu0 0.0
    %6524 = vmatpush1.msra.mxu0 0.0
    %6525 = vmatprep.subr.mxu0 0.0
    %6526 = vmatpush1.msra.mxu0 0.0
    %6527 = vmatprep.subr.mxu0 0.0
    %6528 = vmatpush1.msra.mxu0 0.0
    %6529 = vmatprep.subr.mxu0 0.0
    %6530 = vmatpush1.msra.mxu0 0.0
    %6531 = vmatprep.subr.mxu0 0.0
    %6532 = vmatpush1.msra.mxu0 0.0
    %6533 = vmatprep.subr.mxu0 0.0
    %6534 = vmatpush1.msra.mxu0 0.0
    %6535 = vmatprep.subr.mxu0 0.0
    %6536 = vmatpush1.msra.mxu0 0.0
    %6537 = vmatprep.subr.mxu0 0.0
    %6538 = vmatpush1.msra.mxu0 0.0
    %6539 = vmatprep.subr.mxu0 0.0
    %6540 = vmatpush1.msra.mxu0 0.0
    %6541 = vmatprep.subr.mxu0 0.0
    %6542 = vmatpush1.msra.mxu0 0.0
    %6543 = vmatprep.subr.mxu0 0.0
    %6544 = vmatpush1.msra.mxu0 0.0
    %6545 = vmatprep.subr.mxu0 0.0
    %6546 = vmatpush1.msra.mxu0 0.0
    %6547 = vmatprep.subr.mxu0 0.0
    %6548 = vmatpush1.msra.mxu0 0.0
    %6549 = vmatprep.subr.mxu0 0.0
    %6550 = vmatpush1.msra.mxu0 0.0
    %6551 = vmatprep.subr.mxu0 0.0
    %6552 = vmatpush1.msra.mxu0 0.0
    %6553 = vmatprep.subr.mxu0 0.0
    %6554 = vmatpush1.msra.mxu0 0.0
    %6555 = vmatprep.mubr.f32.mxu0 0.0
    %6556 = vmatmul.mubr.f32.gmra.mrb[0].mxu0 %v4844
    %v6557 = vpop.f32.mrb[0].mxu0
    %v6558 = vadd.f32 %v6481, %v6557
    %v6559 = vpop.f32.mrb[0].mxu0
    %v6560 = vadd.f32 %v6483, %v6559
    %6561 = vmatprep.mubr.f32.mxu0 0.0
    %6562 = vmatmul.mubr.f32.gmra.mrb[0].mxu0 %v4851
    %v6563 = vpop.f32.mrb[0].mxu0
    %v6564 = vadd.f32 %v6487, %v6563
    %v6565 = vpop.f32.mrb[0].mxu0
    %v6566 = vadd.f32 %v6489, %v6565
    %6567 = vdwg.mxu0
    %6568 = vmatprep.subr.mxu0 %v4855
    %6569 = vmatpush1.msra.mxu0 %v4854
    %6570 = vmatprep.subr.mxu0 %v4867
    %6571 = vmatpush1.msra.mxu0 %v4866
    %6572 = vmatprep.subr.mxu0 %v4879
    %6573 = vmatpush1.msra.mxu0 %v4878
    %6574 = vmatprep.subr.mxu0 %v4891
    %6575 = vmatpush1.msra.mxu0 %v4890
    %6576 = vmatprep.subr.mxu0 %v4903
    %6577 = vmatpush1.msra.mxu0 %v4902
    %6578 = vmatprep.subr.mxu0 %v4915
    %6579 = vmatpush1.msra.mxu0 %v4914
    %6580 = vmatprep.subr.mxu0 %v4927
    %6581 = vmatpush1.msra.mxu0 %v4926
    %6582 = vmatprep.subr.mxu0 %v4939
    %6583 = vmatpush1.msra.mxu0 %v4938
    %6584 = vmatprep.subr.mxu0 %v4951
    %6585 = vmatpush1.msra.mxu0 %v4950
    %6586 = vmatprep.subr.mxu0 %v4963
    %6587 = vmatpush1.msra.mxu0 %v4962
    %6588 = vmatprep.subr.mxu0 %v4975
    %6589 = vmatpush1.msra.mxu0 %v4974
    %6590 = vmatprep.subr.mxu0 %v4987
    %6591 = vmatpush1.msra.mxu0 %v4986
    %6592 = vmatprep.subr.mxu0 %v4999
    %6593 = vmatpush1.msra.mxu0 %v4998
    %6594 = vmatprep.subr.mxu0 %v5011
    %6595 = vmatpush1.msra.mxu0 %v5010
    %6596 = vmatprep.subr.mxu0 %v5023
    %6597 = vmatpush1.msra.mxu0 %v5022
    %6598 = vmatprep.subr.mxu0 %v5035
    %6599 = vmatpush1.msra.mxu0 %v5034
    %6600 = vmatprep.subr.mxu0 %v5047
    %6601 = vmatpush1.msra.mxu0 %v5046
    %6602 = vmatprep.subr.mxu0 %v5059
    %6603 = vmatpush1.msra.mxu0 %v5058
    %6604 = vmatprep.subr.mxu0 %v5071
    %6605 = vmatpush1.msra.mxu0 %v5070
    %6606 = vmatprep.subr.mxu0 %v5083
    %6607 = vmatpush1.msra.mxu0 %v5082
    %6608 = vmatprep.subr.mxu0 %v5095
    %6609 = vmatpush1.msra.mxu0 %v5094
    %6610 = vmatprep.subr.mxu0 %v5107
    %6611 = vmatpush1.msra.mxu0 %v5106
    %6612 = vmatprep.subr.mxu0 %v5119
    %6613 = vmatpush1.msra.mxu0 %v5118
    %6614 = vmatprep.subr.mxu0 %v5131
    %6615 = vmatpush1.msra.mxu0 %v5130
    %6616 = vmatprep.subr.mxu0 %v5143
    %6617 = vmatpush1.msra.mxu0 %v5142
    %6618 = vmatprep.subr.mxu0 %v5155
    %6619 = vmatpush1.msra.mxu0 %v5154
    %6620 = vmatprep.subr.mxu0 %v5167
    %6621 = vmatpush1.msra.mxu0 %v5166
    %6622 = vmatprep.subr.mxu0 %v5179
    %6623 = vmatpush1.msra.mxu0 %v5178
    %6624 = vmatprep.subr.mxu0 %v5191
    %6625 = vmatpush1.msra.mxu0 %v5190
    %6626 = vmatprep.subr.mxu0 %v5203
    %6627 = vmatpush1.msra.mxu0 %v5202
    %6628 = vmatprep.subr.mxu0 %v5215
    %6629 = vmatpush1.msra.mxu0 %v5214
    %6630 = vmatprep.subr.mxu0 %v5227
    %6631 = vmatpush1.msra.mxu0 %v5226
    %6632 = vmatprep.mubr.f32.mxu0 %v4839
    %6633 = vmatmul.mubr.f32.gmra.mrb[0].mxu0 %v4838
    %v6634 = vpop.f32.mrb[0].mxu0
    %v6635 = vadd.f32 %v6211, %v6634
    %v6636 = vpop.f32.mrb[0].mxu0
    %v6637 = vadd.f32 %v6215, %v6636
    %6638 = vmatprep.mubr.f32.mxu0 %v4846
    %6639 = vmatmul.mubr.f32.gmra.mrb[0].mxu0 %v4845
    %v6640 = vpop.f32.mrb[0].mxu0
    %v6641 = vadd.f32 %v6211, %v6640
    %v6642 = vpop.f32.mrb[0].mxu0
    %v6643 = vadd.f32 %v6215, %v6642
    %6644 = vdwg.mxu0
    %6645 = vmatprep.subr.mxu0 %v5239
    %6646 = vmatpush1.msra.mxu0 %v5238
    %6647 = vmatprep.subr.mxu0 %v5251
    %6648 = vmatpush1.msra.mxu0 %v5250
    %6649 = vmatprep.subr.mxu0 %v5263
    %6650 = vmatpush1.msra.mxu0 %v5262
    %6651 = vmatprep.subr.mxu0 %v5275
    %6652 = vmatpush1.msra.mxu0 %v5274
    %6653 = vmatprep.subr.mxu0 %v5287
    %6654 = vmatpush1.msra.mxu0 %v5286
    %6655 = vmatprep.subr.mxu0 %v5299
    %6656 = vmatpush1.msra.mxu0 %v5298
    %6657 = vmatprep.subr.mxu0 %v5311
    %6658 = vmatpush1.msra.mxu0 %v5310
    %6659 = vmatprep.subr.mxu0 %v5323
    %6660 = vmatpush1.msra.mxu0 %v5322
    %6661 = vmatprep.subr.mxu0 %v5335
    %6662 = vmatpush1.msra.mxu0 %v5334
    %6663 = vmatprep.subr.mxu0 %v5347
    %6664 = vmatpush1.msra.mxu0 %v5346
    %6665 = vmatprep.subr.mxu0 %v5359
    %6666 = vmatpush1.msra.mxu0 %v5358
    %6667 = vmatprep.subr.mxu0 %v5371
    %6668 = vmatpush1.msra.mxu0 %v5370
    %6669 = vmatprep.subr.mxu0 %v5383
    %6670 = vmatpush1.msra.mxu0 %v5382
    %6671 = vmatprep.subr.mxu0 %v5395
    %6672 = vmatpush1.msra.mxu0 %v5394
    %6673 = vmatprep.subr.mxu0 %v5407
    %6674 = vmatpush1.msra.mxu0 %v5406
    %6675 = vmatprep.subr.mxu0 %v5419
    %6676 = vmatpush1.msra.mxu0 %v5418
    %6677 = vmatprep.subr.mxu0 %v5431
    %6678 = vmatpush1.msra.mxu0 %v5430
    %6679 = vmatprep.subr.mxu0 %v5443
    %6680 = vmatpush1.msra.mxu0 %v5442
    %6681 = vmatprep.subr.mxu0 %v5455
    %6682 = vmatpush1.msra.mxu0 %v5454
    %6683 = vmatprep.subr.mxu0 %v5467
    %6684 = vmatpush1.msra.mxu0 %v5466
    %6685 = vmatprep.subr.mxu0 %v5479
    %6686 = vmatpush1.msra.mxu0 %v5478
    %6687 = vmatprep.subr.mxu0 %v5491
    %6688 = vmatpush1.msra.mxu0 %v5490
    %6689 = vmatprep.subr.mxu0 %v5503
    %6690 = vmatpush1.msra.mxu0 %v5502
    %6691 = vmatprep.subr.mxu0 %v5515
    %6692 = vmatpush1.msra.mxu0 %v5514
    %6693 = vmatprep.subr.mxu0 %v5527
    %6694 = vmatpush1.msra.mxu0 %v5526
    %6695 = vmatprep.subr.mxu0 %v5539
    %6696 = vmatpush1.msra.mxu0 %v5538
    %6697 = vmatprep.subr.mxu0 %v5551
    %6698 = vmatpush1.msra.mxu0 %v5550
    %6699 = vmatprep.subr.mxu0 %v5563
    %6700 = vmatpush1.msra.mxu0 %v5562
    %6701 = vmatprep.subr.mxu0 %v5575
    %6702 = vmatpush1.msra.mxu0 %v5574
    %6703 = vmatprep.subr.mxu0 %v5587
    %6704 = vmatpush1.msra.mxu0 %v5586
    %6705 = vmatprep.subr.mxu0 %v5599
    %6706 = vmatpush1.msra.mxu0 %v5598
    %6707 = vmatprep.subr.mxu0 %v5611
    %6708 = vmatpush1.msra.mxu0 %v5610
    %6709 = vmatprep.mubr.f32.mxu0 %v4841
    %6710 = vmatmul.mubr.f32.gmra.mrb[0].mxu0 %v4840
    %v6711 = vpop.f32.mrb[0].mxu0
    %v6712 = vadd.f32 %v6635, %v6711
    %v6713 = vpop.f32.mrb[0].mxu0
    %v6714 = vadd.f32 %v6637, %v6713
    %6715 = vmatprep.mubr.f32.mxu0 %v4848
    %6716 = vmatmul.mubr.f32.gmra.mrb[0].mxu0 %v4847
    %v6717 = vpop.f32.mrb[0].mxu0
    %v6718 = vadd.f32 %v6641, %v6717
    %v6719 = vpop.f32.mrb[0].mxu0
    %v6720 = vadd.f32 %v6643, %v6719
    %6721 = vdwg.mxu0
    %6722 = vmatprep.subr.mxu0 %v5623
    %6723 = vmatpush1.msra.mxu0 %v5622
    %6724 = vmatprep.subr.mxu0 %v5635
    %6725 = vmatpush1.msra.mxu0 %v5634
    %6726 = vmatprep.subr.mxu0 %v5647
    %6727 = vmatpush1.msra.mxu0 %v5646
    %6728 = vmatprep.subr.mxu0 %v5659
    %6729 = vmatpush1.msra.mxu0 %v5658
    %6730 = vmatprep.subr.mxu0 %v5671
    %6731 = vmatpush1.msra.mxu0 %v5670
    %6732 = vmatprep.subr.mxu0 %v5683
    %6733 = vmatpush1.msra.mxu0 %v5682
    %6734 = vmatprep.subr.mxu0 %v5695
    %6735 = vmatpush1.msra.mxu0 %v5694
    %6736 = vmatprep.subr.mxu0 %v5707
    %6737 = vmatpush1.msra.mxu0 %v5706
    %6738 = vmatprep.subr.mxu0 %v5719
    %6739 = vmatpush1.msra.mxu0 %v5718
    %6740 = vmatprep.subr.mxu0 %v5731
    %6741 = vmatpush1.msra.mxu0 %v5730
    %6742 = vmatprep.subr.mxu0 %v5743
    %6743 = vmatpush1.msra.mxu0 %v5742
    %6744 = vmatprep.subr.mxu0 %v5755
    %6745 = vmatpush1.msra.mxu0 %v5754
    %6746 = vmatprep.subr.mxu0 %v5767
    %6747 = vmatpush1.msra.mxu0 %v5766
    %6748 = vmatprep.subr.mxu0 %v5779
    %6749 = vmatpush1.msra.mxu0 %v5778
    %6750 = vmatprep.subr.mxu0 %v5791
    %6751 = vmatpush1.msra.mxu0 %v5790
    %6752 = vmatprep.subr.mxu0 %v5803
    %6753 = vmatpush1.msra.mxu0 %v5802
    %6754 = vmatprep.subr.mxu0 %v5815
    %6755 = vmatpush1.msra.mxu0 %v5814
    %6756 = vmatprep.subr.mxu0 %v5827
    %6757 = vmatpush1.msra.mxu0 %v5826
    %6758 = vmatprep.subr.mxu0 %v5839
    %6759 = vmatpush1.msra.mxu0 %v5838
    %6760 = vmatprep.subr.mxu0 %v5851
    %6761 = vmatpush1.msra.mxu0 %v5850
    %6762 = vmatprep.subr.mxu0 %v5863
    %6763 = vmatpush1.msra.mxu0 %v5862
    %6764 = vmatprep.subr.mxu0 %v5875
    %6765 = vmatpush1.msra.mxu0 %v5874
    %6766 = vmatprep.subr.mxu0 %v5887
    %6767 = vmatpush1.msra.mxu0 %v5886
    %6768 = vmatprep.subr.mxu0 %v5899
    %6769 = vmatpush1.msra.mxu0 %v5898
    %6770 = vmatprep.subr.mxu0 %v5911
    %6771 = vmatpush1.msra.mxu0 %v5910
    %6772 = vmatprep.subr.mxu0 %v5923
    %6773 = vmatpush1.msra.mxu0 %v5922
    %6774 = vmatprep.subr.mxu0 %v5935
    %6775 = vmatpush1.msra.mxu0 %v5934
    %6776 = vmatprep.subr.mxu0 %v5947
    %6777 = vmatpush1.msra.mxu0 %v5946
    %6778 = vmatprep.subr.mxu0 %v5959
    %6779 = vmatpush1.msra.mxu0 %v5958
    %6780 = vmatprep.subr.mxu0 %v5971
    %6781 = vmatpush1.msra.mxu0 %v5970
    %6782 = vmatprep.subr.mxu0 %v5983
    %6783 = vmatpush1.msra.mxu0 %v5982
    %6784 = vmatprep.subr.mxu0 %v5995
    %6785 = vmatpush1.msra.mxu0 %v5994
    %6786 = vmatprep.mubr.f32.mxu0 %v4843
    %6787 = vmatmul.mubr.f32.gmra.mrb[0].mxu0 %v4842
    %v6788 = vpop.f32.mrb[0].mxu0
    %v6789 = vadd.f32 %v6712, %v6788
    %v6790 = vpop.f32.mrb[0].mxu0
    %v6791 = vadd.f32 %v6714, %v6790
    %6792 = vmatprep.mubr.f32.mxu0 %v4850
    %6793 = vmatmul.mubr.f32.gmra.mrb[0].mxu0 %v4849
    %v6794 = vpop.f32.mrb[0].mxu0
    %v6795 = vadd.f32 %v6718, %v6794
    %v6796 = vpop.f32.mrb[0].mxu0
    %v6797 = vadd.f32 %v6720, %v6796
    %6798 = vdwg.mxu0
    %6799 = vmatprep.subr.mxu0 %v6007
    %6800 = vmatpush1.msra.mxu0 %v6006
    %6801 = vmatprep.subr.mxu0 %v6019
    %6802 = vmatpush1.msra.mxu0 %v6018
    %6803 = vmatprep.subr.mxu0 %v6031
    %6804 = vmatpush1.msra.mxu0 %v6030
    %6805 = vmatprep.subr.mxu0 %v6043
    %6806 = vmatpush1.msra.mxu0 %v6042
    %6807 = vmatprep.subr.mxu0 %v6055
    %6808 = vmatpush1.msra.mxu0 %v6054
    %6809 = vmatprep.subr.mxu0 %v6067
    %6810 = vmatpush1.msra.mxu0 %v6066
    %6811 = vmatprep.subr.mxu0 %v6079
    %6812 = vmatpush1.msra.mxu0 %v6078
    %6813 = vmatprep.subr.mxu0 %v6091
    %6814 = vmatpush1.msra.mxu0 %v6090
    %6815 = vmatprep.subr.mxu0 %v6103
    %6816 = vmatpush1.msra.mxu0 %v6102
    %6817 = vmatprep.subr.mxu0 %v6115
    %6818 = vmatpush1.msra.mxu0 %v6114
    %6819 = vmatprep.subr.mxu0 %v6127
    %6820 = vmatpush1.msra.mxu0 %v6126
    %6821 = vmatprep.subr.mxu0 %v6139
    %6822 = vmatpush1.msra.mxu0 %v6138
    %6823 = vmatprep.subr.mxu0 %v6151
    %6824 = vmatpush1.msra.mxu0 %v6150
    %6825 = vmatprep.subr.mxu0 %v6163
    %6826 = vmatpush1.msra.mxu0 %v6162
    %6827 = vmatprep.subr.mxu0 %v6175
    %6828 = vmatpush1.msra.mxu0 %v6174
    %6829 = vmatprep.subr.mxu0 %v6187
    %6830 = vmatpush1.msra.mxu0 %v6186
    %6831 = vmatprep.subr.mxu0 0.0
    %6832 = vmatpush1.msra.mxu0 0.0
    %6833 = vmatprep.subr.mxu0 0.0
    %6834 = vmatpush1.msra.mxu0 0.0
    %6835 = vmatprep.subr.mxu0 0.0
    %6836 = vmatpush1.msra.mxu0 0.0
    %6837 = vmatprep.subr.mxu0 0.0
    %6838 = vmatpush1.msra.mxu0 0.0
    %6839 = vmatprep.subr.mxu0 0.0
    %6840 = vmatpush1.msra.mxu0 0.0
    %6841 = vmatprep.subr.mxu0 0.0
    %6842 = vmatpush1.msra.mxu0 0.0
    %6843 = vmatprep.subr.mxu0 0.0
    %6844 = vmatpush1.msra.mxu0 0.0
    %6845 = vmatprep.subr.mxu0 0.0
    %6846 = vmatpush1.msra.mxu0 0.0
    %6847 = vmatprep.subr.mxu0 0.0
    %6848 = vmatpush1.msra.mxu0 0.0
    %6849 = vmatprep.subr.mxu0 0.0
    %6850 = vmatpush1.msra.mxu0 0.0
    %6851 = vmatprep.subr.mxu0 0.0
    %6852 = vmatpush1.msra.mxu0 0.0
    %6853 = vmatprep.subr.mxu0 0.0
    %6854 = vmatpush1.msra.mxu0 0.0
    %6855 = vmatprep.subr.mxu0 0.0
    %6856 = vmatpush1.msra.mxu0 0.0
    %6857 = vmatprep.subr.mxu0 0.0
    %6858 = vmatpush1.msra.mxu0 0.0
    %6859 = vmatprep.subr.mxu0 0.0
    %6860 = vmatpush1.msra.mxu0 0.0
    %6861 = vmatprep.subr.mxu0 0.0
    %6862 = vmatpush1.msra.mxu0 0.0
    %6863 = vmatprep.mubr.f32.mxu0 0.0
    %6864 = vmatmul.mubr.f32.gmra.mrb[0].mxu0 %v4844
    %v6865 = vpop.f32.mrb[0].mxu0
    %v6866 = vadd.f32 %v6789, %v6865
    %v6867 = vpop.f32.mrb[0].mxu0
    %v6868 = vadd.f32 %v6791, %v6867
    %6869 = vmatprep.mubr.f32.mxu0 0.0
    %6870 = vmatmul.mubr.f32.gmra.mrb[0].mxu0 %v4851
    %v6871 = vpop.f32.mrb[0].mxu0
    %v6872 = vadd.f32 %v6795, %v6871
    %v6873 = vpop.f32.mrb[0].mxu0
    %v6874 = vadd.f32 %v6797, %v6873
    %6875 = vdwg.mxu0
    %6876 = vmatprep.subr.mxu0 %v4857
    %6877 = vmatpush1.msra.mxu0 %v4856
    %6878 = vmatprep.subr.mxu0 %v4869
    %6879 = vmatpush1.msra.mxu0 %v4868
    %6880 = vmatprep.subr.mxu0 %v4881
    %6881 = vmatpush1.msra.mxu0 %v4880
    %6882 = vmatprep.subr.mxu0 %v4893
    %6883 = vmatpush1.msra.mxu0 %v4892
    %6884 = vmatprep.subr.mxu0 %v4905
    %6885 = vmatpush1.msra.mxu0 %v4904
    %6886 = vmatprep.subr.mxu0 %v4917
    %6887 = vmatpush1.msra.mxu0 %v4916
    %6888 = vmatprep.subr.mxu0 %v4929
    %6889 = vmatpush1.msra.mxu0 %v4928
    %6890 = vmatprep.subr.mxu0 %v4941
    %6891 = vmatpush1.msra.mxu0 %v4940
    %6892 = vmatprep.subr.mxu0 %v4953
    %6893 = vmatpush1.msra.mxu0 %v4952
    %6894 = vmatprep.subr.mxu0 %v4965
    %6895 = vmatpush1.msra.mxu0 %v4964
    %6896 = vmatprep.subr.mxu0 %v4977
    %6897 = vmatpush1.msra.mxu0 %v4976
    %6898 = vmatprep.subr.mxu0 %v4989
    %6899 = vmatpush1.msra.mxu0 %v4988
    %6900 = vmatprep.subr.mxu0 %v5001
    %6901 = vmatpush1.msra.mxu0 %v5000
    %6902 = vmatprep.subr.mxu0 %v5013
    %6903 = vmatpush1.msra.mxu0 %v5012
    %6904 = vmatprep.subr.mxu0 %v5025
    %6905 = vmatpush1.msra.mxu0 %v5024
    %6906 = vmatprep.subr.mxu0 %v5037
    %6907 = vmatpush1.msra.mxu0 %v5036
    %6908 = vmatprep.subr.mxu0 %v5049
    %6909 = vmatpush1.msra.mxu0 %v5048
    %6910 = vmatprep.subr.mxu0 %v5061
    %6911 = vmatpush1.msra.mxu0 %v5060
    %6912 = vmatprep.subr.mxu0 %v5073
    %6913 = vmatpush1.msra.mxu0 %v5072
    %6914 = vmatprep.subr.mxu0 %v5085
    %6915 = vmatpush1.msra.mxu0 %v5084
    %6916 = vmatprep.subr.mxu0 %v5097
    %6917 = vmatpush1.msra.mxu0 %v5096
    %6918 = vmatprep.subr.mxu0 %v5109
    %6919 = vmatpush1.msra.mxu0 %v5108
    %6920 = vmatprep.subr.mxu0 %v5121
    %6921 = vmatpush1.msra.mxu0 %v5120
    %6922 = vmatprep.subr.mxu0 %v5133
    %6923 = vmatpush1.msra.mxu0 %v5132
    %6924 = vmatprep.subr.mxu0 %v5145
    %6925 = vmatpush1.msra.mxu0 %v5144
    %6926 = vmatprep.subr.mxu0 %v5157
    %6927 = vmatpush1.msra.mxu0 %v5156
    %6928 = vmatprep.subr.mxu0 %v5169
    %6929 = vmatpush1.msra.mxu0 %v5168
    %6930 = vmatprep.subr.mxu0 %v5181
    %6931 = vmatpush1.msra.mxu0 %v5180
    %6932 = vmatprep.subr.mxu0 %v5193
    %6933 = vmatpush1.msra.mxu0 %v5192
    %6934 = vmatprep.subr.mxu0 %v5205
    %6935 = vmatpush1.msra.mxu0 %v5204
    %6936 = vmatprep.subr.mxu0 %v5217
    %6937 = vmatpush1.msra.mxu0 %v5216
    %6938 = vmatprep.subr.mxu0 %v5229
    %6939 = vmatpush1.msra.mxu0 %v5228
    %6940 = vmatprep.mubr.f32.mxu0 %v4839
    %6941 = vmatmul.mubr.f32.gmra.mrb[0].mxu0 %v4838
    %v6942 = vpop.f32.mrb[0].mxu0
    %v6943 = vadd.f32 %v6219, %v6942
    %v6944 = vpop.f32.mrb[0].mxu0
    %v6945 = vadd.f32 %v6223, %v6944
    %6946 = vmatprep.mubr.f32.mxu0 %v4846
    %6947 = vmatmul.mubr.f32.gmra.mrb[0].mxu0 %v4845
    %v6948 = vpop.f32.mrb[0].mxu0
    %v6949 = vadd.f32 %v6219, %v6948
    %v6950 = vpop.f32.mrb[0].mxu0
    %v6951 = vadd.f32 %v6223, %v6950
    %6952 = vdwg.mxu0
    %6953 = vmatprep.subr.mxu0 %v5241
    %6954 = vmatpush1.msra.mxu0 %v5240
    %6955 = vmatprep.subr.mxu0 %v5253
    %6956 = vmatpush1.msra.mxu0 %v5252
    %6957 = vmatprep.subr.mxu0 %v5265
    %6958 = vmatpush1.msra.mxu0 %v5264
    %6959 = vmatprep.subr.mxu0 %v5277
    %6960 = vmatpush1.msra.mxu0 %v5276
    %6961 = vmatprep.subr.mxu0 %v5289
    %6962 = vmatpush1.msra.mxu0 %v5288
    %6963 = vmatprep.subr.mxu0 %v5301
    %6964 = vmatpush1.msra.mxu0 %v5300
    %6965 = vmatprep.subr.mxu0 %v5313
    %6966 = vmatpush1.msra.mxu0 %v5312
    %6967 = vmatprep.subr.mxu0 %v5325
    %6968 = vmatpush1.msra.mxu0 %v5324
    %6969 = vmatprep.subr.mxu0 %v5337
    %6970 = vmatpush1.msra.mxu0 %v5336
    %6971 = vmatprep.subr.mxu0 %v5349
    %6972 = vmatpush1.msra.mxu0 %v5348
    %6973 = vmatprep.subr.mxu0 %v5361
    %6974 = vmatpush1.msra.mxu0 %v5360
    %6975 = vmatprep.subr.mxu0 %v5373
    %6976 = vmatpush1.msra.mxu0 %v5372
    %6977 = vmatprep.subr.mxu0 %v5385
    %6978 = vmatpush1.msra.mxu0 %v5384
    %6979 = vmatprep.subr.mxu0 %v5397
    %6980 = vmatpush1.msra.mxu0 %v5396
    %6981 = vmatprep.subr.mxu0 %v5409
    %6982 = vmatpush1.msra.mxu0 %v5408
    %6983 = vmatprep.subr.mxu0 %v5421
    %6984 = vmatpush1.msra.mxu0 %v5420
    %6985 = vmatprep.subr.mxu0 %v5433
    %6986 = vmatpush1.msra.mxu0 %v5432
    %6987 = vmatprep.subr.mxu0 %v5445
    %6988 = vmatpush1.msra.mxu0 %v5444
    %6989 = vmatprep.subr.mxu0 %v5457
    %6990 = vmatpush1.msra.mxu0 %v5456
    %6991 = vmatprep.subr.mxu0 %v5469
    %6992 = vmatpush1.msra.mxu0 %v5468
    %6993 = vmatprep.subr.mxu0 %v5481
    %6994 = vmatpush1.msra.mxu0 %v5480
    %6995 = vmatprep.subr.mxu0 %v5493
    %6996 = vmatpush1.msra.mxu0 %v5492
    %6997 = vmatprep.subr.mxu0 %v5505
    %6998 = vmatpush1.msra.mxu0 %v5504
    %6999 = vmatprep.subr.mxu0 %v5517
    %7000 = vmatpush1.msra.mxu0 %v5516
    %7001 = vmatprep.subr.mxu0 %v5529
    %7002 = vmatpush1.msra.mxu0 %v5528
    %7003 = vmatprep.subr.mxu0 %v5541
    %7004 = vmatpush1.msra.mxu0 %v5540
    %7005 = vmatprep.subr.mxu0 %v5553
    %7006 = vmatpush1.msra.mxu0 %v5552
    %7007 = vmatprep.subr.mxu0 %v5565
    %7008 = vmatpush1.msra.mxu0 %v5564
    %7009 = vmatprep.subr.mxu0 %v5577
    %7010 = vmatpush1.msra.mxu0 %v5576
    %7011 = vmatprep.subr.mxu0 %v5589
    %7012 = vmatpush1.msra.mxu0 %v5588
    %7013 = vmatprep.subr.mxu0 %v5601
    %7014 = vmatpush1.msra.mxu0 %v5600
    %7015 = vmatprep.subr.mxu0 %v5613
    %7016 = vmatpush1.msra.mxu0 %v5612
    %7017 = vmatprep.mubr.f32.mxu0 %v4841
    %7018 = vmatmul.mubr.f32.gmra.mrb[0].mxu0 %v4840
    %v7019 = vpop.f32.mrb[0].mxu0
    %v7020 = vadd.f32 %v6943, %v7019
    %v7021 = vpop.f32.mrb[0].mxu0
    %v7022 = vadd.f32 %v6945, %v7021
    %7023 = vmatprep.mubr.f32.mxu0 %v4848
    %7024 = vmatmul.mubr.f32.gmra.mrb[0].mxu0 %v4847
    %v7025 = vpop.f32.mrb[0].mxu0
    %v7026 = vadd.f32 %v6949, %v7025
    %v7027 = vpop.f32.mrb[0].mxu0
    %v7028 = vadd.f32 %v6951, %v7027
    %7029 = vdwg.mxu0
    %7030 = vmatprep.subr.mxu0 %v5625
    %7031 = vmatpush1.msra.mxu0 %v5624
    %7032 = vmatprep.subr.mxu0 %v5637
    %7033 = vmatpush1.msra.mxu0 %v5636
    %7034 = vmatprep.subr.mxu0 %v5649
    %7035 = vmatpush1.msra.mxu0 %v5648
    %7036 = vmatprep.subr.mxu0 %v5661
    %7037 = vmatpush1.msra.mxu0 %v5660
    %7038 = vmatprep.subr.mxu0 %v5673
    %7039 = vmatpush1.msra.mxu0 %v5672
    %7040 = vmatprep.subr.mxu0 %v5685
    %7041 = vmatpush1.msra.mxu0 %v5684
    %7042 = vmatprep.subr.mxu0 %v5697
    %7043 = vmatpush1.msra.mxu0 %v5696
    %7044 = vmatprep.subr.mxu0 %v5709
    %7045 = vmatpush1.msra.mxu0 %v5708
    %7046 = vmatprep.subr.mxu0 %v5721
    %7047 = vmatpush1.msra.mxu0 %v5720
    %7048 = vmatprep.subr.mxu0 %v5733
    %7049 = vmatpush1.msra.mxu0 %v5732
    %7050 = vmatprep.subr.mxu0 %v5745
    %7051 = vmatpush1.msra.mxu0 %v5744
    %7052 = vmatprep.subr.mxu0 %v5757
    %7053 = vmatpush1.msra.mxu0 %v5756
    %7054 = vmatprep.subr.mxu0 %v5769
    %7055 = vmatpush1.msra.mxu0 %v5768
    %7056 = vmatprep.subr.mxu0 %v5781
    %7057 = vmatpush1.msra.mxu0 %v5780
    %7058 = vmatprep.subr.mxu0 %v5793
    %7059 = vmatpush1.msra.mxu0 %v5792
    %7060 = vmatprep.subr.mxu0 %v5805
    %7061 = vmatpush1.msra.mxu0 %v5804
    %7062 = vmatprep.subr.mxu0 %v5817
    %7063 = vmatpush1.msra.mxu0 %v5816
    %7064 = vmatprep.subr.mxu0 %v5829
    %7065 = vmatpush1.msra.mxu0 %v5828
    %7066 = vmatprep.subr.mxu0 %v5841
    %7067 = vmatpush1.msra.mxu0 %v5840
    %7068 = vmatprep.subr.mxu0 %v5853
    %7069 = vmatpush1.msra.mxu0 %v5852
    %7070 = vmatprep.subr.mxu0 %v5865
    %7071 = vmatpush1.msra.mxu0 %v5864
    %7072 = vmatprep.subr.mxu0 %v5877
    %7073 = vmatpush1.msra.mxu0 %v5876
    %7074 = vmatprep.subr.mxu0 %v5889
    %7075 = vmatpush1.msra.mxu0 %v5888
    %7076 = vmatprep.subr.mxu0 %v5901
    %7077 = vmatpush1.msra.mxu0 %v5900
    %7078 = vmatprep.subr.mxu0 %v5913
    %7079 = vmatpush1.msra.mxu0 %v5912
    %7080 = vmatprep.subr.mxu0 %v5925
    %7081 = vmatpush1.msra.mxu0 %v5924
    %7082 = vmatprep.subr.mxu0 %v5937
    %7083 = vmatpush1.msra.mxu0 %v5936
    %7084 = vmatprep.subr.mxu0 %v5949
    %7085 = vmatpush1.msra.mxu0 %v5948
    %7086 = vmatprep.subr.mxu0 %v5961
    %7087 = vmatpush1.msra.mxu0 %v5960
    %7088 = vmatprep.subr.mxu0 %v5973
    %7089 = vmatpush1.msra.mxu0 %v5972
    %7090 = vmatprep.subr.mxu0 %v5985
    %7091 = vmatpush1.msra.mxu0 %v5984
    %7092 = vmatprep.subr.mxu0 %v5997
    %7093 = vmatpush1.msra.mxu0 %v5996
    %7094 = vmatprep.mubr.f32.mxu0 %v4843
    %7095 = vmatmul.mubr.f32.gmra.mrb[0].mxu0 %v4842
    %v7096 = vpop.f32.mrb[0].mxu0
    %v7097 = vadd.f32 %v7020, %v7096
    %v7098 = vpop.f32.mrb[0].mxu0
    %v7099 = vadd.f32 %v7022, %v7098
    %7100 = vmatprep.mubr.f32.mxu0 %v4850
    %7101 = vmatmul.mubr.f32.gmra.mrb[0].mxu0 %v4849
    %v7102 = vpop.f32.mrb[0].mxu0
    %v7103 = vadd.f32 %v7026, %v7102
    %v7104 = vpop.f32.mrb[0].mxu0
    %v7105 = vadd.f32 %v7028, %v7104
    %7106 = vdwg.mxu0
    %7107 = vmatprep.subr.mxu0 %v6009
    %7108 = vmatpush1.msra.mxu0 %v6008
    %7109 = vmatprep.subr.mxu0 %v6021
    %7110 = vmatpush1.msra.mxu0 %v6020
    %7111 = vmatprep.subr.mxu0 %v6033
    %7112 = vmatpush1.msra.mxu0 %v6032
    %7113 = vmatprep.subr.mxu0 %v6045
    %7114 = vmatpush1.msra.mxu0 %v6044
    %7115 = vmatprep.subr.mxu0 %v6057
    %7116 = vmatpush1.msra.mxu0 %v6056
    %7117 = vmatprep.subr.mxu0 %v6069
    %7118 = vmatpush1.msra.mxu0 %v6068
    %7119 = vmatprep.subr.mxu0 %v6081
    %7120 = vmatpush1.msra.mxu0 %v6080
    %7121 = vmatprep.subr.mxu0 %v6093
    %7122 = vmatpush1.msra.mxu0 %v6092
    %7123 = vmatprep.subr.mxu0 %v6105
    %7124 = vmatpush1.msra.mxu0 %v6104
    %7125 = vmatprep.subr.mxu0 %v6117
    %7126 = vmatpush1.msra.mxu0 %v6116
    %7127 = vmatprep.subr.mxu0 %v6129
    %7128 = vmatpush1.msra.mxu0 %v6128
    %7129 = vmatprep.subr.mxu0 %v6141
    %7130 = vmatpush1.msra.mxu0 %v6140
    %7131 = vmatprep.subr.mxu0 %v6153
    %7132 = vmatpush1.msra.mxu0 %v6152
    %7133 = vmatprep.subr.mxu0 %v6165
    %7134 = vmatpush1.msra.mxu0 %v6164
    %7135 = vmatprep.subr.mxu0 %v6177
    %7136 = vmatpush1.msra.mxu0 %v6176
    %7137 = vmatprep.subr.mxu0 %v6189
    %7138 = vmatpush1.msra.mxu0 %v6188
    %7139 = vmatprep.subr.mxu0 0.0
    %7140 = vmatpush1.msra.mxu0 0.0
    %7141 = vmatprep.subr.mxu0 0.0
    %7142 = vmatpush1.msra.mxu0 0.0
    %7143 = vmatprep.subr.mxu0 0.0
    %7144 = vmatpush1.msra.mxu0 0.0
    %7145 = vmatprep.subr.mxu0 0.0
    %7146 = vmatpush1.msra.mxu0 0.0
    %7147 = vmatprep.subr.mxu0 0.0
    %7148 = vmatpush1.msra.mxu0 0.0
    %7149 = vmatprep.subr.mxu0 0.0
    %7150 = vmatpush1.msra.mxu0 0.0
    %7151 = vmatprep.subr.mxu0 0.0
    %7152 = vmatpush1.msra.mxu0 0.0
    %7153 = vmatprep.subr.mxu0 0.0
    %7154 = vmatpush1.msra.mxu0 0.0
    %7155 = vmatprep.subr.mxu0 0.0
    %7156 = vmatpush1.msra.mxu0 0.0
    %7157 = vmatprep.subr.mxu0 0.0
    %7158 = vmatpush1.msra.mxu0 0.0
    %7159 = vmatprep.subr.mxu0 0.0
    %7160 = vmatpush1.msra.mxu0 0.0
    %7161 = vmatprep.subr.mxu0 0.0
    %7162 = vmatpush1.msra.mxu0 0.0
    %7163 = vmatprep.subr.mxu0 0.0
    %7164 = vmatpush1.msra.mxu0 0.0
    %7165 = vmatprep.subr.mxu0 0.0
    %7166 = vmatpush1.msra.mxu0 0.0
    %7167 = vmatprep.subr.mxu0 0.0
    %7168 = vmatpush1.msra.mxu0 0.0
    %7169 = vmatprep.subr.mxu0 0.0
    %7170 = vmatpush1.msra.mxu0 0.0
    %7171 = vmatprep.mubr.f32.mxu0 0.0
    %7172 = vmatmul.mubr.f32.gmra.mrb[0].mxu0 %v4844
    %v7173 = vpop.f32.mrb[0].mxu0
    %v7174 = vadd.f32 %v7097, %v7173
    %v7175 = vpop.f32.mrb[0].mxu0
    %v7176 = vadd.f32 %v7099, %v7175
    %7177 = vmatprep.mubr.f32.mxu0 0.0
    %7178 = vmatmul.mubr.f32.gmra.mrb[0].mxu0 %v4851
    %v7179 = vpop.f32.mrb[0].mxu0
    %v7180 = vadd.f32 %v7103, %v7179
    %v7181 = vpop.f32.mrb[0].mxu0
    %v7182 = vadd.f32 %v7105, %v7181
    %7183 = vdwg.mxu0
    %7184 = vmatprep.subr.mxu0 %v4859
    %7185 = vmatpush1.msra.mxu0 %v4858
    %7186 = vmatprep.subr.mxu0 %v4871
    %7187 = vmatpush1.msra.mxu0 %v4870
    %7188 = vmatprep.subr.mxu0 %v4883
    %7189 = vmatpush1.msra.mxu0 %v4882
    %7190 = vmatprep.subr.mxu0 %v4895
    %7191 = vmatpush1.msra.mxu0 %v4894
    %7192 = vmatprep.subr.mxu0 %v4907
    %7193 = vmatpush1.msra.mxu0 %v4906
    %7194 = vmatprep.subr.mxu0 %v4919
    %7195 = vmatpush1.msra.mxu0 %v4918
    %7196 = vmatprep.subr.mxu0 %v4931
    %7197 = vmatpush1.msra.mxu0 %v4930
    %7198 = vmatprep.subr.mxu0 %v4943
    %7199 = vmatpush1.msra.mxu0 %v4942
    %7200 = vmatprep.subr.mxu0 %v4955
    %7201 = vmatpush1.msra.mxu0 %v4954
    %7202 = vmatprep.subr.mxu0 %v4967
    %7203 = vmatpush1.msra.mxu0 %v4966
    %7204 = vmatprep.subr.mxu0 %v4979
    %7205 = vmatpush1.msra.mxu0 %v4978
    %7206 = vmatprep.subr.mxu0 %v4991
    %7207 = vmatpush1.msra.mxu0 %v4990
    %7208 = vmatprep.subr.mxu0 %v5003
    %7209 = vmatpush1.msra.mxu0 %v5002
    %7210 = vmatprep.subr.mxu0 %v5015
    %7211 = vmatpush1.msra.mxu0 %v5014
    %7212 = vmatprep.subr.mxu0 %v5027
    %7213 = vmatpush1.msra.mxu0 %v5026
    %7214 = vmatprep.subr.mxu0 %v5039
    %7215 = vmatpush1.msra.mxu0 %v5038
    %7216 = vmatprep.subr.mxu0 %v5051
    %7217 = vmatpush1.msra.mxu0 %v5050
    %7218 = vmatprep.subr.mxu0 %v5063
    %7219 = vmatpush1.msra.mxu0 %v5062
    %7220 = vmatprep.subr.mxu0 %v5075
    %7221 = vmatpush1.msra.mxu0 %v5074
    %7222 = vmatprep.subr.mxu0 %v5087
    %7223 = vmatpush1.msra.mxu0 %v5086
    %7224 = vmatprep.subr.mxu0 %v5099
    %7225 = vmatpush1.msra.mxu0 %v5098
    %7226 = vmatprep.subr.mxu0 %v5111
    %7227 = vmatpush1.msra.mxu0 %v5110
    %7228 = vmatprep.subr.mxu0 %v5123
    %7229 = vmatpush1.msra.mxu0 %v5122
    %7230 = vmatprep.subr.mxu0 %v5135
    %7231 = vmatpush1.msra.mxu0 %v5134
    %7232 = vmatprep.subr.mxu0 %v5147
    %7233 = vmatpush1.msra.mxu0 %v5146
    %7234 = vmatprep.subr.mxu0 %v5159
    %7235 = vmatpush1.msra.mxu0 %v5158
    %7236 = vmatprep.subr.mxu0 %v5171
    %7237 = vmatpush1.msra.mxu0 %v5170
    %7238 = vmatprep.subr.mxu0 %v5183
    %7239 = vmatpush1.msra.mxu0 %v5182
    %7240 = vmatprep.subr.mxu0 %v5195
    %7241 = vmatpush1.msra.mxu0 %v5194
    %7242 = vmatprep.subr.mxu0 %v5207
    %7243 = vmatpush1.msra.mxu0 %v5206
    %7244 = vmatprep.subr.mxu0 %v5219
    %7245 = vmatpush1.msra.mxu0 %v5218
    %7246 = vmatprep.subr.mxu0 %v5231
    %7247 = vmatpush1.msra.mxu0 %v5230
    %7248 = vmatprep.mubr.f32.mxu0 %v4839
    %7249 = vmatmul.mubr.f32.gmra.mrb[0].mxu0 %v4838
    %v7250 = vpop.f32.mrb[0].mxu0
    %v7251 = vadd.f32 %v6227, %v7250
    %v7252 = vpop.f32.mrb[0].mxu0
    %v7253 = vadd.f32 %v6231, %v7252
    %7254 = vmatprep.mubr.f32.mxu0 %v4846
    %7255 = vmatmul.mubr.f32.gmra.mrb[0].mxu0 %v4845
    %v7256 = vpop.f32.mrb[0].mxu0
    %v7257 = vadd.f32 %v6227, %v7256
    %v7258 = vpop.f32.mrb[0].mxu0
    %v7259 = vadd.f32 %v6231, %v7258
    %7260 = vdwg.mxu0
    %7261 = vmatprep.subr.mxu0 %v5243
    %7262 = vmatpush1.msra.mxu0 %v5242
    %7263 = vmatprep.subr.mxu0 %v5255
    %7264 = vmatpush1.msra.mxu0 %v5254
    %7265 = vmatprep.subr.mxu0 %v5267
    %7266 = vmatpush1.msra.mxu0 %v5266
    %7267 = vmatprep.subr.mxu0 %v5279
    %7268 = vmatpush1.msra.mxu0 %v5278
    %7269 = vmatprep.subr.mxu0 %v5291
    %7270 = vmatpush1.msra.mxu0 %v5290
    %7271 = vmatprep.subr.mxu0 %v5303
    %7272 = vmatpush1.msra.mxu0 %v5302
    %7273 = vmatprep.subr.mxu0 %v5315
    %7274 = vmatpush1.msra.mxu0 %v5314
    %7275 = vmatprep.subr.mxu0 %v5327
    %7276 = vmatpush1.msra.mxu0 %v5326
    %7277 = vmatprep.subr.mxu0 %v5339
    %7278 = vmatpush1.msra.mxu0 %v5338
    %7279 = vmatprep.subr.mxu0 %v5351
    %7280 = vmatpush1.msra.mxu0 %v5350
    %7281 = vmatprep.subr.mxu0 %v5363
    %7282 = vmatpush1.msra.mxu0 %v5362
    %7283 = vmatprep.subr.mxu0 %v5375
    %7284 = vmatpush1.msra.mxu0 %v5374
    %7285 = vmatprep.subr.mxu0 %v5387
    %7286 = vmatpush1.msra.mxu0 %v5386
    %7287 = vmatprep.subr.mxu0 %v5399
    %7288 = vmatpush1.msra.mxu0 %v5398
    %7289 = vmatprep.subr.mxu0 %v5411
    %7290 = vmatpush1.msra.mxu0 %v5410
    %7291 = vmatprep.subr.mxu0 %v5423
    %7292 = vmatpush1.msra.mxu0 %v5422
    %7293 = vmatprep.subr.mxu0 %v5435
    %7294 = vmatpush1.msra.mxu0 %v5434
    %7295 = vmatprep.subr.mxu0 %v5447
    %7296 = vmatpush1.msra.mxu0 %v5446
    %7297 = vmatprep.subr.mxu0 %v5459
    %7298 = vmatpush1.msra.mxu0 %v5458
    %7299 = vmatprep.subr.mxu0 %v5471
    %7300 = vmatpush1.msra.mxu0 %v5470
    %7301 = vmatprep.subr.mxu0 %v5483
    %7302 = vmatpush1.msra.mxu0 %v5482
    %7303 = vmatprep.subr.mxu0 %v5495
    %7304 = vmatpush1.msra.mxu0 %v5494
    %7305 = vmatprep.subr.mxu0 %v5507
    %7306 = vmatpush1.msra.mxu0 %v5506
    %7307 = vmatprep.subr.mxu0 %v5519
    %7308 = vmatpush1.msra.mxu0 %v5518
    %7309 = vmatprep.subr.mxu0 %v5531
    %7310 = vmatpush1.msra.mxu0 %v5530
    %7311 = vmatprep.subr.mxu0 %v5543
    %7312 = vmatpush1.msra.mxu0 %v5542
    %7313 = vmatprep.subr.mxu0 %v5555
    %7314 = vmatpush1.msra.mxu0 %v5554
    %7315 = vmatprep.subr.mxu0 %v5567
    %7316 = vmatpush1.msra.mxu0 %v5566
    %7317 = vmatprep.subr.mxu0 %v5579
    %7318 = vmatpush1.msra.mxu0 %v5578
    %7319 = vmatprep.subr.mxu0 %v5591
    %7320 = vmatpush1.msra.mxu0 %v5590
    %7321 = vmatprep.subr.mxu0 %v5603
    %7322 = vmatpush1.msra.mxu0 %v5602
    %7323 = vmatprep.subr.mxu0 %v5615
    %7324 = vmatpush1.msra.mxu0 %v5614
    %7325 = vmatprep.mubr.f32.mxu0 %v4841
    %7326 = vmatmul.mubr.f32.gmra.mrb[0].mxu0 %v4840
    %v7327 = vpop.f32.mrb[0].mxu0
    %v7328 = vadd.f32 %v7251, %v7327
    %v7329 = vpop.f32.mrb[0].mxu0
    %v7330 = vadd.f32 %v7253, %v7329
    %7331 = vmatprep.mubr.f32.mxu0 %v4848
    %7332 = vmatmul.mubr.f32.gmra.mrb[0].mxu0 %v4847
    %v7333 = vpop.f32.mrb[0].mxu0
    %v7334 = vadd.f32 %v7257, %v7333
    %v7335 = vpop.f32.mrb[0].mxu0
    %v7336 = vadd.f32 %v7259, %v7335
    %7337 = vdwg.mxu0
    %7338 = vmatprep.subr.mxu0 %v5627
    %7339 = vmatpush1.msra.mxu0 %v5626
    %7340 = vmatprep.subr.mxu0 %v5639
    %7341 = vmatpush1.msra.mxu0 %v5638
    %7342 = vmatprep.subr.mxu0 %v5651
    %7343 = vmatpush1.msra.mxu0 %v5650
    %7344 = vmatprep.subr.mxu0 %v5663
    %7345 = vmatpush1.msra.mxu0 %v5662
    %7346 = vmatprep.subr.mxu0 %v5675
    %7347 = vmatpush1.msra.mxu0 %v5674
    %7348 = vmatprep.subr.mxu0 %v5687
    %7349 = vmatpush1.msra.mxu0 %v5686
    %7350 = vmatprep.subr.mxu0 %v5699
    %7351 = vmatpush1.msra.mxu0 %v5698
    %7352 = vmatprep.subr.mxu0 %v5711
    %7353 = vmatpush1.msra.mxu0 %v5710
    %7354 = vmatprep.subr.mxu0 %v5723
    %7355 = vmatpush1.msra.mxu0 %v5722
    %7356 = vmatprep.subr.mxu0 %v5735
    %7357 = vmatpush1.msra.mxu0 %v5734
    %7358 = vmatprep.subr.mxu0 %v5747
    %7359 = vmatpush1.msra.mxu0 %v5746
    %7360 = vmatprep.subr.mxu0 %v5759
    %7361 = vmatpush1.msra.mxu0 %v5758
    %7362 = vmatprep.subr.mxu0 %v5771
    %7363 = vmatpush1.msra.mxu0 %v5770
    %7364 = vmatprep.subr.mxu0 %v5783
    %7365 = vmatpush1.msra.mxu0 %v5782
    %7366 = vmatprep.subr.mxu0 %v5795
    %7367 = vmatpush1.msra.mxu0 %v5794
    %7368 = vmatprep.subr.mxu0 %v5807
    %7369 = vmatpush1.msra.mxu0 %v5806
    %7370 = vmatprep.subr.mxu0 %v5819
    %7371 = vmatpush1.msra.mxu0 %v5818
    %7372 = vmatprep.subr.mxu0 %v5831
    %7373 = vmatpush1.msra.mxu0 %v5830
    %7374 = vmatprep.subr.mxu0 %v5843
    %7375 = vmatpush1.msra.mxu0 %v5842
    %7376 = vmatprep.subr.mxu0 %v5855
    %7377 = vmatpush1.msra.mxu0 %v5854
    %7378 = vmatprep.subr.mxu0 %v5867
    %7379 = vmatpush1.msra.mxu0 %v5866
    %7380 = vmatprep.subr.mxu0 %v5879
    %7381 = vmatpush1.msra.mxu0 %v5878
    %7382 = vmatprep.subr.mxu0 %v5891
    %7383 = vmatpush1.msra.mxu0 %v5890
    %7384 = vmatprep.subr.mxu0 %v5903
    %7385 = vmatpush1.msra.mxu0 %v5902
    %7386 = vmatprep.subr.mxu0 %v5915
    %7387 = vmatpush1.msra.mxu0 %v5914
    %7388 = vmatprep.subr.mxu0 %v5927
    %7389 = vmatpush1.msra.mxu0 %v5926
    %7390 = vmatprep.subr.mxu0 %v5939
    %7391 = vmatpush1.msra.mxu0 %v5938
    %7392 = vmatprep.subr.mxu0 %v5951
    %7393 = vmatpush1.msra.mxu0 %v5950
    %7394 = vmatprep.subr.mxu0 %v5963
    %7395 = vmatpush1.msra.mxu0 %v5962
    %7396 = vmatprep.subr.mxu0 %v5975
    %7397 = vmatpush1.msra.mxu0 %v5974
    %7398 = vmatprep.subr.mxu0 %v5987
    %7399 = vmatpush1.msra.mxu0 %v5986
    %7400 = vmatprep.subr.mxu0 %v5999
    %7401 = vmatpush1.msra.mxu0 %v5998
    %7402 = vmatprep.mubr.f32.mxu0 %v4843
    %7403 = vmatmul.mubr.f32.gmra.mrb[0].mxu0 %v4842
    %v7404 = vpop.f32.mrb[0].mxu0
    %v7405 = vadd.f32 %v7328, %v7404
    %v7406 = vpop.f32.mrb[0].mxu0
    %v7407 = vadd.f32 %v7330, %v7406
    %7408 = vmatprep.mubr.f32.mxu0 %v4850
    %7409 = vmatmul.mubr.f32.gmra.mrb[0].mxu0 %v4849
    %v7410 = vpop.f32.mrb[0].mxu0
    %v7411 = vadd.f32 %v7334, %v7410
    %v7412 = vpop.f32.mrb[0].mxu0
    %v7413 = vadd.f32 %v7336, %v7412
    %7414 = vdwg.mxu0
    %7415 = vmatprep.subr.mxu0 %v6011
    %7416 = vmatpush1.msra.mxu0 %v6010
    %7417 = vmatprep.subr.mxu0 %v6023
    %7418 = vmatpush1.msra.mxu0 %v6022
    %7419 = vmatprep.subr.mxu0 %v6035
    %7420 = vmatpush1.msra.mxu0 %v6034
    %7421 = vmatprep.subr.mxu0 %v6047
    %7422 = vmatpush1.msra.mxu0 %v6046
    %7423 = vmatprep.subr.mxu0 %v6059
    %7424 = vmatpush1.msra.mxu0 %v6058
    %7425 = vmatprep.subr.mxu0 %v6071
    %7426 = vmatpush1.msra.mxu0 %v6070
    %7427 = vmatprep.subr.mxu0 %v6083
    %7428 = vmatpush1.msra.mxu0 %v6082
    %7429 = vmatprep.subr.mxu0 %v6095
    %7430 = vmatpush1.msra.mxu0 %v6094
    %7431 = vmatprep.subr.mxu0 %v6107
    %7432 = vmatpush1.msra.mxu0 %v6106
    %7433 = vmatprep.subr.mxu0 %v6119
    %7434 = vmatpush1.msra.mxu0 %v6118
    %7435 = vmatprep.subr.mxu0 %v6131
    %7436 = vmatpush1.msra.mxu0 %v6130
    %7437 = vmatprep.subr.mxu0 %v6143
    %7438 = vmatpush1.msra.mxu0 %v6142
    %7439 = vmatprep.subr.mxu0 %v6155
    %7440 = vmatpush1.msra.mxu0 %v6154
    %7441 = vmatprep.subr.mxu0 %v6167
    %7442 = vmatpush1.msra.mxu0 %v6166
    %7443 = vmatprep.subr.mxu0 %v6179
    %7444 = vmatpush1.msra.mxu0 %v6178
    %7445 = vmatprep.subr.mxu0 %v6191
    %7446 = vmatpush1.msra.mxu0 %v6190
    %7447 = vmatprep.subr.mxu0 0.0
    %7448 = vmatpush1.msra.mxu0 0.0
    %7449 = vmatprep.subr.mxu0 0.0
    %7450 = vmatpush1.msra.mxu0 0.0
    %7451 = vmatprep.subr.mxu0 0.0
    %7452 = vmatpush1.msra.mxu0 0.0
    %7453 = vmatprep.subr.mxu0 0.0
    %7454 = vmatpush1.msra.mxu0 0.0
    %7455 = vmatprep.subr.mxu0 0.0
    %7456 = vmatpush1.msra.mxu0 0.0
    %7457 = vmatprep.subr.mxu0 0.0
    %7458 = vmatpush1.msra.mxu0 0.0
    %7459 = vmatprep.subr.mxu0 0.0
    %7460 = vmatpush1.msra.mxu0 0.0
    %7461 = vmatprep.subr.mxu0 0.0
    %7462 = vmatpush1.msra.mxu0 0.0
    %7463 = vmatprep.subr.mxu0 0.0
    %7464 = vmatpush1.msra.mxu0 0.0
    %7465 = vmatprep.subr.mxu0 0.0
    %7466 = vmatpush1.msra.mxu0 0.0
    %7467 = vmatprep.subr.mxu0 0.0
    %7468 = vmatpush1.msra.mxu0 0.0
    %7469 = vmatprep.subr.mxu0 0.0
    %7470 = vmatpush1.msra.mxu0 0.0
    %7471 = vmatprep.subr.mxu0 0.0
    %7472 = vmatpush1.msra.mxu0 0.0
    %7473 = vmatprep.subr.mxu0 0.0
    %7474 = vmatpush1.msra.mxu0 0.0
    %7475 = vmatprep.subr.mxu0 0.0
    %7476 = vmatpush1.msra.mxu0 0.0
    %7477 = vmatprep.subr.mxu0 0.0
    %7478 = vmatpush1.msra.mxu0 0.0
    %7479 = vmatprep.mubr.f32.mxu0 0.0
    %7480 = vmatmul.mubr.f32.gmra.mrb[0].mxu0 %v4844
    %v7481 = vpop.f32.mrb[0].mxu0
    %v7482 = vadd.f32 %v7405, %v7481
    %v7483 = vpop.f32.mrb[0].mxu0
    %v7484 = vadd.f32 %v7407, %v7483
    %7485 = vmatprep.mubr.f32.mxu0 0.0
    %7486 = vmatmul.mubr.f32.gmra.mrb[0].mxu0 %v4851
    %v7487 = vpop.f32.mrb[0].mxu0
    %v7488 = vadd.f32 %v7411, %v7487
    %v7489 = vpop.f32.mrb[0].mxu0
    %v7490 = vadd.f32 %v7413, %v7489
    %7491 = vdwg.mxu0
    %7492 = vmatprep.subr.mxu0 %v4861
    %7493 = vmatpush1.msra.mxu0 %v4860
    %7494 = vmatprep.subr.mxu0 %v4873
    %7495 = vmatpush1.msra.mxu0 %v4872
    %7496 = vmatprep.subr.mxu0 %v4885
    %7497 = vmatpush1.msra.mxu0 %v4884
    %7498 = vmatprep.subr.mxu0 %v4897
    %7499 = vmatpush1.msra.mxu0 %v4896
    %7500 = vmatprep.subr.mxu0 %v4909
    %7501 = vmatpush1.msra.mxu0 %v4908
    %7502 = vmatprep.subr.mxu0 %v4921
    %7503 = vmatpush1.msra.mxu0 %v4920
    %7504 = vmatprep.subr.mxu0 %v4933
    %7505 = vmatpush1.msra.mxu0 %v4932
    %7506 = vmatprep.subr.mxu0 %v4945
    %7507 = vmatpush1.msra.mxu0 %v4944
    %7508 = vmatprep.subr.mxu0 %v4957
    %7509 = vmatpush1.msra.mxu0 %v4956
    %7510 = vmatprep.subr.mxu0 %v4969
    %7511 = vmatpush1.msra.mxu0 %v4968
    %7512 = vmatprep.subr.mxu0 %v4981
    %7513 = vmatpush1.msra.mxu0 %v4980
    %7514 = vmatprep.subr.mxu0 %v4993
    %7515 = vmatpush1.msra.mxu0 %v4992
    %7516 = vmatprep.subr.mxu0 %v5005
    %7517 = vmatpush1.msra.mxu0 %v5004
    %7518 = vmatprep.subr.mxu0 %v5017
    %7519 = vmatpush1.msra.mxu0 %v5016
    %7520 = vmatprep.subr.mxu0 %v5029
    %7521 = vmatpush1.msra.mxu0 %v5028
    %7522 = vmatprep.subr.mxu0 %v5041
    %7523 = vmatpush1.msra.mxu0 %v5040
    %7524 = vmatprep.subr.mxu0 %v5053
    %7525 = vmatpush1.msra.mxu0 %v5052
    %7526 = vmatprep.subr.mxu0 %v5065
    %7527 = vmatpush1.msra.mxu0 %v5064
    %7528 = vmatprep.subr.mxu0 %v5077
    %7529 = vmatpush1.msra.mxu0 %v5076
    %7530 = vmatprep.subr.mxu0 %v5089
    %7531 = vmatpush1.msra.mxu0 %v5088
    %7532 = vmatprep.subr.mxu0 %v5101
    %7533 = vmatpush1.msra.mxu0 %v5100
    %7534 = vmatprep.subr.mxu0 %v5113
    %7535 = vmatpush1.msra.mxu0 %v5112
    %7536 = vmatprep.subr.mxu0 %v5125
    %7537 = vmatpush1.msra.mxu0 %v5124
    %7538 = vmatprep.subr.mxu0 %v5137
    %7539 = vmatpush1.msra.mxu0 %v5136
    %7540 = vmatprep.subr.mxu0 %v5149
    %7541 = vmatpush1.msra.mxu0 %v5148
    %7542 = vmatprep.subr.mxu0 %v5161
    %7543 = vmatpush1.msra.mxu0 %v5160
    %7544 = vmatprep.subr.mxu0 %v5173
    %7545 = vmatpush1.msra.mxu0 %v5172
    %7546 = vmatprep.subr.mxu0 %v5185
    %7547 = vmatpush1.msra.mxu0 %v5184
    %7548 = vmatprep.subr.mxu0 %v5197
    %7549 = vmatpush1.msra.mxu0 %v5196
    %7550 = vmatprep.subr.mxu0 %v5209
    %7551 = vmatpush1.msra.mxu0 %v5208
    %7552 = vmatprep.subr.mxu0 %v5221
    %7553 = vmatpush1.msra.mxu0 %v5220
    %7554 = vmatprep.subr.mxu0 %v5233
    %7555 = vmatpush1.msra.mxu0 %v5232
    %7556 = vmatprep.mubr.f32.mxu0 %v4839
    %7557 = vmatmul.mubr.f32.gmra.mrb[0].mxu0 %v4838
    %v7558 = vpop.f32.mrb[0].mxu0
    %v7559 = vadd.f32 %v6235, %v7558
    %v7560 = vpop.f32.mrb[0].mxu0
    %v7561 = vadd.f32 %v6239, %v7560
    %7562 = vmatprep.mubr.f32.mxu0 %v4846
    %7563 = vmatmul.mubr.f32.gmra.mrb[0].mxu0 %v4845
    %v7564 = vpop.f32.mrb[0].mxu0
    %v7565 = vadd.f32 %v6235, %v7564
    %v7566 = vpop.f32.mrb[0].mxu0
    %v7567 = vadd.f32 %v6239, %v7566
    %7568 = vdwg.mxu0
    %7569 = vmatprep.subr.mxu0 %v5245
    %7570 = vmatpush1.msra.mxu0 %v5244
    %7571 = vmatprep.subr.mxu0 %v5257
    %7572 = vmatpush1.msra.mxu0 %v5256
    %7573 = vmatprep.subr.mxu0 %v5269
    %7574 = vmatpush1.msra.mxu0 %v5268
    %7575 = vmatprep.subr.mxu0 %v5281
    %7576 = vmatpush1.msra.mxu0 %v5280
    %7577 = vmatprep.subr.mxu0 %v5293
    %7578 = vmatpush1.msra.mxu0 %v5292
    %7579 = vmatprep.subr.mxu0 %v5305
    %7580 = vmatpush1.msra.mxu0 %v5304
    %7581 = vmatprep.subr.mxu0 %v5317
    %7582 = vmatpush1.msra.mxu0 %v5316
    %7583 = vmatprep.subr.mxu0 %v5329
    %7584 = vmatpush1.msra.mxu0 %v5328
    %7585 = vmatprep.subr.mxu0 %v5341
    %7586 = vmatpush1.msra.mxu0 %v5340
    %7587 = vmatprep.subr.mxu0 %v5353
    %7588 = vmatpush1.msra.mxu0 %v5352
    %7589 = vmatprep.subr.mxu0 %v5365
    %7590 = vmatpush1.msra.mxu0 %v5364
    %7591 = vmatprep.subr.mxu0 %v5377
    %7592 = vmatpush1.msra.mxu0 %v5376
    %7593 = vmatprep.subr.mxu0 %v5389
    %7594 = vmatpush1.msra.mxu0 %v5388
    %7595 = vmatprep.subr.mxu0 %v5401
    %7596 = vmatpush1.msra.mxu0 %v5400
    %7597 = vmatprep.subr.mxu0 %v5413
    %7598 = vmatpush1.msra.mxu0 %v5412
    %7599 = vmatprep.subr.mxu0 %v5425
    %7600 = vmatpush1.msra.mxu0 %v5424
    %7601 = vmatprep.subr.mxu0 %v5437
    %7602 = vmatpush1.msra.mxu0 %v5436
    %7603 = vmatprep.subr.mxu0 %v5449
    %7604 = vmatpush1.msra.mxu0 %v5448
    %7605 = vmatprep.subr.mxu0 %v5461
    %7606 = vmatpush1.msra.mxu0 %v5460
    %7607 = vmatprep.subr.mxu0 %v5473
    %7608 = vmatpush1.msra.mxu0 %v5472
    %7609 = vmatprep.subr.mxu0 %v5485
    %7610 = vmatpush1.msra.mxu0 %v5484
    %7611 = vmatprep.subr.mxu0 %v5497
    %7612 = vmatpush1.msra.mxu0 %v5496
    %7613 = vmatprep.subr.mxu0 %v5509
    %7614 = vmatpush1.msra.mxu0 %v5508
    %7615 = vmatprep.subr.mxu0 %v5521
    %7616 = vmatpush1.msra.mxu0 %v5520
    %7617 = vmatprep.subr.mxu0 %v5533
    %7618 = vmatpush1.msra.mxu0 %v5532
    %7619 = vmatprep.subr.mxu0 %v5545
    %7620 = vmatpush1.msra.mxu0 %v5544
    %7621 = vmatprep.subr.mxu0 %v5557
    %7622 = vmatpush1.msra.mxu0 %v5556
    %7623 = vmatprep.subr.mxu0 %v5569
    %7624 = vmatpush1.msra.mxu0 %v5568
    %7625 = vmatprep.subr.mxu0 %v5581
    %7626 = vmatpush1.msra.mxu0 %v5580
    %7627 = vmatprep.subr.mxu0 %v5593
    %7628 = vmatpush1.msra.mxu0 %v5592
    %7629 = vmatprep.subr.mxu0 %v5605
    %7630 = vmatpush1.msra.mxu0 %v5604
    %7631 = vmatprep.subr.mxu0 %v5617
    %7632 = vmatpush1.msra.mxu0 %v5616
    %7633 = vmatprep.mubr.f32.mxu0 %v4841
    %7634 = vmatmul.mubr.f32.gmra.mrb[0].mxu0 %v4840
    %v7635 = vpop.f32.mrb[0].mxu0
    %v7636 = vadd.f32 %v7559, %v7635
    %v7637 = vpop.f32.mrb[0].mxu0
    %v7638 = vadd.f32 %v7561, %v7637
    %7639 = vmatprep.mubr.f32.mxu0 %v4848
    %7640 = vmatmul.mubr.f32.gmra.mrb[0].mxu0 %v4847
    %v7641 = vpop.f32.mrb[0].mxu0
    %v7642 = vadd.f32 %v7565, %v7641
    %v7643 = vpop.f32.mrb[0].mxu0
    %v7644 = vadd.f32 %v7567, %v7643
    %7645 = vdwg.mxu0
    %7646 = vmatprep.subr.mxu0 %v5629
    %7647 = vmatpush1.msra.mxu0 %v5628
    %7648 = vmatprep.subr.mxu0 %v5641
    %7649 = vmatpush1.msra.mxu0 %v5640
    %7650 = vmatprep.subr.mxu0 %v5653
    %7651 = vmatpush1.msra.mxu0 %v5652
    %7652 = vmatprep.subr.mxu0 %v5665
    %7653 = vmatpush1.msra.mxu0 %v5664
    %7654 = vmatprep.subr.mxu0 %v5677
    %7655 = vmatpush1.msra.mxu0 %v5676
    %7656 = vmatprep.subr.mxu0 %v5689
    %7657 = vmatpush1.msra.mxu0 %v5688
    %7658 = vmatprep.subr.mxu0 %v5701
    %7659 = vmatpush1.msra.mxu0 %v5700
    %7660 = vmatprep.subr.mxu0 %v5713
    %7661 = vmatpush1.msra.mxu0 %v5712
    %7662 = vmatprep.subr.mxu0 %v5725
    %7663 = vmatpush1.msra.mxu0 %v5724
    %7664 = vmatprep.subr.mxu0 %v5737
    %7665 = vmatpush1.msra.mxu0 %v5736
    %7666 = vmatprep.subr.mxu0 %v5749
    %7667 = vmatpush1.msra.mxu0 %v5748
    %7668 = vmatprep.subr.mxu0 %v5761
    %7669 = vmatpush1.msra.mxu0 %v5760
    %7670 = vmatprep.subr.mxu0 %v5773
    %7671 = vmatpush1.msra.mxu0 %v5772
    %7672 = vmatprep.subr.mxu0 %v5785
    %7673 = vmatpush1.msra.mxu0 %v5784
    %7674 = vmatprep.subr.mxu0 %v5797
    %7675 = vmatpush1.msra.mxu0 %v5796
    %7676 = vmatprep.subr.mxu0 %v5809
    %7677 = vmatpush1.msra.mxu0 %v5808
    %7678 = vmatprep.subr.mxu0 %v5821
    %7679 = vmatpush1.msra.mxu0 %v5820
    %7680 = vmatprep.subr.mxu0 %v5833
    %7681 = vmatpush1.msra.mxu0 %v5832
    %7682 = vmatprep.subr.mxu0 %v5845
    %7683 = vmatpush1.msra.mxu0 %v5844
    %7684 = vmatprep.subr.mxu0 %v5857
    %7685 = vmatpush1.msra.mxu0 %v5856
    %7686 = vmatprep.subr.mxu0 %v5869
    %7687 = vmatpush1.msra.mxu0 %v5868
    %7688 = vmatprep.subr.mxu0 %v5881
    %7689 = vmatpush1.msra.mxu0 %v5880
    %7690 = vmatprep.subr.mxu0 %v5893
    %7691 = vmatpush1.msra.mxu0 %v5892
    %7692 = vmatprep.subr.mxu0 %v5905
    %7693 = vmatpush1.msra.mxu0 %v5904
    %7694 = vmatprep.subr.mxu0 %v5917
    %7695 = vmatpush1.msra.mxu0 %v5916
    %7696 = vmatprep.subr.mxu0 %v5929
    %7697 = vmatpush1.msra.mxu0 %v5928
    %7698 = vmatprep.subr.mxu0 %v5941
    %7699 = vmatpush1.msra.mxu0 %v5940
    %7700 = vmatprep.subr.mxu0 %v5953
    %7701 = vmatpush1.msra.mxu0 %v5952
    %7702 = vmatprep.subr.mxu0 %v5965
    %7703 = vmatpush1.msra.mxu0 %v5964
    %7704 = vmatprep.subr.mxu0 %v5977
    %7705 = vmatpush1.msra.mxu0 %v5976
    %7706 = vmatprep.subr.mxu0 %v5989
    %7707 = vmatpush1.msra.mxu0 %v5988
    %7708 = vmatprep.subr.mxu0 %v6001
    %7709 = vmatpush1.msra.mxu0 %v6000
    %7710 = vmatprep.mubr.f32.mxu0 %v4843
    %7711 = vmatmul.mubr.f32.gmra.mrb[0].mxu0 %v4842
    %v7712 = vpop.f32.mrb[0].mxu0
    %v7713 = vadd.f32 %v7636, %v7712
    %v7714 = vpop.f32.mrb[0].mxu0
    %v7715 = vadd.f32 %v7638, %v7714
    %7716 = vmatprep.mubr.f32.mxu0 %v4850
    %7717 = vmatmul.mubr.f32.gmra.mrb[0].mxu0 %v4849
    %v7718 = vpop.f32.mrb[0].mxu0
    %v7719 = vadd.f32 %v7642, %v7718
    %v7720 = vpop.f32.mrb[0].mxu0
    %v7721 = vadd.f32 %v7644, %v7720
    %7722 = vdwg.mxu0
    %7723 = vmatprep.subr.mxu0 %v6013
    %7724 = vmatpush1.msra.mxu0 %v6012
    %7725 = vmatprep.subr.mxu0 %v6025
    %7726 = vmatpush1.msra.mxu0 %v6024
    %7727 = vmatprep.subr.mxu0 %v6037
    %7728 = vmatpush1.msra.mxu0 %v6036
    %7729 = vmatprep.subr.mxu0 %v6049
    %7730 = vmatpush1.msra.mxu0 %v6048
    %7731 = vmatprep.subr.mxu0 %v6061
    %7732 = vmatpush1.msra.mxu0 %v6060
    %7733 = vmatprep.subr.mxu0 %v6073
    %7734 = vmatpush1.msra.mxu0 %v6072
    %7735 = vmatprep.subr.mxu0 %v6085
    %7736 = vmatpush1.msra.mxu0 %v6084
    %7737 = vmatprep.subr.mxu0 %v6097
    %7738 = vmatpush1.msra.mxu0 %v6096
    %7739 = vmatprep.subr.mxu0 %v6109
    %7740 = vmatpush1.msra.mxu0 %v6108
    %7741 = vmatprep.subr.mxu0 %v6121
    %7742 = vmatpush1.msra.mxu0 %v6120
    %7743 = vmatprep.subr.mxu0 %v6133
    %7744 = vmatpush1.msra.mxu0 %v6132
    %7745 = vmatprep.subr.mxu0 %v6145
    %7746 = vmatpush1.msra.mxu0 %v6144
    %7747 = vmatprep.subr.mxu0 %v6157
    %7748 = vmatpush1.msra.mxu0 %v6156
    %7749 = vmatprep.subr.mxu0 %v6169
    %7750 = vmatpush1.msra.mxu0 %v6168
    %7751 = vmatprep.subr.mxu0 %v6181
    %7752 = vmatpush1.msra.mxu0 %v6180
    %7753 = vmatprep.subr.mxu0 %v6193
    %7754 = vmatpush1.msra.mxu0 %v6192
    %7755 = vmatprep.subr.mxu0 0.0
    %7756 = vmatpush1.msra.mxu0 0.0
    %7757 = vmatprep.subr.mxu0 0.0
    %7758 = vmatpush1.msra.mxu0 0.0
    %7759 = vmatprep.subr.mxu0 0.0
    %7760 = vmatpush1.msra.mxu0 0.0
    %7761 = vmatprep.subr.mxu0 0.0
    %7762 = vmatpush1.msra.mxu0 0.0
    %7763 = vmatprep.subr.mxu0 0.0
    %7764 = vmatpush1.msra.mxu0 0.0
    %7765 = vmatprep.subr.mxu0 0.0
    %7766 = vmatpush1.msra.mxu0 0.0
    %7767 = vmatprep.subr.mxu0 0.0
    %7768 = vmatpush1.msra.mxu0 0.0
    %7769 = vmatprep.subr.mxu0 0.0
    %7770 = vmatpush1.msra.mxu0 0.0
    %7771 = vmatprep.subr.mxu0 0.0
    %7772 = vmatpush1.msra.mxu0 0.0
    %7773 = vmatprep.subr.mxu0 0.0
    %7774 = vmatpush1.msra.mxu0 0.0
    %7775 = vmatprep.subr.mxu0 0.0
    %7776 = vmatpush1.msra.mxu0 0.0
    %7777 = vmatprep.subr.mxu0 0.0
    %7778 = vmatpush1.msra.mxu0 0.0
    %7779 = vmatprep.subr.mxu0 0.0
    %7780 = vmatpush1.msra.mxu0 0.0
    %7781 = vmatprep.subr.mxu0 0.0
    %7782 = vmatpush1.msra.mxu0 0.0
    %7783 = vmatprep.subr.mxu0 0.0
    %7784 = vmatpush1.msra.mxu0 0.0
    %7785 = vmatprep.subr.mxu0 0.0
    %7786 = vmatpush1.msra.mxu0 0.0
    %7787 = vmatprep.mubr.f32.mxu0 0.0
    %7788 = vmatmul.mubr.f32.gmra.mrb[0].mxu0 %v4844
    %v7789 = vpop.f32.mrb[0].mxu0
    %v7790 = vadd.f32 %v7713, %v7789
    %v7791 = vpop.f32.mrb[0].mxu0
    %v7792 = vadd.f32 %v7715, %v7791
    %7793 = vmatprep.mubr.f32.mxu0 0.0
    %7794 = vmatmul.mubr.f32.gmra.mrb[0].mxu0 %v4851
    %v7795 = vpop.f32.mrb[0].mxu0
    %v7796 = vadd.f32 %v7719, %v7795
    %v7797 = vpop.f32.mrb[0].mxu0
    %v7798 = vadd.f32 %v7721, %v7797
    %7799 = vdwg.mxu0
    %7800 = vmatprep.subr.mxu0 %v4863
    %7801 = vmatpush1.msra.mxu0 %v4862
    %7802 = vmatprep.subr.mxu0 %v4875
    %7803 = vmatpush1.msra.mxu0 %v4874
    %7804 = vmatprep.subr.mxu0 %v4887
    %7805 = vmatpush1.msra.mxu0 %v4886
    %7806 = vmatprep.subr.mxu0 %v4899
    %7807 = vmatpush1.msra.mxu0 %v4898
    %7808 = vmatprep.subr.mxu0 %v4911
    %7809 = vmatpush1.msra.mxu0 %v4910
    %7810 = vmatprep.subr.mxu0 %v4923
    %7811 = vmatpush1.msra.mxu0 %v4922
    %7812 = vmatprep.subr.mxu0 %v4935
    %7813 = vmatpush1.msra.mxu0 %v4934
    %7814 = vmatprep.subr.mxu0 %v4947
    %7815 = vmatpush1.msra.mxu0 %v4946
    %7816 = vmatprep.subr.mxu0 %v4959
    %7817 = vmatpush1.msra.mxu0 %v4958
    %7818 = vmatprep.subr.mxu0 %v4971
    %7819 = vmatpush1.msra.mxu0 %v4970
    %7820 = vmatprep.subr.mxu0 %v4983
    %7821 = vmatpush1.msra.mxu0 %v4982
    %7822 = vmatprep.subr.mxu0 %v4995
    %7823 = vmatpush1.msra.mxu0 %v4994
    %7824 = vmatprep.subr.mxu0 %v5007
    %7825 = vmatpush1.msra.mxu0 %v5006
    %7826 = vmatprep.subr.mxu0 %v5019
    %7827 = vmatpush1.msra.mxu0 %v5018
    %7828 = vmatprep.subr.mxu0 %v5031
    %7829 = vmatpush1.msra.mxu0 %v5030
    %7830 = vmatprep.subr.mxu0 %v5043
    %7831 = vmatpush1.msra.mxu0 %v5042
    %7832 = vmatprep.subr.mxu0 %v5055
    %7833 = vmatpush1.msra.mxu0 %v5054
    %7834 = vmatprep.subr.mxu0 %v5067
    %7835 = vmatpush1.msra.mxu0 %v5066
    %7836 = vmatprep.subr.mxu0 %v5079
    %7837 = vmatpush1.msra.mxu0 %v5078
    %7838 = vmatprep.subr.mxu0 %v5091
    %7839 = vmatpush1.msra.mxu0 %v5090
    %7840 = vmatprep.subr.mxu0 %v5103
    %7841 = vmatpush1.msra.mxu0 %v5102
    %7842 = vmatprep.subr.mxu0 %v5115
    %7843 = vmatpush1.msra.mxu0 %v5114
    %7844 = vmatprep.subr.mxu0 %v5127
    %7845 = vmatpush1.msra.mxu0 %v5126
    %7846 = vmatprep.subr.mxu0 %v5139
    %7847 = vmatpush1.msra.mxu0 %v5138
    %7848 = vmatprep.subr.mxu0 %v5151
    %7849 = vmatpush1.msra.mxu0 %v5150
    %7850 = vmatprep.subr.mxu0 %v5163
    %7851 = vmatpush1.msra.mxu0 %v5162
    %7852 = vmatprep.subr.mxu0 %v5175
    %7853 = vmatpush1.msra.mxu0 %v5174
    %7854 = vmatprep.subr.mxu0 %v5187
    %7855 = vmatpush1.msra.mxu0 %v5186
    %7856 = vmatprep.subr.mxu0 %v5199
    %7857 = vmatpush1.msra.mxu0 %v5198
    %7858 = vmatprep.subr.mxu0 %v5211
    %7859 = vmatpush1.msra.mxu0 %v5210
    %7860 = vmatprep.subr.mxu0 %v5223
    %7861 = vmatpush1.msra.mxu0 %v5222
    %7862 = vmatprep.subr.mxu0 %v5235
    %7863 = vmatpush1.msra.mxu0 %v5234
    %7864 = vmatprep.mubr.f32.mxu0 %v4839
    %7865 = vmatmul.mubr.f32.gmra.mrb[0].mxu0 %v4838
    %v7866 = vpop.f32.mrb[0].mxu0
    %v7867 = vadd.f32 %v6243, %v7866
    %v7868 = vpop.f32.mrb[0].mxu0
    %v7869 = vadd.f32 %v6247, %v7868
    %7870 = vmatprep.mubr.f32.mxu0 %v4846
    %7871 = vmatmul.mubr.f32.gmra.mrb[0].mxu0 %v4845
    %v7872 = vpop.f32.mrb[0].mxu0
    %v7873 = vadd.f32 %v6243, %v7872
    %v7874 = vpop.f32.mrb[0].mxu0
    %v7875 = vadd.f32 %v6247, %v7874
    %7876 = vdwg.mxu0
    %7877 = vmatprep.subr.mxu0 %v5247
    %7878 = vmatpush1.msra.mxu0 %v5246
    %7879 = vmatprep.subr.mxu0 %v5259
    %7880 = vmatpush1.msra.mxu0 %v5258
    %7881 = vmatprep.subr.mxu0 %v5271
    %7882 = vmatpush1.msra.mxu0 %v5270
    %7883 = vmatprep.subr.mxu0 %v5283
    %7884 = vmatpush1.msra.mxu0 %v5282
    %7885 = vmatprep.subr.mxu0 %v5295
    %7886 = vmatpush1.msra.mxu0 %v5294
    %7887 = vmatprep.subr.mxu0 %v5307
    %7888 = vmatpush1.msra.mxu0 %v5306
    %7889 = vmatprep.subr.mxu0 %v5319
    %7890 = vmatpush1.msra.mxu0 %v5318
    %7891 = vmatprep.subr.mxu0 %v5331
    %7892 = vmatpush1.msra.mxu0 %v5330
    %7893 = vmatprep.subr.mxu0 %v5343
    %7894 = vmatpush1.msra.mxu0 %v5342
    %7895 = vmatprep.subr.mxu0 %v5355
    %7896 = vmatpush1.msra.mxu0 %v5354
    %7897 = vmatprep.subr.mxu0 %v5367
    %7898 = vmatpush1.msra.mxu0 %v5366
    %7899 = vmatprep.subr.mxu0 %v5379
    %7900 = vmatpush1.msra.mxu0 %v5378
    %7901 = vmatprep.subr.mxu0 %v5391
    %7902 = vmatpush1.msra.mxu0 %v5390
    %7903 = vmatprep.subr.mxu0 %v5403
    %7904 = vmatpush1.msra.mxu0 %v5402
    %7905 = vmatprep.subr.mxu0 %v5415
    %7906 = vmatpush1.msra.mxu0 %v5414
    %7907 = vmatprep.subr.mxu0 %v5427
    %7908 = vmatpush1.msra.mxu0 %v5426
    %7909 = vmatprep.subr.mxu0 %v5439
    %7910 = vmatpush1.msra.mxu0 %v5438
    %7911 = vmatprep.subr.mxu0 %v5451
    %7912 = vmatpush1.msra.mxu0 %v5450
    %7913 = vmatprep.subr.mxu0 %v5463
    %7914 = vmatpush1.msra.mxu0 %v5462
    %7915 = vmatprep.subr.mxu0 %v5475
    %7916 = vmatpush1.msra.mxu0 %v5474
    %7917 = vmatprep.subr.mxu0 %v5487
    %7918 = vmatpush1.msra.mxu0 %v5486
    %7919 = vmatprep.subr.mxu0 %v5499
    %7920 = vmatpush1.msra.mxu0 %v5498
    %7921 = vmatprep.subr.mxu0 %v5511
    %7922 = vmatpush1.msra.mxu0 %v5510
    %7923 = vmatprep.subr.mxu0 %v5523
    %7924 = vmatpush1.msra.mxu0 %v5522
    %7925 = vmatprep.subr.mxu0 %v5535
    %7926 = vmatpush1.msra.mxu0 %v5534
    %7927 = vmatprep.subr.mxu0 %v5547
    %7928 = vmatpush1.msra.mxu0 %v5546
    %7929 = vmatprep.subr.mxu0 %v5559
    %7930 = vmatpush1.msra.mxu0 %v5558
    %7931 = vmatprep.subr.mxu0 %v5571
    %7932 = vmatpush1.msra.mxu0 %v5570
    %7933 = vmatprep.subr.mxu0 %v5583
    %7934 = vmatpush1.msra.mxu0 %v5582
    %7935 = vmatprep.subr.mxu0 %v5595
    %7936 = vmatpush1.msra.mxu0 %v5594
    %7937 = vmatprep.subr.mxu0 %v5607
    %7938 = vmatpush1.msra.mxu0 %v5606
    %7939 = vmatprep.subr.mxu0 %v5619
    %7940 = vmatpush1.msra.mxu0 %v5618
    %7941 = vmatprep.mubr.f32.mxu0 %v4841
    %7942 = vmatmul.mubr.f32.gmra.mrb[0].mxu0 %v4840
    %v7943 = vpop.f32.mrb[0].mxu0
    %v7944 = vadd.f32 %v7867, %v7943
    %v7945 = vpop.f32.mrb[0].mxu0
    %v7946 = vadd.f32 %v7869, %v7945
    %7947 = vmatprep.mubr.f32.mxu0 %v4848
    %7948 = vmatmul.mubr.f32.gmra.mrb[0].mxu0 %v4847
    %v7949 = vpop.f32.mrb[0].mxu0
    %v7950 = vadd.f32 %v7873, %v7949
    %v7951 = vpop.f32.mrb[0].mxu0
    %v7952 = vadd.f32 %v7875, %v7951
    %7953 = vdwg.mxu0
    %7954 = vmatprep.subr.mxu0 %v5631
    %7955 = vmatpush1.msra.mxu0 %v5630
    %7956 = vmatprep.subr.mxu0 %v5643
    %7957 = vmatpush1.msra.mxu0 %v5642
    %7958 = vmatprep.subr.mxu0 %v5655
    %7959 = vmatpush1.msra.mxu0 %v5654
    %7960 = vmatprep.subr.mxu0 %v5667
    %7961 = vmatpush1.msra.mxu0 %v5666
    %7962 = vmatprep.subr.mxu0 %v5679
    %7963 = vmatpush1.msra.mxu0 %v5678
    %7964 = vmatprep.subr.mxu0 %v5691
    %7965 = vmatpush1.msra.mxu0 %v5690
    %7966 = vmatprep.subr.mxu0 %v5703
    %7967 = vmatpush1.msra.mxu0 %v5702
    %7968 = vmatprep.subr.mxu0 %v5715
    %7969 = vmatpush1.msra.mxu0 %v5714
    %7970 = vmatprep.subr.mxu0 %v5727
    %7971 = vmatpush1.msra.mxu0 %v5726
    %7972 = vmatprep.subr.mxu0 %v5739
    %7973 = vmatpush1.msra.mxu0 %v5738
    %7974 = vmatprep.subr.mxu0 %v5751
    %7975 = vmatpush1.msra.mxu0 %v5750
    %7976 = vmatprep.subr.mxu0 %v5763
    %7977 = vmatpush1.msra.mxu0 %v5762
    %7978 = vmatprep.subr.mxu0 %v5775
    %7979 = vmatpush1.msra.mxu0 %v5774
    %7980 = vmatprep.subr.mxu0 %v5787
    %7981 = vmatpush1.msra.mxu0 %v5786
    %7982 = vmatprep.subr.mxu0 %v5799
    %7983 = vmatpush1.msra.mxu0 %v5798
    %7984 = vmatprep.subr.mxu0 %v5811
    %7985 = vmatpush1.msra.mxu0 %v5810
    %7986 = vmatprep.subr.mxu0 %v5823
    %7987 = vmatpush1.msra.mxu0 %v5822
    %7988 = vmatprep.subr.mxu0 %v5835
    %7989 = vmatpush1.msra.mxu0 %v5834
    %7990 = vmatprep.subr.mxu0 %v5847
    %7991 = vmatpush1.msra.mxu0 %v5846
    %7992 = vmatprep.subr.mxu0 %v5859
    %7993 = vmatpush1.msra.mxu0 %v5858
    %7994 = vmatprep.subr.mxu0 %v5871
    %7995 = vmatpush1.msra.mxu0 %v5870
    %7996 = vmatprep.subr.mxu0 %v5883
    %7997 = vmatpush1.msra.mxu0 %v5882
    %7998 = vmatprep.subr.mxu0 %v5895
    %7999 = vmatpush1.msra.mxu0 %v5894
    %8000 = vmatprep.subr.mxu0 %v5907
    %8001 = vmatpush1.msra.mxu0 %v5906
    %8002 = vmatprep.subr.mxu0 %v5919
    %8003 = vmatpush1.msra.mxu0 %v5918
    %8004 = vmatprep.subr.mxu0 %v5931
    %8005 = vmatpush1.msra.mxu0 %v5930
    %8006 = vmatprep.subr.mxu0 %v5943
    %8007 = vmatpush1.msra.mxu0 %v5942
    %8008 = vmatprep.subr.mxu0 %v5955
    %8009 = vmatpush1.msra.mxu0 %v5954
    %8010 = vmatprep.subr.mxu0 %v5967
    %8011 = vmatpush1.msra.mxu0 %v5966
    %8012 = vmatprep.subr.mxu0 %v5979
    %8013 = vmatpush1.msra.mxu0 %v5978
    %8014 = vmatprep.subr.mxu0 %v5991
    %8015 = vmatpush1.msra.mxu0 %v5990
    %8016 = vmatprep.subr.mxu0 %v6003
    %8017 = vmatpush1.msra.mxu0 %v6002
    %8018 = vmatprep.mubr.f32.mxu0 %v4843
    %8019 = vmatmul.mubr.f32.gmra.mrb[0].mxu0 %v4842
    %v8020 = vpop.f32.mrb[0].mxu0
    %v8021 = vadd.f32 %v7944, %v8020
    %v8022 = vpop.f32.mrb[0].mxu0
    %v8023 = vadd.f32 %v7946, %v8022
    %8024 = vmatprep.mubr.f32.mxu0 %v4850
    %8025 = vmatmul.mubr.f32.gmra.mrb[0].mxu0 %v4849
    %v8026 = vpop.f32.mrb[0].mxu0
    %v8027 = vadd.f32 %v7950, %v8026
    %v8028 = vpop.f32.mrb[0].mxu0
    %v8029 = vadd.f32 %v7952, %v8028
    %8030 = vdwg.mxu0
    %8031 = vmatprep.subr.mxu0 %v6015
    %8032 = vmatpush1.msra.mxu0 %v6014
    %8033 = vmatprep.subr.mxu0 %v6027
    %8034 = vmatpush1.msra.mxu0 %v6026
    %8035 = vmatprep.subr.mxu0 %v6039
    %8036 = vmatpush1.msra.mxu0 %v6038
    %8037 = vmatprep.subr.mxu0 %v6051
    %8038 = vmatpush1.msra.mxu0 %v6050
    %8039 = vmatprep.subr.mxu0 %v6063
    %8040 = vmatpush1.msra.mxu0 %v6062
    %8041 = vmatprep.subr.mxu0 %v6075
    %8042 = vmatpush1.msra.mxu0 %v6074
    %8043 = vmatprep.subr.mxu0 %v6087
    %8044 = vmatpush1.msra.mxu0 %v6086
    %8045 = vmatprep.subr.mxu0 %v6099
    %8046 = vmatpush1.msra.mxu0 %v6098
    %8047 = vmatprep.subr.mxu0 %v6111
    %8048 = vmatpush1.msra.mxu0 %v6110
    %8049 = vmatprep.subr.mxu0 %v6123
    %8050 = vmatpush1.msra.mxu0 %v6122
    %8051 = vmatprep.subr.mxu0 %v6135
    %8052 = vmatpush1.msra.mxu0 %v6134
    %8053 = vmatprep.subr.mxu0 %v6147
    %8054 = vmatpush1.msra.mxu0 %v6146
    %8055 = vmatprep.subr.mxu0 %v6159
    %8056 = vmatpush1.msra.mxu0 %v6158
    %8057 = vmatprep.subr.mxu0 %v6171
    %8058 = vmatpush1.msra.mxu0 %v6170
    %8059 = vmatprep.subr.mxu0 %v6183
    %8060 = vmatpush1.msra.mxu0 %v6182
    %8061 = vmatprep.subr.mxu0 %v6195
    %8062 = vmatpush1.msra.mxu0 %v6194
    %8063 = vmatprep.subr.mxu0 0.0
    %8064 = vmatpush1.msra.mxu0 0.0
    %8065 = vmatprep.subr.mxu0 0.0
    %8066 = vmatpush1.msra.mxu0 0.0
    %8067 = vmatprep.subr.mxu0 0.0
    %8068 = vmatpush1.msra.mxu0 0.0
    %8069 = vmatprep.subr.mxu0 0.0
    %8070 = vmatpush1.msra.mxu0 0.0
    %8071 = vmatprep.subr.mxu0 0.0
    %8072 = vmatpush1.msra.mxu0 0.0
    %8073 = vmatprep.subr.mxu0 0.0
    %8074 = vmatpush1.msra.mxu0 0.0
    %8075 = vmatprep.subr.mxu0 0.0
    %8076 = vmatpush1.msra.mxu0 0.0
    %8077 = vmatprep.subr.mxu0 0.0
    %8078 = vmatpush1.msra.mxu0 0.0
    %8079 = vmatprep.subr.mxu0 0.0
    %8080 = vmatpush1.msra.mxu0 0.0
    %8081 = vmatprep.subr.mxu0 0.0
    %8082 = vmatpush1.msra.mxu0 0.0
    %8083 = vmatprep.subr.mxu0 0.0
    %8084 = vmatpush1.msra.mxu0 0.0
    %8085 = vmatprep.subr.mxu0 0.0
    %8086 = vmatpush1.msra.mxu0 0.0
    %8087 = vmatprep.subr.mxu0 0.0
    %8088 = vmatpush1.msra.mxu0 0.0
    %8089 = vmatprep.subr.mxu0 0.0
    %8090 = vmatpush1.msra.mxu0 0.0
    %8091 = vmatprep.subr.mxu0 0.0
    %8092 = vmatpush1.msra.mxu0 0.0
    %8093 = vmatprep.subr.mxu0 0.0
    %8094 = vmatpush1.msra.mxu0 0.0
    %8095 = vmatprep.mubr.f32.mxu0 0.0
    %8096 = vmatmul.mubr.f32.gmra.mrb[0].mxu0 %v4844
    %v8097 = vpop.f32.mrb[0].mxu0
    %v8098 = vadd.f32 %v8021, %v8097
    %v8099 = vpop.f32.mrb[0].mxu0
    %v8100 = vadd.f32 %v8023, %v8099
    %8101 = vmatprep.mubr.f32.mxu0 0.0
    %8102 = vmatmul.mubr.f32.gmra.mrb[0].mxu0 %v4851
    %v8103 = vpop.f32.mrb[0].mxu0
    %v8104 = vadd.f32 %v8027, %v8103
    %v8105 = vpop.f32.mrb[0].mxu0
    %v8106 = vadd.f32 %v8029, %v8105
    %8107 = vdwg.mxu0
    %v8108 = vmax.f32 %v6558, 0.0
    %v8109 = vmax.f32 %v6560, 0.0
    %v8110 = vmax.f32 %v6866, 0.0
    %v8111 = vmax.f32 %v6868, 0.0
    %v8112 = vmax.f32 %v7174, 0.0
    %v8113 = vmax.f32 %v7176, 0.0
    %v8114 = vmax.f32 %v7482, 0.0
    %v8115 = vmax.f32 %v7484, 0.0
    %v8116 = vmax.f32 %v7790, 0.0
    %v8117 = vmax.f32 %v7792, 0.0
    %v8118 = vmax.f32 %v8098, 0.0
    %v8119 = vmax.f32 %v8100, 0.0
    %v8120 = vmax.f32 %v6564, 0.0
    %v8121 = vmax.f32 %v6566, 0.0
    %v8122 = vmax.f32 %v6872, 0.0
    %v8123 = vmax.f32 %v6874, 0.0
    %v8124 = vmax.f32 %v7180, 0.0
    %v8125 = vmax.f32 %v7182, 0.0
    %v8126 = vmax.f32 %v7488, 0.0
    %v8127 = vmax.f32 %v7490, 0.0
    %v8128 = vmax.f32 %v7796, 0.0
    %v8129 = vmax.f32 %v7798, 0.0
    %v8130 = vmax.f32 %v8104, 0.0
    %v8131 = vmax.f32 %v8106, 0.0
    %v8132 = vmax.f32 %v8108, %v8112
    %v8133 = vmax.f32 %v8109, %v8113
    %v8134 = vmax.f32 %v8110, %v8114
    %v8135 = vmax.f32 %v8111, %v8115
    %v8136 = vmax.f32 %v8120, %v8124
    %v8137 = vmax.f32 %v8121, %v8125
    %v8138 = vmax.f32 %v8122, %v8126
    %v8139 = vmax.f32 %v8123, %v8127
    %v8140 = vmax.f32 %v8132, %v8116
    %v8141 = vmax.f32 %v8133, %v8117
    %v8142 = vmax.f32 %v8134, %v8118
    %v8143 = vmax.f32 %v8135, %v8119
    %v8144 = vmax.f32 %v8136, %v8128
    %v8145 = vmax.f32 %v8137, %v8129
    %v8146 = vmax.f32 %v8138, %v8130
    %v8147 = vmax.f32 %v8139, %v8131
    %v8148 = vld [vmem:[#allocation6] sm:$0xff]
    %v8149 = vld [vmem:[#allocation6 + $0x8] sm:$0xff]
    %v8150 = vld [vmem:[#allocation6 + $0x10] sm:$0xff]
    %v8151 = vld [vmem:[#allocation6 + $0x18] sm:$0xff]
    %v8152 = vld [vmem:[#allocation6 + $0x20] sm:$0xff]
    %v8153 = vld [vmem:[#allocation6 + $0x28] sm:$0xff]
    %v8154 = vld [vmem:[#allocation6 + $0x30] sm:$0xff]
    %v8155 = vld [vmem:[#allocation6 + $0x38] sm:$0xff]
    %v8156 = vld [vmem:[#allocation6 + $0x40] sm:$0xff]
    %v8157 = vld [vmem:[#allocation6 + $0x48] sm:$0xff]
    %v8158 = vld [vmem:[#allocation6 + $0x50] sm:$0xff]
    %v8159 = vld [vmem:[#allocation6 + $0x58] sm:$0xff]
    %v8160 = vld [vmem:[#allocation6 + $0x60] sm:$0xff]
    %v8161 = vld [vmem:[#allocation6 + $0x68] sm:$0xff]
    %v8162 = vld [vmem:[#allocation6 + $0x70] sm:$0xff]
    %v8163 = vld [vmem:[#allocation6 + $0x78] sm:$0xff]
    %v8164 = vld [vmem:[#allocation6 + $0x80] sm:$0xff]
    %v8165 = vld [vmem:[#allocation6 + $0x88] sm:$0xff]
    %v8166 = vld [vmem:[#allocation6 + $0x90] sm:$0xff]
    %v8167 = vld [vmem:[#allocation6 + $0x98] sm:$0xff]
    %v8168 = vld [vmem:[#allocation6 + $0xa0] sm:$0xff]
    %v8169 = vld [vmem:[#allocation6 + $0xa8] sm:$0xff]
    %v8170 = vld [vmem:[#allocation6 + $0xb0] sm:$0xff]
    %v8171 = vld [vmem:[#allocation6 + $0xb8] sm:$0xff]
    %v8172 = vld [vmem:[#allocation6 + $0xc0] sm:$0xff]
    %v8173 = vld [vmem:[#allocation6 + $0xc8] sm:$0xff]
    %v8174 = vld [vmem:[#allocation6 + $0xd0] sm:$0xff]
    %v8175 = vld [vmem:[#allocation6 + $0xd8] sm:$0xff]
    %v8176 = vld [vmem:[#allocation6 + $0xe0] sm:$0xff]
    %v8177 = vld [vmem:[#allocation6 + $0xe8] sm:$0xff]
    %v8178 = vld [vmem:[#allocation6 + $0xf0] sm:$0xff]
    %v8179 = vld [vmem:[#allocation6 + $0xf8] sm:$0xff]
    %v8180 = vld [vmem:[#allocation6 + $0x100] sm:$0xff]
    %v8181 = vld [vmem:[#allocation6 + $0x108] sm:$0xff]
    %v8182 = vld [vmem:[#allocation6 + $0x110] sm:$0xff]
    %v8183 = vld [vmem:[#allocation6 + $0x118] sm:$0xff]
    %v8184 = vld [vmem:[#allocation6 + $0x120] sm:$0xff]
    %v8185 = vld [vmem:[#allocation6 + $0x128] sm:$0xff]
    %v8186 = vld [vmem:[#allocation6 + $0x130] sm:$0xff]
    %v8187 = vld [vmem:[#allocation6 + $0x138] sm:$0xff]
    %v8188 = vld [vmem:[#allocation6 + $0x140] sm:$0xff]
    %v8189 = vld [vmem:[#allocation6 + $0x148] sm:$0xff]
    %v8190 = vld [vmem:[#allocation6 + $0x150] sm:$0xff]
    %v8191 = vld [vmem:[#allocation6 + $0x158] sm:$0xff]
    %v8192 = vld [vmem:[#allocation6 + $0x160] sm:$0xff]
    %v8193 = vld [vmem:[#allocation6 + $0x168] sm:$0xff]
    %v8194 = vld [vmem:[#allocation6 + $0x170] sm:$0xff]
    %v8195 = vld [vmem:[#allocation6 + $0x178] sm:$0xff]
    %v8196 = vld [vmem:[#allocation6 + $0x180] sm:$0xff]
    %v8197 = vld [vmem:[#allocation6 + $0x188] sm:$0xff]
    %v8198 = vld [vmem:[#allocation6 + $0x190] sm:$0xff]
    %v8199 = vld [vmem:[#allocation6 + $0x198] sm:$0xff]
    %v8200 = vld [vmem:[#allocation6 + $0x1a0] sm:$0xff]
    %v8201 = vld [vmem:[#allocation6 + $0x1a8] sm:$0xff]
    %v8202 = vld [vmem:[#allocation6 + $0x1b0] sm:$0xff]
    %v8203 = vld [vmem:[#allocation6 + $0x1b8] sm:$0xff]
    %v8204 = vld [vmem:[#allocation6 + $0x1c0] sm:$0xff]
    %v8205 = vld [vmem:[#allocation6 + $0x1c8] sm:$0xff]
    %v8206 = vld [vmem:[#allocation6 + $0x1d0] sm:$0xff]
    %v8207 = vld [vmem:[#allocation6 + $0x1d8] sm:$0xff]
    %v8208 = vld [vmem:[#allocation6 + $0x1e0] sm:$0xff]
    %v8209 = vld [vmem:[#allocation6 + $0x1e8] sm:$0xff]
    %v8210 = vld [vmem:[#allocation6 + $0x1f0] sm:$0xff]
    %v8211 = vld [vmem:[#allocation6 + $0x1f8] sm:$0xff]
    %v8212 = vld [vmem:[#allocation10] sm:$0x1]
    %v8214 = vlaneseq
    %v8215 = vshrl.u32 %v8214, 7
    %v8216 = vsub.s32 0, %v8215
    %v8217 = vrot.slane %v8212, %v8216
    %8219 = vmatprep.subr.mxu0 0.0
    %8220 = vmatpush1.msra.mxu0 %v8148
    %8221 = vmatprep.subr.mxu0 0.0
    %8222 = vmatpush1.msra.mxu0 %v8149
    %8223 = vmatprep.subr.mxu0 0.0
    %8224 = vmatpush1.msra.mxu0 %v8150
    %8225 = vmatprep.subr.mxu0 0.0
    %8226 = vmatpush1.msra.mxu0 %v8151
    %8227 = vmatprep.subr.mxu0 0.0
    %8228 = vmatpush1.msra.mxu0 %v8152
    %8229 = vmatprep.subr.mxu0 0.0
    %8230 = vmatpush1.msra.mxu0 %v8153
    %8231 = vmatprep.subr.mxu0 0.0
    %8232 = vmatpush1.msra.mxu0 %v8154
    %8233 = vmatprep.subr.mxu0 0.0
    %8234 = vmatpush1.msra.mxu0 %v8155
    %8235 = vmatprep.subr.mxu0 0.0
    %8236 = vmatpush1.msra.mxu0 %v8156
    %8237 = vmatprep.subr.mxu0 0.0
    %8238 = vmatpush1.msra.mxu0 %v8157
    %8239 = vmatprep.subr.mxu0 0.0
    %8240 = vmatpush1.msra.mxu0 %v8158
    %8241 = vmatprep.subr.mxu0 0.0
    %8242 = vmatpush1.msra.mxu0 %v8159
    %8243 = vmatprep.subr.mxu0 0.0
    %8244 = vmatpush1.msra.mxu0 %v8160
    %8245 = vmatprep.subr.mxu0 0.0
    %8246 = vmatpush1.msra.mxu0 %v8161
    %8247 = vmatprep.subr.mxu0 0.0
    %8248 = vmatpush1.msra.mxu0 %v8162
    %8249 = vmatprep.subr.mxu0 0.0
    %8250 = vmatpush1.msra.mxu0 %v8163
    %8251 = vmatprep.subr.mxu0 0.0
    %8252 = vmatpush1.msra.mxu0 %v8164
    %8253 = vmatprep.subr.mxu0 0.0
    %8254 = vmatpush1.msra.mxu0 %v8165
    %8255 = vmatprep.subr.mxu0 0.0
    %8256 = vmatpush1.msra.mxu0 %v8166
    %8257 = vmatprep.subr.mxu0 0.0
    %8258 = vmatpush1.msra.mxu0 %v8167
    %8259 = vmatprep.subr.mxu0 0.0
    %8260 = vmatpush1.msra.mxu0 %v8168
    %8261 = vmatprep.subr.mxu0 0.0
    %8262 = vmatpush1.msra.mxu0 %v8169
    %8263 = vmatprep.subr.mxu0 0.0
    %8264 = vmatpush1.msra.mxu0 %v8170
    %8265 = vmatprep.subr.mxu0 0.0
    %8266 = vmatpush1.msra.mxu0 %v8171
    %8267 = vmatprep.subr.mxu0 0.0
    %8268 = vmatpush1.msra.mxu0 %v8172
    %8269 = vmatprep.subr.mxu0 0.0
    %8270 = vmatpush1.msra.mxu0 %v8173
    %8271 = vmatprep.subr.mxu0 0.0
    %8272 = vmatpush1.msra.mxu0 %v8174
    %8273 = vmatprep.subr.mxu0 0.0
    %8274 = vmatpush1.msra.mxu0 %v8175
    %8275 = vmatprep.subr.mxu0 0.0
    %8276 = vmatpush1.msra.mxu0 %v8176
    %8277 = vmatprep.subr.mxu0 0.0
    %8278 = vmatpush1.msra.mxu0 %v8177
    %8279 = vmatprep.subr.mxu0 0.0
    %8280 = vmatpush1.msra.mxu0 %v8178
    %8281 = vmatprep.subr.mxu0 0.0
    %8282 = vmatpush1.msra.mxu0 %v8179
    %8283 = vmatprep.mubr.f32.mxu0 %v8141
    %8284 = vmatmul.mubr.f32.gmra.mrb[0].mxu0 %v8140
    %v8285 = vpop.f32.mrb[0].mxu0
    %v8286 = vadd.f32 %v8217, %v8285
    %v8287 = vpop.f32.mrb[0].mxu0
    %8288 = vmatprep.mubr.f32.mxu0 %v8145
    %8289 = vmatmul.mubr.f32.gmra.mrb[0].mxu0 %v8144
    %v8290 = vpop.f32.mrb[0].mxu0
    %v8291 = vadd.f32 %v8217, %v8290
    %v8292 = vpop.f32.mrb[0].mxu0
    %8293 = vdwg.mxu0
    %8294 = vmatprep.subr.mxu0 0.0
    %8295 = vmatpush1.msra.mxu0 %v8180
    %8296 = vmatprep.subr.mxu0 0.0
    %8297 = vmatpush1.msra.mxu0 %v8181
    %8298 = vmatprep.subr.mxu0 0.0
    %8299 = vmatpush1.msra.mxu0 %v8182
    %8300 = vmatprep.subr.mxu0 0.0
    %8301 = vmatpush1.msra.mxu0 %v8183
    %8302 = vmatprep.subr.mxu0 0.0
    %8303 = vmatpush1.msra.mxu0 %v8184
    %8304 = vmatprep.subr.mxu0 0.0
    %8305 = vmatpush1.msra.mxu0 %v8185
    %8306 = vmatprep.subr.mxu0 0.0
    %8307 = vmatpush1.msra.mxu0 %v8186
    %8308 = vmatprep.subr.mxu0 0.0
    %8309 = vmatpush1.msra.mxu0 %v8187
    %8310 = vmatprep.subr.mxu0 0.0
    %8311 = vmatpush1.msra.mxu0 %v8188
    %8312 = vmatprep.subr.mxu0 0.0
    %8313 = vmatpush1.msra.mxu0 %v8189
    %8314 = vmatprep.subr.mxu0 0.0
    %8315 = vmatpush1.msra.mxu0 %v8190
    %8316 = vmatprep.subr.mxu0 0.0
    %8317 = vmatpush1.msra.mxu0 %v8191
    %8318 = vmatprep.subr.mxu0 0.0
    %8319 = vmatpush1.msra.mxu0 %v8192
    %8320 = vmatprep.subr.mxu0 0.0
    %8321 = vmatpush1.msra.mxu0 %v8193
    %8322 = vmatprep.subr.mxu0 0.0
    %8323 = vmatpush1.msra.mxu0 %v8194
    %8324 = vmatprep.subr.mxu0 0.0
    %8325 = vmatpush1.msra.mxu0 %v8195
    %8326 = vmatprep.subr.mxu0 0.0
    %8327 = vmatpush1.msra.mxu0 %v8196
    %8328 = vmatprep.subr.mxu0 0.0
    %8329 = vmatpush1.msra.mxu0 %v8197
    %8330 = vmatprep.subr.mxu0 0.0
    %8331 = vmatpush1.msra.mxu0 %v8198
    %8332 = vmatprep.subr.mxu0 0.0
    %8333 = vmatpush1.msra.mxu0 %v8199
    %8334 = vmatprep.subr.mxu0 0.0
    %8335 = vmatpush1.msra.mxu0 %v8200
    %8336 = vmatprep.subr.mxu0 0.0
    %8337 = vmatpush1.msra.mxu0 %v8201
    %8338 = vmatprep.subr.mxu0 0.0
    %8339 = vmatpush1.msra.mxu0 %v8202
    %8340 = vmatprep.subr.mxu0 0.0
    %8341 = vmatpush1.msra.mxu0 %v8203
    %8342 = vmatprep.subr.mxu0 0.0
    %8343 = vmatpush1.msra.mxu0 %v8204
    %8344 = vmatprep.subr.mxu0 0.0
    %8345 = vmatpush1.msra.mxu0 %v8205
    %8346 = vmatprep.subr.mxu0 0.0
    %8347 = vmatpush1.msra.mxu0 %v8206
    %8348 = vmatprep.subr.mxu0 0.0
    %8349 = vmatpush1.msra.mxu0 %v8207
    %8350 = vmatprep.subr.mxu0 0.0
    %8351 = vmatpush1.msra.mxu0 %v8208
    %8352 = vmatprep.subr.mxu0 0.0
    %8353 = vmatpush1.msra.mxu0 %v8209
    %8354 = vmatprep.subr.mxu0 0.0
    %8355 = vmatpush1.msra.mxu0 %v8210
    %8356 = vmatprep.subr.mxu0 0.0
    %8357 = vmatpush1.msra.mxu0 %v8211
    %8358 = vmatprep.mubr.f32.mxu0 %v8143
    %8359 = vmatmul.mubr.f32.gmra.mrb[0].mxu0 %v8142
    %v8360 = vpop.f32.mrb[0].mxu0
    %v8361 = vadd.f32 %v8286, %v8360
    %v8362 = vpop.f32.mrb[0].mxu0
    %8363 = vmatprep.mubr.f32.mxu0 %v8147
    %8364 = vmatmul.mubr.f32.gmra.mrb[0].mxu0 %v8146
    %v8365 = vpop.f32.mrb[0].mxu0
    %v8366 = vadd.f32 %v8291, %v8365
    %v8367 = vpop.f32.mrb[0].mxu0
    %8368 = vdwg.mxu0
    %v8369 = vmax.f32 %v8361, 0.0
    %v8370 = vmax.f32 %v8366, 0.0
    %v8371 = vld [vmem:[%s4] sm:$0xff]
    %v8372 = vld [vmem:[%s4 + $0x8] sm:$0xff]
    %v8373 = vld [vmem:[%s4 + $0x10] sm:$0xff]
    %v8374 = vld [vmem:[%s4 + $0x18] sm:$0xff]
    %v8375 = vld [vmem:[%s4 + $0x20] sm:$0xff]
    %v8376 = vld [vmem:[%s4 + $0x28] sm:$0xff]
    %v8377 = vld [vmem:[%s4 + $0x30] sm:$0xff]
    %v8378 = vld [vmem:[%s4 + $0x38] sm:$0xff]
    %v8379 = vld [vmem:[%s4 + $0x40] sm:$0xff]
    %v8380 = vld [vmem:[%s4 + $0x48] sm:$0xff]
    %v8381 = vld [vmem:[%s4 + $0x50] sm:$0xff]
    %v8382 = vld [vmem:[%s4 + $0x58] sm:$0xff]
    %v8383 = vld [vmem:[%s4 + $0x60] sm:$0xff]
    %v8384 = vld [vmem:[%s4 + $0x68] sm:$0xff]
    %v8385 = vld [vmem:[%s4 + $0x70] sm:$0xff]
    %v8386 = vld [vmem:[%s4 + $0x78] sm:$0xff]
    %v8387 = vld [vmem:[#allocation12] sm:$0x1]
    %v8389 = vlaneseq
    %v8390 = vshrl.u32 %v8389, 7
    %v8391 = vsub.s32 0, %v8390
    %v8392 = vrot.slane %v8387, %v8391
    %8394 = vmatprep.subr.mxu0 0.0
    %8395 = vmatpush1.msra.mxu0 %v8371
    %8396 = vmatprep.subr.mxu0 0.0
    %8397 = vmatpush1.msra.mxu0 %v8372
    %8398 = vmatprep.subr.mxu0 0.0
    %8399 = vmatpush1.msra.mxu0 %v8373
    %8400 = vmatprep.subr.mxu0 0.0
    %8401 = vmatpush1.msra.mxu0 %v8374
    %8402 = vmatprep.subr.mxu0 0.0
    %8403 = vmatpush1.msra.mxu0 %v8375
    %8404 = vmatprep.subr.mxu0 0.0
    %8405 = vmatpush1.msra.mxu0 %v8376
    %8406 = vmatprep.subr.mxu0 0.0
    %8407 = vmatpush1.msra.mxu0 %v8377
    %8408 = vmatprep.subr.mxu0 0.0
    %8409 = vmatpush1.msra.mxu0 %v8378
    %8410 = vmatprep.subr.mxu0 0.0
    %8411 = vmatpush1.msra.mxu0 %v8379
    %8412 = vmatprep.subr.mxu0 0.0
    %8413 = vmatpush1.msra.mxu0 %v8380
    %8414 = vmatprep.subr.mxu0 0.0
    %8415 = vmatpush1.msra.mxu0 %v8381
    %8416 = vmatprep.subr.mxu0 0.0
    %8417 = vmatpush1.msra.mxu0 %v8382
    %8418 = vmatprep.subr.mxu0 0.0
    %8419 = vmatpush1.msra.mxu0 %v8383
    %8420 = vmatprep.subr.mxu0 0.0
    %8421 = vmatpush1.msra.mxu0 %v8384
    %8422 = vmatprep.subr.mxu0 0.0
    %8423 = vmatpush1.msra.mxu0 %v8385
    %8424 = vmatprep.subr.mxu0 0.0
    %8425 = vmatpush1.msra.mxu0 %v8386
    %8426 = vmatprep.subr.mxu0 0.0
    %8427 = vmatpush1.msra.mxu0 0.0
    %8428 = vmatprep.subr.mxu0 0.0
    %8429 = vmatpush1.msra.mxu0 0.0
    %8430 = vmatprep.subr.mxu0 0.0
    %8431 = vmatpush1.msra.mxu0 0.0
    %8432 = vmatprep.subr.mxu0 0.0
    %8433 = vmatpush1.msra.mxu0 0.0
    %8434 = vmatprep.subr.mxu0 0.0
    %8435 = vmatpush1.msra.mxu0 0.0
    %8436 = vmatprep.subr.mxu0 0.0
    %8437 = vmatpush1.msra.mxu0 0.0
    %8438 = vmatprep.subr.mxu0 0.0
    %8439 = vmatpush1.msra.mxu0 0.0
    %8440 = vmatprep.subr.mxu0 0.0
    %8441 = vmatpush1.msra.mxu0 0.0
    %8442 = vmatprep.subr.mxu0 0.0
    %8443 = vmatpush1.msra.mxu0 0.0
    %8444 = vmatprep.subr.mxu0 0.0
    %8445 = vmatpush1.msra.mxu0 0.0
    %8446 = vmatprep.subr.mxu0 0.0
    %8447 = vmatpush1.msra.mxu0 0.0
    %8448 = vmatprep.subr.mxu0 0.0
    %8449 = vmatpush1.msra.mxu0 0.0
    %8450 = vmatprep.subr.mxu0 0.0
    %8451 = vmatpush1.msra.mxu0 0.0
    %8452 = vmatprep.subr.mxu0 0.0
    %8453 = vmatpush1.msra.mxu0 0.0
    %8454 = vmatprep.subr.mxu0 0.0
    %8455 = vmatpush1.msra.mxu0 0.0
    %8456 = vmatprep.subr.mxu0 0.0
    %8457 = vmatpush1.msra.mxu0 0.0
    %8458 = vmatprep.mubr.f32.mxu0 0.0
    %8459 = vmatmul.mubr.f32.gmra.mrb[0].mxu0 %v8369
    %v8460 = vpop.f32.mrb[0].mxu0
    %v8461 = vadd.f32 %v8392, %v8460
    %v8462 = vpop.f32.mrb[0].mxu0
    %8463 = vmatprep.mubr.f32.mxu0 0.0
    %8464 = vmatmul.mubr.f32.gmra.mrb[0].mxu0 %v8370
    %v8465 = vpop.f32.mrb[0].mxu0
    %v8466 = vadd.f32 %v8392, %v8465
    %v8467 = vpop.f32.mrb[0].mxu0
    %8468 = vdwg.mxu0
    %v8469 = vmax.f32 %v8461, 0.0
    %v8470 = vmax.f32 %v8466, 0.0
    %v8471 = vld [vmem:[%s5] sm:$0xff]
    %v8472 = vld [vmem:[%s5 + $0x8] sm:$0xff]
    %v8473 = vld [vmem:[%s5 + $0x10] sm:$0xff]
    %v8474 = vld [vmem:[%s5 + $0x18] sm:$0xff]
    %v8475 = vld [vmem:[#allocation13] sm:$0x1]
    %v8477 = vlaneseq
    %v8478 = vshrl.u32 %v8477, 7
    %v8479 = vsub.s32 0, %v8478
    %v8480 = vrot.slane %v8475, %v8479
    %vm8482 = vcmask 261120
    %v8484 = vsel %vm8482, %v8469, 0
    %v8487 = vsel %vm8482, %v8470, 0
    %8489 = vmatprep.subr.mxu0 0.0
    %8490 = vmatpush1.msra.mxu0 %v8471
    %8491 = vmatprep.subr.mxu0 0.0
    %8492 = vmatpush1.msra.mxu0 %v8472
    %8493 = vmatprep.subr.mxu0 0.0
    %8494 = vmatpush1.msra.mxu0 %v8473
    %8495 = vmatprep.subr.mxu0 0.0
    %8496 = vmatpush1.msra.mxu0 %v8474
    %8497 = vmatprep.subr.mxu0 0.0
    %8498 = vmatpush1.msra.mxu0 0.0
    %8499 = vmatprep.subr.mxu0 0.0
    %8500 = vmatpush1.msra.mxu0 0.0
    %8501 = vmatprep.subr.mxu0 0.0
    %8502 = vmatpush1.msra.mxu0 0.0
    %8503 = vmatprep.subr.mxu0 0.0
    %8504 = vmatpush1.msra.mxu0 0.0
    %8505 = vmatprep.subr.mxu0 0.0
    %8506 = vmatpush1.msra.mxu0 0.0
    %8507 = vmatprep.subr.mxu0 0.0
    %8508 = vmatpush1.msra.mxu0 0.0
    %8509 = vmatprep.subr.mxu0 0.0
    %8510 = vmatpush1.msra.mxu0 0.0
    %8511 = vmatprep.subr.mxu0 0.0
    %8512 = vmatpush1.msra.mxu0 0.0
    %8513 = vmatprep.subr.mxu0 0.0
    %8514 = vmatpush1.msra.mxu0 0.0
    %8515 = vmatprep.subr.mxu0 0.0
    %8516 = vmatpush1.msra.mxu0 0.0
    %8517 = vmatprep.subr.mxu0 0.0
    %8518 = vmatpush1.msra.mxu0 0.0
    %8519 = vmatprep.subr.mxu0 0.0
    %8520 = vmatpush1.msra.mxu0 0.0
    %8521 = vmatprep.subr.mxu0 0.0
    %8522 = vmatpush1.msra.mxu0 0.0
    %8523 = vmatprep.subr.mxu0 0.0
    %8524 = vmatpush1.msra.mxu0 0.0
    %8525 = vmatprep.subr.mxu0 0.0
    %8526 = vmatpush1.msra.mxu0 0.0
    %8527 = vmatprep.subr.mxu0 0.0
    %8528 = vmatpush1.msra.mxu0 0.0
    %8529 = vmatprep.subr.mxu0 0.0
    %8530 = vmatpush1.msra.mxu0 0.0
    %8531 = vmatprep.subr.mxu0 0.0
    %8532 = vmatpush1.msra.mxu0 0.0
    %8533 = vmatprep.subr.mxu0 0.0
    %8534 = vmatpush1.msra.mxu0 0.0
    %8535 = vmatprep.subr.mxu0 0.0
    %8536 = vmatpush1.msra.mxu0 0.0
    %8537 = vmatprep.subr.mxu0 0.0
    %8538 = vmatpush1.msra.mxu0 0.0
    %8539 = vmatprep.subr.mxu0 0.0
    %8540 = vmatpush1.msra.mxu0 0.0
    %8541 = vmatprep.subr.mxu0 0.0
    %8542 = vmatpush1.msra.mxu0 0.0
    %8543 = vmatprep.subr.mxu0 0.0
    %8544 = vmatpush1.msra.mxu0 0.0
    %8545 = vmatprep.subr.mxu0 0.0
    %8546 = vmatpush1.msra.mxu0 0.0
    %8547 = vmatprep.subr.mxu0 0.0
    %8548 = vmatpush1.msra.mxu0 0.0
    %8549 = vmatprep.subr.mxu0 0.0
    %8550 = vmatpush1.msra.mxu0 0.0
    %8551 = vmatprep.subr.mxu0 0.0
    %8552 = vmatpush1.msra.mxu0 0.0
    %8553 = vmatprep.mubr.f32.mxu0 0.0
    %8554 = vmatmul.mubr.f32.gmra.mrb[0].mxu0 %v8484
    %v8555 = vpop.f32.mrb[0].mxu0
    %v8556 = vadd.f32 %v8480, %v8555
    %v8557 = vpop.f32.mrb[0].mxu0
    %8558 = vmatprep.mubr.f32.mxu0 0.0
    %8559 = vmatmul.mubr.f32.gmra.mrb[0].mxu0 %v8487
    %v8560 = vpop.f32.mrb[0].mxu0
    %v8561 = vadd.f32 %v8480, %v8560
    %v8562 = vpop.f32.mrb[0].mxu0
    %8563 = vdwg.mxu0
    %vm8564 = vcmask 31744
    %8565 = vst.msk [vmem:[%s11] sm:$0xff] %vm8564, %v8556
    %8566 = vst.msk [vmem:[%s11 + $0x8] sm:$0xff] %vm8564, %v8561
    // Predicated region
    $region78: #{experimental_network_forward.1} parent=1 // pred_check
      _
    $region79: #{experimental_network_forward.1} parent=1 // pred_check_branch
      %8568 = sbr.rel (0) target = $region81
    $region80: #{experimental_network_forward.1} parent=1 // pred_region
      _
    $region81: #{experimental_network_forward.1} parent=1 // pred_fallthru
      _
    // Predicated region
    $region82: #{experimental_network_forward.1} parent=1 // pred_check
      _
    $region83: #{experimental_network_forward.1} parent=1 // pred_check_branch
      %8570 = sbr.rel (0) target = $region85
    $region84: #{experimental_network_forward.1} parent=1 // pred_region
      _
    $region85: #{experimental_network_forward.1} parent=1 // pred_fallthru
      _
    %8571 = vsyncpa [#allocation3], 1
    %8572 = vsyncpa [#allocation5], 1
    %8573 = vsyncpa [#allocation8], 1
    %8574 = vsyncpa [#allocation11], 1
    %8575 = vsyncpa [#allocation14], 1

</llo_original>
